<compile_context>
chip_gen: v5e
topology: v5e:2x2
jax: 0.10.0
libtpu: 0.0.40
codegen_flags: <defaults>
</compile_context>

<pallas_src>
import jax
import jax.numpy as jnp
from jax.experimental import pallas as pl
from jax.experimental.pallas import tpu as pltpu

N_ACTION = 32     # len(Action)
N_ABILITY = 41    # len(AbilitySlot)
N_SWAP = 17       # len(const.ItemSlot)
N_ITEM = 288      # const.ITEM_COUNT

# MXU-native operand dtype for all matmuls (accumulation is always float32).
# Set to jnp.float32 to reproduce full-precision numerics.
MATMUL_DTYPE = jnp.bfloat16

_LANE = 128


def _align(n):
    return ((n + _LANE - 1) // _LANE) * _LANE


# Lane-aligned packing of the 5 head outputs into one dense output slab.
_OFF_ITEM = 0
_OFF_ACTION = _align(_OFF_ITEM + N_ITEM)         # 384
_OFF_ABILITY = _align(_OFF_ACTION + N_ACTION)    # 512
_OFF_SWAP = _align(_OFF_ABILITY + N_ABILITY)     # 640
_OFF_VLOC = _align(_OFF_SWAP + N_SWAP)           # 768
_OUT_W = _align(_OFF_VLOC + 2)                   # 896

_VMEM_SPEC = pl.BlockSpec(memory_space=pltpu.MemorySpace.VMEM)


# --------------------------------------------------------------------------
# Fused kernel: 3-layer LSTM -> 4 SelectionCategorical heads + position head
# --------------------------------------------------------------------------
def _hero_kernel(x_ref, h0_ref, c0_ref, *refs):
    lstm_refs = refs[0:9]        # (wih, whh, b) for layers 0, 1, 2
    sel_refs = refs[9:41]        # action | ability | swap | item: (w1,b1,...,w4,b4)
    pos_refs = refs[41:45]       # position head: (w1, b1, w2, b2)
    out_ref, hn_ref, cn_ref = refs[45], refs[46], refs[47]
    seq_ref = refs[48]           # (S*B, H) scratch: per-layer output sequence

    SB = x_ref.shape[0]
    H = h0_ref.shape[-1]
    B = h0_ref.shape[1]
    S = SB // B

    def mm(a, w):  # MXU matmul, bf16 operands, f32 accumulation
        return jnp.dot(a.astype(MATMUL_DTYPE), w.astype(MATMUL_DTYPE),
                       preferred_element_type=jnp.float32)

    # ---------------- 3-layer LSTM ----------------
    def lstm_layer(layer, x_all, wih_ref, whh_ref, b_ref, store_seq):
        GP = wih_ref.shape[-1] // 4                       # gate pitch (128-aligned)
        # Batched input projection for the whole sequence, hoisted out of the
        # recurrent loop; bias added once here.
        xp = mm(x_all, wih_ref[...]) + b_ref[...]         # (S*B, 4*GP) f32
        whh = whh_ref[...].astype(MATMUL_DTYPE)           # cast hoisted
        h = h0_ref[layer]
        c = c0_ref[layer]
        for t in range(S):                                # static unroll (S small & fixed)
            gates = xp[t * B:(t + 1) * B, :] + jnp.dot(
                h.astype(MATMUL_DTYPE), whh, preferred_element_type=jnp.float32)
            i = jax.nn.sigmoid(gates[:, 0 * GP:0 * GP + H])
            f = jax.nn.sigmoid(gates[:, 1 * GP:1 * GP + H])
            g = jnp.tanh(gates[:, 2 * GP:2 * GP + H])
            o = jax.nn.sigmoid(gates[:, 3 * GP:3 * GP + H])
            c = f * c + i * g
            h = o * jnp.tanh(c)
            if store_seq:
                seq_ref[t * B:(t + 1) * B, :] = h
        hn_ref[layer] = h
        cn_ref[layer] = c
        return h

    wih0, whh0, b0, wih1, whh1, b1, wih2, whh2, b2 = lstm_refs
    lstm_layer(0, x_ref[...], wih0, whh0, b0, store_seq=True)
    lstm_layer(1, seq_ref[...], wih1, whh1, b1, store_seq=True)
    # Last layer: only the final hidden state is needed (== hidden[:, -1]).
    hidden = lstm_layer(2, seq_ref[...], wih2, whh2, b2, store_seq=False)

    # ---------------- heads ----------------
    def linear(a, w_ref, bias_ref):
        return mm(a, w_ref[...]) + bias_ref[...]

    def softmax(logits):
        m = jnp.max(logits, axis=-1, keepdims=True)
        e = jnp.exp(logits - m)
        return e / jnp.sum(e, axis=-1, keepdims=True)

    def selection(w1, b1, w2, b2, w3, b3, w4, b4):
        z = jnp.maximum(linear(hidden, w1, b1), 0.0)
        z = jnp.maximum(linear(z, w2, b2), 0.0)
        z = jnp.maximum(linear(z, w3, b3), 0.0)
        return softmax(linear(z, w4, b4))

    action = selection(*sel_refs[0:8])      # (B, 32)
    ability = selection(*sel_refs[8:16])    # (B, 41)
    swap = selection(*sel_refs[16:24])      # (B, 17)
    item = selection(*sel_refs[24:32])      # (B, 288)

    pz = jnp.maximum(linear(hidden, pos_refs[0], pos_refs[1]), 0.0)
    vloc = softmax(linear(pz, pos_refs[2], pos_refs[3])) * 2.0 - 1.0   # (B, 2)

    # Single lane-dense output slab; every write starts at a 128-aligned lane.
    out_ref[...] = jnp.zeros_like(out_ref)
    out_ref[:, _OFF_ITEM:_OFF_ITEM + N_ITEM] = item
    out_ref[:, _OFF_ACTION:_OFF_ACTION + N_ACTION] = action
    out_ref[:, _OFF_ABILITY:_OFF_ABILITY + N_ABILITY] = ability
    out_ref[:, _OFF_SWAP:_OFF_SWAP + N_SWAP] = swap
    out_ref[:, _OFF_VLOC:_OFF_VLOC + 2] = vloc


# --------------------------------------------------------------------------
# Forward wrapper
# --------------------------------------------------------------------------
def hero_model_forward(x, params, state=None):
    """One HeroModel forward pass.  Returns (msg, (hn, cn)).

    The PyTorch module stashes (hn, cn) on `self` between calls; here the new
    LSTM state is returned so the caller can pass it back as `state` on the
    next call.  state=None starts from the h0_init / c0_init parameters
    (first-call semantics).
    """
    B, S, D = x.shape
    L, _, H = params["h0"].shape
    h0, c0 = (params["h0"], params["c0"]) if state is None else state

    # time-major and flattened: one batched input-projection matmul per layer.
    x_tm = jnp.transpose(x, (1, 0, 2)).reshape(S * B, D)

    flat = []
    for (wih, whh, b) in params["lstm"]:
        flat += [wih, whh, b]
    for head in ("action", "ability", "swap", "item"):
        for (w, b) in params[head]:
            flat += [w, b]
    for (w, b) in params["position"]:
        flat += [w, b]

    probs, hn, cn = pl.pallas_call(
        _hero_kernel,
        out_shape=(
            jax.ShapeDtypeStruct((B, _OUT_W), jnp.float32),
            jax.ShapeDtypeStruct((L, B, H), jnp.float32),
            jax.ShapeDtypeStruct((L, B, H), jnp.float32),
        ),
        in_specs=[_VMEM_SPEC] * (3 + len(flat)),
        out_specs=(_VMEM_SPEC, _VMEM_SPEC, _VMEM_SPEC),
        scratch_shapes=[pltpu.VMEM((S * B, H), jnp.float32)],
    )(x_tm, h0, c0, *flat)

    msg = {
        "action": probs[:, _OFF_ACTION:_OFF_ACTION + N_ACTION],      # ARG.action
        "vLoc": probs[:, _OFF_VLOC:_OFF_VLOC + 2],                   # ARG.vLoc
        "sItem": probs[:, _OFF_ITEM:_OFF_ITEM + N_ITEM],             # ARG.sItem
        "nSlot": probs[:, _OFF_ABILITY:_OFF_ABILITY + N_ABILITY],    # ARG.nSlot
        "ix2": probs[:, _OFF_SWAP:_OFF_SWAP + N_SWAP],               # ARG.ix2
    }
    return msg, (hn, cn)


# --------------------------------------------------------------------------
# Deterministic parameter construction (synthetic weights, PyTorch-like init)
# --------------------------------------------------------------------------
def _linear_params(key, fan_in, fan_out):
    kw, kb = jax.random.split(key)
    bound = 1.0 / (fan_in ** 0.5)
    w = jax.random.uniform(kw, (fan_in, fan_out), jnp.float32, -bound, bound)
    b = jax.random.uniform(kb, (1, fan_out), jnp.float32, -bound, bound)
    return w, b


def _lstm_layer_params(key, d_in, hidden):
    """Fused-gate LSTM weights, gate order i, f, g, o (PyTorch).

    Gate g occupies the 128-lane-aligned column band [g*P, g*P + hidden) of the
    fused (rows, 4*P) weight; padding columns are zero.  b = b_ih + b_hh.
    """
    P = _align(hidden)
    kih, khh, kb1, kb2 = jax.random.split(key, 4)
    bound = 1.0 / (hidden ** 0.5)

    def fused_w(k, rows):
        w = jax.random.uniform(k, (4, rows, hidden), jnp.float32, -bound, bound)
        wp = jnp.zeros((4, rows, P), jnp.float32).at[:, :, :hidden].set(w)
        return jnp.transpose(wp, (1, 0, 2)).reshape(rows, 4 * P)

    wih = fused_w(kih, d_in)
    whh = fused_w(khh, hidden)
    b_sum = (jax.random.uniform(kb1, (4, 1, hidden), jnp.float32, -bound, bound)
             + jax.random.uniform(kb2, (4, 1, hidden), jnp.float32, -bound, bound))
    bp = jnp.zeros((4, 1, P), jnp.float32).at[:, :, :hidden].set(b_sum)
    b = jnp.transpose(bp, (1, 0, 2)).reshape(1, 4 * P)
    return wih, whh, b


def _selection_params(key, state_shape, n_classes):
    n_hidden = n_classes * 2
    k1, k2, k3, k4 = jax.random.split(key, 4)
    return [_linear_params(k1, state_shape, n_hidden),
            _linear_params(k2, n_hidden, n_hidden),
            _linear_params(k3, n_hidden, n_hidden),
            _linear_params(k4, n_hidden, n_classes)]


def init_hero_model(key, batch_size, input_size):
    hidden_size = int(input_size * 0.55)
    lstm_layers = 3
    ph = int(hidden_size / 2)
    keys = jax.random.split(key, 9)
    lstm = [
        _lstm_layer_params(keys[0], input_size, hidden_size),
        _lstm_layer_params(keys[1], hidden_size, hidden_size),
        _lstm_layer_params(keys[2], hidden_size, hidden_size),
    ]
    return {
        "h0": jnp.zeros((lstm_layers, batch_size, hidden_size), jnp.float32),
        "c0": jnp.zeros((lstm_layers, batch_size, hidden_size), jnp.float32),
        "lstm": lstm,
        "ability": _selection_params(keys[3], hidden_size, N_ABILITY),
        "action": _selection_params(keys[4], hidden_size, N_ACTION),
        "swap": _selection_params(keys[5], hidden_size, N_SWAP),
        "item": _selection_params(keys[6], hidden_size, N_ITEM),
        "position": [_linear_params(keys[7], hidden_size, ph),
                     _linear_params(keys[8], ph, 2)],
    }


# TODO(synk): the v7x-specific suggestion of running the item head on the
# second TensorCore via pl.core_map is not implemented; everything runs on one
# TC inside the single fused call.

if __name__ == "__main__":
    key = jax.random.PRNGKey(0)
    k_param, k_x = jax.random.split(key)

    # hidden_size = int(0.55 * 80) = 44; batch of 8 fills the vreg sublanes.
    batch_size, seq, input_size = 8, 8, 80
    params = init_hero_model(k_param, batch_size, input_size)
    x = jax.random.normal(k_x, (batch_size, seq, input_size), jnp.float32)

    fwd = jax.jit(hero_model_forward)
    msg, (hn, cn) = fwd(x, params)
    msg, hn, cn = jax.tree_util.tree_map(jax.block_until_ready, (msg, hn, cn))

    hidden_size = int(input_size * 0.55)
    assert msg["action"].shape == (batch_size, N_ACTION)
    assert msg["nSlot"].shape == (batch_size, N_ABILITY)
    assert msg["ix2"].shape == (batch_size, N_SWAP)
    assert msg["sItem"].shape == (batch_size, N_ITEM)
    assert msg["vLoc"].shape == (batch_size, 2)
    assert hn.shape == (3, batch_size, hidden_size) and cn.shape == hn.shape

    # categorical heads are softmax outputs -> each row sums to 1
    for k in ("action", "nSlot", "ix2", "sItem"):
        row_sums = jnp.sum(msg[k], axis=-1)
        assert bool(jnp.all(jnp.abs(row_sums - 1.0) < 1e-3)), k
    # vLoc = softmax * 2 - 1 -> each row sums to 0
    assert bool(jnp.all(jnp.abs(jnp.sum(msg["vLoc"], axis=-1)) < 1e-3))

    print("KERNEL_OK")
</pallas_src>

<mosaic_0001>
module attributes {stable_mosaic.version = 11 : i64} {
  func.func @_hero_kernel(%arg0: memref<64x80xf32, #tpu.memory_space<vmem>>, %arg1: memref<3x8x44xf32, #tpu.memory_space<vmem>>, %arg2: memref<3x8x44xf32, #tpu.memory_space<vmem>>, %arg3: memref<80x512xf32, #tpu.memory_space<vmem>>, %arg4: memref<44x512xf32, #tpu.memory_space<vmem>>, %arg5: memref<1x512xf32, #tpu.memory_space<vmem>>, %arg6: memref<44x512xf32, #tpu.memory_space<vmem>>, %arg7: memref<44x512xf32, #tpu.memory_space<vmem>>, %arg8: memref<1x512xf32, #tpu.memory_space<vmem>>, %arg9: memref<44x512xf32, #tpu.memory_space<vmem>>, %arg10: memref<44x512xf32, #tpu.memory_space<vmem>>, %arg11: memref<1x512xf32, #tpu.memory_space<vmem>>, %arg12: memref<44x64xf32, #tpu.memory_space<vmem>>, %arg13: memref<1x64xf32, #tpu.memory_space<vmem>>, %arg14: memref<64x64xf32, #tpu.memory_space<vmem>>, %arg15: memref<1x64xf32, #tpu.memory_space<vmem>>, %arg16: memref<64x64xf32, #tpu.memory_space<vmem>>, %arg17: memref<1x64xf32, #tpu.memory_space<vmem>>, %arg18: memref<64x32xf32, #tpu.memory_space<vmem>>, %arg19: memref<1x32xf32, #tpu.memory_space<vmem>>, %arg20: memref<44x82xf32, #tpu.memory_space<vmem>>, %arg21: memref<1x82xf32, #tpu.memory_space<vmem>>, %arg22: memref<82x82xf32, #tpu.memory_space<vmem>>, %arg23: memref<1x82xf32, #tpu.memory_space<vmem>>, %arg24: memref<82x82xf32, #tpu.memory_space<vmem>>, %arg25: memref<1x82xf32, #tpu.memory_space<vmem>>, %arg26: memref<82x41xf32, #tpu.memory_space<vmem>>, %arg27: memref<1x41xf32, #tpu.memory_space<vmem>>, %arg28: memref<44x34xf32, #tpu.memory_space<vmem>>, %arg29: memref<1x34xf32, #tpu.memory_space<vmem>>, %arg30: memref<34x34xf32, #tpu.memory_space<vmem>>, %arg31: memref<1x34xf32, #tpu.memory_space<vmem>>, %arg32: memref<34x34xf32, #tpu.memory_space<vmem>>, %arg33: memref<1x34xf32, #tpu.memory_space<vmem>>, %arg34: memref<34x17xf32, #tpu.memory_space<vmem>>, %arg35: memref<1x17xf32, #tpu.memory_space<vmem>>, %arg36: memref<44x576xf32, #tpu.memory_space<vmem>>, %arg37: memref<1x576xf32, #tpu.memory_space<vmem>>, %arg38: memref<576x576xf32, #tpu.memory_space<vmem>>, %arg39: memref<1x576xf32, #tpu.memory_space<vmem>>, %arg40: memref<576x576xf32, #tpu.memory_space<vmem>>, %arg41: memref<1x576xf32, #tpu.memory_space<vmem>>, %arg42: memref<576x288xf32, #tpu.memory_space<vmem>>, %arg43: memref<1x288xf32, #tpu.memory_space<vmem>>, %arg44: memref<44x22xf32, #tpu.memory_space<vmem>>, %arg45: memref<1x22xf32, #tpu.memory_space<vmem>>, %arg46: memref<22x2xf32, #tpu.memory_space<vmem>>, %arg47: memref<1x2xf32, #tpu.memory_space<vmem>>, %arg48: memref<8x896xf32, #tpu.memory_space<vmem>>, %arg49: memref<3x8x44xf32, #tpu.memory_space<vmem>>, %arg50: memref<3x8x44xf32, #tpu.memory_space<vmem>>, %arg51: memref<64x44xf32, #tpu.memory_space<vmem>>) attributes {dimension_semantics = [], scalar_prefetch = 0 : i64, scratch_operands = 1 : i64, tpu.core_type = #tpu.core_type<tc>} {
    %c0 = arith.constant 0 : index
    %c0_0 = arith.constant 0 : index
    %0 = vector.load %arg0[%c0, %c0_0] : memref<64x80xf32, #tpu.memory_space<vmem>>, vector<64x80xf32>
    %c0_1 = arith.constant 0 : index
    %c0_2 = arith.constant 0 : index
    %1 = vector.load %arg3[%c0_1, %c0_2] : memref<80x512xf32, #tpu.memory_space<vmem>>, vector<80x512xf32>
    %2 = arith.truncf %0 : vector<64x80xf32> to vector<64x80xbf16>
    %3 = arith.truncf %1 : vector<80x512xf32> to vector<80x512xbf16>
    %cst = arith.constant dense<0.000000e+00> : vector<64x512xf32>
    %4 = tpu.matmul %2, %3, %cst {dimension_numbers = #tpu.dot_dimension_numbers<[1], [0], [0], [1], [0, 0, 1, 1], [], []>} : vector<64x80xbf16>, vector<80x512xbf16>, vector<64x512xf32> -> vector<64x512xf32>
    %c0_3 = arith.constant 0 : index
    %c0_4 = arith.constant 0 : index
    %5 = vector.load %arg5[%c0_3, %c0_4] : memref<1x512xf32, #tpu.memory_space<vmem>>, vector<1x512xf32>
    %6 = vector.broadcast %5 : vector<1x512xf32> to vector<64x512xf32>
    %7 = arith.addf %4, %6 : vector<64x512xf32>
    %c0_5 = arith.constant 0 : index
    %c0_6 = arith.constant 0 : index
    %8 = vector.load %arg4[%c0_5, %c0_6] : memref<44x512xf32, #tpu.memory_space<vmem>>, vector<44x512xf32>
    %9 = arith.truncf %8 : vector<44x512xf32> to vector<44x512xbf16>
    %c0_7 = arith.constant 0 : index
    %c0_8 = arith.constant 0 : index
    %c0_9 = arith.constant 0 : index
    %10 = vector.load %arg1[%c0_7, %c0_8, %c0_9] : memref<3x8x44xf32, #tpu.memory_space<vmem>>, vector<1x8x44xf32>
    %11 = vector.shape_cast %10 : vector<1x8x44xf32> to vector<8x44xf32>
    %c0_10 = arith.constant 0 : index
    %c0_11 = arith.constant 0 : index
    %c0_12 = arith.constant 0 : index
    %12 = vector.load %arg2[%c0_10, %c0_11, %c0_12] : memref<3x8x44xf32, #tpu.memory_space<vmem>>, vector<1x8x44xf32>
    %13 = vector.shape_cast %12 : vector<1x8x44xf32> to vector<8x44xf32>
    %14 = vector.extract_strided_slice %7 {offsets = [0, 0], sizes = [8, 512], strides = [1, 1]} : vector<64x512xf32> to vector<8x512xf32>
    %15 = arith.truncf %11 : vector<8x44xf32> to vector<8x44xbf16>
    %cst_13 = arith.constant dense<0.000000e+00> : vector<8x512xf32>
    %16 = tpu.matmul %15, %9, %cst_13 {dimension_numbers = #tpu.dot_dimension_numbers<[1], [0], [0], [1], [0, 0, 1, 1], [], []>} : vector<8x44xbf16>, vector<44x512xbf16>, vector<8x512xf32> -> vector<8x512xf32>
    %17 = arith.addf %14, %16 : vector<8x512xf32>
    %18 = vector.extract_strided_slice %17 {offsets = [0, 0], sizes = [8, 44], strides = [1, 1]} : vector<8x512xf32> to vector<8x44xf32>
    %19 = arith.negf %18 : vector<8x44xf32>
    %20 = math.exp %19 : vector<8x44xf32>
    %cst_14 = arith.constant 1.000000e+00 : f32
    %21 = vector.broadcast %cst_14 : f32 to vector<8x44xf32>
    %22 = arith.addf %21, %20 : vector<8x44xf32>
    %23 = arith.divf %21, %22 : vector<8x44xf32>
    %24 = vector.extract_strided_slice %17 {offsets = [0, 128], sizes = [8, 44], strides = [1, 1]} : vector<8x512xf32> to vector<8x44xf32>
    %25 = arith.negf %24 : vector<8x44xf32>
    %26 = math.exp %25 : vector<8x44xf32>
    %cst_15 = arith.constant 1.000000e+00 : f32
    %27 = vector.broadcast %cst_15 : f32 to vector<8x44xf32>
    %28 = arith.addf %27, %26 : vector<8x44xf32>
    %29 = arith.divf %27, %28 : vector<8x44xf32>
    %30 = vector.extract_strided_slice %17 {offsets = [0, 256], sizes = [8, 44], strides = [1, 1]} : vector<8x512xf32> to vector<8x44xf32>
    %31 = math.tanh %30 : vector<8x44xf32>
    %32 = vector.extract_strided_slice %17 {offsets = [0, 384], sizes = [8, 44], strides = [1, 1]} : vector<8x512xf32> to vector<8x44xf32>
    %33 = arith.negf %32 : vector<8x44xf32>
    %34 = math.exp %33 : vector<8x44xf32>
    %cst_16 = arith.constant 1.000000e+00 : f32
    %35 = vector.broadcast %cst_16 : f32 to vector<8x44xf32>
    %36 = arith.addf %35, %34 : vector<8x44xf32>
    %37 = arith.divf %35, %36 : vector<8x44xf32>
    %38 = arith.mulf %29, %13 : vector<8x44xf32>
    %39 = arith.mulf %23, %31 : vector<8x44xf32>
    %40 = arith.addf %38, %39 : vector<8x44xf32>
    %41 = math.tanh %40 : vector<8x44xf32>
    %42 = arith.mulf %37, %41 : vector<8x44xf32>
    %c0_17 = arith.constant 0 : index
    %c0_18 = arith.constant 0 : index
    %43 = vector.load %arg51[%c0_17, %c0_18] : memref<64x44xf32, #tpu.memory_space<vmem>>, vector<8x44xf32>
    tpu.vector_store %arg51[%c0_17, %c0_18], %42 {strides = array<i32>} : memref<64x44xf32, #tpu.memory_space<vmem>>, vector<8x44xf32>,
    %44 = vector.extract_strided_slice %7 {offsets = [8, 0], sizes = [8, 512], strides = [1, 1]} : vector<64x512xf32> to vector<8x512xf32>
    %45 = arith.truncf %42 : vector<8x44xf32> to vector<8x44xbf16>
    %cst_19 = arith.constant dense<0.000000e+00> : vector<8x512xf32>
    %46 = tpu.matmul %45, %9, %cst_19 {dimension_numbers = #tpu.dot_dimension_numbers<[1], [0], [0], [1], [0, 0, 1, 1], [], []>} : vector<8x44xbf16>, vector<44x512xbf16>, vector<8x512xf32> -> vector<8x512xf32>
    %47 = arith.addf %44, %46 : vector<8x512xf32>
    %48 = vector.extract_strided_slice %47 {offsets = [0, 0], sizes = [8, 44], strides = [1, 1]} : vector<8x512xf32> to vector<8x44xf32>
    %49 = arith.negf %48 : vector<8x44xf32>
    %50 = math.exp %49 : vector<8x44xf32>
    %cst_20 = arith.constant 1.000000e+00 : f32
    %51 = vector.broadcast %cst_20 : f32 to vector<8x44xf32>
    %52 = arith.addf %51, %50 : vector<8x44xf32>
    %53 = arith.divf %51, %52 : vector<8x44xf32>
    %54 = vector.extract_strided_slice %47 {offsets = [0, 128], sizes = [8, 44], strides = [1, 1]} : vector<8x512xf32> to vector<8x44xf32>
    %55 = arith.negf %54 : vector<8x44xf32>
    %56 = math.exp %55 : vector<8x44xf32>
    %cst_21 = arith.constant 1.000000e+00 : f32
    %57 = vector.broadcast %cst_21 : f32 to vector<8x44xf32>
    %58 = arith.addf %57, %56 : vector<8x44xf32>
    %59 = arith.divf %57, %58 : vector<8x44xf32>
    %60 = vector.extract_strided_slice %47 {offsets = [0, 256], sizes = [8, 44], strides = [1, 1]} : vector<8x512xf32> to vector<8x44xf32>
    %61 = math.tanh %60 : vector<8x44xf32>
    %62 = vector.extract_strided_slice %47 {offsets = [0, 384], sizes = [8, 44], strides = [1, 1]} : vector<8x512xf32> to vector<8x44xf32>
    %63 = arith.negf %62 : vector<8x44xf32>
    %64 = math.exp %63 : vector<8x44xf32>
    %cst_22 = arith.constant 1.000000e+00 : f32
    %65 = vector.broadcast %cst_22 : f32 to vector<8x44xf32>
    %66 = arith.addf %65, %64 : vector<8x44xf32>
    %67 = arith.divf %65, %66 : vector<8x44xf32>
    %68 = arith.mulf %59, %40 : vector<8x44xf32>
    %69 = arith.mulf %53, %61 : vector<8x44xf32>
    %70 = arith.addf %68, %69 : vector<8x44xf32>
    %71 = math.tanh %70 : vector<8x44xf32>
    %72 = arith.mulf %67, %71 : vector<8x44xf32>
    %c8 = arith.constant 8 : index
    %c0_23 = arith.constant 0 : index
    %73 = vector.load %arg51[%c8, %c0_23] : memref<64x44xf32, #tpu.memory_space<vmem>>, vector<8x44xf32>
    tpu.vector_store %arg51[%c8, %c0_23], %72 {strides = array<i32>} : memref<64x44xf32, #tpu.memory_space<vmem>>, vector<8x44xf32>,
    %74 = vector.extract_strided_slice %7 {offsets = [16, 0], sizes = [8, 512], strides = [1, 1]} : vector<64x512xf32> to vector<8x512xf32>
    %75 = arith.truncf %72 : vector<8x44xf32> to vector<8x44xbf16>
    %cst_24 = arith.constant dense<0.000000e+00> : vector<8x512xf32>
    %76 = tpu.matmul %75, %9, %cst_24 {dimension_numbers = #tpu.dot_dimension_numbers<[1], [0], [0], [1], [0, 0, 1, 1], [], []>} : vector<8x44xbf16>, vector<44x512xbf16>, vector<8x512xf32> -> vector<8x512xf32>
    %77 = arith.addf %74, %76 : vector<8x512xf32>
    %78 = vector.extract_strided_slice %77 {offsets = [0, 0], sizes = [8, 44], strides = [1, 1]} : vector<8x512xf32> to vector<8x44xf32>
    %79 = arith.negf %78 : vector<8x44xf32>
    %80 = math.exp %79 : vector<8x44xf32>
    %cst_25 = arith.constant 1.000000e+00 : f32
    %81 = vector.broadcast %cst_25 : f32 to vector<8x44xf32>
    %82 = arith.addf %81, %80 : vector<8x44xf32>
    %83 = arith.divf %81, %82 : vector<8x44xf32>
    %84 = vector.extract_strided_slice %77 {offsets = [0, 128], sizes = [8, 44], strides = [1, 1]} : vector<8x512xf32> to vector<8x44xf32>
    %85 = arith.negf %84 : vector<8x44xf32>
    %86 = math.exp %85 : vector<8x44xf32>
    %cst_26 = arith.constant 1.000000e+00 : f32
    %87 = vector.broadcast %cst_26 : f32 to vector<8x44xf32>
    %88 = arith.addf %87, %86 : vector<8x44xf32>
    %89 = arith.divf %87, %88 : vector<8x44xf32>
    %90 = vector.extract_strided_slice %77 {offsets = [0, 256], sizes = [8, 44], strides = [1, 1]} : vector<8x512xf32> to vector<8x44xf32>
    %91 = math.tanh %90 : vector<8x44xf32>
    %92 = vector.extract_strided_slice %77 {offsets = [0, 384], sizes = [8, 44], strides = [1, 1]} : vector<8x512xf32> to vector<8x44xf32>
    %93 = arith.negf %92 : vector<8x44xf32>
    %94 = math.exp %93 : vector<8x44xf32>
    %cst_27 = arith.constant 1.000000e+00 : f32
    %95 = vector.broadcast %cst_27 : f32 to vector<8x44xf32>
    %96 = arith.addf %95, %94 : vector<8x44xf32>
    %97 = arith.divf %95, %96 : vector<8x44xf32>
    %98 = arith.mulf %89, %70 : vector<8x44xf32>
    %99 = arith.mulf %83, %91 : vector<8x44xf32>
    %100 = arith.addf %98, %99 : vector<8x44xf32>
    %101 = math.tanh %100 : vector<8x44xf32>
    %102 = arith.mulf %97, %101 : vector<8x44xf32>
    %c16 = arith.constant 16 : index
    %c0_28 = arith.constant 0 : index
    %103 = vector.load %arg51[%c16, %c0_28] : memref<64x44xf32, #tpu.memory_space<vmem>>, vector<8x44xf32>
    tpu.vector_store %arg51[%c16, %c0_28], %102 {strides = array<i32>} : memref<64x44xf32, #tpu.memory_space<vmem>>, vector<8x44xf32>,
    %104 = vector.extract_strided_slice %7 {offsets = [24, 0], sizes = [8, 512], strides = [1, 1]} : vector<64x512xf32> to vector<8x512xf32>
    %105 = arith.truncf %102 : vector<8x44xf32> to vector<8x44xbf16>
    %cst_29 = arith.constant dense<0.000000e+00> : vector<8x512xf32>
    %106 = tpu.matmul %105, %9, %cst_29 {dimension_numbers = #tpu.dot_dimension_numbers<[1], [0], [0], [1], [0, 0, 1, 1], [], []>} : vector<8x44xbf16>, vector<44x512xbf16>, vector<8x512xf32> -> vector<8x512xf32>
    %107 = arith.addf %104, %106 : vector<8x512xf32>
    %108 = vector.extract_strided_slice %107 {offsets = [0, 0], sizes = [8, 44], strides = [1, 1]} : vector<8x512xf32> to vector<8x44xf32>
    %109 = arith.negf %108 : vector<8x44xf32>
    %110 = math.exp %109 : vector<8x44xf32>
    %cst_30 = arith.constant 1.000000e+00 : f32
    %111 = vector.broadcast %cst_30 : f32 to vector<8x44xf32>
    %112 = arith.addf %111, %110 : vector<8x44xf32>
    %113 = arith.divf %111, %112 : vector<8x44xf32>
    %114 = vector.extract_strided_slice %107 {offsets = [0, 128], sizes = [8, 44], strides = [1, 1]} : vector<8x512xf32> to vector<8x44xf32>
    %115 = arith.negf %114 : vector<8x44xf32>
    %116 = math.exp %115 : vector<8x44xf32>
    %cst_31 = arith.constant 1.000000e+00 : f32
    %117 = vector.broadcast %cst_31 : f32 to vector<8x44xf32>
    %118 = arith.addf %117, %116 : vector<8x44xf32>
    %119 = arith.divf %117, %118 : vector<8x44xf32>
    %120 = vector.extract_strided_slice %107 {offsets = [0, 256], sizes = [8, 44], strides = [1, 1]} : vector<8x512xf32> to vector<8x44xf32>
    %121 = math.tanh %120 : vector<8x44xf32>
    %122 = vector.extract_strided_slice %107 {offsets = [0, 384], sizes = [8, 44], strides = [1, 1]} : vector<8x512xf32> to vector<8x44xf32>
    %123 = arith.negf %122 : vector<8x44xf32>
    %124 = math.exp %123 : vector<8x44xf32>
    %cst_32 = arith.constant 1.000000e+00 : f32
    %125 = vector.broadcast %cst_32 : f32 to vector<8x44xf32>
    %126 = arith.addf %125, %124 : vector<8x44xf32>
    %127 = arith.divf %125, %126 : vector<8x44xf32>
    %128 = arith.mulf %119, %100 : vector<8x44xf32>
    %129 = arith.mulf %113, %121 : vector<8x44xf32>
    %130 = arith.addf %128, %129 : vector<8x44xf32>
    %131 = math.tanh %130 : vector<8x44xf32>
    %132 = arith.mulf %127, %131 : vector<8x44xf32>
    %c24 = arith.constant 24 : index
    %c0_33 = arith.constant 0 : index
    %133 = vector.load %arg51[%c24, %c0_33] : memref<64x44xf32, #tpu.memory_space<vmem>>, vector<8x44xf32>
    tpu.vector_store %arg51[%c24, %c0_33], %132 {strides = array<i32>} : memref<64x44xf32, #tpu.memory_space<vmem>>, vector<8x44xf32>,
    %134 = vector.extract_strided_slice %7 {offsets = [32, 0], sizes = [8, 512], strides = [1, 1]} : vector<64x512xf32> to vector<8x512xf32>
    %135 = arith.truncf %132 : vector<8x44xf32> to vector<8x44xbf16>
    %cst_34 = arith.constant dense<0.000000e+00> : vector<8x512xf32>
    %136 = tpu.matmul %135, %9, %cst_34 {dimension_numbers = #tpu.dot_dimension_numbers<[1], [0], [0], [1], [0, 0, 1, 1], [], []>} : vector<8x44xbf16>, vector<44x512xbf16>, vector<8x512xf32> -> vector<8x512xf32>
    %137 = arith.addf %134, %136 : vector<8x512xf32>
    %138 = vector.extract_strided_slice %137 {offsets = [0, 0], sizes = [8, 44], strides = [1, 1]} : vector<8x512xf32> to vector<8x44xf32>
    %139 = arith.negf %138 : vector<8x44xf32>
    %140 = math.exp %139 : vector<8x44xf32>
    %cst_35 = arith.constant 1.000000e+00 : f32
    %141 = vector.broadcast %cst_35 : f32 to vector<8x44xf32>
    %142 = arith.addf %141, %140 : vector<8x44xf32>
    %143 = arith.divf %141, %142 : vector<8x44xf32>
    %144 = vector.extract_strided_slice %137 {offsets = [0, 128], sizes = [8, 44], strides = [1, 1]} : vector<8x512xf32> to vector<8x44xf32>
    %145 = arith.negf %144 : vector<8x44xf32>
    %146 = math.exp %145 : vector<8x44xf32>
    %cst_36 = arith.constant 1.000000e+00 : f32
    %147 = vector.broadcast %cst_36 : f32 to vector<8x44xf32>
    %148 = arith.addf %147, %146 : vector<8x44xf32>
    %149 = arith.divf %147, %148 : vector<8x44xf32>
    %150 = vector.extract_strided_slice %137 {offsets = [0, 256], sizes = [8, 44], strides = [1, 1]} : vector<8x512xf32> to vector<8x44xf32>
    %151 = math.tanh %150 : vector<8x44xf32>
    %152 = vector.extract_strided_slice %137 {offsets = [0, 384], sizes = [8, 44], strides = [1, 1]} : vector<8x512xf32> to vector<8x44xf32>
    %153 = arith.negf %152 : vector<8x44xf32>
    %154 = math.exp %153 : vector<8x44xf32>
    %cst_37 = arith.constant 1.000000e+00 : f32
    %155 = vector.broadcast %cst_37 : f32 to vector<8x44xf32>
    %156 = arith.addf %155, %154 : vector<8x44xf32>
    %157 = arith.divf %155, %156 : vector<8x44xf32>
    %158 = arith.mulf %149, %130 : vector<8x44xf32>
    %159 = arith.mulf %143, %151 : vector<8x44xf32>
    %160 = arith.addf %158, %159 : vector<8x44xf32>
    %161 = math.tanh %160 : vector<8x44xf32>
    %162 = arith.mulf %157, %161 : vector<8x44xf32>
    %c32 = arith.constant 32 : index
    %c0_38 = arith.constant 0 : index
    %163 = vector.load %arg51[%c32, %c0_38] : memref<64x44xf32, #tpu.memory_space<vmem>>, vector<8x44xf32>
    tpu.vector_store %arg51[%c32, %c0_38], %162 {strides = array<i32>} : memref<64x44xf32, #tpu.memory_space<vmem>>, vector<8x44xf32>,
    %164 = vector.extract_strided_slice %7 {offsets = [40, 0], sizes = [8, 512], strides = [1, 1]} : vector<64x512xf32> to vector<8x512xf32>
    %165 = arith.truncf %162 : vector<8x44xf32> to vector<8x44xbf16>
    %cst_39 = arith.constant dense<0.000000e+00> : vector<8x512xf32>
    %166 = tpu.matmul %165, %9, %cst_39 {dimension_numbers = #tpu.dot_dimension_numbers<[1], [0], [0], [1], [0, 0, 1, 1], [], []>} : vector<8x44xbf16>, vector<44x512xbf16>, vector<8x512xf32> -> vector<8x512xf32>
    %167 = arith.addf %164, %166 : vector<8x512xf32>
    %168 = vector.extract_strided_slice %167 {offsets = [0, 0], sizes = [8, 44], strides = [1, 1]} : vector<8x512xf32> to vector<8x44xf32>
    %169 = arith.negf %168 : vector<8x44xf32>
    %170 = math.exp %169 : vector<8x44xf32>
    %cst_40 = arith.constant 1.000000e+00 : f32
    %171 = vector.broadcast %cst_40 : f32 to vector<8x44xf32>
    %172 = arith.addf %171, %170 : vector<8x44xf32>
    %173 = arith.divf %171, %172 : vector<8x44xf32>
    %174 = vector.extract_strided_slice %167 {offsets = [0, 128], sizes = [8, 44], strides = [1, 1]} : vector<8x512xf32> to vector<8x44xf32>
    %175 = arith.negf %174 : vector<8x44xf32>
    %176 = math.exp %175 : vector<8x44xf32>
    %cst_41 = arith.constant 1.000000e+00 : f32
    %177 = vector.broadcast %cst_41 : f32 to vector<8x44xf32>
    %178 = arith.addf %177, %176 : vector<8x44xf32>
    %179 = arith.divf %177, %178 : vector<8x44xf32>
    %180 = vector.extract_strided_slice %167 {offsets = [0, 256], sizes = [8, 44], strides = [1, 1]} : vector<8x512xf32> to vector<8x44xf32>
    %181 = math.tanh %180 : vector<8x44xf32>
    %182 = vector.extract_strided_slice %167 {offsets = [0, 384], sizes = [8, 44], strides = [1, 1]} : vector<8x512xf32> to vector<8x44xf32>
    %183 = arith.negf %182 : vector<8x44xf32>
    %184 = math.exp %183 : vector<8x44xf32>
    %cst_42 = arith.constant 1.000000e+00 : f32
    %185 = vector.broadcast %cst_42 : f32 to vector<8x44xf32>
    %186 = arith.addf %185, %184 : vector<8x44xf32>
    %187 = arith.divf %185, %186 : vector<8x44xf32>
    %188 = arith.mulf %179, %160 : vector<8x44xf32>
    %189 = arith.mulf %173, %181 : vector<8x44xf32>
    %190 = arith.addf %188, %189 : vector<8x44xf32>
    %191 = math.tanh %190 : vector<8x44xf32>
    %192 = arith.mulf %187, %191 : vector<8x44xf32>
    %c40 = arith.constant 40 : index
    %c0_43 = arith.constant 0 : index
    %193 = vector.load %arg51[%c40, %c0_43] : memref<64x44xf32, #tpu.memory_space<vmem>>, vector<8x44xf32>
    tpu.vector_store %arg51[%c40, %c0_43], %192 {strides = array<i32>} : memref<64x44xf32, #tpu.memory_space<vmem>>, vector<8x44xf32>,
    %194 = vector.extract_strided_slice %7 {offsets = [48, 0], sizes = [8, 512], strides = [1, 1]} : vector<64x512xf32> to vector<8x512xf32>
    %195 = arith.truncf %192 : vector<8x44xf32> to vector<8x44xbf16>
    %cst_44 = arith.constant dense<0.000000e+00> : vector<8x512xf32>
    %196 = tpu.matmul %195, %9, %cst_44 {dimension_numbers = #tpu.dot_dimension_numbers<[1], [0], [0], [1], [0, 0, 1, 1], [], []>} : vector<8x44xbf16>, vector<44x512xbf16>, vector<8x512xf32> -> vector<8x512xf32>
    %197 = arith.addf %194, %196 : vector<8x512xf32>
    %198 = vector.extract_strided_slice %197 {offsets = [0, 0], sizes = [8, 44], strides = [1, 1]} : vector<8x512xf32> to vector<8x44xf32>
    %199 = arith.negf %198 : vector<8x44xf32>
    %200 = math.exp %199 : vector<8x44xf32>
    %cst_45 = arith.constant 1.000000e+00 : f32
    %201 = vector.broadcast %cst_45 : f32 to vector<8x44xf32>
    %202 = arith.addf %201, %200 : vector<8x44xf32>
    %203 = arith.divf %201, %202 : vector<8x44xf32>
    %204 = vector.extract_strided_slice %197 {offsets = [0, 128], sizes = [8, 44], strides = [1, 1]} : vector<8x512xf32> to vector<8x44xf32>
    %205 = arith.negf %204 : vector<8x44xf32>
    %206 = math.exp %205 : vector<8x44xf32>
    %cst_46 = arith.constant 1.000000e+00 : f32
    %207 = vector.broadcast %cst_46 : f32 to vector<8x44xf32>
    %208 = arith.addf %207, %206 : vector<8x44xf32>
    %209 = arith.divf %207, %208 : vector<8x44xf32>
    %210 = vector.extract_strided_slice %197 {offsets = [0, 256], sizes = [8, 44], strides = [1, 1]} : vector<8x512xf32> to vector<8x44xf32>
    %211 = math.tanh %210 : vector<8x44xf32>
    %212 = vector.extract_strided_slice %197 {offsets = [0, 384], sizes = [8, 44], strides = [1, 1]} : vector<8x512xf32> to vector<8x44xf32>
    %213 = arith.negf %212 : vector<8x44xf32>
    %214 = math.exp %213 : vector<8x44xf32>
    %cst_47 = arith.constant 1.000000e+00 : f32
    %215 = vector.broadcast %cst_47 : f32 to vector<8x44xf32>
    %216 = arith.addf %215, %214 : vector<8x44xf32>
    %217 = arith.divf %215, %216 : vector<8x44xf32>
    %218 = arith.mulf %209, %190 : vector<8x44xf32>
    %219 = arith.mulf %203, %211 : vector<8x44xf32>
    %220 = arith.addf %218, %219 : vector<8x44xf32>
    %221 = math.tanh %220 : vector<8x44xf32>
    %222 = arith.mulf %217, %221 : vector<8x44xf32>
    %c48 = arith.constant 48 : index
    %c0_48 = arith.constant 0 : index
    %223 = vector.load %arg51[%c48, %c0_48] : memref<64x44xf32, #tpu.memory_space<vmem>>, vector<8x44xf32>
    tpu.vector_store %arg51[%c48, %c0_48], %222 {strides = array<i32>} : memref<64x44xf32, #tpu.memory_space<vmem>>, vector<8x44xf32>,
    %224 = vector.extract_strided_slice %7 {offsets = [56, 0], sizes = [8, 512], strides = [1, 1]} : vector<64x512xf32> to vector<8x512xf32>
    %225 = arith.truncf %222 : vector<8x44xf32> to vector<8x44xbf16>
    %cst_49 = arith.constant dense<0.000000e+00> : vector<8x512xf32>
    %226 = tpu.matmul %225, %9, %cst_49 {dimension_numbers = #tpu.dot_dimension_numbers<[1], [0], [0], [1], [0, 0, 1, 1], [], []>} : vector<8x44xbf16>, vector<44x512xbf16>, vector<8x512xf32> -> vector<8x512xf32>
    %227 = arith.addf %224, %226 : vector<8x512xf32>
    %228 = vector.extract_strided_slice %227 {offsets = [0, 0], sizes = [8, 44], strides = [1, 1]} : vector<8x512xf32> to vector<8x44xf32>
    %229 = arith.negf %228 : vector<8x44xf32>
    %230 = math.exp %229 : vector<8x44xf32>
    %cst_50 = arith.constant 1.000000e+00 : f32
    %231 = vector.broadcast %cst_50 : f32 to vector<8x44xf32>
    %232 = arith.addf %231, %230 : vector<8x44xf32>
    %233 = arith.divf %231, %232 : vector<8x44xf32>
    %234 = vector.extract_strided_slice %227 {offsets = [0, 128], sizes = [8, 44], strides = [1, 1]} : vector<8x512xf32> to vector<8x44xf32>
    %235 = arith.negf %234 : vector<8x44xf32>
    %236 = math.exp %235 : vector<8x44xf32>
    %cst_51 = arith.constant 1.000000e+00 : f32
    %237 = vector.broadcast %cst_51 : f32 to vector<8x44xf32>
    %238 = arith.addf %237, %236 : vector<8x44xf32>
    %239 = arith.divf %237, %238 : vector<8x44xf32>
    %240 = vector.extract_strided_slice %227 {offsets = [0, 256], sizes = [8, 44], strides = [1, 1]} : vector<8x512xf32> to vector<8x44xf32>
    %241 = math.tanh %240 : vector<8x44xf32>
    %242 = vector.extract_strided_slice %227 {offsets = [0, 384], sizes = [8, 44], strides = [1, 1]} : vector<8x512xf32> to vector<8x44xf32>
    %243 = arith.negf %242 : vector<8x44xf32>
    %244 = math.exp %243 : vector<8x44xf32>
    %cst_52 = arith.constant 1.000000e+00 : f32
    %245 = vector.broadcast %cst_52 : f32 to vector<8x44xf32>
    %246 = arith.addf %245, %244 : vector<8x44xf32>
    %247 = arith.divf %245, %246 : vector<8x44xf32>
    %248 = arith.mulf %239, %220 : vector<8x44xf32>
    %249 = arith.mulf %233, %241 : vector<8x44xf32>
    %250 = arith.addf %248, %249 : vector<8x44xf32>
    %251 = math.tanh %250 : vector<8x44xf32>
    %252 = arith.mulf %247, %251 : vector<8x44xf32>
    %c56 = arith.constant 56 : index
    %c0_53 = arith.constant 0 : index
    %253 = vector.load %arg51[%c56, %c0_53] : memref<64x44xf32, #tpu.memory_space<vmem>>, vector<8x44xf32>
    tpu.vector_store %arg51[%c56, %c0_53], %252 {strides = array<i32>} : memref<64x44xf32, #tpu.memory_space<vmem>>, vector<8x44xf32>,
    %c0_54 = arith.constant 0 : index
    %c0_55 = arith.constant 0 : index
    %c0_56 = arith.constant 0 : index
    %254 = vector.load %arg49[%c0_54, %c0_55, %c0_56] : memref<3x8x44xf32, #tpu.memory_space<vmem>>, vector<1x8x44xf32>
    %255 = vector.shape_cast %254 : vector<1x8x44xf32> to vector<8x44xf32>
    %256 = vector.shape_cast %252 : vector<8x44xf32> to vector<1x8x44xf32>
    tpu.vector_store %arg49[%c0_54, %c0_55, %c0_56], %256 {strides = array<i32>} : memref<3x8x44xf32, #tpu.memory_space<vmem>>, vector<1x8x44xf32>,
    %c0_57 = arith.constant 0 : index
    %c0_58 = arith.constant 0 : index
    %c0_59 = arith.constant 0 : index
    %257 = vector.load %arg50[%c0_57, %c0_58, %c0_59] : memref<3x8x44xf32, #tpu.memory_space<vmem>>, vector<1x8x44xf32>
    %258 = vector.shape_cast %257 : vector<1x8x44xf32> to vector<8x44xf32>
    %259 = vector.shape_cast %250 : vector<8x44xf32> to vector<1x8x44xf32>
    tpu.vector_store %arg50[%c0_57, %c0_58, %c0_59], %259 {strides = array<i32>} : memref<3x8x44xf32, #tpu.memory_space<vmem>>, vector<1x8x44xf32>,
    %c0_60 = arith.constant 0 : index
    %c0_61 = arith.constant 0 : index
    %260 = vector.load %arg51[%c0_60, %c0_61] : memref<64x44xf32, #tpu.memory_space<vmem>>, vector<64x44xf32>
    %c0_62 = arith.constant 0 : index
    %c0_63 = arith.constant 0 : index
    %261 = vector.load %arg6[%c0_62, %c0_63] : memref<44x512xf32, #tpu.memory_space<vmem>>, vector<44x512xf32>
    %262 = arith.truncf %260 : vector<64x44xf32> to vector<64x44xbf16>
    %263 = arith.truncf %261 : vector<44x512xf32> to vector<44x512xbf16>
    %cst_64 = arith.constant dense<0.000000e+00> : vector<64x512xf32>
    %264 = tpu.matmul %262, %263, %cst_64 {dimension_numbers = #tpu.dot_dimension_numbers<[1], [0], [0], [1], [0, 0, 1, 1], [], []>} : vector<64x44xbf16>, vector<44x512xbf16>, vector<64x512xf32> -> vector<64x512xf32>
    %c0_65 = arith.constant 0 : index
    %c0_66 = arith.constant 0 : index
    %265 = vector.load %arg8[%c0_65, %c0_66] : memref<1x512xf32, #tpu.memory_space<vmem>>, vector<1x512xf32>
    %266 = vector.broadcast %265 : vector<1x512xf32> to vector<64x512xf32>
    %267 = arith.addf %264, %266 : vector<64x512xf32>
    %c0_67 = arith.constant 0 : index
    %c0_68 = arith.constant 0 : index
    %268 = vector.load %arg7[%c0_67, %c0_68] : memref<44x512xf32, #tpu.memory_space<vmem>>, vector<44x512xf32>
    %269 = arith.truncf %268 : vector<44x512xf32> to vector<44x512xbf16>
    %c1 = arith.constant 1 : index
    %c0_69 = arith.constant 0 : index
    %c0_70 = arith.constant 0 : index
    %270 = vector.load %arg1[%c1, %c0_69, %c0_70] : memref<3x8x44xf32, #tpu.memory_space<vmem>>, vector<1x8x44xf32>
    %271 = vector.shape_cast %270 : vector<1x8x44xf32> to vector<8x44xf32>
    %c1_71 = arith.constant 1 : index
    %c0_72 = arith.constant 0 : index
    %c0_73 = arith.constant 0 : index
    %272 = vector.load %arg2[%c1_71, %c0_72, %c0_73] : memref<3x8x44xf32, #tpu.memory_space<vmem>>, vector<1x8x44xf32>
    %273 = vector.shape_cast %272 : vector<1x8x44xf32> to vector<8x44xf32>
    %274 = vector.extract_strided_slice %267 {offsets = [0, 0], sizes = [8, 512], strides = [1, 1]} : vector<64x512xf32> to vector<8x512xf32>
    %275 = arith.truncf %271 : vector<8x44xf32> to vector<8x44xbf16>
    %cst_74 = arith.constant dense<0.000000e+00> : vector<8x512xf32>
    %276 = tpu.matmul %275, %269, %cst_74 {dimension_numbers = #tpu.dot_dimension_numbers<[1], [0], [0], [1], [0, 0, 1, 1], [], []>} : vector<8x44xbf16>, vector<44x512xbf16>, vector<8x512xf32> -> vector<8x512xf32>
    %277 = arith.addf %274, %276 : vector<8x512xf32>
    %278 = vector.extract_strided_slice %277 {offsets = [0, 0], sizes = [8, 44], strides = [1, 1]} : vector<8x512xf32> to vector<8x44xf32>
    %279 = arith.negf %278 : vector<8x44xf32>
    %280 = math.exp %279 : vector<8x44xf32>
    %cst_75 = arith.constant 1.000000e+00 : f32
    %281 = vector.broadcast %cst_75 : f32 to vector<8x44xf32>
    %282 = arith.addf %281, %280 : vector<8x44xf32>
    %283 = arith.divf %281, %282 : vector<8x44xf32>
    %284 = vector.extract_strided_slice %277 {offsets = [0, 128], sizes = [8, 44], strides = [1, 1]} : vector<8x512xf32> to vector<8x44xf32>
    %285 = arith.negf %284 : vector<8x44xf32>
    %286 = math.exp %285 : vector<8x44xf32>
    %cst_76 = arith.constant 1.000000e+00 : f32
    %287 = vector.broadcast %cst_76 : f32 to vector<8x44xf32>
    %288 = arith.addf %287, %286 : vector<8x44xf32>
    %289 = arith.divf %287, %288 : vector<8x44xf32>
    %290 = vector.extract_strided_slice %277 {offsets = [0, 256], sizes = [8, 44], strides = [1, 1]} : vector<8x512xf32> to vector<8x44xf32>
    %291 = math.tanh %290 : vector<8x44xf32>
    %292 = vector.extract_strided_slice %277 {offsets = [0, 384], sizes = [8, 44], strides = [1, 1]} : vector<8x512xf32> to vector<8x44xf32>
    %293 = arith.negf %292 : vector<8x44xf32>
    %294 = math.exp %293 : vector<8x44xf32>
    %cst_77 = arith.constant 1.000000e+00 : f32
    %295 = vector.broadcast %cst_77 : f32 to vector<8x44xf32>
    %296 = arith.addf %295, %294 : vector<8x44xf32>
    %297 = arith.divf %295, %296 : vector<8x44xf32>
    %298 = arith.mulf %289, %273 : vector<8x44xf32>
    %299 = arith.mulf %283, %291 : vector<8x44xf32>
    %300 = arith.addf %298, %299 : vector<8x44xf32>
    %301 = math.tanh %300 : vector<8x44xf32>
    %302 = arith.mulf %297, %301 : vector<8x44xf32>
    %c0_78 = arith.constant 0 : index
    %c0_79 = arith.constant 0 : index
    %303 = vector.load %arg51[%c0_78, %c0_79] : memref<64x44xf32, #tpu.memory_space<vmem>>, vector<8x44xf32>
    tpu.vector_store %arg51[%c0_78, %c0_79], %302 {strides = array<i32>} : memref<64x44xf32, #tpu.memory_space<vmem>>, vector<8x44xf32>,
    %304 = vector.extract_strided_slice %267 {offsets = [8, 0], sizes = [8, 512], strides = [1, 1]} : vector<64x512xf32> to vector<8x512xf32>
    %305 = arith.truncf %302 : vector<8x44xf32> to vector<8x44xbf16>
    %cst_80 = arith.constant dense<0.000000e+00> : vector<8x512xf32>
    %306 = tpu.matmul %305, %269, %cst_80 {dimension_numbers = #tpu.dot_dimension_numbers<[1], [0], [0], [1], [0, 0, 1, 1], [], []>} : vector<8x44xbf16>, vector<44x512xbf16>, vector<8x512xf32> -> vector<8x512xf32>
    %307 = arith.addf %304, %306 : vector<8x512xf32>
    %308 = vector.extract_strided_slice %307 {offsets = [0, 0], sizes = [8, 44], strides = [1, 1]} : vector<8x512xf32> to vector<8x44xf32>
    %309 = arith.negf %308 : vector<8x44xf32>
    %310 = math.exp %309 : vector<8x44xf32>
    %cst_81 = arith.constant 1.000000e+00 : f32
    %311 = vector.broadcast %cst_81 : f32 to vector<8x44xf32>
    %312 = arith.addf %311, %310 : vector<8x44xf32>
    %313 = arith.divf %311, %312 : vector<8x44xf32>
    %314 = vector.extract_strided_slice %307 {offsets = [0, 128], sizes = [8, 44], strides = [1, 1]} : vector<8x512xf32> to vector<8x44xf32>
    %315 = arith.negf %314 : vector<8x44xf32>
    %316 = math.exp %315 : vector<8x44xf32>
    %cst_82 = arith.constant 1.000000e+00 : f32
    %317 = vector.broadcast %cst_82 : f32 to vector<8x44xf32>
    %318 = arith.addf %317, %316 : vector<8x44xf32>
    %319 = arith.divf %317, %318 : vector<8x44xf32>
    %320 = vector.extract_strided_slice %307 {offsets = [0, 256], sizes = [8, 44], strides = [1, 1]} : vector<8x512xf32> to vector<8x44xf32>
    %321 = math.tanh %320 : vector<8x44xf32>
    %322 = vector.extract_strided_slice %307 {offsets = [0, 384], sizes = [8, 44], strides = [1, 1]} : vector<8x512xf32> to vector<8x44xf32>
    %323 = arith.negf %322 : vector<8x44xf32>
    %324 = math.exp %323 : vector<8x44xf32>
    %cst_83 = arith.constant 1.000000e+00 : f32
    %325 = vector.broadcast %cst_83 : f32 to vector<8x44xf32>
    %326 = arith.addf %325, %324 : vector<8x44xf32>
    %327 = arith.divf %325, %326 : vector<8x44xf32>
    %328 = arith.mulf %319, %300 : vector<8x44xf32>
    %329 = arith.mulf %313, %321 : vector<8x44xf32>
    %330 = arith.addf %328, %329 : vector<8x44xf32>
    %331 = math.tanh %330 : vector<8x44xf32>
    %332 = arith.mulf %327, %331 : vector<8x44xf32>
    %c8_84 = arith.constant 8 : index
    %c0_85 = arith.constant 0 : index
    %333 = vector.load %arg51[%c8_84, %c0_85] : memref<64x44xf32, #tpu.memory_space<vmem>>, vector<8x44xf32>
    tpu.vector_store %arg51[%c8_84, %c0_85], %332 {strides = array<i32>} : memref<64x44xf32, #tpu.memory_space<vmem>>, vector<8x44xf32>,
    %334 = vector.extract_strided_slice %267 {offsets = [16, 0], sizes = [8, 512], strides = [1, 1]} : vector<64x512xf32> to vector<8x512xf32>
    %335 = arith.truncf %332 : vector<8x44xf32> to vector<8x44xbf16>
    %cst_86 = arith.constant dense<0.000000e+00> : vector<8x512xf32>
    %336 = tpu.matmul %335, %269, %cst_86 {dimension_numbers = #tpu.dot_dimension_numbers<[1], [0], [0], [1], [0, 0, 1, 1], [], []>} : vector<8x44xbf16>, vector<44x512xbf16>, vector<8x512xf32> -> vector<8x512xf32>
    %337 = arith.addf %334, %336 : vector<8x512xf32>
    %338 = vector.extract_strided_slice %337 {offsets = [0, 0], sizes = [8, 44], strides = [1, 1]} : vector<8x512xf32> to vector<8x44xf32>
    %339 = arith.negf %338 : vector<8x44xf32>
    %340 = math.exp %339 : vector<8x44xf32>
    %cst_87 = arith.constant 1.000000e+00 : f32
    %341 = vector.broadcast %cst_87 : f32 to vector<8x44xf32>
    %342 = arith.addf %341, %340 : vector<8x44xf32>
    %343 = arith.divf %341, %342 : vector<8x44xf32>
    %344 = vector.extract_strided_slice %337 {offsets = [0, 128], sizes = [8, 44], strides = [1, 1]} : vector<8x512xf32> to vector<8x44xf32>
    %345 = arith.negf %344 : vector<8x44xf32>
    %346 = math.exp %345 : vector<8x44xf32>
    %cst_88 = arith.constant 1.000000e+00 : f32
    %347 = vector.broadcast %cst_88 : f32 to vector<8x44xf32>
    %348 = arith.addf %347, %346 : vector<8x44xf32>
    %349 = arith.divf %347, %348 : vector<8x44xf32>
    %350 = vector.extract_strided_slice %337 {offsets = [0, 256], sizes = [8, 44], strides = [1, 1]} : vector<8x512xf32> to vector<8x44xf32>
    %351 = math.tanh %350 : vector<8x44xf32>
    %352 = vector.extract_strided_slice %337 {offsets = [0, 384], sizes = [8, 44], strides = [1, 1]} : vector<8x512xf32> to vector<8x44xf32>
    %353 = arith.negf %352 : vector<8x44xf32>
    %354 = math.exp %353 : vector<8x44xf32>
    %cst_89 = arith.constant 1.000000e+00 : f32
    %355 = vector.broadcast %cst_89 : f32 to vector<8x44xf32>
    %356 = arith.addf %355, %354 : vector<8x44xf32>
    %357 = arith.divf %355, %356 : vector<8x44xf32>
    %358 = arith.mulf %349, %330 : vector<8x44xf32>
    %359 = arith.mulf %343, %351 : vector<8x44xf32>
    %360 = arith.addf %358, %359 : vector<8x44xf32>
    %361 = math.tanh %360 : vector<8x44xf32>
    %362 = arith.mulf %357, %361 : vector<8x44xf32>
    %c16_90 = arith.constant 16 : index
    %c0_91 = arith.constant 0 : index
    %363 = vector.load %arg51[%c16_90, %c0_91] : memref<64x44xf32, #tpu.memory_space<vmem>>, vector<8x44xf32>
    tpu.vector_store %arg51[%c16_90, %c0_91], %362 {strides = array<i32>} : memref<64x44xf32, #tpu.memory_space<vmem>>, vector<8x44xf32>,
    %364 = vector.extract_strided_slice %267 {offsets = [24, 0], sizes = [8, 512], strides = [1, 1]} : vector<64x512xf32> to vector<8x512xf32>
    %365 = arith.truncf %362 : vector<8x44xf32> to vector<8x44xbf16>
    %cst_92 = arith.constant dense<0.000000e+00> : vector<8x512xf32>
    %366 = tpu.matmul %365, %269, %cst_92 {dimension_numbers = #tpu.dot_dimension_numbers<[1], [0], [0], [1], [0, 0, 1, 1], [], []>} : vector<8x44xbf16>, vector<44x512xbf16>, vector<8x512xf32> -> vector<8x512xf32>
    %367 = arith.addf %364, %366 : vector<8x512xf32>
    %368 = vector.extract_strided_slice %367 {offsets = [0, 0], sizes = [8, 44], strides = [1, 1]} : vector<8x512xf32> to vector<8x44xf32>
    %369 = arith.negf %368 : vector<8x44xf32>
    %370 = math.exp %369 : vector<8x44xf32>
    %cst_93 = arith.constant 1.000000e+00 : f32
    %371 = vector.broadcast %cst_93 : f32 to vector<8x44xf32>
    %372 = arith.addf %371, %370 : vector<8x44xf32>
    %373 = arith.divf %371, %372 : vector<8x44xf32>
    %374 = vector.extract_strided_slice %367 {offsets = [0, 128], sizes = [8, 44], strides = [1, 1]} : vector<8x512xf32> to vector<8x44xf32>
    %375 = arith.negf %374 : vector<8x44xf32>
    %376 = math.exp %375 : vector<8x44xf32>
    %cst_94 = arith.constant 1.000000e+00 : f32
    %377 = vector.broadcast %cst_94 : f32 to vector<8x44xf32>
    %378 = arith.addf %377, %376 : vector<8x44xf32>
    %379 = arith.divf %377, %378 : vector<8x44xf32>
    %380 = vector.extract_strided_slice %367 {offsets = [0, 256], sizes = [8, 44], strides = [1, 1]} : vector<8x512xf32> to vector<8x44xf32>
    %381 = math.tanh %380 : vector<8x44xf32>
    %382 = vector.extract_strided_slice %367 {offsets = [0, 384], sizes = [8, 44], strides = [1, 1]} : vector<8x512xf32> to vector<8x44xf32>
    %383 = arith.negf %382 : vector<8x44xf32>
    %384 = math.exp %383 : vector<8x44xf32>
    %cst_95 = arith.constant 1.000000e+00 : f32
    %385 = vector.broadcast %cst_95 : f32 to vector<8x44xf32>
    %386 = arith.addf %385, %384 : vector<8x44xf32>
    %387 = arith.divf %385, %386 : vector<8x44xf32>
    %388 = arith.mulf %379, %360 : vector<8x44xf32>
    %389 = arith.mulf %373, %381 : vector<8x44xf32>
    %390 = arith.addf %388, %389 : vector<8x44xf32>
    %391 = math.tanh %390 : vector<8x44xf32>
    %392 = arith.mulf %387, %391 : vector<8x44xf32>
    %c24_96 = arith.constant 24 : index
    %c0_97 = arith.constant 0 : index
    %393 = vector.load %arg51[%c24_96, %c0_97] : memref<64x44xf32, #tpu.memory_space<vmem>>, vector<8x44xf32>
    tpu.vector_store %arg51[%c24_96, %c0_97], %392 {strides = array<i32>} : memref<64x44xf32, #tpu.memory_space<vmem>>, vector<8x44xf32>,
    %394 = vector.extract_strided_slice %267 {offsets = [32, 0], sizes = [8, 512], strides = [1, 1]} : vector<64x512xf32> to vector<8x512xf32>
    %395 = arith.truncf %392 : vector<8x44xf32> to vector<8x44xbf16>
    %cst_98 = arith.constant dense<0.000000e+00> : vector<8x512xf32>
    %396 = tpu.matmul %395, %269, %cst_98 {dimension_numbers = #tpu.dot_dimension_numbers<[1], [0], [0], [1], [0, 0, 1, 1], [], []>} : vector<8x44xbf16>, vector<44x512xbf16>, vector<8x512xf32> -> vector<8x512xf32>
    %397 = arith.addf %394, %396 : vector<8x512xf32>
    %398 = vector.extract_strided_slice %397 {offsets = [0, 0], sizes = [8, 44], strides = [1, 1]} : vector<8x512xf32> to vector<8x44xf32>
    %399 = arith.negf %398 : vector<8x44xf32>
    %400 = math.exp %399 : vector<8x44xf32>
    %cst_99 = arith.constant 1.000000e+00 : f32
    %401 = vector.broadcast %cst_99 : f32 to vector<8x44xf32>
    %402 = arith.addf %401, %400 : vector<8x44xf32>
    %403 = arith.divf %401, %402 : vector<8x44xf32>
    %404 = vector.extract_strided_slice %397 {offsets = [0, 128], sizes = [8, 44], strides = [1, 1]} : vector<8x512xf32> to vector<8x44xf32>
    %405 = arith.negf %404 : vector<8x44xf32>
    %406 = math.exp %405 : vector<8x44xf32>
    %cst_100 = arith.constant 1.000000e+00 : f32
    %407 = vector.broadcast %cst_100 : f32 to vector<8x44xf32>
    %408 = arith.addf %407, %406 : vector<8x44xf32>
    %409 = arith.divf %407, %408 : vector<8x44xf32>
    %410 = vector.extract_strided_slice %397 {offsets = [0, 256], sizes = [8, 44], strides = [1, 1]} : vector<8x512xf32> to vector<8x44xf32>
    %411 = math.tanh %410 : vector<8x44xf32>
    %412 = vector.extract_strided_slice %397 {offsets = [0, 384], sizes = [8, 44], strides = [1, 1]} : vector<8x512xf32> to vector<8x44xf32>
    %413 = arith.negf %412 : vector<8x44xf32>
    %414 = math.exp %413 : vector<8x44xf32>
    %cst_101 = arith.constant 1.000000e+00 : f32
    %415 = vector.broadcast %cst_101 : f32 to vector<8x44xf32>
    %416 = arith.addf %415, %414 : vector<8x44xf32>
    %417 = arith.divf %415, %416 : vector<8x44xf32>
    %418 = arith.mulf %409, %390 : vector<8x44xf32>
    %419 = arith.mulf %403, %411 : vector<8x44xf32>
    %420 = arith.addf %418, %419 : vector<8x44xf32>
    %421 = math.tanh %420 : vector<8x44xf32>
    %422 = arith.mulf %417, %421 : vector<8x44xf32>
    %c32_102 = arith.constant 32 : index
    %c0_103 = arith.constant 0 : index
    %423 = vector.load %arg51[%c32_102, %c0_103] : memref<64x44xf32, #tpu.memory_space<vmem>>, vector<8x44xf32>
    tpu.vector_store %arg51[%c32_102, %c0_103], %422 {strides = array<i32>} : memref<64x44xf32, #tpu.memory_space<vmem>>, vector<8x44xf32>,
    %424 = vector.extract_strided_slice %267 {offsets = [40, 0], sizes = [8, 512], strides = [1, 1]} : vector<64x512xf32> to vector<8x512xf32>
    %425 = arith.truncf %422 : vector<8x44xf32> to vector<8x44xbf16>
    %cst_104 = arith.constant dense<0.000000e+00> : vector<8x512xf32>
    %426 = tpu.matmul %425, %269, %cst_104 {dimension_numbers = #tpu.dot_dimension_numbers<[1], [0], [0], [1], [0, 0, 1, 1], [], []>} : vector<8x44xbf16>, vector<44x512xbf16>, vector<8x512xf32> -> vector<8x512xf32>
    %427 = arith.addf %424, %426 : vector<8x512xf32>
    %428 = vector.extract_strided_slice %427 {offsets = [0, 0], sizes = [8, 44], strides = [1, 1]} : vector<8x512xf32> to vector<8x44xf32>
    %429 = arith.negf %428 : vector<8x44xf32>
    %430 = math.exp %429 : vector<8x44xf32>
    %cst_105 = arith.constant 1.000000e+00 : f32
    %431 = vector.broadcast %cst_105 : f32 to vector<8x44xf32>
    %432 = arith.addf %431, %430 : vector<8x44xf32>
    %433 = arith.divf %431, %432 : vector<8x44xf32>
    %434 = vector.extract_strided_slice %427 {offsets = [0, 128], sizes = [8, 44], strides = [1, 1]} : vector<8x512xf32> to vector<8x44xf32>
    %435 = arith.negf %434 : vector<8x44xf32>
    %436 = math.exp %435 : vector<8x44xf32>
    %cst_106 = arith.constant 1.000000e+00 : f32
    %437 = vector.broadcast %cst_106 : f32 to vector<8x44xf32>
    %438 = arith.addf %437, %436 : vector<8x44xf32>
    %439 = arith.divf %437, %438 : vector<8x44xf32>
    %440 = vector.extract_strided_slice %427 {offsets = [0, 256], sizes = [8, 44], strides = [1, 1]} : vector<8x512xf32> to vector<8x44xf32>
    %441 = math.tanh %440 : vector<8x44xf32>
    %442 = vector.extract_strided_slice %427 {offsets = [0, 384], sizes = [8, 44], strides = [1, 1]} : vector<8x512xf32> to vector<8x44xf32>
    %443 = arith.negf %442 : vector<8x44xf32>
    %444 = math.exp %443 : vector<8x44xf32>
    %cst_107 = arith.constant 1.000000e+00 : f32
    %445 = vector.broadcast %cst_107 : f32 to vector<8x44xf32>
    %446 = arith.addf %445, %444 : vector<8x44xf32>
    %447 = arith.divf %445, %446 : vector<8x44xf32>
    %448 = arith.mulf %439, %420 : vector<8x44xf32>
    %449 = arith.mulf %433, %441 : vector<8x44xf32>
    %450 = arith.addf %448, %449 : vector<8x44xf32>
    %451 = math.tanh %450 : vector<8x44xf32>
    %452 = arith.mulf %447, %451 : vector<8x44xf32>
    %c40_108 = arith.constant 40 : index
    %c0_109 = arith.constant 0 : index
    %453 = vector.load %arg51[%c40_108, %c0_109] : memref<64x44xf32, #tpu.memory_space<vmem>>, vector<8x44xf32>
    tpu.vector_store %arg51[%c40_108, %c0_109], %452 {strides = array<i32>} : memref<64x44xf32, #tpu.memory_space<vmem>>, vector<8x44xf32>,
    %454 = vector.extract_strided_slice %267 {offsets = [48, 0], sizes = [8, 512], strides = [1, 1]} : vector<64x512xf32> to vector<8x512xf32>
    %455 = arith.truncf %452 : vector<8x44xf32> to vector<8x44xbf16>
    %cst_110 = arith.constant dense<0.000000e+00> : vector<8x512xf32>
    %456 = tpu.matmul %455, %269, %cst_110 {dimension_numbers = #tpu.dot_dimension_numbers<[1], [0], [0], [1], [0, 0, 1, 1], [], []>} : vector<8x44xbf16>, vector<44x512xbf16>, vector<8x512xf32> -> vector<8x512xf32>
    %457 = arith.addf %454, %456 : vector<8x512xf32>
    %458 = vector.extract_strided_slice %457 {offsets = [0, 0], sizes = [8, 44], strides = [1, 1]} : vector<8x512xf32> to vector<8x44xf32>
    %459 = arith.negf %458 : vector<8x44xf32>
    %460 = math.exp %459 : vector<8x44xf32>
    %cst_111 = arith.constant 1.000000e+00 : f32
    %461 = vector.broadcast %cst_111 : f32 to vector<8x44xf32>
    %462 = arith.addf %461, %460 : vector<8x44xf32>
    %463 = arith.divf %461, %462 : vector<8x44xf32>
    %464 = vector.extract_strided_slice %457 {offsets = [0, 128], sizes = [8, 44], strides = [1, 1]} : vector<8x512xf32> to vector<8x44xf32>
    %465 = arith.negf %464 : vector<8x44xf32>
    %466 = math.exp %465 : vector<8x44xf32>
    %cst_112 = arith.constant 1.000000e+00 : f32
    %467 = vector.broadcast %cst_112 : f32 to vector<8x44xf32>
    %468 = arith.addf %467, %466 : vector<8x44xf32>
    %469 = arith.divf %467, %468 : vector<8x44xf32>
    %470 = vector.extract_strided_slice %457 {offsets = [0, 256], sizes = [8, 44], strides = [1, 1]} : vector<8x512xf32> to vector<8x44xf32>
    %471 = math.tanh %470 : vector<8x44xf32>
    %472 = vector.extract_strided_slice %457 {offsets = [0, 384], sizes = [8, 44], strides = [1, 1]} : vector<8x512xf32> to vector<8x44xf32>
    %473 = arith.negf %472 : vector<8x44xf32>
    %474 = math.exp %473 : vector<8x44xf32>
    %cst_113 = arith.constant 1.000000e+00 : f32
    %475 = vector.broadcast %cst_113 : f32 to vector<8x44xf32>
    %476 = arith.addf %475, %474 : vector<8x44xf32>
    %477 = arith.divf %475, %476 : vector<8x44xf32>
    %478 = arith.mulf %469, %450 : vector<8x44xf32>
    %479 = arith.mulf %463, %471 : vector<8x44xf32>
    %480 = arith.addf %478, %479 : vector<8x44xf32>
    %481 = math.tanh %480 : vector<8x44xf32>
    %482 = arith.mulf %477, %481 : vector<8x44xf32>
    %c48_114 = arith.constant 48 : index
    %c0_115 = arith.constant 0 : index
    %483 = vector.load %arg51[%c48_114, %c0_115] : memref<64x44xf32, #tpu.memory_space<vmem>>, vector<8x44xf32>
    tpu.vector_store %arg51[%c48_114, %c0_115], %482 {strides = array<i32>} : memref<64x44xf32, #tpu.memory_space<vmem>>, vector<8x44xf32>,
    %484 = vector.extract_strided_slice %267 {offsets = [56, 0], sizes = [8, 512], strides = [1, 1]} : vector<64x512xf32> to vector<8x512xf32>
    %485 = arith.truncf %482 : vector<8x44xf32> to vector<8x44xbf16>
    %cst_116 = arith.constant dense<0.000000e+00> : vector<8x512xf32>
    %486 = tpu.matmul %485, %269, %cst_116 {dimension_numbers = #tpu.dot_dimension_numbers<[1], [0], [0], [1], [0, 0, 1, 1], [], []>} : vector<8x44xbf16>, vector<44x512xbf16>, vector<8x512xf32> -> vector<8x512xf32>
    %487 = arith.addf %484, %486 : vector<8x512xf32>
    %488 = vector.extract_strided_slice %487 {offsets = [0, 0], sizes = [8, 44], strides = [1, 1]} : vector<8x512xf32> to vector<8x44xf32>
    %489 = arith.negf %488 : vector<8x44xf32>
    %490 = math.exp %489 : vector<8x44xf32>
    %cst_117 = arith.constant 1.000000e+00 : f32
    %491 = vector.broadcast %cst_117 : f32 to vector<8x44xf32>
    %492 = arith.addf %491, %490 : vector<8x44xf32>
    %493 = arith.divf %491, %492 : vector<8x44xf32>
    %494 = vector.extract_strided_slice %487 {offsets = [0, 128], sizes = [8, 44], strides = [1, 1]} : vector<8x512xf32> to vector<8x44xf32>
    %495 = arith.negf %494 : vector<8x44xf32>
    %496 = math.exp %495 : vector<8x44xf32>
    %cst_118 = arith.constant 1.000000e+00 : f32
    %497 = vector.broadcast %cst_118 : f32 to vector<8x44xf32>
    %498 = arith.addf %497, %496 : vector<8x44xf32>
    %499 = arith.divf %497, %498 : vector<8x44xf32>
    %500 = vector.extract_strided_slice %487 {offsets = [0, 256], sizes = [8, 44], strides = [1, 1]} : vector<8x512xf32> to vector<8x44xf32>
    %501 = math.tanh %500 : vector<8x44xf32>
    %502 = vector.extract_strided_slice %487 {offsets = [0, 384], sizes = [8, 44], strides = [1, 1]} : vector<8x512xf32> to vector<8x44xf32>
    %503 = arith.negf %502 : vector<8x44xf32>
    %504 = math.exp %503 : vector<8x44xf32>
    %cst_119 = arith.constant 1.000000e+00 : f32
    %505 = vector.broadcast %cst_119 : f32 to vector<8x44xf32>
    %506 = arith.addf %505, %504 : vector<8x44xf32>
    %507 = arith.divf %505, %506 : vector<8x44xf32>
    %508 = arith.mulf %499, %480 : vector<8x44xf32>
    %509 = arith.mulf %493, %501 : vector<8x44xf32>
    %510 = arith.addf %508, %509 : vector<8x44xf32>
    %511 = math.tanh %510 : vector<8x44xf32>
    %512 = arith.mulf %507, %511 : vector<8x44xf32>
    %c56_120 = arith.constant 56 : index
    %c0_121 = arith.constant 0 : index
    %513 = vector.load %arg51[%c56_120, %c0_121] : memref<64x44xf32, #tpu.memory_space<vmem>>, vector<8x44xf32>
    tpu.vector_store %arg51[%c56_120, %c0_121], %512 {strides = array<i32>} : memref<64x44xf32, #tpu.memory_space<vmem>>, vector<8x44xf32>,
    %c1_122 = arith.constant 1 : index
    %c0_123 = arith.constant 0 : index
    %c0_124 = arith.constant 0 : index
    %514 = vector.load %arg49[%c1_122, %c0_123, %c0_124] : memref<3x8x44xf32, #tpu.memory_space<vmem>>, vector<1x8x44xf32>
    %515 = vector.shape_cast %514 : vector<1x8x44xf32> to vector<8x44xf32>
    %516 = vector.shape_cast %512 : vector<8x44xf32> to vector<1x8x44xf32>
    tpu.vector_store %arg49[%c1_122, %c0_123, %c0_124], %516 {strides = array<i32>} : memref<3x8x44xf32, #tpu.memory_space<vmem>>, vector<1x8x44xf32>,
    %c1_125 = arith.constant 1 : index
    %c0_126 = arith.constant 0 : index
    %c0_127 = arith.constant 0 : index
    %517 = vector.load %arg50[%c1_125, %c0_126, %c0_127] : memref<3x8x44xf32, #tpu.memory_space<vmem>>, vector<1x8x44xf32>
    %518 = vector.shape_cast %517 : vector<1x8x44xf32> to vector<8x44xf32>
    %519 = vector.shape_cast %510 : vector<8x44xf32> to vector<1x8x44xf32>
    tpu.vector_store %arg50[%c1_125, %c0_126, %c0_127], %519 {strides = array<i32>} : memref<3x8x44xf32, #tpu.memory_space<vmem>>, vector<1x8x44xf32>,
    %c0_128 = arith.constant 0 : index
    %c0_129 = arith.constant 0 : index
    %520 = vector.load %arg51[%c0_128, %c0_129] : memref<64x44xf32, #tpu.memory_space<vmem>>, vector<64x44xf32>
    %c0_130 = arith.constant 0 : index
    %c0_131 = arith.constant 0 : index
    %521 = vector.load %arg9[%c0_130, %c0_131] : memref<44x512xf32, #tpu.memory_space<vmem>>, vector<44x512xf32>
    %522 = arith.truncf %520 : vector<64x44xf32> to vector<64x44xbf16>
    %523 = arith.truncf %521 : vector<44x512xf32> to vector<44x512xbf16>
    %cst_132 = arith.constant dense<0.000000e+00> : vector<64x512xf32>
    %524 = tpu.matmul %522, %523, %cst_132 {dimension_numbers = #tpu.dot_dimension_numbers<[1], [0], [0], [1], [0, 0, 1, 1], [], []>} : vector<64x44xbf16>, vector<44x512xbf16>, vector<64x512xf32> -> vector<64x512xf32>
    %c0_133 = arith.constant 0 : index
    %c0_134 = arith.constant 0 : index
    %525 = vector.load %arg11[%c0_133, %c0_134] : memref<1x512xf32, #tpu.memory_space<vmem>>, vector<1x512xf32>
    %526 = vector.broadcast %525 : vector<1x512xf32> to vector<64x512xf32>
    %527 = arith.addf %524, %526 : vector<64x512xf32>
    %c0_135 = arith.constant 0 : index
    %c0_136 = arith.constant 0 : index
    %528 = vector.load %arg10[%c0_135, %c0_136] : memref<44x512xf32, #tpu.memory_space<vmem>>, vector<44x512xf32>
    %529 = arith.truncf %528 : vector<44x512xf32> to vector<44x512xbf16>
    %c2 = arith.constant 2 : index
    %c0_137 = arith.constant 0 : index
    %c0_138 = arith.constant 0 : index
    %530 = vector.load %arg1[%c2, %c0_137, %c0_138] : memref<3x8x44xf32, #tpu.memory_space<vmem>>, vector<1x8x44xf32>
    %531 = vector.shape_cast %530 : vector<1x8x44xf32> to vector<8x44xf32>
    %c2_139 = arith.constant 2 : index
    %c0_140 = arith.constant 0 : index
    %c0_141 = arith.constant 0 : index
    %532 = vector.load %arg2[%c2_139, %c0_140, %c0_141] : memref<3x8x44xf32, #tpu.memory_space<vmem>>, vector<1x8x44xf32>
    %533 = vector.shape_cast %532 : vector<1x8x44xf32> to vector<8x44xf32>
    %534 = vector.extract_strided_slice %527 {offsets = [0, 0], sizes = [8, 512], strides = [1, 1]} : vector<64x512xf32> to vector<8x512xf32>
    %535 = arith.truncf %531 : vector<8x44xf32> to vector<8x44xbf16>
    %cst_142 = arith.constant dense<0.000000e+00> : vector<8x512xf32>
    %536 = tpu.matmul %535, %529, %cst_142 {dimension_numbers = #tpu.dot_dimension_numbers<[1], [0], [0], [1], [0, 0, 1, 1], [], []>} : vector<8x44xbf16>, vector<44x512xbf16>, vector<8x512xf32> -> vector<8x512xf32>
    %537 = arith.addf %534, %536 : vector<8x512xf32>
    %538 = vector.extract_strided_slice %537 {offsets = [0, 0], sizes = [8, 44], strides = [1, 1]} : vector<8x512xf32> to vector<8x44xf32>
    %539 = arith.negf %538 : vector<8x44xf32>
    %540 = math.exp %539 : vector<8x44xf32>
    %cst_143 = arith.constant 1.000000e+00 : f32
    %541 = vector.broadcast %cst_143 : f32 to vector<8x44xf32>
    %542 = arith.addf %541, %540 : vector<8x44xf32>
    %543 = arith.divf %541, %542 : vector<8x44xf32>
    %544 = vector.extract_strided_slice %537 {offsets = [0, 128], sizes = [8, 44], strides = [1, 1]} : vector<8x512xf32> to vector<8x44xf32>
    %545 = arith.negf %544 : vector<8x44xf32>
    %546 = math.exp %545 : vector<8x44xf32>
    %cst_144 = arith.constant 1.000000e+00 : f32
    %547 = vector.broadcast %cst_144 : f32 to vector<8x44xf32>
    %548 = arith.addf %547, %546 : vector<8x44xf32>
    %549 = arith.divf %547, %548 : vector<8x44xf32>
    %550 = vector.extract_strided_slice %537 {offsets = [0, 256], sizes = [8, 44], strides = [1, 1]} : vector<8x512xf32> to vector<8x44xf32>
    %551 = math.tanh %550 : vector<8x44xf32>
    %552 = vector.extract_strided_slice %537 {offsets = [0, 384], sizes = [8, 44], strides = [1, 1]} : vector<8x512xf32> to vector<8x44xf32>
    %553 = arith.negf %552 : vector<8x44xf32>
    %554 = math.exp %553 : vector<8x44xf32>
    %cst_145 = arith.constant 1.000000e+00 : f32
    %555 = vector.broadcast %cst_145 : f32 to vector<8x44xf32>
    %556 = arith.addf %555, %554 : vector<8x44xf32>
    %557 = arith.divf %555, %556 : vector<8x44xf32>
    %558 = arith.mulf %549, %533 : vector<8x44xf32>
    %559 = arith.mulf %543, %551 : vector<8x44xf32>
    %560 = arith.addf %558, %559 : vector<8x44xf32>
    %561 = math.tanh %560 : vector<8x44xf32>
    %562 = arith.mulf %557, %561 : vector<8x44xf32>
    %563 = vector.extract_strided_slice %527 {offsets = [8, 0], sizes = [8, 512], strides = [1, 1]} : vector<64x512xf32> to vector<8x512xf32>
    %564 = arith.truncf %562 : vector<8x44xf32> to vector<8x44xbf16>
    %cst_146 = arith.constant dense<0.000000e+00> : vector<8x512xf32>
    %565 = tpu.matmul %564, %529, %cst_146 {dimension_numbers = #tpu.dot_dimension_numbers<[1], [0], [0], [1], [0, 0, 1, 1], [], []>} : vector<8x44xbf16>, vector<44x512xbf16>, vector<8x512xf32> -> vector<8x512xf32>
    %566 = arith.addf %563, %565 : vector<8x512xf32>
    %567 = vector.extract_strided_slice %566 {offsets = [0, 0], sizes = [8, 44], strides = [1, 1]} : vector<8x512xf32> to vector<8x44xf32>
    %568 = arith.negf %567 : vector<8x44xf32>
    %569 = math.exp %568 : vector<8x44xf32>
    %cst_147 = arith.constant 1.000000e+00 : f32
    %570 = vector.broadcast %cst_147 : f32 to vector<8x44xf32>
    %571 = arith.addf %570, %569 : vector<8x44xf32>
    %572 = arith.divf %570, %571 : vector<8x44xf32>
    %573 = vector.extract_strided_slice %566 {offsets = [0, 128], sizes = [8, 44], strides = [1, 1]} : vector<8x512xf32> to vector<8x44xf32>
    %574 = arith.negf %573 : vector<8x44xf32>
    %575 = math.exp %574 : vector<8x44xf32>
    %cst_148 = arith.constant 1.000000e+00 : f32
    %576 = vector.broadcast %cst_148 : f32 to vector<8x44xf32>
    %577 = arith.addf %576, %575 : vector<8x44xf32>
    %578 = arith.divf %576, %577 : vector<8x44xf32>
    %579 = vector.extract_strided_slice %566 {offsets = [0, 256], sizes = [8, 44], strides = [1, 1]} : vector<8x512xf32> to vector<8x44xf32>
    %580 = math.tanh %579 : vector<8x44xf32>
    %581 = vector.extract_strided_slice %566 {offsets = [0, 384], sizes = [8, 44], strides = [1, 1]} : vector<8x512xf32> to vector<8x44xf32>
    %582 = arith.negf %581 : vector<8x44xf32>
    %583 = math.exp %582 : vector<8x44xf32>
    %cst_149 = arith.constant 1.000000e+00 : f32
    %584 = vector.broadcast %cst_149 : f32 to vector<8x44xf32>
    %585 = arith.addf %584, %583 : vector<8x44xf32>
    %586 = arith.divf %584, %585 : vector<8x44xf32>
    %587 = arith.mulf %578, %560 : vector<8x44xf32>
    %588 = arith.mulf %572, %580 : vector<8x44xf32>
    %589 = arith.addf %587, %588 : vector<8x44xf32>
    %590 = math.tanh %589 : vector<8x44xf32>
    %591 = arith.mulf %586, %590 : vector<8x44xf32>
    %592 = vector.extract_strided_slice %527 {offsets = [16, 0], sizes = [8, 512], strides = [1, 1]} : vector<64x512xf32> to vector<8x512xf32>
    %593 = arith.truncf %591 : vector<8x44xf32> to vector<8x44xbf16>
    %cst_150 = arith.constant dense<0.000000e+00> : vector<8x512xf32>
    %594 = tpu.matmul %593, %529, %cst_150 {dimension_numbers = #tpu.dot_dimension_numbers<[1], [0], [0], [1], [0, 0, 1, 1], [], []>} : vector<8x44xbf16>, vector<44x512xbf16>, vector<8x512xf32> -> vector<8x512xf32>
    %595 = arith.addf %592, %594 : vector<8x512xf32>
    %596 = vector.extract_strided_slice %595 {offsets = [0, 0], sizes = [8, 44], strides = [1, 1]} : vector<8x512xf32> to vector<8x44xf32>
    %597 = arith.negf %596 : vector<8x44xf32>
    %598 = math.exp %597 : vector<8x44xf32>
    %cst_151 = arith.constant 1.000000e+00 : f32
    %599 = vector.broadcast %cst_151 : f32 to vector<8x44xf32>
    %600 = arith.addf %599, %598 : vector<8x44xf32>
    %601 = arith.divf %599, %600 : vector<8x44xf32>
    %602 = vector.extract_strided_slice %595 {offsets = [0, 128], sizes = [8, 44], strides = [1, 1]} : vector<8x512xf32> to vector<8x44xf32>
    %603 = arith.negf %602 : vector<8x44xf32>
    %604 = math.exp %603 : vector<8x44xf32>
    %cst_152 = arith.constant 1.000000e+00 : f32
    %605 = vector.broadcast %cst_152 : f32 to vector<8x44xf32>
    %606 = arith.addf %605, %604 : vector<8x44xf32>
    %607 = arith.divf %605, %606 : vector<8x44xf32>
    %608 = vector.extract_strided_slice %595 {offsets = [0, 256], sizes = [8, 44], strides = [1, 1]} : vector<8x512xf32> to vector<8x44xf32>
    %609 = math.tanh %608 : vector<8x44xf32>
    %610 = vector.extract_strided_slice %595 {offsets = [0, 384], sizes = [8, 44], strides = [1, 1]} : vector<8x512xf32> to vector<8x44xf32>
    %611 = arith.negf %610 : vector<8x44xf32>
    %612 = math.exp %611 : vector<8x44xf32>
    %cst_153 = arith.constant 1.000000e+00 : f32
    %613 = vector.broadcast %cst_153 : f32 to vector<8x44xf32>
    %614 = arith.addf %613, %612 : vector<8x44xf32>
    %615 = arith.divf %613, %614 : vector<8x44xf32>
    %616 = arith.mulf %607, %589 : vector<8x44xf32>
    %617 = arith.mulf %601, %609 : vector<8x44xf32>
    %618 = arith.addf %616, %617 : vector<8x44xf32>
    %619 = math.tanh %618 : vector<8x44xf32>
    %620 = arith.mulf %615, %619 : vector<8x44xf32>
    %621 = vector.extract_strided_slice %527 {offsets = [24, 0], sizes = [8, 512], strides = [1, 1]} : vector<64x512xf32> to vector<8x512xf32>
    %622 = arith.truncf %620 : vector<8x44xf32> to vector<8x44xbf16>
    %cst_154 = arith.constant dense<0.000000e+00> : vector<8x512xf32>
    %623 = tpu.matmul %622, %529, %cst_154 {dimension_numbers = #tpu.dot_dimension_numbers<[1], [0], [0], [1], [0, 0, 1, 1], [], []>} : vector<8x44xbf16>, vector<44x512xbf16>, vector<8x512xf32> -> vector<8x512xf32>
    %624 = arith.addf %621, %623 : vector<8x512xf32>
    %625 = vector.extract_strided_slice %624 {offsets = [0, 0], sizes = [8, 44], strides = [1, 1]} : vector<8x512xf32> to vector<8x44xf32>
    %626 = arith.negf %625 : vector<8x44xf32>
    %627 = math.exp %626 : vector<8x44xf32>
    %cst_155 = arith.constant 1.000000e+00 : f32
    %628 = vector.broadcast %cst_155 : f32 to vector<8x44xf32>
    %629 = arith.addf %628, %627 : vector<8x44xf32>
    %630 = arith.divf %628, %629 : vector<8x44xf32>
    %631 = vector.extract_strided_slice %624 {offsets = [0, 128], sizes = [8, 44], strides = [1, 1]} : vector<8x512xf32> to vector<8x44xf32>
    %632 = arith.negf %631 : vector<8x44xf32>
    %633 = math.exp %632 : vector<8x44xf32>
    %cst_156 = arith.constant 1.000000e+00 : f32
    %634 = vector.broadcast %cst_156 : f32 to vector<8x44xf32>
    %635 = arith.addf %634, %633 : vector<8x44xf32>
    %636 = arith.divf %634, %635 : vector<8x44xf32>
    %637 = vector.extract_strided_slice %624 {offsets = [0, 256], sizes = [8, 44], strides = [1, 1]} : vector<8x512xf32> to vector<8x44xf32>
    %638 = math.tanh %637 : vector<8x44xf32>
    %639 = vector.extract_strided_slice %624 {offsets = [0, 384], sizes = [8, 44], strides = [1, 1]} : vector<8x512xf32> to vector<8x44xf32>
    %640 = arith.negf %639 : vector<8x44xf32>
    %641 = math.exp %640 : vector<8x44xf32>
    %cst_157 = arith.constant 1.000000e+00 : f32
    %642 = vector.broadcast %cst_157 : f32 to vector<8x44xf32>
    %643 = arith.addf %642, %641 : vector<8x44xf32>
    %644 = arith.divf %642, %643 : vector<8x44xf32>
    %645 = arith.mulf %636, %618 : vector<8x44xf32>
    %646 = arith.mulf %630, %638 : vector<8x44xf32>
    %647 = arith.addf %645, %646 : vector<8x44xf32>
    %648 = math.tanh %647 : vector<8x44xf32>
    %649 = arith.mulf %644, %648 : vector<8x44xf32>
    %650 = vector.extract_strided_slice %527 {offsets = [32, 0], sizes = [8, 512], strides = [1, 1]} : vector<64x512xf32> to vector<8x512xf32>
    %651 = arith.truncf %649 : vector<8x44xf32> to vector<8x44xbf16>
    %cst_158 = arith.constant dense<0.000000e+00> : vector<8x512xf32>
    %652 = tpu.matmul %651, %529, %cst_158 {dimension_numbers = #tpu.dot_dimension_numbers<[1], [0], [0], [1], [0, 0, 1, 1], [], []>} : vector<8x44xbf16>, vector<44x512xbf16>, vector<8x512xf32> -> vector<8x512xf32>
    %653 = arith.addf %650, %652 : vector<8x512xf32>
    %654 = vector.extract_strided_slice %653 {offsets = [0, 0], sizes = [8, 44], strides = [1, 1]} : vector<8x512xf32> to vector<8x44xf32>
    %655 = arith.negf %654 : vector<8x44xf32>
    %656 = math.exp %655 : vector<8x44xf32>
    %cst_159 = arith.constant 1.000000e+00 : f32
    %657 = vector.broadcast %cst_159 : f32 to vector<8x44xf32>
    %658 = arith.addf %657, %656 : vector<8x44xf32>
    %659 = arith.divf %657, %658 : vector<8x44xf32>
    %660 = vector.extract_strided_slice %653 {offsets = [0, 128], sizes = [8, 44], strides = [1, 1]} : vector<8x512xf32> to vector<8x44xf32>
    %661 = arith.negf %660 : vector<8x44xf32>
    %662 = math.exp %661 : vector<8x44xf32>
    %cst_160 = arith.constant 1.000000e+00 : f32
    %663 = vector.broadcast %cst_160 : f32 to vector<8x44xf32>
    %664 = arith.addf %663, %662 : vector<8x44xf32>
    %665 = arith.divf %663, %664 : vector<8x44xf32>
    %666 = vector.extract_strided_slice %653 {offsets = [0, 256], sizes = [8, 44], strides = [1, 1]} : vector<8x512xf32> to vector<8x44xf32>
    %667 = math.tanh %666 : vector<8x44xf32>
    %668 = vector.extract_strided_slice %653 {offsets = [0, 384], sizes = [8, 44], strides = [1, 1]} : vector<8x512xf32> to vector<8x44xf32>
    %669 = arith.negf %668 : vector<8x44xf32>
    %670 = math.exp %669 : vector<8x44xf32>
    %cst_161 = arith.constant 1.000000e+00 : f32
    %671 = vector.broadcast %cst_161 : f32 to vector<8x44xf32>
    %672 = arith.addf %671, %670 : vector<8x44xf32>
    %673 = arith.divf %671, %672 : vector<8x44xf32>
    %674 = arith.mulf %665, %647 : vector<8x44xf32>
    %675 = arith.mulf %659, %667 : vector<8x44xf32>
    %676 = arith.addf %674, %675 : vector<8x44xf32>
    %677 = math.tanh %676 : vector<8x44xf32>
    %678 = arith.mulf %673, %677 : vector<8x44xf32>
    %679 = vector.extract_strided_slice %527 {offsets = [40, 0], sizes = [8, 512], strides = [1, 1]} : vector<64x512xf32> to vector<8x512xf32>
    %680 = arith.truncf %678 : vector<8x44xf32> to vector<8x44xbf16>
    %cst_162 = arith.constant dense<0.000000e+00> : vector<8x512xf32>
    %681 = tpu.matmul %680, %529, %cst_162 {dimension_numbers = #tpu.dot_dimension_numbers<[1], [0], [0], [1], [0, 0, 1, 1], [], []>} : vector<8x44xbf16>, vector<44x512xbf16>, vector<8x512xf32> -> vector<8x512xf32>
    %682 = arith.addf %679, %681 : vector<8x512xf32>
    %683 = vector.extract_strided_slice %682 {offsets = [0, 0], sizes = [8, 44], strides = [1, 1]} : vector<8x512xf32> to vector<8x44xf32>
    %684 = arith.negf %683 : vector<8x44xf32>
    %685 = math.exp %684 : vector<8x44xf32>
    %cst_163 = arith.constant 1.000000e+00 : f32
    %686 = vector.broadcast %cst_163 : f32 to vector<8x44xf32>
    %687 = arith.addf %686, %685 : vector<8x44xf32>
    %688 = arith.divf %686, %687 : vector<8x44xf32>
    %689 = vector.extract_strided_slice %682 {offsets = [0, 128], sizes = [8, 44], strides = [1, 1]} : vector<8x512xf32> to vector<8x44xf32>
    %690 = arith.negf %689 : vector<8x44xf32>
    %691 = math.exp %690 : vector<8x44xf32>
    %cst_164 = arith.constant 1.000000e+00 : f32
    %692 = vector.broadcast %cst_164 : f32 to vector<8x44xf32>
    %693 = arith.addf %692, %691 : vector<8x44xf32>
    %694 = arith.divf %692, %693 : vector<8x44xf32>
    %695 = vector.extract_strided_slice %682 {offsets = [0, 256], sizes = [8, 44], strides = [1, 1]} : vector<8x512xf32> to vector<8x44xf32>
    %696 = math.tanh %695 : vector<8x44xf32>
    %697 = vector.extract_strided_slice %682 {offsets = [0, 384], sizes = [8, 44], strides = [1, 1]} : vector<8x512xf32> to vector<8x44xf32>
    %698 = arith.negf %697 : vector<8x44xf32>
    %699 = math.exp %698 : vector<8x44xf32>
    %cst_165 = arith.constant 1.000000e+00 : f32
    %700 = vector.broadcast %cst_165 : f32 to vector<8x44xf32>
    %701 = arith.addf %700, %699 : vector<8x44xf32>
    %702 = arith.divf %700, %701 : vector<8x44xf32>
    %703 = arith.mulf %694, %676 : vector<8x44xf32>
    %704 = arith.mulf %688, %696 : vector<8x44xf32>
    %705 = arith.addf %703, %704 : vector<8x44xf32>
    %706 = math.tanh %705 : vector<8x44xf32>
    %707 = arith.mulf %702, %706 : vector<8x44xf32>
    %708 = vector.extract_strided_slice %527 {offsets = [48, 0], sizes = [8, 512], strides = [1, 1]} : vector<64x512xf32> to vector<8x512xf32>
    %709 = arith.truncf %707 : vector<8x44xf32> to vector<8x44xbf16>
    %cst_166 = arith.constant dense<0.000000e+00> : vector<8x512xf32>
    %710 = tpu.matmul %709, %529, %cst_166 {dimension_numbers = #tpu.dot_dimension_numbers<[1], [0], [0], [1], [0, 0, 1, 1], [], []>} : vector<8x44xbf16>, vector<44x512xbf16>, vector<8x512xf32> -> vector<8x512xf32>
    %711 = arith.addf %708, %710 : vector<8x512xf32>
    %712 = vector.extract_strided_slice %711 {offsets = [0, 0], sizes = [8, 44], strides = [1, 1]} : vector<8x512xf32> to vector<8x44xf32>
    %713 = arith.negf %712 : vector<8x44xf32>
    %714 = math.exp %713 : vector<8x44xf32>
    %cst_167 = arith.constant 1.000000e+00 : f32
    %715 = vector.broadcast %cst_167 : f32 to vector<8x44xf32>
    %716 = arith.addf %715, %714 : vector<8x44xf32>
    %717 = arith.divf %715, %716 : vector<8x44xf32>
    %718 = vector.extract_strided_slice %711 {offsets = [0, 128], sizes = [8, 44], strides = [1, 1]} : vector<8x512xf32> to vector<8x44xf32>
    %719 = arith.negf %718 : vector<8x44xf32>
    %720 = math.exp %719 : vector<8x44xf32>
    %cst_168 = arith.constant 1.000000e+00 : f32
    %721 = vector.broadcast %cst_168 : f32 to vector<8x44xf32>
    %722 = arith.addf %721, %720 : vector<8x44xf32>
    %723 = arith.divf %721, %722 : vector<8x44xf32>
    %724 = vector.extract_strided_slice %711 {offsets = [0, 256], sizes = [8, 44], strides = [1, 1]} : vector<8x512xf32> to vector<8x44xf32>
    %725 = math.tanh %724 : vector<8x44xf32>
    %726 = vector.extract_strided_slice %711 {offsets = [0, 384], sizes = [8, 44], strides = [1, 1]} : vector<8x512xf32> to vector<8x44xf32>
    %727 = arith.negf %726 : vector<8x44xf32>
    %728 = math.exp %727 : vector<8x44xf32>
    %cst_169 = arith.constant 1.000000e+00 : f32
    %729 = vector.broadcast %cst_169 : f32 to vector<8x44xf32>
    %730 = arith.addf %729, %728 : vector<8x44xf32>
    %731 = arith.divf %729, %730 : vector<8x44xf32>
    %732 = arith.mulf %723, %705 : vector<8x44xf32>
    %733 = arith.mulf %717, %725 : vector<8x44xf32>
    %734 = arith.addf %732, %733 : vector<8x44xf32>
    %735 = math.tanh %734 : vector<8x44xf32>
    %736 = arith.mulf %731, %735 : vector<8x44xf32>
    %737 = vector.extract_strided_slice %527 {offsets = [56, 0], sizes = [8, 512], strides = [1, 1]} : vector<64x512xf32> to vector<8x512xf32>
    %738 = arith.truncf %736 : vector<8x44xf32> to vector<8x44xbf16>
    %cst_170 = arith.constant dense<0.000000e+00> : vector<8x512xf32>
    %739 = tpu.matmul %738, %529, %cst_170 {dimension_numbers = #tpu.dot_dimension_numbers<[1], [0], [0], [1], [0, 0, 1, 1], [], []>} : vector<8x44xbf16>, vector<44x512xbf16>, vector<8x512xf32> -> vector<8x512xf32>
    %740 = arith.addf %737, %739 : vector<8x512xf32>
    %741 = vector.extract_strided_slice %740 {offsets = [0, 0], sizes = [8, 44], strides = [1, 1]} : vector<8x512xf32> to vector<8x44xf32>
    %742 = arith.negf %741 : vector<8x44xf32>
    %743 = math.exp %742 : vector<8x44xf32>
    %cst_171 = arith.constant 1.000000e+00 : f32
    %744 = vector.broadcast %cst_171 : f32 to vector<8x44xf32>
    %745 = arith.addf %744, %743 : vector<8x44xf32>
    %746 = arith.divf %744, %745 : vector<8x44xf32>
    %747 = vector.extract_strided_slice %740 {offsets = [0, 128], sizes = [8, 44], strides = [1, 1]} : vector<8x512xf32> to vector<8x44xf32>
    %748 = arith.negf %747 : vector<8x44xf32>
    %749 = math.exp %748 : vector<8x44xf32>
    %cst_172 = arith.constant 1.000000e+00 : f32
    %750 = vector.broadcast %cst_172 : f32 to vector<8x44xf32>
    %751 = arith.addf %750, %749 : vector<8x44xf32>
    %752 = arith.divf %750, %751 : vector<8x44xf32>
    %753 = vector.extract_strided_slice %740 {offsets = [0, 256], sizes = [8, 44], strides = [1, 1]} : vector<8x512xf32> to vector<8x44xf32>
    %754 = math.tanh %753 : vector<8x44xf32>
    %755 = vector.extract_strided_slice %740 {offsets = [0, 384], sizes = [8, 44], strides = [1, 1]} : vector<8x512xf32> to vector<8x44xf32>
    %756 = arith.negf %755 : vector<8x44xf32>
    %757 = math.exp %756 : vector<8x44xf32>
    %cst_173 = arith.constant 1.000000e+00 : f32
    %758 = vector.broadcast %cst_173 : f32 to vector<8x44xf32>
    %759 = arith.addf %758, %757 : vector<8x44xf32>
    %760 = arith.divf %758, %759 : vector<8x44xf32>
    %761 = arith.mulf %752, %734 : vector<8x44xf32>
    %762 = arith.mulf %746, %754 : vector<8x44xf32>
    %763 = arith.addf %761, %762 : vector<8x44xf32>
    %764 = math.tanh %763 : vector<8x44xf32>
    %765 = arith.mulf %760, %764 : vector<8x44xf32>
    %c2_174 = arith.constant 2 : index
    %c0_175 = arith.constant 0 : index
    %c0_176 = arith.constant 0 : index
    %766 = vector.load %arg49[%c2_174, %c0_175, %c0_176] : memref<3x8x44xf32, #tpu.memory_space<vmem>>, vector<1x8x44xf32>
    %767 = vector.shape_cast %766 : vector<1x8x44xf32> to vector<8x44xf32>
    %768 = vector.shape_cast %765 : vector<8x44xf32> to vector<1x8x44xf32>
    tpu.vector_store %arg49[%c2_174, %c0_175, %c0_176], %768 {strides = array<i32>} : memref<3x8x44xf32, #tpu.memory_space<vmem>>, vector<1x8x44xf32>,
    %c2_177 = arith.constant 2 : index
    %c0_178 = arith.constant 0 : index
    %c0_179 = arith.constant 0 : index
    %769 = vector.load %arg50[%c2_177, %c0_178, %c0_179] : memref<3x8x44xf32, #tpu.memory_space<vmem>>, vector<1x8x44xf32>
    %770 = vector.shape_cast %769 : vector<1x8x44xf32> to vector<8x44xf32>
    %771 = vector.shape_cast %763 : vector<8x44xf32> to vector<1x8x44xf32>
    tpu.vector_store %arg50[%c2_177, %c0_178, %c0_179], %771 {strides = array<i32>} : memref<3x8x44xf32, #tpu.memory_space<vmem>>, vector<1x8x44xf32>,
    %c0_180 = arith.constant 0 : index
    %c0_181 = arith.constant 0 : index
    %772 = vector.load %arg12[%c0_180, %c0_181] : memref<44x64xf32, #tpu.memory_space<vmem>>, vector<44x64xf32>
    %773 = arith.truncf %765 : vector<8x44xf32> to vector<8x44xbf16>
    %774 = arith.truncf %772 : vector<44x64xf32> to vector<44x64xbf16>
    %cst_182 = arith.constant dense<0.000000e+00> : vector<8x64xf32>
    %775 = tpu.matmul %773, %774, %cst_182 {dimension_numbers = #tpu.dot_dimension_numbers<[1], [0], [0], [1], [0, 0, 1, 1], [], []>} : vector<8x44xbf16>, vector<44x64xbf16>, vector<8x64xf32> -> vector<8x64xf32>
    %c0_183 = arith.constant 0 : index
    %c0_184 = arith.constant 0 : index
    %776 = vector.load %arg13[%c0_183, %c0_184] : memref<1x64xf32, #tpu.memory_space<vmem>>, vector<1x64xf32>
    %777 = vector.broadcast %776 : vector<1x64xf32> to vector<8x64xf32>
    %778 = arith.addf %775, %777 : vector<8x64xf32>
    %cst_185 = arith.constant 0.000000e+00 : f32
    %779 = vector.broadcast %cst_185 : f32 to vector<8x64xf32>
    %780 = arith.maximumf %778, %779 : vector<8x64xf32>
    %c0_186 = arith.constant 0 : index
    %c0_187 = arith.constant 0 : index
    %781 = vector.load %arg14[%c0_186, %c0_187] : memref<64x64xf32, #tpu.memory_space<vmem>>, vector<64x64xf32>
    %782 = arith.truncf %780 : vector<8x64xf32> to vector<8x64xbf16>
    %783 = arith.truncf %781 : vector<64x64xf32> to vector<64x64xbf16>
    %cst_188 = arith.constant dense<0.000000e+00> : vector<8x64xf32>
    %784 = tpu.matmul %782, %783, %cst_188 {dimension_numbers = #tpu.dot_dimension_numbers<[1], [0], [0], [1], [0, 0, 1, 1], [], []>} : vector<8x64xbf16>, vector<64x64xbf16>, vector<8x64xf32> -> vector<8x64xf32>
    %c0_189 = arith.constant 0 : index
    %c0_190 = arith.constant 0 : index
    %785 = vector.load %arg15[%c0_189, %c0_190] : memref<1x64xf32, #tpu.memory_space<vmem>>, vector<1x64xf32>
    %786 = vector.broadcast %785 : vector<1x64xf32> to vector<8x64xf32>
    %787 = arith.addf %784, %786 : vector<8x64xf32>
    %cst_191 = arith.constant 0.000000e+00 : f32
    %788 = vector.broadcast %cst_191 : f32 to vector<8x64xf32>
    %789 = arith.maximumf %787, %788 : vector<8x64xf32>
    %c0_192 = arith.constant 0 : index
    %c0_193 = arith.constant 0 : index
    %790 = vector.load %arg16[%c0_192, %c0_193] : memref<64x64xf32, #tpu.memory_space<vmem>>, vector<64x64xf32>
    %791 = arith.truncf %789 : vector<8x64xf32> to vector<8x64xbf16>
    %792 = arith.truncf %790 : vector<64x64xf32> to vector<64x64xbf16>
    %cst_194 = arith.constant dense<0.000000e+00> : vector<8x64xf32>
    %793 = tpu.matmul %791, %792, %cst_194 {dimension_numbers = #tpu.dot_dimension_numbers<[1], [0], [0], [1], [0, 0, 1, 1], [], []>} : vector<8x64xbf16>, vector<64x64xbf16>, vector<8x64xf32> -> vector<8x64xf32>
    %c0_195 = arith.constant 0 : index
    %c0_196 = arith.constant 0 : index
    %794 = vector.load %arg17[%c0_195, %c0_196] : memref<1x64xf32, #tpu.memory_space<vmem>>, vector<1x64xf32>
    %795 = vector.broadcast %794 : vector<1x64xf32> to vector<8x64xf32>
    %796 = arith.addf %793, %795 : vector<8x64xf32>
    %cst_197 = arith.constant 0.000000e+00 : f32
    %797 = vector.broadcast %cst_197 : f32 to vector<8x64xf32>
    %798 = arith.maximumf %796, %797 : vector<8x64xf32>
    %c0_198 = arith.constant 0 : index
    %c0_199 = arith.constant 0 : index
    %799 = vector.load %arg18[%c0_198, %c0_199] : memref<64x32xf32, #tpu.memory_space<vmem>>, vector<64x32xf32>
    %800 = arith.truncf %798 : vector<8x64xf32> to vector<8x64xbf16>
    %801 = arith.truncf %799 : vector<64x32xf32> to vector<64x32xbf16>
    %cst_200 = arith.constant dense<0.000000e+00> : vector<8x32xf32>
    %802 = tpu.matmul %800, %801, %cst_200 {dimension_numbers = #tpu.dot_dimension_numbers<[1], [0], [0], [1], [0, 0, 1, 1], [], []>} : vector<8x64xbf16>, vector<64x32xbf16>, vector<8x32xf32> -> vector<8x32xf32>
    %c0_201 = arith.constant 0 : index
    %c0_202 = arith.constant 0 : index
    %803 = vector.load %arg19[%c0_201, %c0_202] : memref<1x32xf32, #tpu.memory_space<vmem>>, vector<1x32xf32>
    %804 = vector.broadcast %803 : vector<1x32xf32> to vector<8x32xf32>
    %805 = arith.addf %802, %804 : vector<8x32xf32>
    %cst_203 = arith.constant dense<0xFF800000> : vector<8xf32>
    %806 = vector.multi_reduction <maximumf>, %805, %cst_203 [1] : vector<8x32xf32> to vector<8xf32>
    %807 = vector.shape_cast %806 : vector<8xf32> to vector<8x1xf32>
    %808 = vector.broadcast %807 : vector<8x1xf32> to vector<8x32xf32>
    %809 = arith.subf %805, %808 : vector<8x32xf32>
    %810 = math.exp %809 : vector<8x32xf32>
    %cst_204 = arith.constant dense<0.000000e+00> : vector<8xf32>
    %811 = vector.multi_reduction <add>, %810, %cst_204 [1] : vector<8x32xf32> to vector<8xf32>
    %812 = vector.shape_cast %811 : vector<8xf32> to vector<8x1xf32>
    %813 = vector.broadcast %812 : vector<8x1xf32> to vector<8x32xf32>
    %814 = arith.divf %810, %813 : vector<8x32xf32>
    %c0_205 = arith.constant 0 : index
    %c0_206 = arith.constant 0 : index
    %815 = vector.load %arg20[%c0_205, %c0_206] : memref<44x82xf32, #tpu.memory_space<vmem>>, vector<44x82xf32>
    %816 = arith.truncf %765 : vector<8x44xf32> to vector<8x44xbf16>
    %817 = arith.truncf %815 : vector<44x82xf32> to vector<44x82xbf16>
    %cst_207 = arith.constant dense<0.000000e+00> : vector<8x82xf32>
    %818 = tpu.matmul %816, %817, %cst_207 {dimension_numbers = #tpu.dot_dimension_numbers<[1], [0], [0], [1], [0, 0, 1, 1], [], []>} : vector<8x44xbf16>, vector<44x82xbf16>, vector<8x82xf32> -> vector<8x82xf32>
    %c0_208 = arith.constant 0 : index
    %c0_209 = arith.constant 0 : index
    %819 = vector.load %arg21[%c0_208, %c0_209] : memref<1x82xf32, #tpu.memory_space<vmem>>, vector<1x82xf32>
    %820 = vector.broadcast %819 : vector<1x82xf32> to vector<8x82xf32>
    %821 = arith.addf %818, %820 : vector<8x82xf32>
    %cst_210 = arith.constant 0.000000e+00 : f32
    %822 = vector.broadcast %cst_210 : f32 to vector<8x82xf32>
    %823 = arith.maximumf %821, %822 : vector<8x82xf32>
    %c0_211 = arith.constant 0 : index
    %c0_212 = arith.constant 0 : index
    %824 = vector.load %arg22[%c0_211, %c0_212] : memref<82x82xf32, #tpu.memory_space<vmem>>, vector<82x82xf32>
    %825 = arith.truncf %823 : vector<8x82xf32> to vector<8x82xbf16>
    %826 = arith.truncf %824 : vector<82x82xf32> to vector<82x82xbf16>
    %cst_213 = arith.constant dense<0.000000e+00> : vector<8x82xf32>
    %827 = tpu.matmul %825, %826, %cst_213 {dimension_numbers = #tpu.dot_dimension_numbers<[1], [0], [0], [1], [0, 0, 1, 1], [], []>} : vector<8x82xbf16>, vector<82x82xbf16>, vector<8x82xf32> -> vector<8x82xf32>
    %c0_214 = arith.constant 0 : index
    %c0_215 = arith.constant 0 : index
    %828 = vector.load %arg23[%c0_214, %c0_215] : memref<1x82xf32, #tpu.memory_space<vmem>>, vector<1x82xf32>
    %829 = vector.broadcast %828 : vector<1x82xf32> to vector<8x82xf32>
    %830 = arith.addf %827, %829 : vector<8x82xf32>
    %cst_216 = arith.constant 0.000000e+00 : f32
    %831 = vector.broadcast %cst_216 : f32 to vector<8x82xf32>
    %832 = arith.maximumf %830, %831 : vector<8x82xf32>
    %c0_217 = arith.constant 0 : index
    %c0_218 = arith.constant 0 : index
    %833 = vector.load %arg24[%c0_217, %c0_218] : memref<82x82xf32, #tpu.memory_space<vmem>>, vector<82x82xf32>
    %834 = arith.truncf %832 : vector<8x82xf32> to vector<8x82xbf16>
    %835 = arith.truncf %833 : vector<82x82xf32> to vector<82x82xbf16>
    %cst_219 = arith.constant dense<0.000000e+00> : vector<8x82xf32>
    %836 = tpu.matmul %834, %835, %cst_219 {dimension_numbers = #tpu.dot_dimension_numbers<[1], [0], [0], [1], [0, 0, 1, 1], [], []>} : vector<8x82xbf16>, vector<82x82xbf16>, vector<8x82xf32> -> vector<8x82xf32>
    %c0_220 = arith.constant 0 : index
    %c0_221 = arith.constant 0 : index
    %837 = vector.load %arg25[%c0_220, %c0_221] : memref<1x82xf32, #tpu.memory_space<vmem>>, vector<1x82xf32>
    %838 = vector.broadcast %837 : vector<1x82xf32> to vector<8x82xf32>
    %839 = arith.addf %836, %838 : vector<8x82xf32>
    %cst_222 = arith.constant 0.000000e+00 : f32
    %840 = vector.broadcast %cst_222 : f32 to vector<8x82xf32>
    %841 = arith.maximumf %839, %840 : vector<8x82xf32>
    %c0_223 = arith.constant 0 : index
    %c0_224 = arith.constant 0 : index
    %842 = vector.load %arg26[%c0_223, %c0_224] : memref<82x41xf32, #tpu.memory_space<vmem>>, vector<82x41xf32>
    %843 = arith.truncf %841 : vector<8x82xf32> to vector<8x82xbf16>
    %844 = arith.truncf %842 : vector<82x41xf32> to vector<82x41xbf16>
    %cst_225 = arith.constant dense<0.000000e+00> : vector<8x41xf32>
    %845 = tpu.matmul %843, %844, %cst_225 {dimension_numbers = #tpu.dot_dimension_numbers<[1], [0], [0], [1], [0, 0, 1, 1], [], []>} : vector<8x82xbf16>, vector<82x41xbf16>, vector<8x41xf32> -> vector<8x41xf32>
    %c0_226 = arith.constant 0 : index
    %c0_227 = arith.constant 0 : index
    %846 = vector.load %arg27[%c0_226, %c0_227] : memref<1x41xf32, #tpu.memory_space<vmem>>, vector<1x41xf32>
    %847 = vector.broadcast %846 : vector<1x41xf32> to vector<8x41xf32>
    %848 = arith.addf %845, %847 : vector<8x41xf32>
    %cst_228 = arith.constant dense<0xFF800000> : vector<8xf32>
    %849 = vector.multi_reduction <maximumf>, %848, %cst_228 [1] : vector<8x41xf32> to vector<8xf32>
    %850 = vector.shape_cast %849 : vector<8xf32> to vector<8x1xf32>
    %851 = vector.broadcast %850 : vector<8x1xf32> to vector<8x41xf32>
    %852 = arith.subf %848, %851 : vector<8x41xf32>
    %853 = math.exp %852 : vector<8x41xf32>
    %cst_229 = arith.constant dense<0.000000e+00> : vector<8xf32>
    %854 = vector.multi_reduction <add>, %853, %cst_229 [1] : vector<8x41xf32> to vector<8xf32>
    %855 = vector.shape_cast %854 : vector<8xf32> to vector<8x1xf32>
    %856 = vector.broadcast %855 : vector<8x1xf32> to vector<8x41xf32>
    %857 = arith.divf %853, %856 : vector<8x41xf32>
    %c0_230 = arith.constant 0 : index
    %c0_231 = arith.constant 0 : index
    %858 = vector.load %arg28[%c0_230, %c0_231] : memref<44x34xf32, #tpu.memory_space<vmem>>, vector<44x34xf32>
    %859 = arith.truncf %765 : vector<8x44xf32> to vector<8x44xbf16>
    %860 = arith.truncf %858 : vector<44x34xf32> to vector<44x34xbf16>
    %cst_232 = arith.constant dense<0.000000e+00> : vector<8x34xf32>
    %861 = tpu.matmul %859, %860, %cst_232 {dimension_numbers = #tpu.dot_dimension_numbers<[1], [0], [0], [1], [0, 0, 1, 1], [], []>} : vector<8x44xbf16>, vector<44x34xbf16>, vector<8x34xf32> -> vector<8x34xf32>
    %c0_233 = arith.constant 0 : index
    %c0_234 = arith.constant 0 : index
    %862 = vector.load %arg29[%c0_233, %c0_234] : memref<1x34xf32, #tpu.memory_space<vmem>>, vector<1x34xf32>
    %863 = vector.broadcast %862 : vector<1x34xf32> to vector<8x34xf32>
    %864 = arith.addf %861, %863 : vector<8x34xf32>
    %cst_235 = arith.constant 0.000000e+00 : f32
    %865 = vector.broadcast %cst_235 : f32 to vector<8x34xf32>
    %866 = arith.maximumf %864, %865 : vector<8x34xf32>
    %c0_236 = arith.constant 0 : index
    %c0_237 = arith.constant 0 : index
    %867 = vector.load %arg30[%c0_236, %c0_237] : memref<34x34xf32, #tpu.memory_space<vmem>>, vector<34x34xf32>
    %868 = arith.truncf %866 : vector<8x34xf32> to vector<8x34xbf16>
    %869 = arith.truncf %867 : vector<34x34xf32> to vector<34x34xbf16>
    %cst_238 = arith.constant dense<0.000000e+00> : vector<8x34xf32>
    %870 = tpu.matmul %868, %869, %cst_238 {dimension_numbers = #tpu.dot_dimension_numbers<[1], [0], [0], [1], [0, 0, 1, 1], [], []>} : vector<8x34xbf16>, vector<34x34xbf16>, vector<8x34xf32> -> vector<8x34xf32>
    %c0_239 = arith.constant 0 : index
    %c0_240 = arith.constant 0 : index
    %871 = vector.load %arg31[%c0_239, %c0_240] : memref<1x34xf32, #tpu.memory_space<vmem>>, vector<1x34xf32>
    %872 = vector.broadcast %871 : vector<1x34xf32> to vector<8x34xf32>
    %873 = arith.addf %870, %872 : vector<8x34xf32>
    %cst_241 = arith.constant 0.000000e+00 : f32
    %874 = vector.broadcast %cst_241 : f32 to vector<8x34xf32>
    %875 = arith.maximumf %873, %874 : vector<8x34xf32>
    %c0_242 = arith.constant 0 : index
    %c0_243 = arith.constant 0 : index
    %876 = vector.load %arg32[%c0_242, %c0_243] : memref<34x34xf32, #tpu.memory_space<vmem>>, vector<34x34xf32>
    %877 = arith.truncf %875 : vector<8x34xf32> to vector<8x34xbf16>
    %878 = arith.truncf %876 : vector<34x34xf32> to vector<34x34xbf16>
    %cst_244 = arith.constant dense<0.000000e+00> : vector<8x34xf32>
    %879 = tpu.matmul %877, %878, %cst_244 {dimension_numbers = #tpu.dot_dimension_numbers<[1], [0], [0], [1], [0, 0, 1, 1], [], []>} : vector<8x34xbf16>, vector<34x34xbf16>, vector<8x34xf32> -> vector<8x34xf32>
    %c0_245 = arith.constant 0 : index
    %c0_246 = arith.constant 0 : index
    %880 = vector.load %arg33[%c0_245, %c0_246] : memref<1x34xf32, #tpu.memory_space<vmem>>, vector<1x34xf32>
    %881 = vector.broadcast %880 : vector<1x34xf32> to vector<8x34xf32>
    %882 = arith.addf %879, %881 : vector<8x34xf32>
    %cst_247 = arith.constant 0.000000e+00 : f32
    %883 = vector.broadcast %cst_247 : f32 to vector<8x34xf32>
    %884 = arith.maximumf %882, %883 : vector<8x34xf32>
    %c0_248 = arith.constant 0 : index
    %c0_249 = arith.constant 0 : index
    %885 = vector.load %arg34[%c0_248, %c0_249] : memref<34x17xf32, #tpu.memory_space<vmem>>, vector<34x17xf32>
    %886 = arith.truncf %884 : vector<8x34xf32> to vector<8x34xbf16>
    %887 = arith.truncf %885 : vector<34x17xf32> to vector<34x17xbf16>
    %cst_250 = arith.constant dense<0.000000e+00> : vector<8x17xf32>
    %888 = tpu.matmul %886, %887, %cst_250 {dimension_numbers = #tpu.dot_dimension_numbers<[1], [0], [0], [1], [0, 0, 1, 1], [], []>} : vector<8x34xbf16>, vector<34x17xbf16>, vector<8x17xf32> -> vector<8x17xf32>
    %c0_251 = arith.constant 0 : index
    %c0_252 = arith.constant 0 : index
    %889 = vector.load %arg35[%c0_251, %c0_252] : memref<1x17xf32, #tpu.memory_space<vmem>>, vector<1x17xf32>
    %890 = vector.broadcast %889 : vector<1x17xf32> to vector<8x17xf32>
    %891 = arith.addf %888, %890 : vector<8x17xf32>
    %cst_253 = arith.constant dense<0xFF800000> : vector<8xf32>
    %892 = vector.multi_reduction <maximumf>, %891, %cst_253 [1] : vector<8x17xf32> to vector<8xf32>
    %893 = vector.shape_cast %892 : vector<8xf32> to vector<8x1xf32>
    %894 = vector.broadcast %893 : vector<8x1xf32> to vector<8x17xf32>
    %895 = arith.subf %891, %894 : vector<8x17xf32>
    %896 = math.exp %895 : vector<8x17xf32>
    %cst_254 = arith.constant dense<0.000000e+00> : vector<8xf32>
    %897 = vector.multi_reduction <add>, %896, %cst_254 [1] : vector<8x17xf32> to vector<8xf32>
    %898 = vector.shape_cast %897 : vector<8xf32> to vector<8x1xf32>
    %899 = vector.broadcast %898 : vector<8x1xf32> to vector<8x17xf32>
    %900 = arith.divf %896, %899 : vector<8x17xf32>
    %c0_255 = arith.constant 0 : index
    %c0_256 = arith.constant 0 : index
    %901 = vector.load %arg36[%c0_255, %c0_256] : memref<44x576xf32, #tpu.memory_space<vmem>>, vector<44x576xf32>
    %902 = arith.truncf %765 : vector<8x44xf32> to vector<8x44xbf16>
    %903 = arith.truncf %901 : vector<44x576xf32> to vector<44x576xbf16>
    %cst_257 = arith.constant dense<0.000000e+00> : vector<8x576xf32>
    %904 = tpu.matmul %902, %903, %cst_257 {dimension_numbers = #tpu.dot_dimension_numbers<[1], [0], [0], [1], [0, 0, 1, 1], [], []>} : vector<8x44xbf16>, vector<44x576xbf16>, vector<8x576xf32> -> vector<8x576xf32>
    %c0_258 = arith.constant 0 : index
    %c0_259 = arith.constant 0 : index
    %905 = vector.load %arg37[%c0_258, %c0_259] : memref<1x576xf32, #tpu.memory_space<vmem>>, vector<1x576xf32>
    %906 = vector.broadcast %905 : vector<1x576xf32> to vector<8x576xf32>
    %907 = arith.addf %904, %906 : vector<8x576xf32>
    %cst_260 = arith.constant 0.000000e+00 : f32
    %908 = vector.broadcast %cst_260 : f32 to vector<8x576xf32>
    %909 = arith.maximumf %907, %908 : vector<8x576xf32>
    %c0_261 = arith.constant 0 : index
    %c0_262 = arith.constant 0 : index
    %910 = vector.load %arg38[%c0_261, %c0_262] : memref<576x576xf32, #tpu.memory_space<vmem>>, vector<576x576xf32>
    %911 = arith.truncf %909 : vector<8x576xf32> to vector<8x576xbf16>
    %912 = arith.truncf %910 : vector<576x576xf32> to vector<576x576xbf16>
    %cst_263 = arith.constant dense<0.000000e+00> : vector<8x576xf32>
    %913 = tpu.matmul %911, %912, %cst_263 {dimension_numbers = #tpu.dot_dimension_numbers<[1], [0], [0], [1], [0, 0, 1, 1], [], []>} : vector<8x576xbf16>, vector<576x576xbf16>, vector<8x576xf32> -> vector<8x576xf32>
    %c0_264 = arith.constant 0 : index
    %c0_265 = arith.constant 0 : index
    %914 = vector.load %arg39[%c0_264, %c0_265] : memref<1x576xf32, #tpu.memory_space<vmem>>, vector<1x576xf32>
    %915 = vector.broadcast %914 : vector<1x576xf32> to vector<8x576xf32>
    %916 = arith.addf %913, %915 : vector<8x576xf32>
    %cst_266 = arith.constant 0.000000e+00 : f32
    %917 = vector.broadcast %cst_266 : f32 to vector<8x576xf32>
    %918 = arith.maximumf %916, %917 : vector<8x576xf32>
    %c0_267 = arith.constant 0 : index
    %c0_268 = arith.constant 0 : index
    %919 = vector.load %arg40[%c0_267, %c0_268] : memref<576x576xf32, #tpu.memory_space<vmem>>, vector<576x576xf32>
    %920 = arith.truncf %918 : vector<8x576xf32> to vector<8x576xbf16>
    %921 = arith.truncf %919 : vector<576x576xf32> to vector<576x576xbf16>
    %cst_269 = arith.constant dense<0.000000e+00> : vector<8x576xf32>
    %922 = tpu.matmul %920, %921, %cst_269 {dimension_numbers = #tpu.dot_dimension_numbers<[1], [0], [0], [1], [0, 0, 1, 1], [], []>} : vector<8x576xbf16>, vector<576x576xbf16>, vector<8x576xf32> -> vector<8x576xf32>
    %c0_270 = arith.constant 0 : index
    %c0_271 = arith.constant 0 : index
    %923 = vector.load %arg41[%c0_270, %c0_271] : memref<1x576xf32, #tpu.memory_space<vmem>>, vector<1x576xf32>
    %924 = vector.broadcast %923 : vector<1x576xf32> to vector<8x576xf32>
    %925 = arith.addf %922, %924 : vector<8x576xf32>
    %cst_272 = arith.constant 0.000000e+00 : f32
    %926 = vector.broadcast %cst_272 : f32 to vector<8x576xf32>
    %927 = arith.maximumf %925, %926 : vector<8x576xf32>
    %c0_273 = arith.constant 0 : index
    %c0_274 = arith.constant 0 : index
    %928 = vector.load %arg42[%c0_273, %c0_274] : memref<576x288xf32, #tpu.memory_space<vmem>>, vector<576x288xf32>
    %929 = arith.truncf %927 : vector<8x576xf32> to vector<8x576xbf16>
    %930 = arith.truncf %928 : vector<576x288xf32> to vector<576x288xbf16>
    %cst_275 = arith.constant dense<0.000000e+00> : vector<8x288xf32>
    %931 = tpu.matmul %929, %930, %cst_275 {dimension_numbers = #tpu.dot_dimension_numbers<[1], [0], [0], [1], [0, 0, 1, 1], [], []>} : vector<8x576xbf16>, vector<576x288xbf16>, vector<8x288xf32> -> vector<8x288xf32>
    %c0_276 = arith.constant 0 : index
    %c0_277 = arith.constant 0 : index
    %932 = vector.load %arg43[%c0_276, %c0_277] : memref<1x288xf32, #tpu.memory_space<vmem>>, vector<1x288xf32>
    %933 = vector.broadcast %932 : vector<1x288xf32> to vector<8x288xf32>
    %934 = arith.addf %931, %933 : vector<8x288xf32>
    %cst_278 = arith.constant dense<0xFF800000> : vector<8xf32>
    %935 = vector.multi_reduction <maximumf>, %934, %cst_278 [1] : vector<8x288xf32> to vector<8xf32>
    %936 = vector.shape_cast %935 : vector<8xf32> to vector<8x1xf32>
    %937 = vector.broadcast %936 : vector<8x1xf32> to vector<8x288xf32>
    %938 = arith.subf %934, %937 : vector<8x288xf32>
    %939 = math.exp %938 : vector<8x288xf32>
    %cst_279 = arith.constant dense<0.000000e+00> : vector<8xf32>
    %940 = vector.multi_reduction <add>, %939, %cst_279 [1] : vector<8x288xf32> to vector<8xf32>
    %941 = vector.shape_cast %940 : vector<8xf32> to vector<8x1xf32>
    %942 = vector.broadcast %941 : vector<8x1xf32> to vector<8x288xf32>
    %943 = arith.divf %939, %942 : vector<8x288xf32>
    %c0_280 = arith.constant 0 : index
    %c0_281 = arith.constant 0 : index
    %944 = vector.load %arg44[%c0_280, %c0_281] : memref<44x22xf32, #tpu.memory_space<vmem>>, vector<44x22xf32>
    %945 = arith.truncf %765 : vector<8x44xf32> to vector<8x44xbf16>
    %946 = arith.truncf %944 : vector<44x22xf32> to vector<44x22xbf16>
    %cst_282 = arith.constant dense<0.000000e+00> : vector<8x22xf32>
    %947 = tpu.matmul %945, %946, %cst_282 {dimension_numbers = #tpu.dot_dimension_numbers<[1], [0], [0], [1], [0, 0, 1, 1], [], []>} : vector<8x44xbf16>, vector<44x22xbf16>, vector<8x22xf32> -> vector<8x22xf32>
    %c0_283 = arith.constant 0 : index
    %c0_284 = arith.constant 0 : index
    %948 = vector.load %arg45[%c0_283, %c0_284] : memref<1x22xf32, #tpu.memory_space<vmem>>, vector<1x22xf32>
    %949 = vector.broadcast %948 : vector<1x22xf32> to vector<8x22xf32>
    %950 = arith.addf %947, %949 : vector<8x22xf32>
    %cst_285 = arith.constant 0.000000e+00 : f32
    %951 = vector.broadcast %cst_285 : f32 to vector<8x22xf32>
    %952 = arith.maximumf %950, %951 : vector<8x22xf32>
    %c0_286 = arith.constant 0 : index
    %c0_287 = arith.constant 0 : index
    %953 = vector.load %arg46[%c0_286, %c0_287] : memref<22x2xf32, #tpu.memory_space<vmem>>, vector<22x2xf32>
    %954 = arith.truncf %952 : vector<8x22xf32> to vector<8x22xbf16>
    %955 = arith.truncf %953 : vector<22x2xf32> to vector<22x2xbf16>
    %cst_288 = arith.constant dense<0.000000e+00> : vector<8x2xf32>
    %956 = tpu.matmul %954, %955, %cst_288 {dimension_numbers = #tpu.dot_dimension_numbers<[1], [0], [0], [1], [0, 0, 1, 1], [], []>} : vector<8x22xbf16>, vector<22x2xbf16>, vector<8x2xf32> -> vector<8x2xf32>
    %c0_289 = arith.constant 0 : index
    %c0_290 = arith.constant 0 : index
    %957 = vector.load %arg47[%c0_289, %c0_290] : memref<1x2xf32, #tpu.memory_space<vmem>>, vector<1x2xf32>
    %958 = vector.broadcast %957 : vector<1x2xf32> to vector<8x2xf32>
    %959 = arith.addf %956, %958 : vector<8x2xf32>
    %cst_291 = arith.constant dense<0xFF800000> : vector<8xf32>
    %960 = vector.multi_reduction <maximumf>, %959, %cst_291 [1] : vector<8x2xf32> to vector<8xf32>
    %961 = vector.shape_cast %960 : vector<8xf32> to vector<8x1xf32>
    %962 = vector.broadcast %961 : vector<8x1xf32> to vector<8x2xf32>
    %963 = arith.subf %959, %962 : vector<8x2xf32>
    %964 = math.exp %963 : vector<8x2xf32>
    %cst_292 = arith.constant dense<0.000000e+00> : vector<8xf32>
    %965 = vector.multi_reduction <add>, %964, %cst_292 [1] : vector<8x2xf32> to vector<8xf32>
    %966 = vector.shape_cast %965 : vector<8xf32> to vector<8x1xf32>
    %967 = vector.broadcast %966 : vector<8x1xf32> to vector<8x2xf32>
    %968 = arith.divf %964, %967 : vector<8x2xf32>
    %cst_293 = arith.constant 2.000000e+00 : f32
    %969 = vector.broadcast %cst_293 : f32 to vector<8x2xf32>
    %970 = arith.mulf %968, %969 : vector<8x2xf32>
    %cst_294 = arith.constant 1.000000e+00 : f32
    %971 = vector.broadcast %cst_294 : f32 to vector<8x2xf32>
    %972 = arith.subf %970, %971 : vector<8x2xf32>
    %cst_295 = arith.constant 0.000000e+00 : f32
    %973 = vector.broadcast %cst_295 : f32 to vector<8x896xf32>
    %c0_296 = arith.constant 0 : index
    %c0_297 = arith.constant 0 : index
    %974 = vector.load %arg48[%c0_296, %c0_297] : memref<8x896xf32, #tpu.memory_space<vmem>>, vector<8x896xf32>
    tpu.vector_store %arg48[%c0_296, %c0_297], %973 {strides = array<i32>} : memref<8x896xf32, #tpu.memory_space<vmem>>, vector<8x896xf32>,
    %c0_298 = arith.constant 0 : index
    %c0_299 = arith.constant 0 : index
    %975 = vector.load %arg48[%c0_298, %c0_299] : memref<8x896xf32, #tpu.memory_space<vmem>>, vector<8x288xf32>
    tpu.vector_store %arg48[%c0_298, %c0_299], %943 {strides = array<i32>} : memref<8x896xf32, #tpu.memory_space<vmem>>, vector<8x288xf32>,
    %c0_300 = arith.constant 0 : index
    %c384 = arith.constant 384 : index
    %976 = vector.load %arg48[%c0_300, %c384] : memref<8x896xf32, #tpu.memory_space<vmem>>, vector<8x32xf32>
    tpu.vector_store %arg48[%c0_300, %c384], %814 {strides = array<i32>} : memref<8x896xf32, #tpu.memory_space<vmem>>, vector<8x32xf32>,
    %c0_301 = arith.constant 0 : index
    %c512 = arith.constant 512 : index
    %977 = vector.load %arg48[%c0_301, %c512] : memref<8x896xf32, #tpu.memory_space<vmem>>, vector<8x41xf32>
    tpu.vector_store %arg48[%c0_301, %c512], %857 {strides = array<i32>} : memref<8x896xf32, #tpu.memory_space<vmem>>, vector<8x41xf32>,
    %c0_302 = arith.constant 0 : index
    %c640 = arith.constant 640 : index
    %978 = vector.load %arg48[%c0_302, %c640] : memref<8x896xf32, #tpu.memory_space<vmem>>, vector<8x17xf32>
    tpu.vector_store %arg48[%c0_302, %c640], %900 {strides = array<i32>} : memref<8x896xf32, #tpu.memory_space<vmem>>, vector<8x17xf32>,
    %c0_303 = arith.constant 0 : index
    %c768 = arith.constant 768 : index
    %979 = vector.load %arg48[%c0_303, %c768] : memref<8x896xf32, #tpu.memory_space<vmem>>, vector<8x2xf32>
    tpu.vector_store %arg48[%c0_303, %c768], %972 {strides = array<i32>} : memref<8x896xf32, #tpu.memory_space<vmem>>, vector<8x2xf32>,
    return
  }
}

</mosaic_0001>

<llo_original>
// kernel: hero_model_forward.1
$region0: #{hero_model_forward.1}
  #allocation0 [shape = 'u32[]', space=smem, size = 0x4, offset = 0x4, fixed_abs, tag = 'smem constant byte address 0x4 - core index']
  #allocation1 [shape = 'u32[72,128]{1,0:T(1,128)}', space=vmem, size = 0x9000, scoped, tag = 'internal scratch']
  #allocation2 [shape = 'f32[64,44]{1,0:T(8,128)}', space=vmem, size = 0x8000, scoped, tag = 'scratch operand']
  %s0 = inlined_call_operand.smem [shape: u32[51], index: -1, kind: input, shape index: {}]
  %s1 = sld [smem:[%s0]]
  %s2 = scalar_lea.smem %s0, 1
  %s3 = sld [smem:[%s2]]
  %s4 = scalar_lea.smem %s0, 2
  %s5 = sld [smem:[%s4]]
  %s6 = scalar_lea.smem %s0, 3
  %s7 = sld [smem:[%s6]]
  %s8 = scalar_lea.smem %s0, 4
  %s9 = sld [smem:[%s8]]
  %s10 = scalar_lea.smem %s0, 5
  %s11 = sld [smem:[%s10]]
  %s12 = scalar_lea.smem %s0, 6
  %s13 = sld [smem:[%s12]]
  %s14 = scalar_lea.smem %s0, 7
  %s15 = sld [smem:[%s14]]
  %s16 = scalar_lea.smem %s0, 8
  %s17 = sld [smem:[%s16]]
  %s18 = scalar_lea.smem %s0, 9
  %s19 = sld [smem:[%s18]]
  %s20 = scalar_lea.smem %s0, 10
  %s21 = sld [smem:[%s20]]
  %s22 = scalar_lea.smem %s0, 11
  %s23 = sld [smem:[%s22]]
  %s24 = scalar_lea.smem %s0, 12
  %s25 = sld [smem:[%s24]]
  %s26 = scalar_lea.smem %s0, 13
  %s27 = sld [smem:[%s26]]
  %s28 = scalar_lea.smem %s0, 14
  %s29 = sld [smem:[%s28]]
  %s30 = scalar_lea.smem %s0, 15
  %s31 = sld [smem:[%s30]]
  %s32 = scalar_lea.smem %s0, 16
  %s33 = sld [smem:[%s32]]
  %s34 = scalar_lea.smem %s0, 17
  %s35 = sld [smem:[%s34]]
  %s36 = scalar_lea.smem %s0, 18
  %s37 = sld [smem:[%s36]]
  %s38 = scalar_lea.smem %s0, 19
  %s39 = sld [smem:[%s38]]
  %s40 = scalar_lea.smem %s0, 20
  %s41 = sld [smem:[%s40]]
  %s42 = scalar_lea.smem %s0, 21
  %s43 = sld [smem:[%s42]]
  %s44 = scalar_lea.smem %s0, 22
  %s45 = sld [smem:[%s44]]
  %s46 = scalar_lea.smem %s0, 23
  %s47 = sld [smem:[%s46]]
  %s48 = scalar_lea.smem %s0, 24
  %s49 = sld [smem:[%s48]]
  %s50 = scalar_lea.smem %s0, 25
  %s51 = sld [smem:[%s50]]
  %s52 = scalar_lea.smem %s0, 26
  %s53 = sld [smem:[%s52]]
  %s54 = scalar_lea.smem %s0, 27
  %s55 = sld [smem:[%s54]]
  %s56 = scalar_lea.smem %s0, 28
  %s57 = sld [smem:[%s56]]
  %s58 = scalar_lea.smem %s0, 29
  %s59 = sld [smem:[%s58]]
  %s60 = scalar_lea.smem %s0, 30
  %s61 = sld [smem:[%s60]]
  %s62 = scalar_lea.smem %s0, 31
  %s63 = sld [smem:[%s62]]
  %s64 = scalar_lea.smem %s0, 32
  %s65 = sld [smem:[%s64]]
  %s66 = scalar_lea.smem %s0, 33
  %s67 = sld [smem:[%s66]]
  %s68 = scalar_lea.smem %s0, 34
  %s69 = sld [smem:[%s68]]
  %s70 = scalar_lea.smem %s0, 35
  %s71 = sld [smem:[%s70]]
  %s72 = scalar_lea.smem %s0, 36
  %s73 = sld [smem:[%s72]]
  %s74 = scalar_lea.smem %s0, 37
  %s75 = sld [smem:[%s74]]
  %s76 = scalar_lea.smem %s0, 38
  %s77 = sld [smem:[%s76]]
  %s78 = scalar_lea.smem %s0, 39
  %s79 = sld [smem:[%s78]]
  %s80 = scalar_lea.smem %s0, 40
  %s81 = sld [smem:[%s80]]
  %s82 = scalar_lea.smem %s0, 41
  %s83 = sld [smem:[%s82]]
  %s84 = scalar_lea.smem %s0, 42
  %s85 = sld [smem:[%s84]]
  %s86 = scalar_lea.smem %s0, 43
  %s87 = sld [smem:[%s86]]
  %s88 = scalar_lea.smem %s0, 44
  %s89 = sld [smem:[%s88]]
  %s90 = scalar_lea.smem %s0, 45
  %s91 = sld [smem:[%s90]]
  %s92 = scalar_lea.smem %s0, 46
  %s93 = sld [smem:[%s92]]
  %s94 = scalar_lea.smem %s0, 47
  %s95 = sld [smem:[%s94]]
  %s96 = scalar_lea.smem %s0, 48
  %s97 = sld [smem:[%s96]]
  %s98 = scalar_lea.smem %s0, 49
  %s99 = sld [smem:[%s98]]
  %s100 = scalar_lea.smem %s0, 50
  %s101 = sld [smem:[%s100]]
  %102 = xla_tuple %s97, %s99, %s101
  %s103 = sld [smem:[#allocation0]]
  $region302: #{hero_model_forward.1} parent=0
    _
  %s105 = ssub.s32 1, %s103
  %s106 = scalar_select 0, %s105, %s103
  $region1: #{hero_model_forward.1} parent=0
    #allocation3 [shape = 'u8[12288]{0}', space=vmem, size = 0x3000, scoped, tag = 'input window, operand 1, single buffered']
    #allocation4 [shape = 's32[1]{0}', space=sflag, size = 0x4, scoped, tag = 'scoped memory for hero_model_forward.1']
    #allocation5 [shape = 's32[1]{0}', space=sflag, size = 0x4, scoped, tag = 'scoped memory for hero_model_forward.1']
    #allocation6 [shape = 'u8[12288]{0}', space=vmem, size = 0x3000, scoped, tag = 'input window, operand 2, single buffered']
    #allocation7 [shape = 's32[1]{0}', space=sflag, size = 0x4, scoped, tag = 'scoped memory for hero_model_forward.1']
    #allocation8 [shape = 'u8[98304]{0}', space=vmem, size = 0x18000, scoped, tag = 'input window, operand 6, single buffered']
    #allocation9 [shape = 'u8[98304]{0}', space=vmem, size = 0x18000, scoped, tag = 'input window, operand 7, single buffered']
    #allocation10 [shape = 's32[1]{0}', space=sflag, size = 0x4, scoped, tag = 'scoped memory for hero_model_forward.1']
    #allocation11 [shape = 'u8[98304]{0}', space=vmem, size = 0x18000, scoped, tag = 'input window, operand 9, single buffered']
    #allocation12 [shape = 'u8[98304]{0}', space=vmem, size = 0x18000, scoped, tag = 'input window, operand 10, single buffered']
    #allocation13 [shape = 's32[1]{0}', space=sflag, size = 0x4, scoped, tag = 'scoped memory for hero_model_forward.1']
    #allocation14 [shape = 'u8[24576]{0}', space=vmem, size = 0x6000, scoped, tag = 'input window, operand 12, single buffered']
    #allocation15 [shape = 'u8[512]{0}', space=vmem, size = 0x400, scoped, tag = 'input window, operand 15, single buffered']
    #allocation16 [shape = 's32[1]{0}', space=sflag, size = 0x4, scoped, tag = 'scoped memory for hero_model_forward.1']
    #allocation17 [shape = 'u8[32768]{0}', space=vmem, size = 0x8000, scoped, tag = 'input window, operand 16, single buffered']
    #allocation18 [shape = 'u8[512]{0}', space=vmem, size = 0x400, scoped, tag = 'input window, operand 17, single buffered']
    #allocation19 [shape = 's32[1]{0}', space=sflag, size = 0x4, scoped, tag = 'scoped memory for hero_model_forward.1']
    #allocation20 [shape = 'u8[512]{0}', space=vmem, size = 0x400, scoped, tag = 'input window, operand 19, single buffered']
    #allocation21 [shape = 'u8[24576]{0}', space=vmem, size = 0x6000, scoped, tag = 'input window, operand 20, single buffered']
    #allocation22 [shape = 's32[1]{0}', space=sflag, size = 0x4, scoped, tag = 'scoped memory for hero_model_forward.1']
    #allocation23 [shape = 'u8[512]{0}', space=vmem, size = 0x400, scoped, tag = 'input window, operand 21, single buffered']
    #allocation24 [shape = 'u8[512]{0}', space=vmem, size = 0x400, scoped, tag = 'input window, operand 23, single buffered']
    #allocation25 [shape = 's32[1]{0}', space=sflag, size = 0x4, scoped, tag = 'scoped memory for hero_model_forward.1']
    #allocation26 [shape = 'u8[45056]{0}', space=vmem, size = 0xb000, scoped, tag = 'input window, operand 24, single buffered']
    #allocation27 [shape = 'u8[512]{0}', space=vmem, size = 0x400, scoped, tag = 'input window, operand 25, single buffered']
    #allocation28 [shape = 's32[1]{0}', space=sflag, size = 0x4, scoped, tag = 'scoped memory for hero_model_forward.1']
    #allocation29 [shape = 'u8[512]{0}', space=vmem, size = 0x400, scoped, tag = 'input window, operand 27, single buffered']
    #allocation30 [shape = 'u8[20480]{0}', space=vmem, size = 0x5000, scoped, tag = 'input window, operand 30, single buffered']
    #allocation31 [shape = 's32[1]{0}', space=sflag, size = 0x4, scoped, tag = 'scoped memory for hero_model_forward.1']
    #allocation32 [shape = 'u8[20480]{0}', space=vmem, size = 0x5000, scoped, tag = 'input window, operand 32, single buffered']
    #allocation33 [shape = 'u8[1474560]{0}', space=vmem, size = 0x168000, scoped, tag = 'input window, operand 40, single buffered']
    #allocation34 [shape = 's32[1]{0}', space=sflag, size = 0x4, scoped, tag = 'scoped memory for hero_model_forward.1']
    #allocation35 [shape = 'u8[1536]{0}', space=vmem, size = 0x800, scoped, tag = 'input window, operand 43, single buffered']
    #allocation36 [shape = 'u8[12288]{0}', space=vmem, size = 0x3000, scoped, tag = 'output window, operand 1, single buffered']
    #allocation37 [shape = 'u8[12288]{0}', space=vmem, size = 0x3000, scoped, tag = 'output window, operand 2, single buffered']
    #allocation38 [shape = 's32[1]{0}', space=sflag, size = 0x4, scoped, tag = 'scoped memory for hero_model_forward.1']
    %107 = vsyncpa [#allocation4], 0
    %108 = vsyncpa [#allocation7], 0
    %109 = vsyncpa [#allocation10], 0
    %110 = vsyncpa [#allocation13], 0
    %111 = vsyncpa [#allocation16], 0
    %112 = vsyncpa [#allocation19], 0
    %113 = vsyncpa [#allocation22], 0
    %114 = vsyncpa [#allocation25], 0
    %115 = vsyncpa [#allocation28], 0
    %116 = vsyncpa [#allocation31], 0
    %117 = vsyncpa [#allocation34], 0
    %118 = vsyncpa [#allocation5], 0
    %119 = vsyncpa [#allocation38], 0
    // Predicated region
    $region2: #{hero_model_forward.1} parent=1 // pred_check
      _
    $region3: #{hero_model_forward.1} parent=1 // pred_check_branch
      %121 = sbr.rel (0) target = $region5
    $region4: #{hero_model_forward.1} parent=1 // pred_region
      _
    $region5: #{hero_model_forward.1} parent=1 // pred_fallthru
      _
    // Predicated region
    $region6: #{hero_model_forward.1} parent=1 // pred_check
      _
    $region7: #{hero_model_forward.1} parent=1 // pred_check_branch
      %123 = sbr.rel (0) target = $region9
    $region8: #{hero_model_forward.1} parent=1 // pred_region
      %125 = vsyncadd [#allocation4], 0
      %s126 = sshll.u32 %s3, 4
      %s127 = int_to_ptr.hbm [resolvable:$true] %s126
      %s128 = sshll.u32 [#allocation3], 4
      %s129 = int_to_ptr.vmem [resolvable:$true] %s128
      %134 = dma.hbm_to_vmem [thread:$0]  %s127, 384, %s129, [#allocation4], 128, 128, 8
    $region9: #{hero_model_forward.1} parent=1 // pred_fallthru
      _
    // Predicated region
    $region10: #{hero_model_forward.1} parent=1 // pred_check
      _
    $region11: #{hero_model_forward.1} parent=1 // pred_check_branch
      %136 = sbr.rel (0) target = $region13
    $region12: #{hero_model_forward.1} parent=1 // pred_region
      %138 = vsyncadd [#allocation7], 0
      %s139 = sshll.u32 %s5, 4
      %s140 = int_to_ptr.hbm [resolvable:$true] %s139
      %s141 = sshll.u32 [#allocation6], 4
      %s142 = int_to_ptr.vmem [resolvable:$true] %s141
      %147 = dma.hbm_to_vmem [thread:$0]  %s140, 384, %s142, [#allocation7], 128, 128, 8
    $region13: #{hero_model_forward.1} parent=1 // pred_fallthru
      _
    // Predicated region
    $region14: #{hero_model_forward.1} parent=1 // pred_check
      _
    $region15: #{hero_model_forward.1} parent=1 // pred_check_branch
      %149 = sbr.rel (0) target = $region17
    $region16: #{hero_model_forward.1} parent=1 // pred_region
      _
    $region17: #{hero_model_forward.1} parent=1 // pred_fallthru
      _
    // Predicated region
    $region18: #{hero_model_forward.1} parent=1 // pred_check
      _
    $region19: #{hero_model_forward.1} parent=1 // pred_check_branch
      %151 = sbr.rel (0) target = $region21
    $region20: #{hero_model_forward.1} parent=1 // pred_region
      _
    $region21: #{hero_model_forward.1} parent=1 // pred_fallthru
      _
    // Predicated region
    $region22: #{hero_model_forward.1} parent=1 // pred_check
      _
    $region23: #{hero_model_forward.1} parent=1 // pred_check_branch
      %153 = sbr.rel (0) target = $region25
    $region24: #{hero_model_forward.1} parent=1 // pred_region
      _
    $region25: #{hero_model_forward.1} parent=1 // pred_fallthru
      _
    // Predicated region
    $region26: #{hero_model_forward.1} parent=1 // pred_check
      _
    $region27: #{hero_model_forward.1} parent=1 // pred_check_branch
      %155 = sbr.rel (0) target = $region29
    $region28: #{hero_model_forward.1} parent=1 // pred_region
      %157 = vsyncadd [#allocation7], 0
      %s158 = sshll.u32 %s13, 4
      %s159 = int_to_ptr.hbm [resolvable:$true] %s158
      %s160 = sshll.u32 [#allocation8], 4
      %s161 = int_to_ptr.vmem [resolvable:$true] %s160
      %166 = dma.hbm_to_vmem [thread:$0]  %s159, 3072, %s161, [#allocation7], 512, 512, 32
    $region29: #{hero_model_forward.1} parent=1 // pred_fallthru
      _
    // Predicated region
    $region30: #{hero_model_forward.1} parent=1 // pred_check
      _
    $region31: #{hero_model_forward.1} parent=1 // pred_check_branch
      %168 = sbr.rel (0) target = $region33
    $region32: #{hero_model_forward.1} parent=1 // pred_region
      %170 = vsyncadd [#allocation10], 0
      %s171 = sshll.u32 %s15, 4
      %s172 = int_to_ptr.hbm [resolvable:$true] %s171
      %s173 = sshll.u32 [#allocation9], 4
      %s174 = int_to_ptr.vmem [resolvable:$true] %s173
      %179 = dma.hbm_to_vmem [thread:$0]  %s172, 3072, %s174, [#allocation10], 512, 512, 32
    $region33: #{hero_model_forward.1} parent=1 // pred_fallthru
      _
    // Predicated region
    $region34: #{hero_model_forward.1} parent=1 // pred_check
      _
    $region35: #{hero_model_forward.1} parent=1 // pred_check_branch
      %181 = sbr.rel (0) target = $region37
    $region36: #{hero_model_forward.1} parent=1 // pred_region
      _
    $region37: #{hero_model_forward.1} parent=1 // pred_fallthru
      _
    // Predicated region
    $region38: #{hero_model_forward.1} parent=1 // pred_check
      _
    $region39: #{hero_model_forward.1} parent=1 // pred_check_branch
      %183 = sbr.rel (0) target = $region41
    $region40: #{hero_model_forward.1} parent=1 // pred_region
      %185 = vsyncadd [#allocation10], 0
      %s186 = sshll.u32 %s19, 4
      %s187 = int_to_ptr.hbm [resolvable:$true] %s186
      %s188 = sshll.u32 [#allocation11], 4
      %s189 = int_to_ptr.vmem [resolvable:$true] %s188
      %194 = dma.hbm_to_vmem [thread:$0]  %s187, 3072, %s189, [#allocation10], 512, 512, 32
    $region41: #{hero_model_forward.1} parent=1 // pred_fallthru
      _
    // Predicated region
    $region42: #{hero_model_forward.1} parent=1 // pred_check
      _
    $region43: #{hero_model_forward.1} parent=1 // pred_check_branch
      %196 = sbr.rel (0) target = $region45
    $region44: #{hero_model_forward.1} parent=1 // pred_region
      %198 = vsyncadd [#allocation13], 0
      %s199 = sshll.u32 %s21, 4
      %s200 = int_to_ptr.hbm [resolvable:$true] %s199
      %s201 = sshll.u32 [#allocation12], 4
      %s202 = int_to_ptr.vmem [resolvable:$true] %s201
      %207 = dma.hbm_to_vmem [thread:$0]  %s200, 3072, %s202, [#allocation13], 512, 512, 32
    $region45: #{hero_model_forward.1} parent=1 // pred_fallthru
      _
    // Predicated region
    $region46: #{hero_model_forward.1} parent=1 // pred_check
      _
    $region47: #{hero_model_forward.1} parent=1 // pred_check_branch
      %209 = sbr.rel (0) target = $region49
    $region48: #{hero_model_forward.1} parent=1 // pred_region
      _
    $region49: #{hero_model_forward.1} parent=1 // pred_fallthru
      _
    // Predicated region
    $region50: #{hero_model_forward.1} parent=1 // pred_check
      _
    $region51: #{hero_model_forward.1} parent=1 // pred_check_branch
      %211 = sbr.rel (0) target = $region53
    $region52: #{hero_model_forward.1} parent=1 // pred_region
      %213 = vsyncadd [#allocation13], 0
      %s214 = sshll.u32 %s25, 4
      %s215 = int_to_ptr.hbm [resolvable:$true] %s214
      %s216 = sshll.u32 [#allocation14], 4
      %s217 = int_to_ptr.vmem [resolvable:$true] %s216
      %222 = dma.hbm_to_vmem [thread:$0]  %s215, 768, %s217, [#allocation13], 128, 128, 8
    $region53: #{hero_model_forward.1} parent=1 // pred_fallthru
      _
    // Predicated region
    $region54: #{hero_model_forward.1} parent=1 // pred_check
      _
    $region55: #{hero_model_forward.1} parent=1 // pred_check_branch
      %224 = sbr.rel (0) target = $region57
    $region56: #{hero_model_forward.1} parent=1 // pred_region
      _
    $region57: #{hero_model_forward.1} parent=1 // pred_fallthru
      _
    // Predicated region
    $region58: #{hero_model_forward.1} parent=1 // pred_check
      _
    $region59: #{hero_model_forward.1} parent=1 // pred_check_branch
      %226 = sbr.rel (0) target = $region61
    $region60: #{hero_model_forward.1} parent=1 // pred_region
      _
    $region61: #{hero_model_forward.1} parent=1 // pred_fallthru
      _
    // Predicated region
    $region62: #{hero_model_forward.1} parent=1 // pred_check
      _
    $region63: #{hero_model_forward.1} parent=1 // pred_check_branch
      %228 = sbr.rel (0) target = $region65
    $region64: #{hero_model_forward.1} parent=1 // pred_region
      %230 = vsyncadd [#allocation16], 0
      %s232 = sshll.u32 %s31, 4
      %s233 = int_to_ptr.hbm [resolvable:$true] %s232
      %s234 = sshll.u32 [#allocation15], 4
      %s235 = int_to_ptr.vmem [resolvable:$true] %s234
      %237 = dma.hbm_to_vmem [thread:$0]  %s233, 16, %s235, [#allocation16]
    $region65: #{hero_model_forward.1} parent=1 // pred_fallthru
      _
    // Predicated region
    $region66: #{hero_model_forward.1} parent=1 // pred_check
      _
    $region67: #{hero_model_forward.1} parent=1 // pred_check_branch
      %239 = sbr.rel (0) target = $region69
    $region68: #{hero_model_forward.1} parent=1 // pred_region
      %241 = vsyncadd [#allocation16], 0
      %s242 = sshll.u32 %s33, 4
      %s243 = int_to_ptr.hbm [resolvable:$true] %s242
      %s244 = sshll.u32 [#allocation17], 4
      %s245 = int_to_ptr.vmem [resolvable:$true] %s244
      %250 = dma.hbm_to_vmem [thread:$0]  %s243, 1024, %s245, [#allocation16], 128, 128, 8
    $region69: #{hero_model_forward.1} parent=1 // pred_fallthru
      _
    // Predicated region
    $region70: #{hero_model_forward.1} parent=1 // pred_check
      _
    $region71: #{hero_model_forward.1} parent=1 // pred_check_branch
      %252 = sbr.rel (0) target = $region73
    $region72: #{hero_model_forward.1} parent=1 // pred_region
      %254 = vsyncadd [#allocation19], 0
      %s256 = sshll.u32 %s35, 4
      %s257 = int_to_ptr.hbm [resolvable:$true] %s256
      %s258 = sshll.u32 [#allocation18], 4
      %s259 = int_to_ptr.vmem [resolvable:$true] %s258
      %261 = dma.hbm_to_vmem [thread:$0]  %s257, 16, %s259, [#allocation19]
    $region73: #{hero_model_forward.1} parent=1 // pred_fallthru
      _
    // Predicated region
    $region74: #{hero_model_forward.1} parent=1 // pred_check
      _
    $region75: #{hero_model_forward.1} parent=1 // pred_check_branch
      %263 = sbr.rel (0) target = $region77
    $region76: #{hero_model_forward.1} parent=1 // pred_region
      _
    $region77: #{hero_model_forward.1} parent=1 // pred_fallthru
      _
    // Predicated region
    $region78: #{hero_model_forward.1} parent=1 // pred_check
      _
    $region79: #{hero_model_forward.1} parent=1 // pred_check_branch
      %265 = sbr.rel (0) target = $region81
    $region80: #{hero_model_forward.1} parent=1 // pred_region
      %267 = vsyncadd [#allocation19], 0
      %s269 = sshll.u32 %s39, 4
      %s270 = int_to_ptr.hbm [resolvable:$true] %s269
      %s271 = sshll.u32 [#allocation20], 4
      %s272 = int_to_ptr.vmem [resolvable:$true] %s271
      %274 = dma.hbm_to_vmem [thread:$0]  %s270, 16, %s272, [#allocation19]
    $region81: #{hero_model_forward.1} parent=1 // pred_fallthru
      _
    // Predicated region
    $region82: #{hero_model_forward.1} parent=1 // pred_check
      _
    $region83: #{hero_model_forward.1} parent=1 // pred_check_branch
      %276 = sbr.rel (0) target = $region85
    $region84: #{hero_model_forward.1} parent=1 // pred_region
      %278 = vsyncadd [#allocation22], 0
      %s279 = sshll.u32 %s41, 4
      %s280 = int_to_ptr.hbm [resolvable:$true] %s279
      %s281 = sshll.u32 [#allocation21], 4
      %s282 = int_to_ptr.vmem [resolvable:$true] %s281
      %287 = dma.hbm_to_vmem [thread:$0]  %s280, 768, %s282, [#allocation22], 128, 128, 8
    $region85: #{hero_model_forward.1} parent=1 // pred_fallthru
      _
    // Predicated region
    $region86: #{hero_model_forward.1} parent=1 // pred_check
      _
    $region87: #{hero_model_forward.1} parent=1 // pred_check_branch
      %289 = sbr.rel (0) target = $region89
    $region88: #{hero_model_forward.1} parent=1 // pred_region
      %291 = vsyncadd [#allocation22], 0
      %s293 = sshll.u32 %s43, 4
      %s294 = int_to_ptr.hbm [resolvable:$true] %s293
      %s295 = sshll.u32 [#allocation23], 4
      %s296 = int_to_ptr.vmem [resolvable:$true] %s295
      %298 = dma.hbm_to_vmem [thread:$0]  %s294, 16, %s296, [#allocation22]
    $region89: #{hero_model_forward.1} parent=1 // pred_fallthru
      _
    // Predicated region
    $region90: #{hero_model_forward.1} parent=1 // pred_check
      _
    $region91: #{hero_model_forward.1} parent=1 // pred_check_branch
      %300 = sbr.rel (0) target = $region93
    $region92: #{hero_model_forward.1} parent=1 // pred_region
      _
    $region93: #{hero_model_forward.1} parent=1 // pred_fallthru
      _
    // Predicated region
    $region94: #{hero_model_forward.1} parent=1 // pred_check
      _
    $region95: #{hero_model_forward.1} parent=1 // pred_check_branch
      %302 = sbr.rel (0) target = $region97
    $region96: #{hero_model_forward.1} parent=1 // pred_region
      %304 = vsyncadd [#allocation25], 0
      %s306 = sshll.u32 %s47, 4
      %s307 = int_to_ptr.hbm [resolvable:$true] %s306
      %s308 = sshll.u32 [#allocation24], 4
      %s309 = int_to_ptr.vmem [resolvable:$true] %s308
      %311 = dma.hbm_to_vmem [thread:$0]  %s307, 16, %s309, [#allocation25]
    $region97: #{hero_model_forward.1} parent=1 // pred_fallthru
      _
    // Predicated region
    $region98: #{hero_model_forward.1} parent=1 // pred_check
      _
    $region99: #{hero_model_forward.1} parent=1 // pred_check_branch
      %313 = sbr.rel (0) target = $region101
    $region100: #{hero_model_forward.1} parent=1 // pred_region
      %315 = vsyncadd [#allocation25], 0
      %s316 = sshll.u32 %s49, 4
      %s317 = int_to_ptr.hbm [resolvable:$true] %s316
      %s318 = sshll.u32 [#allocation26], 4
      %s319 = int_to_ptr.vmem [resolvable:$true] %s318
      %324 = dma.hbm_to_vmem [thread:$0]  %s317, 1408, %s319, [#allocation25], 128, 128, 8
    $region101: #{hero_model_forward.1} parent=1 // pred_fallthru
      _
    // Predicated region
    $region102: #{hero_model_forward.1} parent=1 // pred_check
      _
    $region103: #{hero_model_forward.1} parent=1 // pred_check_branch
      %326 = sbr.rel (0) target = $region105
    $region104: #{hero_model_forward.1} parent=1 // pred_region
      %328 = vsyncadd [#allocation28], 0
      %s330 = sshll.u32 %s51, 4
      %s331 = int_to_ptr.hbm [resolvable:$true] %s330
      %s332 = sshll.u32 [#allocation27], 4
      %s333 = int_to_ptr.vmem [resolvable:$true] %s332
      %335 = dma.hbm_to_vmem [thread:$0]  %s331, 16, %s333, [#allocation28]
    $region105: #{hero_model_forward.1} parent=1 // pred_fallthru
      _
    // Predicated region
    $region106: #{hero_model_forward.1} parent=1 // pred_check
      _
    $region107: #{hero_model_forward.1} parent=1 // pred_check_branch
      %337 = sbr.rel (0) target = $region109
    $region108: #{hero_model_forward.1} parent=1 // pred_region
      _
    $region109: #{hero_model_forward.1} parent=1 // pred_fallthru
      _
    // Predicated region
    $region110: #{hero_model_forward.1} parent=1 // pred_check
      _
    $region111: #{hero_model_forward.1} parent=1 // pred_check_branch
      %339 = sbr.rel (0) target = $region113
    $region112: #{hero_model_forward.1} parent=1 // pred_region
      %341 = vsyncadd [#allocation28], 0
      %s343 = sshll.u32 %s55, 4
      %s344 = int_to_ptr.hbm [resolvable:$true] %s343
      %s345 = sshll.u32 [#allocation29], 4
      %s346 = int_to_ptr.vmem [resolvable:$true] %s345
      %348 = dma.hbm_to_vmem [thread:$0]  %s344, 16, %s346, [#allocation28]
    $region113: #{hero_model_forward.1} parent=1 // pred_fallthru
      _
    // Predicated region
    $region114: #{hero_model_forward.1} parent=1 // pred_check
      _
    $region115: #{hero_model_forward.1} parent=1 // pred_check_branch
      %350 = sbr.rel (0) target = $region117
    $region116: #{hero_model_forward.1} parent=1 // pred_region
      _
    $region117: #{hero_model_forward.1} parent=1 // pred_fallthru
      _
    // Predicated region
    $region118: #{hero_model_forward.1} parent=1 // pred_check
      _
    $region119: #{hero_model_forward.1} parent=1 // pred_check_branch
      %352 = sbr.rel (0) target = $region121
    $region120: #{hero_model_forward.1} parent=1 // pred_region
      _
    $region121: #{hero_model_forward.1} parent=1 // pred_fallthru
      _
    // Predicated region
    $region122: #{hero_model_forward.1} parent=1 // pred_check
      _
    $region123: #{hero_model_forward.1} parent=1 // pred_check_branch
      %354 = sbr.rel (0) target = $region125
    $region124: #{hero_model_forward.1} parent=1 // pred_region
      %356 = vsyncadd [#allocation31], 0
      %s357 = sshll.u32 %s61, 4
      %s358 = int_to_ptr.hbm [resolvable:$true] %s357
      %s359 = sshll.u32 [#allocation30], 4
      %s360 = int_to_ptr.vmem [resolvable:$true] %s359
      %365 = dma.hbm_to_vmem [thread:$0]  %s358, 640, %s360, [#allocation31], 128, 128, 8
    $region125: #{hero_model_forward.1} parent=1 // pred_fallthru
      _
    // Predicated region
    $region126: #{hero_model_forward.1} parent=1 // pred_check
      _
    $region127: #{hero_model_forward.1} parent=1 // pred_check_branch
      %367 = sbr.rel (0) target = $region129
    $region128: #{hero_model_forward.1} parent=1 // pred_region
      _
    $region129: #{hero_model_forward.1} parent=1 // pred_fallthru
      _
    // Predicated region
    $region130: #{hero_model_forward.1} parent=1 // pred_check
      _
    $region131: #{hero_model_forward.1} parent=1 // pred_check_branch
      %369 = sbr.rel (0) target = $region133
    $region132: #{hero_model_forward.1} parent=1 // pred_region
      %371 = vsyncadd [#allocation31], 0
      %s372 = sshll.u32 %s65, 4
      %s373 = int_to_ptr.hbm [resolvable:$true] %s372
      %s374 = sshll.u32 [#allocation32], 4
      %s375 = int_to_ptr.vmem [resolvable:$true] %s374
      %380 = dma.hbm_to_vmem [thread:$0]  %s373, 640, %s375, [#allocation31], 128, 128, 8
    $region133: #{hero_model_forward.1} parent=1 // pred_fallthru
      _
    // Predicated region
    $region134: #{hero_model_forward.1} parent=1 // pred_check
      _
    $region135: #{hero_model_forward.1} parent=1 // pred_check_branch
      %382 = sbr.rel (0) target = $region137
    $region136: #{hero_model_forward.1} parent=1 // pred_region
      _
    $region137: #{hero_model_forward.1} parent=1 // pred_fallthru
      _
    // Predicated region
    $region138: #{hero_model_forward.1} parent=1 // pred_check
      _
    $region139: #{hero_model_forward.1} parent=1 // pred_check_branch
      %384 = sbr.rel (0) target = $region141
    $region140: #{hero_model_forward.1} parent=1 // pred_region
      _
    $region141: #{hero_model_forward.1} parent=1 // pred_fallthru
      _
    // Predicated region
    $region142: #{hero_model_forward.1} parent=1 // pred_check
      _
    $region143: #{hero_model_forward.1} parent=1 // pred_check_branch
      %386 = sbr.rel (0) target = $region145
    $region144: #{hero_model_forward.1} parent=1 // pred_region
      _
    $region145: #{hero_model_forward.1} parent=1 // pred_fallthru
      _
    // Predicated region
    $region146: #{hero_model_forward.1} parent=1 // pred_check
      _
    $region147: #{hero_model_forward.1} parent=1 // pred_check_branch
      %388 = sbr.rel (0) target = $region149
    $region148: #{hero_model_forward.1} parent=1 // pred_region
      _
    $region149: #{hero_model_forward.1} parent=1 // pred_fallthru
      _
    // Predicated region
    $region150: #{hero_model_forward.1} parent=1 // pred_check
      _
    $region151: #{hero_model_forward.1} parent=1 // pred_check_branch
      %390 = sbr.rel (0) target = $region153
    $region152: #{hero_model_forward.1} parent=1 // pred_region
      _
    $region153: #{hero_model_forward.1} parent=1 // pred_fallthru
      _
    // Predicated region
    $region154: #{hero_model_forward.1} parent=1 // pred_check
      _
    $region155: #{hero_model_forward.1} parent=1 // pred_check_branch
      %392 = sbr.rel (0) target = $region157
    $region156: #{hero_model_forward.1} parent=1 // pred_region
      _
    $region157: #{hero_model_forward.1} parent=1 // pred_fallthru
      _
    // Predicated region
    $region158: #{hero_model_forward.1} parent=1 // pred_check
      _
    $region159: #{hero_model_forward.1} parent=1 // pred_check_branch
      %394 = sbr.rel (0) target = $region161
    $region160: #{hero_model_forward.1} parent=1 // pred_region
      _
    $region161: #{hero_model_forward.1} parent=1 // pred_fallthru
      _
    // Predicated region
    $region162: #{hero_model_forward.1} parent=1 // pred_check
      _
    $region163: #{hero_model_forward.1} parent=1 // pred_check_branch
      %396 = sbr.rel (0) target = $region165
    $region164: #{hero_model_forward.1} parent=1 // pred_region
      %398 = vsyncadd [#allocation34], 0
      %s399 = sshll.u32 %s81, 4
      %s400 = int_to_ptr.hbm [resolvable:$true] %s399
      %s401 = sshll.u32 [#allocation33], 4
      %s402 = int_to_ptr.vmem [resolvable:$true] %s401
      %407 = dma.hbm_to_vmem [thread:$0]  %s400, 46080, %s402, [#allocation34], 640, 640, 40
    $region165: #{hero_model_forward.1} parent=1 // pred_fallthru
      _
    // Predicated region
    $region166: #{hero_model_forward.1} parent=1 // pred_check
      _
    $region167: #{hero_model_forward.1} parent=1 // pred_check_branch
      %409 = sbr.rel (0) target = $region169
    $region168: #{hero_model_forward.1} parent=1 // pred_region
      _
    $region169: #{hero_model_forward.1} parent=1 // pred_fallthru
      _
    // Predicated region
    $region170: #{hero_model_forward.1} parent=1 // pred_check
      _
    $region171: #{hero_model_forward.1} parent=1 // pred_check_branch
      %411 = sbr.rel (0) target = $region173
    $region172: #{hero_model_forward.1} parent=1 // pred_region
      _
    $region173: #{hero_model_forward.1} parent=1 // pred_fallthru
      _
    // Predicated region
    $region174: #{hero_model_forward.1} parent=1 // pred_check
      _
    $region175: #{hero_model_forward.1} parent=1 // pred_check_branch
      %413 = sbr.rel (0) target = $region177
    $region176: #{hero_model_forward.1} parent=1 // pred_region
      %415 = vsyncadd [#allocation34], 0
      %s417 = sshll.u32 %s87, 4
      %s418 = int_to_ptr.hbm [resolvable:$true] %s417
      %s419 = sshll.u32 [#allocation35], 4
      %s420 = int_to_ptr.vmem [resolvable:$true] %s419
      %422 = dma.hbm_to_vmem [thread:$0]  %s418, 48, %s420, [#allocation34]
    $region177: #{hero_model_forward.1} parent=1 // pred_fallthru
      _
    // Predicated region
    $region178: #{hero_model_forward.1} parent=1 // pred_check
      _
    $region179: #{hero_model_forward.1} parent=1 // pred_check_branch
      %424 = sbr.rel (0) target = $region181
    $region180: #{hero_model_forward.1} parent=1 // pred_region
      _
    $region181: #{hero_model_forward.1} parent=1 // pred_fallthru
      _
    // Predicated region
    $region182: #{hero_model_forward.1} parent=1 // pred_check
      _
    $region183: #{hero_model_forward.1} parent=1 // pred_check_branch
      %426 = sbr.rel (0) target = $region185
    $region184: #{hero_model_forward.1} parent=1 // pred_region
      _
    $region185: #{hero_model_forward.1} parent=1 // pred_fallthru
      _
    // Predicated region
    $region186: #{hero_model_forward.1} parent=1 // pred_check
      _
    $region187: #{hero_model_forward.1} parent=1 // pred_check_branch
      %428 = sbr.rel (0) target = $region189
    $region188: #{hero_model_forward.1} parent=1 // pred_region
      _
    $region189: #{hero_model_forward.1} parent=1 // pred_fallthru
      _
    // Predicated region
    $region190: #{hero_model_forward.1} parent=1 // pred_check
      _
    $region191: #{hero_model_forward.1} parent=1 // pred_check_branch
      %430 = sbr.rel (0) target = $region193
    $region192: #{hero_model_forward.1} parent=1 // pred_region
      _
    $region193: #{hero_model_forward.1} parent=1 // pred_fallthru
      _
    // Predicated region
    $region194: #{hero_model_forward.1} parent=1 // pred_check
      _
    $region195: #{hero_model_forward.1} parent=1 // pred_check_branch
      %432 = sbr.rel (0) target = $region197
    $region196: #{hero_model_forward.1} parent=1 // pred_region
      %434 = dma.done [#allocation4], 384
    $region197: #{hero_model_forward.1} parent=1 // pred_fallthru
      _
    // Predicated region
    $region198: #{hero_model_forward.1} parent=1 // pred_check
      _
    $region199: #{hero_model_forward.1} parent=1 // pred_check_branch
      %436 = sbr.rel (0) target = $region201
    $region200: #{hero_model_forward.1} parent=1 // pred_region
      %438 = dma.done [#allocation7], 384
    $region201: #{hero_model_forward.1} parent=1 // pred_fallthru
      _
    // Predicated region
    $region202: #{hero_model_forward.1} parent=1 // pred_check
      _
    $region203: #{hero_model_forward.1} parent=1 // pred_check_branch
      %440 = sbr.rel (0) target = $region205
    $region204: #{hero_model_forward.1} parent=1 // pred_region
      %442 = dma.done [#allocation7], 3072
    $region205: #{hero_model_forward.1} parent=1 // pred_fallthru
      _
    // Predicated region
    $region206: #{hero_model_forward.1} parent=1 // pred_check
      _
    $region207: #{hero_model_forward.1} parent=1 // pred_check_branch
      %444 = sbr.rel (0) target = $region209
    $region208: #{hero_model_forward.1} parent=1 // pred_region
      %446 = dma.done [#allocation10], 3072
    $region209: #{hero_model_forward.1} parent=1 // pred_fallthru
      _
    // Predicated region
    $region210: #{hero_model_forward.1} parent=1 // pred_check
      _
    $region211: #{hero_model_forward.1} parent=1 // pred_check_branch
      %448 = sbr.rel (0) target = $region213
    $region212: #{hero_model_forward.1} parent=1 // pred_region
      %450 = dma.done [#allocation10], 3072
    $region213: #{hero_model_forward.1} parent=1 // pred_fallthru
      _
    // Predicated region
    $region214: #{hero_model_forward.1} parent=1 // pred_check
      _
    $region215: #{hero_model_forward.1} parent=1 // pred_check_branch
      %452 = sbr.rel (0) target = $region217
    $region216: #{hero_model_forward.1} parent=1 // pred_region
      %454 = dma.done [#allocation13], 3072
    $region217: #{hero_model_forward.1} parent=1 // pred_fallthru
      _
    // Predicated region
    $region218: #{hero_model_forward.1} parent=1 // pred_check
      _
    $region219: #{hero_model_forward.1} parent=1 // pred_check_branch
      %456 = sbr.rel (0) target = $region221
    $region220: #{hero_model_forward.1} parent=1 // pred_region
      %458 = dma.done [#allocation13], 768
    $region221: #{hero_model_forward.1} parent=1 // pred_fallthru
      _
    // Predicated region
    $region222: #{hero_model_forward.1} parent=1 // pred_check
      _
    $region223: #{hero_model_forward.1} parent=1 // pred_check_branch
      %460 = sbr.rel (0) target = $region225
    $region224: #{hero_model_forward.1} parent=1 // pred_region
      %462 = dma.done [#allocation16], 16
    $region225: #{hero_model_forward.1} parent=1 // pred_fallthru
      _
    // Predicated region
    $region226: #{hero_model_forward.1} parent=1 // pred_check
      _
    $region227: #{hero_model_forward.1} parent=1 // pred_check_branch
      %464 = sbr.rel (0) target = $region229
    $region228: #{hero_model_forward.1} parent=1 // pred_region
      %466 = dma.done [#allocation16], 1024
    $region229: #{hero_model_forward.1} parent=1 // pred_fallthru
      _
    // Predicated region
    $region230: #{hero_model_forward.1} parent=1 // pred_check
      _
    $region231: #{hero_model_forward.1} parent=1 // pred_check_branch
      %468 = sbr.rel (0) target = $region233
    $region232: #{hero_model_forward.1} parent=1 // pred_region
      %470 = dma.done [#allocation19], 16
    $region233: #{hero_model_forward.1} parent=1 // pred_fallthru
      _
    // Predicated region
    $region234: #{hero_model_forward.1} parent=1 // pred_check
      _
    $region235: #{hero_model_forward.1} parent=1 // pred_check_branch
      %472 = sbr.rel (0) target = $region237
    $region236: #{hero_model_forward.1} parent=1 // pred_region
      %474 = dma.done [#allocation19], 16
    $region237: #{hero_model_forward.1} parent=1 // pred_fallthru
      _
    // Predicated region
    $region238: #{hero_model_forward.1} parent=1 // pred_check
      _
    $region239: #{hero_model_forward.1} parent=1 // pred_check_branch
      %476 = sbr.rel (0) target = $region241
    $region240: #{hero_model_forward.1} parent=1 // pred_region
      %478 = dma.done [#allocation22], 768
    $region241: #{hero_model_forward.1} parent=1 // pred_fallthru
      _
    // Predicated region
    $region242: #{hero_model_forward.1} parent=1 // pred_check
      _
    $region243: #{hero_model_forward.1} parent=1 // pred_check_branch
      %480 = sbr.rel (0) target = $region245
    $region244: #{hero_model_forward.1} parent=1 // pred_region
      %482 = dma.done [#allocation22], 16
    $region245: #{hero_model_forward.1} parent=1 // pred_fallthru
      _
    // Predicated region
    $region246: #{hero_model_forward.1} parent=1 // pred_check
      _
    $region247: #{hero_model_forward.1} parent=1 // pred_check_branch
      %484 = sbr.rel (0) target = $region249
    $region248: #{hero_model_forward.1} parent=1 // pred_region
      %486 = dma.done [#allocation25], 16
    $region249: #{hero_model_forward.1} parent=1 // pred_fallthru
      _
    // Predicated region
    $region250: #{hero_model_forward.1} parent=1 // pred_check
      _
    $region251: #{hero_model_forward.1} parent=1 // pred_check_branch
      %488 = sbr.rel (0) target = $region253
    $region252: #{hero_model_forward.1} parent=1 // pred_region
      %490 = dma.done [#allocation25], 1408
    $region253: #{hero_model_forward.1} parent=1 // pred_fallthru
      _
    // Predicated region
    $region254: #{hero_model_forward.1} parent=1 // pred_check
      _
    $region255: #{hero_model_forward.1} parent=1 // pred_check_branch
      %492 = sbr.rel (0) target = $region257
    $region256: #{hero_model_forward.1} parent=1 // pred_region
      %494 = dma.done [#allocation28], 16
    $region257: #{hero_model_forward.1} parent=1 // pred_fallthru
      _
    // Predicated region
    $region258: #{hero_model_forward.1} parent=1 // pred_check
      _
    $region259: #{hero_model_forward.1} parent=1 // pred_check_branch
      %496 = sbr.rel (0) target = $region261
    $region260: #{hero_model_forward.1} parent=1 // pred_region
      %498 = dma.done [#allocation28], 16
    $region261: #{hero_model_forward.1} parent=1 // pred_fallthru
      _
    // Predicated region
    $region262: #{hero_model_forward.1} parent=1 // pred_check
      _
    $region263: #{hero_model_forward.1} parent=1 // pred_check_branch
      %500 = sbr.rel (0) target = $region265
    $region264: #{hero_model_forward.1} parent=1 // pred_region
      %502 = dma.done [#allocation31], 640
    $region265: #{hero_model_forward.1} parent=1 // pred_fallthru
      _
    // Predicated region
    $region266: #{hero_model_forward.1} parent=1 // pred_check
      _
    $region267: #{hero_model_forward.1} parent=1 // pred_check_branch
      %504 = sbr.rel (0) target = $region269
    $region268: #{hero_model_forward.1} parent=1 // pred_region
      %506 = dma.done [#allocation31], 640
    $region269: #{hero_model_forward.1} parent=1 // pred_fallthru
      _
    // Predicated region
    $region270: #{hero_model_forward.1} parent=1 // pred_check
      _
    $region271: #{hero_model_forward.1} parent=1 // pred_check_branch
      %508 = sbr.rel (0) target = $region273
    $region272: #{hero_model_forward.1} parent=1 // pred_region
      %510 = dma.done [#allocation34], 46080
    $region273: #{hero_model_forward.1} parent=1 // pred_fallthru
      _
    // Predicated region
    $region274: #{hero_model_forward.1} parent=1 // pred_check
      _
    $region275: #{hero_model_forward.1} parent=1 // pred_check_branch
      %512 = sbr.rel (0) target = $region277
    $region276: #{hero_model_forward.1} parent=1 // pred_region
      %514 = dma.done [#allocation34], 48
    $region277: #{hero_model_forward.1} parent=1 // pred_fallthru
      _
    %v516 = vld [vmem:[%s1] sm:$0xff]
    %v517 = vld [vmem:[%s1 + $0x8] sm:$0xff]
    %v518 = vld [vmem:[%s1 + $0x10] sm:$0xff]
    %v519 = vld [vmem:[%s1 + $0x18] sm:$0xff]
    %v520 = vld [vmem:[%s1 + $0x20] sm:$0xff]
    %v521 = vld [vmem:[%s1 + $0x28] sm:$0xff]
    %v522 = vld [vmem:[%s1 + $0x30] sm:$0xff]
    %v523 = vld [vmem:[%s1 + $0x38] sm:$0xff]
    %v524 = vld [vmem:[%s7] sm:$0xff]
    %v525 = vld [vmem:[%s7 + $0x8] sm:$0xff]
    %v526 = vld [vmem:[%s7 + $0x10] sm:$0xff]
    %v527 = vld [vmem:[%s7 + $0x18] sm:$0xff]
    %v528 = vld [vmem:[%s7 + $0x20] sm:$0xff]
    %v529 = vld [vmem:[%s7 + $0x28] sm:$0xff]
    %v530 = vld [vmem:[%s7 + $0x30] sm:$0xff]
    %v531 = vld [vmem:[%s7 + $0x38] sm:$0xff]
    %v532 = vld [vmem:[%s7 + $0x40] sm:$0xff]
    %v533 = vld [vmem:[%s7 + $0x48] sm:$0xff]
    %v534 = vld [vmem:[%s7 + $0x50] sm:$0xff]
    %v535 = vld [vmem:[%s7 + $0x58] sm:$0xff]
    %v536 = vld [vmem:[%s7 + $0x60] sm:$0xff]
    %v537 = vld [vmem:[%s7 + $0x68] sm:$0xff]
    %v538 = vld [vmem:[%s7 + $0x70] sm:$0xff]
    %v539 = vld [vmem:[%s7 + $0x78] sm:$0xff]
    %v540 = vld [vmem:[%s7 + $0x80] sm:$0xff]
    %v541 = vld [vmem:[%s7 + $0x88] sm:$0xff]
    %v542 = vld [vmem:[%s7 + $0x90] sm:$0xff]
    %v543 = vld [vmem:[%s7 + $0x98] sm:$0xff]
    %v544 = vld [vmem:[%s7 + $0xa0] sm:$0xff]
    %v545 = vld [vmem:[%s7 + $0xa8] sm:$0xff]
    %v546 = vld [vmem:[%s7 + $0xb0] sm:$0xff]
    %v547 = vld [vmem:[%s7 + $0xb8] sm:$0xff]
    %v548 = vld [vmem:[%s7 + $0xc0] sm:$0xff]
    %v549 = vld [vmem:[%s7 + $0xc8] sm:$0xff]
    %v550 = vld [vmem:[%s7 + $0xd0] sm:$0xff]
    %v551 = vld [vmem:[%s7 + $0xd8] sm:$0xff]
    %v552 = vld [vmem:[%s7 + $0xe0] sm:$0xff]
    %v553 = vld [vmem:[%s7 + $0xe8] sm:$0xff]
    %v554 = vld [vmem:[%s7 + $0xf0] sm:$0xff]
    %v555 = vld [vmem:[%s7 + $0xf8] sm:$0xff]
    %v556 = vld [vmem:[%s7 + $0x100] sm:$0xff]
    %v557 = vld [vmem:[%s7 + $0x108] sm:$0xff]
    %v558 = vld [vmem:[%s7 + $0x110] sm:$0xff]
    %v559 = vld [vmem:[%s7 + $0x118] sm:$0xff]
    %v560 = vld [vmem:[%s7 + $0x120] sm:$0xff]
    %v561 = vld [vmem:[%s7 + $0x128] sm:$0xff]
    %v562 = vld [vmem:[%s7 + $0x130] sm:$0xff]
    %v563 = vld [vmem:[%s7 + $0x138] sm:$0xff]
    %v564 = vpack.c.bf16 %v517, %v516
    %v565 = vpack.c.bf16 %v519, %v518
    %v566 = vpack.c.bf16 %v521, %v520
    %v567 = vpack.c.bf16 %v523, %v522
    %v568 = vpack.c.bf16 %v528, %v524
    %v569 = vpack.c.bf16 %v529, %v525
    %v570 = vpack.c.bf16 %v530, %v526
    %v571 = vpack.c.bf16 %v531, %v527
    %v572 = vpack.c.bf16 %v536, %v532
    %v573 = vpack.c.bf16 %v537, %v533
    %v574 = vpack.c.bf16 %v538, %v534
    %v575 = vpack.c.bf16 %v539, %v535
    %v576 = vpack.c.bf16 %v544, %v540
    %v577 = vpack.c.bf16 %v545, %v541
    %v578 = vpack.c.bf16 %v546, %v542
    %v579 = vpack.c.bf16 %v547, %v543
    %v580 = vpack.c.bf16 %v552, %v548
    %v581 = vpack.c.bf16 %v553, %v549
    %v582 = vpack.c.bf16 %v554, %v550
    %v583 = vpack.c.bf16 %v555, %v551
    %v584 = vpack.c.bf16 %v560, %v556
    %v585 = vpack.c.bf16 %v561, %v557
    %v586 = vpack.c.bf16 %v562, %v558
    %v587 = vpack.c.bf16 %v563, %v559
    %v588 = vld [vmem:[%s11] sm:$0xf]
    %v590 = vperm.slane %v588, 0
    %v591 = vperm.slane %v588, 1
    %v592 = vperm.slane %v588, 2
    %v593 = vperm.slane %v588, 3
    %vm598 = vcmask 654336
    %v600 = vsel %vm598, %v564, 0
    %v603 = vsel %vm598, %v565, 0
    %v606 = vsel %vm598, %v566, 0
    %v609 = vsel %vm598, %v567, 0
    %611 = vmatpush.bf16.msra.mxu0 0
    %612 = vmatpush.bf16.msra.mxu0 0
    %613 = vmatpush.bf16.msra.mxu0 0
    %614 = vmatpush.bf16.msra.mxu0 %v584
    %615 = vmatpush.bf16.msra.mxu0 %v580
    %616 = vmatpush.bf16.msra.mxu0 %v576
    %617 = vmatpush.bf16.msra.mxu0 %v572
    %618 = vmatpush.bf16.msra.mxu0 %v568
    %619 = vmatmul.bf16.gmra.mxu0 %v600
    %v620 = vpop.f32.mrf.mxu0
    %v621 = vadd.f32 %v590, %v620
    %v622 = vpop.f32.mrf.mxu0
    %v623 = vadd.f32 %v590, %v622
    %624 = vmatmul.bf16.gmra.mxu0 %v603
    %v625 = vpop.f32.mrf.mxu0
    %v626 = vadd.f32 %v590, %v625
    %v627 = vpop.f32.mrf.mxu0
    %v628 = vadd.f32 %v590, %v627
    %629 = vmatmul.bf16.gmra.mxu0 %v606
    %v630 = vpop.f32.mrf.mxu0
    %v631 = vadd.f32 %v590, %v630
    %v632 = vpop.f32.mrf.mxu0
    %v633 = vadd.f32 %v590, %v632
    %634 = vmatmul.bf16.gmra.mxu0 %v609
    %v635 = vpop.f32.mrf.mxu0
    %v636 = vadd.f32 %v590, %v635
    %v637 = vpop.f32.mrf.mxu0
    %v638 = vadd.f32 %v590, %v637
    %639 = vdwg.mxu0
    %640 = vmatpush.bf16.msra.mxu0 0
    %641 = vmatpush.bf16.msra.mxu0 0
    %642 = vmatpush.bf16.msra.mxu0 0
    %643 = vmatpush.bf16.msra.mxu0 %v585
    %644 = vmatpush.bf16.msra.mxu0 %v581
    %645 = vmatpush.bf16.msra.mxu0 %v577
    %646 = vmatpush.bf16.msra.mxu0 %v573
    %647 = vmatpush.bf16.msra.mxu0 %v569
    %648 = vmatmul.bf16.gmra.mxu0 %v600
    %v649 = vpop.f32.mrf.mxu0
    %v650 = vadd.f32 %v591, %v649
    %v651 = vpop.f32.mrf.mxu0
    %v652 = vadd.f32 %v591, %v651
    %653 = vmatmul.bf16.gmra.mxu0 %v603
    %v654 = vpop.f32.mrf.mxu0
    %v655 = vadd.f32 %v591, %v654
    %v656 = vpop.f32.mrf.mxu0
    %v657 = vadd.f32 %v591, %v656
    %658 = vmatmul.bf16.gmra.mxu0 %v606
    %v659 = vpop.f32.mrf.mxu0
    %v660 = vadd.f32 %v591, %v659
    %v661 = vpop.f32.mrf.mxu0
    %v662 = vadd.f32 %v591, %v661
    %663 = vmatmul.bf16.gmra.mxu0 %v609
    %v664 = vpop.f32.mrf.mxu0
    %v665 = vadd.f32 %v591, %v664
    %v666 = vpop.f32.mrf.mxu0
    %v667 = vadd.f32 %v591, %v666
    %668 = vdwg.mxu0
    %669 = vmatpush.bf16.msra.mxu0 0
    %670 = vmatpush.bf16.msra.mxu0 0
    %671 = vmatpush.bf16.msra.mxu0 0
    %672 = vmatpush.bf16.msra.mxu0 %v586
    %673 = vmatpush.bf16.msra.mxu0 %v582
    %674 = vmatpush.bf16.msra.mxu0 %v578
    %675 = vmatpush.bf16.msra.mxu0 %v574
    %676 = vmatpush.bf16.msra.mxu0 %v570
    %677 = vmatmul.bf16.gmra.mxu0 %v600
    %v678 = vpop.f32.mrf.mxu0
    %v679 = vadd.f32 %v592, %v678
    %v680 = vpop.f32.mrf.mxu0
    %v681 = vadd.f32 %v592, %v680
    %682 = vmatmul.bf16.gmra.mxu0 %v603
    %v683 = vpop.f32.mrf.mxu0
    %v684 = vadd.f32 %v592, %v683
    %v685 = vpop.f32.mrf.mxu0
    %v686 = vadd.f32 %v592, %v685
    %687 = vmatmul.bf16.gmra.mxu0 %v606
    %v688 = vpop.f32.mrf.mxu0
    %v689 = vadd.f32 %v592, %v688
    %v690 = vpop.f32.mrf.mxu0
    %v691 = vadd.f32 %v592, %v690
    %692 = vmatmul.bf16.gmra.mxu0 %v609
    %v693 = vpop.f32.mrf.mxu0
    %v694 = vadd.f32 %v592, %v693
    %v695 = vpop.f32.mrf.mxu0
    %v696 = vadd.f32 %v592, %v695
    %697 = vdwg.mxu0
    %698 = vmatpush.bf16.msra.mxu0 0
    %699 = vmatpush.bf16.msra.mxu0 0
    %700 = vmatpush.bf16.msra.mxu0 0
    %701 = vmatpush.bf16.msra.mxu0 %v587
    %702 = vmatpush.bf16.msra.mxu0 %v583
    %703 = vmatpush.bf16.msra.mxu0 %v579
    %704 = vmatpush.bf16.msra.mxu0 %v575
    %705 = vmatpush.bf16.msra.mxu0 %v571
    %706 = vmatmul.bf16.gmra.mxu0 %v600
    %v707 = vpop.f32.mrf.mxu0
    %v708 = vadd.f32 %v593, %v707
    %v709 = vpop.f32.mrf.mxu0
    %v710 = vadd.f32 %v593, %v709
    %711 = vmatmul.bf16.gmra.mxu0 %v603
    %v712 = vpop.f32.mrf.mxu0
    %v713 = vadd.f32 %v593, %v712
    %v714 = vpop.f32.mrf.mxu0
    %v715 = vadd.f32 %v593, %v714
    %716 = vmatmul.bf16.gmra.mxu0 %v606
    %v717 = vpop.f32.mrf.mxu0
    %v718 = vadd.f32 %v593, %v717
    %v719 = vpop.f32.mrf.mxu0
    %v720 = vadd.f32 %v593, %v719
    %721 = vmatmul.bf16.gmra.mxu0 %v609
    %v722 = vpop.f32.mrf.mxu0
    %v723 = vadd.f32 %v593, %v722
    %v724 = vpop.f32.mrf.mxu0
    %v725 = vadd.f32 %v593, %v724
    %726 = vdwg.mxu0
    %v727 = vld [vmem:[%s9] sm:$0xff]
    %v728 = vld [vmem:[%s9 + $0x8] sm:$0xff]
    %v729 = vld [vmem:[%s9 + $0x10] sm:$0xff]
    %v730 = vld [vmem:[%s9 + $0x18] sm:$0xff]
    %v731 = vld [vmem:[%s9 + $0x20] sm:$0xff]
    %v732 = vld [vmem:[%s9 + $0x28] sm:$0xff]
    %v733 = vld [vmem:[%s9 + $0x30] sm:$0xff]
    %v734 = vld [vmem:[%s9 + $0x38] sm:$0xff]
    %v735 = vld [vmem:[%s9 + $0x40] sm:$0xff]
    %v736 = vld [vmem:[%s9 + $0x48] sm:$0xff]
    %v737 = vld [vmem:[%s9 + $0x50] sm:$0xff]
    %v738 = vld [vmem:[%s9 + $0x58] sm:$0xff]
    %v739 = vld [vmem:[%s9 + $0x60] sm:$0xff]
    %v740 = vld [vmem:[%s9 + $0x68] sm:$0xff]
    %v741 = vld [vmem:[%s9 + $0x70] sm:$0xff]
    %v742 = vld [vmem:[%s9 + $0x78] sm:$0xff]
    %v743 = vld [vmem:[%s9 + $0x80] sm:$0xff]
    %v744 = vld [vmem:[%s9 + $0x88] sm:$0xff]
    %v745 = vld [vmem:[%s9 + $0x90] sm:$0xff]
    %v746 = vld [vmem:[%s9 + $0x98] sm:$0xff]
    %v747 = vld [vmem:[%s9 + $0xa0] sm:$0xf]
    %v748 = vld [vmem:[%s9 + $0xa8] sm:$0xf]
    %v749 = vld [vmem:[%s9 + $0xb0] sm:$0xf]
    %v750 = vld [vmem:[%s9 + $0xb8] sm:$0xf]
    %v751 = vpack.c.bf16 %v731, %v727
    %v752 = vpack.c.bf16 %v732, %v728
    %v753 = vpack.c.bf16 %v733, %v729
    %v754 = vpack.c.bf16 %v734, %v730
    %v755 = vpack.c.bf16 %v739, %v735
    %v756 = vpack.c.bf16 %v740, %v736
    %v757 = vpack.c.bf16 %v741, %v737
    %v758 = vpack.c.bf16 %v742, %v738
    %v759 = vpack.c.bf16 %v747, %v743
    %v760 = vpack.c.bf16 %v748, %v744
    %v761 = vpack.c.bf16 %v749, %v745
    %v762 = vpack.c.bf16 %v750, %v746
    %v763 = vld [vmem:[#allocation3] sm:$0xff]
    %v764 = vld [vmem:[#allocation6] sm:$0xff]
    %v765 = vpack.c.bf16 %v763, %v763
    %vm766 = vcmask 359424
    %v768 = vsel %vm766, %v765, 0
    %vm770 = vcmask 1045504
    %v772 = vsel %vm770, %v759, 0
    %v775 = vsel %vm770, %v760, 0
    %v778 = vsel %vm770, %v761, 0
    %v781 = vsel %vm770, %v762, 0
    %783 = vmatpush.bf16.msra.mxu0 0
    %784 = vmatpush.bf16.msra.mxu0 0
    %785 = vmatpush.bf16.msra.mxu0 0
    %786 = vmatpush.bf16.msra.mxu0 0
    %787 = vmatpush.bf16.msra.mxu0 0
    %788 = vmatpush.bf16.msra.mxu0 %v772
    %789 = vmatpush.bf16.msra.mxu0 %v755
    %790 = vmatpush.bf16.msra.mxu0 %v751
    %791 = vmatmul.bf16.gmra.mxu0 %v768
    %v792 = vpop.f32.mrf.mxu0
    %v793 = vadd.f32 0.0, %v792
    %v794 = vpop.f32.mrf.mxu0
    %795 = vdwg.mxu0
    %796 = vmatpush.bf16.msra.mxu0 0
    %797 = vmatpush.bf16.msra.mxu0 0
    %798 = vmatpush.bf16.msra.mxu0 0
    %799 = vmatpush.bf16.msra.mxu0 0
    %800 = vmatpush.bf16.msra.mxu0 0
    %801 = vmatpush.bf16.msra.mxu0 %v775
    %802 = vmatpush.bf16.msra.mxu0 %v756
    %803 = vmatpush.bf16.msra.mxu0 %v752
    %804 = vmatmul.bf16.gmra.mxu0 %v768
    %v805 = vpop.f32.mrf.mxu0
    %v806 = vadd.f32 0.0, %v805
    %v807 = vpop.f32.mrf.mxu0
    %808 = vdwg.mxu0
    %809 = vmatpush.bf16.msra.mxu0 0
    %810 = vmatpush.bf16.msra.mxu0 0
    %811 = vmatpush.bf16.msra.mxu0 0
    %812 = vmatpush.bf16.msra.mxu0 0
    %813 = vmatpush.bf16.msra.mxu0 0
    %814 = vmatpush.bf16.msra.mxu0 %v778
    %815 = vmatpush.bf16.msra.mxu0 %v757
    %816 = vmatpush.bf16.msra.mxu0 %v753
    %817 = vmatmul.bf16.gmra.mxu0 %v768
    %v818 = vpop.f32.mrf.mxu0
    %v819 = vadd.f32 0.0, %v818
    %v820 = vpop.f32.mrf.mxu0
    %821 = vdwg.mxu0
    %822 = vmatpush.bf16.msra.mxu0 0
    %823 = vmatpush.bf16.msra.mxu0 0
    %824 = vmatpush.bf16.msra.mxu0 0
    %825 = vmatpush.bf16.msra.mxu0 0
    %826 = vmatpush.bf16.msra.mxu0 0
    %827 = vmatpush.bf16.msra.mxu0 %v781
    %828 = vmatpush.bf16.msra.mxu0 %v758
    %829 = vmatpush.bf16.msra.mxu0 %v754
    %830 = vmatmul.bf16.gmra.mxu0 %v768
    %v831 = vpop.f32.mrf.mxu0
    %v832 = vadd.f32 0.0, %v831
    %v833 = vpop.f32.mrf.mxu0
    %834 = vdwg.mxu0
    %v835 = vadd.f32 %v621, %v793
    %v836 = vadd.f32 %v650, %v806
    %v837 = vadd.f32 %v679, %v819
    %v838 = vadd.f32 %v708, %v832
    %v839 = vxor.u32 %v835, 2147483648
    %v840 = vmul.f32 %v839, 1.442695
    %v841 = vpow.pop %v840
    %v842 = vadd.f32 %v841, 1.0
    %v843 = vrcp.pop %v842
    %v844 = vmul.f32 %v842, %v843
    %v845 = vsub.f32 1.0, %v844
    %v846 = vmul.f32 %v843, %v845
    %v847 = vadd.f32 %v843, %v846
    %vm848 = vweird.f32 %v842
    %vm849 = vweird.f32 %v843
    %vm850 = vmor %vm848, %vm849
    %v851 = vsel %vm850, %v843, %v847
    %v852 = vand.u32 2147483647, %v842
    %vm853 = vcmp.eq.f32.partialorder %v852, 8.507059e+37
    %v854 = vand.u32 %v842, 2147483648
    %v855 = vor.u32 1.1754944e-38, %v854
    %v856 = vsel %vm853, %v855, %v851
    %v857 = vmul.f32 1.0, %v856
    %v858 = vxor.u32 %v836, 2147483648
    %v859 = vmul.f32 %v858, 1.442695
    %v860 = vpow.pop %v859
    %v861 = vadd.f32 %v860, 1.0
    %v862 = vrcp.pop %v861
    %v863 = vmul.f32 %v861, %v862
    %v864 = vsub.f32 1.0, %v863
    %v865 = vmul.f32 %v862, %v864
    %v866 = vadd.f32 %v862, %v865
    %vm867 = vweird.f32 %v861
    %vm868 = vweird.f32 %v862
    %vm869 = vmor %vm867, %vm868
    %v870 = vsel %vm869, %v862, %v866
    %v871 = vand.u32 2147483647, %v861
    %vm872 = vcmp.eq.f32.partialorder %v871, 8.507059e+37
    %v873 = vand.u32 %v861, 2147483648
    %v874 = vor.u32 1.1754944e-38, %v873
    %v875 = vsel %vm872, %v874, %v870
    %v876 = vmul.f32 1.0, %v875
    %v877 = vtanh.pop %v837
    %v878 = vxor.u32 %v838, 2147483648
    %v879 = vmul.f32 %v878, 1.442695
    %v880 = vpow.pop %v879
    %v881 = vadd.f32 %v880, 1.0
    %v882 = vrcp.pop %v881
    %v883 = vmul.f32 %v881, %v882
    %v884 = vsub.f32 1.0, %v883
    %v885 = vmul.f32 %v882, %v884
    %v886 = vadd.f32 %v882, %v885
    %vm887 = vweird.f32 %v881
    %vm888 = vweird.f32 %v882
    %vm889 = vmor %vm887, %vm888
    %v890 = vsel %vm889, %v882, %v886
    %v891 = vand.u32 2147483647, %v881
    %vm892 = vcmp.eq.f32.partialorder %v891, 8.507059e+37
    %v893 = vand.u32 %v881, 2147483648
    %v894 = vor.u32 1.1754944e-38, %v893
    %v895 = vsel %vm892, %v894, %v890
    %v896 = vmul.f32 1.0, %v895
    %v897 = vmul.f32 %v876, %v764
    %v898 = vmul.f32 %v857, %v877
    %v899 = vadd.f32 %v897, %v898
    %v900 = vtanh.pop %v899
    %v901 = vmul.f32 %v896, %v900
    %902 = vst.msk [vmem:[#allocation2] sm:$0xff] %vm766, %v901
    %v903 = vpack.c.bf16 %v901, %v901
    %v905 = vsel %vm766, %v903, 0
    %907 = vmatpush.bf16.msra.mxu0 0
    %908 = vmatpush.bf16.msra.mxu0 0
    %909 = vmatpush.bf16.msra.mxu0 0
    %910 = vmatpush.bf16.msra.mxu0 0
    %911 = vmatpush.bf16.msra.mxu0 0
    %912 = vmatpush.bf16.msra.mxu0 %v772
    %913 = vmatpush.bf16.msra.mxu0 %v755
    %914 = vmatpush.bf16.msra.mxu0 %v751
    %915 = vmatmul.bf16.gmra.mxu0 %v905
    %v916 = vpop.f32.mrf.mxu0
    %v917 = vadd.f32 0.0, %v916
    %v918 = vpop.f32.mrf.mxu0
    %919 = vdwg.mxu0
    %920 = vmatpush.bf16.msra.mxu0 0
    %921 = vmatpush.bf16.msra.mxu0 0
    %922 = vmatpush.bf16.msra.mxu0 0
    %923 = vmatpush.bf16.msra.mxu0 0
    %924 = vmatpush.bf16.msra.mxu0 0
    %925 = vmatpush.bf16.msra.mxu0 %v775
    %926 = vmatpush.bf16.msra.mxu0 %v756
    %927 = vmatpush.bf16.msra.mxu0 %v752
    %928 = vmatmul.bf16.gmra.mxu0 %v905
    %v929 = vpop.f32.mrf.mxu0
    %v930 = vadd.f32 0.0, %v929
    %v931 = vpop.f32.mrf.mxu0
    %932 = vdwg.mxu0
    %933 = vmatpush.bf16.msra.mxu0 0
    %934 = vmatpush.bf16.msra.mxu0 0
    %935 = vmatpush.bf16.msra.mxu0 0
    %936 = vmatpush.bf16.msra.mxu0 0
    %937 = vmatpush.bf16.msra.mxu0 0
    %938 = vmatpush.bf16.msra.mxu0 %v778
    %939 = vmatpush.bf16.msra.mxu0 %v757
    %940 = vmatpush.bf16.msra.mxu0 %v753
    %941 = vmatmul.bf16.gmra.mxu0 %v905
    %v942 = vpop.f32.mrf.mxu0
    %v943 = vadd.f32 0.0, %v942
    %v944 = vpop.f32.mrf.mxu0
    %945 = vdwg.mxu0
    %946 = vmatpush.bf16.msra.mxu0 0
    %947 = vmatpush.bf16.msra.mxu0 0
    %948 = vmatpush.bf16.msra.mxu0 0
    %949 = vmatpush.bf16.msra.mxu0 0
    %950 = vmatpush.bf16.msra.mxu0 0
    %951 = vmatpush.bf16.msra.mxu0 %v781
    %952 = vmatpush.bf16.msra.mxu0 %v758
    %953 = vmatpush.bf16.msra.mxu0 %v754
    %954 = vmatmul.bf16.gmra.mxu0 %v905
    %v955 = vpop.f32.mrf.mxu0
    %v956 = vadd.f32 0.0, %v955
    %v957 = vpop.f32.mrf.mxu0
    %958 = vdwg.mxu0
    %v959 = vadd.f32 %v623, %v917
    %v960 = vadd.f32 %v652, %v930
    %v961 = vadd.f32 %v681, %v943
    %v962 = vadd.f32 %v710, %v956
    %v963 = vxor.u32 %v959, 2147483648
    %v964 = vmul.f32 %v963, 1.442695
    %v965 = vpow.pop %v964
    %v966 = vadd.f32 %v965, 1.0
    %v967 = vrcp.pop %v966
    %v968 = vmul.f32 %v966, %v967
    %v969 = vsub.f32 1.0, %v968
    %v970 = vmul.f32 %v967, %v969
    %v971 = vadd.f32 %v967, %v970
    %vm972 = vweird.f32 %v966
    %vm973 = vweird.f32 %v967
    %vm974 = vmor %vm972, %vm973
    %v975 = vsel %vm974, %v967, %v971
    %v976 = vand.u32 2147483647, %v966
    %vm977 = vcmp.eq.f32.partialorder %v976, 8.507059e+37
    %v978 = vand.u32 %v966, 2147483648
    %v979 = vor.u32 1.1754944e-38, %v978
    %v980 = vsel %vm977, %v979, %v975
    %v981 = vmul.f32 1.0, %v980
    %v982 = vxor.u32 %v960, 2147483648
    %v983 = vmul.f32 %v982, 1.442695
    %v984 = vpow.pop %v983
    %v985 = vadd.f32 %v984, 1.0
    %v986 = vrcp.pop %v985
    %v987 = vmul.f32 %v985, %v986
    %v988 = vsub.f32 1.0, %v987
    %v989 = vmul.f32 %v986, %v988
    %v990 = vadd.f32 %v986, %v989
    %vm991 = vweird.f32 %v985
    %vm992 = vweird.f32 %v986
    %vm993 = vmor %vm991, %vm992
    %v994 = vsel %vm993, %v986, %v990
    %v995 = vand.u32 2147483647, %v985
    %vm996 = vcmp.eq.f32.partialorder %v995, 8.507059e+37
    %v997 = vand.u32 %v985, 2147483648
    %v998 = vor.u32 1.1754944e-38, %v997
    %v999 = vsel %vm996, %v998, %v994
    %v1000 = vmul.f32 1.0, %v999
    %v1001 = vtanh.pop %v961
    %v1002 = vxor.u32 %v962, 2147483648
    %v1003 = vmul.f32 %v1002, 1.442695
    %v1004 = vpow.pop %v1003
    %v1005 = vadd.f32 %v1004, 1.0
    %v1006 = vrcp.pop %v1005
    %v1007 = vmul.f32 %v1005, %v1006
    %v1008 = vsub.f32 1.0, %v1007
    %v1009 = vmul.f32 %v1006, %v1008
    %v1010 = vadd.f32 %v1006, %v1009
    %vm1011 = vweird.f32 %v1005
    %vm1012 = vweird.f32 %v1006
    %vm1013 = vmor %vm1011, %vm1012
    %v1014 = vsel %vm1013, %v1006, %v1010
    %v1015 = vand.u32 2147483647, %v1005
    %vm1016 = vcmp.eq.f32.partialorder %v1015, 8.507059e+37
    %v1017 = vand.u32 %v1005, 2147483648
    %v1018 = vor.u32 1.1754944e-38, %v1017
    %v1019 = vsel %vm1016, %v1018, %v1014
    %v1020 = vmul.f32 1.0, %v1019
    %v1021 = vmul.f32 %v1000, %v899
    %v1022 = vmul.f32 %v981, %v1001
    %v1023 = vadd.f32 %v1021, %v1022
    %v1024 = vtanh.pop %v1023
    %v1025 = vmul.f32 %v1020, %v1024
    %1026 = vst.msk [vmem:[#allocation2 + $0x8] sm:$0xff] %vm766, %v1025
    %v1027 = vpack.c.bf16 %v1025, %v1025
    %v1029 = vsel %vm766, %v1027, 0
    %1031 = vmatpush.bf16.msra.mxu0 0
    %1032 = vmatpush.bf16.msra.mxu0 0
    %1033 = vmatpush.bf16.msra.mxu0 0
    %1034 = vmatpush.bf16.msra.mxu0 0
    %1035 = vmatpush.bf16.msra.mxu0 0
    %1036 = vmatpush.bf16.msra.mxu0 %v772
    %1037 = vmatpush.bf16.msra.mxu0 %v755
    %1038 = vmatpush.bf16.msra.mxu0 %v751
    %1039 = vmatmul.bf16.gmra.mxu0 %v1029
    %v1040 = vpop.f32.mrf.mxu0
    %v1041 = vadd.f32 0.0, %v1040
    %v1042 = vpop.f32.mrf.mxu0
    %1043 = vdwg.mxu0
    %1044 = vmatpush.bf16.msra.mxu0 0
    %1045 = vmatpush.bf16.msra.mxu0 0
    %1046 = vmatpush.bf16.msra.mxu0 0
    %1047 = vmatpush.bf16.msra.mxu0 0
    %1048 = vmatpush.bf16.msra.mxu0 0
    %1049 = vmatpush.bf16.msra.mxu0 %v775
    %1050 = vmatpush.bf16.msra.mxu0 %v756
    %1051 = vmatpush.bf16.msra.mxu0 %v752
    %1052 = vmatmul.bf16.gmra.mxu0 %v1029
    %v1053 = vpop.f32.mrf.mxu0
    %v1054 = vadd.f32 0.0, %v1053
    %v1055 = vpop.f32.mrf.mxu0
    %1056 = vdwg.mxu0
    %1057 = vmatpush.bf16.msra.mxu0 0
    %1058 = vmatpush.bf16.msra.mxu0 0
    %1059 = vmatpush.bf16.msra.mxu0 0
    %1060 = vmatpush.bf16.msra.mxu0 0
    %1061 = vmatpush.bf16.msra.mxu0 0
    %1062 = vmatpush.bf16.msra.mxu0 %v778
    %1063 = vmatpush.bf16.msra.mxu0 %v757
    %1064 = vmatpush.bf16.msra.mxu0 %v753
    %1065 = vmatmul.bf16.gmra.mxu0 %v1029
    %v1066 = vpop.f32.mrf.mxu0
    %v1067 = vadd.f32 0.0, %v1066
    %v1068 = vpop.f32.mrf.mxu0
    %1069 = vdwg.mxu0
    %1070 = vmatpush.bf16.msra.mxu0 0
    %1071 = vmatpush.bf16.msra.mxu0 0
    %1072 = vmatpush.bf16.msra.mxu0 0
    %1073 = vmatpush.bf16.msra.mxu0 0
    %1074 = vmatpush.bf16.msra.mxu0 0
    %1075 = vmatpush.bf16.msra.mxu0 %v781
    %1076 = vmatpush.bf16.msra.mxu0 %v758
    %1077 = vmatpush.bf16.msra.mxu0 %v754
    %1078 = vmatmul.bf16.gmra.mxu0 %v1029
    %v1079 = vpop.f32.mrf.mxu0
    %v1080 = vadd.f32 0.0, %v1079
    %v1081 = vpop.f32.mrf.mxu0
    %1082 = vdwg.mxu0
    %v1083 = vadd.f32 %v626, %v1041
    %v1084 = vadd.f32 %v655, %v1054
    %v1085 = vadd.f32 %v684, %v1067
    %v1086 = vadd.f32 %v713, %v1080
    %v1087 = vxor.u32 %v1083, 2147483648
    %v1088 = vmul.f32 %v1087, 1.442695
    %v1089 = vpow.pop %v1088
    %v1090 = vadd.f32 %v1089, 1.0
    %v1091 = vrcp.pop %v1090
    %v1092 = vmul.f32 %v1090, %v1091
    %v1093 = vsub.f32 1.0, %v1092
    %v1094 = vmul.f32 %v1091, %v1093
    %v1095 = vadd.f32 %v1091, %v1094
    %vm1096 = vweird.f32 %v1090
    %vm1097 = vweird.f32 %v1091
    %vm1098 = vmor %vm1096, %vm1097
    %v1099 = vsel %vm1098, %v1091, %v1095
    %v1100 = vand.u32 2147483647, %v1090
    %vm1101 = vcmp.eq.f32.partialorder %v1100, 8.507059e+37
    %v1102 = vand.u32 %v1090, 2147483648
    %v1103 = vor.u32 1.1754944e-38, %v1102
    %v1104 = vsel %vm1101, %v1103, %v1099
    %v1105 = vmul.f32 1.0, %v1104
    %v1106 = vxor.u32 %v1084, 2147483648
    %v1107 = vmul.f32 %v1106, 1.442695
    %v1108 = vpow.pop %v1107
    %v1109 = vadd.f32 %v1108, 1.0
    %v1110 = vrcp.pop %v1109
    %v1111 = vmul.f32 %v1109, %v1110
    %v1112 = vsub.f32 1.0, %v1111
    %v1113 = vmul.f32 %v1110, %v1112
    %v1114 = vadd.f32 %v1110, %v1113
    %vm1115 = vweird.f32 %v1109
    %vm1116 = vweird.f32 %v1110
    %vm1117 = vmor %vm1115, %vm1116
    %v1118 = vsel %vm1117, %v1110, %v1114
    %v1119 = vand.u32 2147483647, %v1109
    %vm1120 = vcmp.eq.f32.partialorder %v1119, 8.507059e+37
    %v1121 = vand.u32 %v1109, 2147483648
    %v1122 = vor.u32 1.1754944e-38, %v1121
    %v1123 = vsel %vm1120, %v1122, %v1118
    %v1124 = vmul.f32 1.0, %v1123
    %v1125 = vtanh.pop %v1085
    %v1126 = vxor.u32 %v1086, 2147483648
    %v1127 = vmul.f32 %v1126, 1.442695
    %v1128 = vpow.pop %v1127
    %v1129 = vadd.f32 %v1128, 1.0
    %v1130 = vrcp.pop %v1129
    %v1131 = vmul.f32 %v1129, %v1130
    %v1132 = vsub.f32 1.0, %v1131
    %v1133 = vmul.f32 %v1130, %v1132
    %v1134 = vadd.f32 %v1130, %v1133
    %vm1135 = vweird.f32 %v1129
    %vm1136 = vweird.f32 %v1130
    %vm1137 = vmor %vm1135, %vm1136
    %v1138 = vsel %vm1137, %v1130, %v1134
    %v1139 = vand.u32 2147483647, %v1129
    %vm1140 = vcmp.eq.f32.partialorder %v1139, 8.507059e+37
    %v1141 = vand.u32 %v1129, 2147483648
    %v1142 = vor.u32 1.1754944e-38, %v1141
    %v1143 = vsel %vm1140, %v1142, %v1138
    %v1144 = vmul.f32 1.0, %v1143
    %v1145 = vmul.f32 %v1124, %v1023
    %v1146 = vmul.f32 %v1105, %v1125
    %v1147 = vadd.f32 %v1145, %v1146
    %v1148 = vtanh.pop %v1147
    %v1149 = vmul.f32 %v1144, %v1148
    %1150 = vst.msk [vmem:[#allocation2 + $0x10] sm:$0xff] %vm766, %v1149
    %v1151 = vpack.c.bf16 %v1149, %v1149
    %v1153 = vsel %vm766, %v1151, 0
    %1155 = vmatpush.bf16.msra.mxu0 0
    %1156 = vmatpush.bf16.msra.mxu0 0
    %1157 = vmatpush.bf16.msra.mxu0 0
    %1158 = vmatpush.bf16.msra.mxu0 0
    %1159 = vmatpush.bf16.msra.mxu0 0
    %1160 = vmatpush.bf16.msra.mxu0 %v772
    %1161 = vmatpush.bf16.msra.mxu0 %v755
    %1162 = vmatpush.bf16.msra.mxu0 %v751
    %1163 = vmatmul.bf16.gmra.mxu0 %v1153
    %v1164 = vpop.f32.mrf.mxu0
    %v1165 = vadd.f32 0.0, %v1164
    %v1166 = vpop.f32.mrf.mxu0
    %1167 = vdwg.mxu0
    %1168 = vmatpush.bf16.msra.mxu0 0
    %1169 = vmatpush.bf16.msra.mxu0 0
    %1170 = vmatpush.bf16.msra.mxu0 0
    %1171 = vmatpush.bf16.msra.mxu0 0
    %1172 = vmatpush.bf16.msra.mxu0 0
    %1173 = vmatpush.bf16.msra.mxu0 %v775
    %1174 = vmatpush.bf16.msra.mxu0 %v756
    %1175 = vmatpush.bf16.msra.mxu0 %v752
    %1176 = vmatmul.bf16.gmra.mxu0 %v1153
    %v1177 = vpop.f32.mrf.mxu0
    %v1178 = vadd.f32 0.0, %v1177
    %v1179 = vpop.f32.mrf.mxu0
    %1180 = vdwg.mxu0
    %1181 = vmatpush.bf16.msra.mxu0 0
    %1182 = vmatpush.bf16.msra.mxu0 0
    %1183 = vmatpush.bf16.msra.mxu0 0
    %1184 = vmatpush.bf16.msra.mxu0 0
    %1185 = vmatpush.bf16.msra.mxu0 0
    %1186 = vmatpush.bf16.msra.mxu0 %v778
    %1187 = vmatpush.bf16.msra.mxu0 %v757
    %1188 = vmatpush.bf16.msra.mxu0 %v753
    %1189 = vmatmul.bf16.gmra.mxu0 %v1153
    %v1190 = vpop.f32.mrf.mxu0
    %v1191 = vadd.f32 0.0, %v1190
    %v1192 = vpop.f32.mrf.mxu0
    %1193 = vdwg.mxu0
    %1194 = vmatpush.bf16.msra.mxu0 0
    %1195 = vmatpush.bf16.msra.mxu0 0
    %1196 = vmatpush.bf16.msra.mxu0 0
    %1197 = vmatpush.bf16.msra.mxu0 0
    %1198 = vmatpush.bf16.msra.mxu0 0
    %1199 = vmatpush.bf16.msra.mxu0 %v781
    %1200 = vmatpush.bf16.msra.mxu0 %v758
    %1201 = vmatpush.bf16.msra.mxu0 %v754
    %1202 = vmatmul.bf16.gmra.mxu0 %v1153
    %v1203 = vpop.f32.mrf.mxu0
    %v1204 = vadd.f32 0.0, %v1203
    %v1205 = vpop.f32.mrf.mxu0
    %1206 = vdwg.mxu0
    %v1207 = vadd.f32 %v628, %v1165
    %v1208 = vadd.f32 %v657, %v1178
    %v1209 = vadd.f32 %v686, %v1191
    %v1210 = vadd.f32 %v715, %v1204
    %v1211 = vxor.u32 %v1207, 2147483648
    %v1212 = vmul.f32 %v1211, 1.442695
    %v1213 = vpow.pop %v1212
    %v1214 = vadd.f32 %v1213, 1.0
    %v1215 = vrcp.pop %v1214
    %v1216 = vmul.f32 %v1214, %v1215
    %v1217 = vsub.f32 1.0, %v1216
    %v1218 = vmul.f32 %v1215, %v1217
    %v1219 = vadd.f32 %v1215, %v1218
    %vm1220 = vweird.f32 %v1214
    %vm1221 = vweird.f32 %v1215
    %vm1222 = vmor %vm1220, %vm1221
    %v1223 = vsel %vm1222, %v1215, %v1219
    %v1224 = vand.u32 2147483647, %v1214
    %vm1225 = vcmp.eq.f32.partialorder %v1224, 8.507059e+37
    %v1226 = vand.u32 %v1214, 2147483648
    %v1227 = vor.u32 1.1754944e-38, %v1226
    %v1228 = vsel %vm1225, %v1227, %v1223
    %v1229 = vmul.f32 1.0, %v1228
    %v1230 = vxor.u32 %v1208, 2147483648
    %v1231 = vmul.f32 %v1230, 1.442695
    %v1232 = vpow.pop %v1231
    %v1233 = vadd.f32 %v1232, 1.0
    %v1234 = vrcp.pop %v1233
    %v1235 = vmul.f32 %v1233, %v1234
    %v1236 = vsub.f32 1.0, %v1235
    %v1237 = vmul.f32 %v1234, %v1236
    %v1238 = vadd.f32 %v1234, %v1237
    %vm1239 = vweird.f32 %v1233
    %vm1240 = vweird.f32 %v1234
    %vm1241 = vmor %vm1239, %vm1240
    %v1242 = vsel %vm1241, %v1234, %v1238
    %v1243 = vand.u32 2147483647, %v1233
    %vm1244 = vcmp.eq.f32.partialorder %v1243, 8.507059e+37
    %v1245 = vand.u32 %v1233, 2147483648
    %v1246 = vor.u32 1.1754944e-38, %v1245
    %v1247 = vsel %vm1244, %v1246, %v1242
    %v1248 = vmul.f32 1.0, %v1247
    %v1249 = vtanh.pop %v1209
    %v1250 = vxor.u32 %v1210, 2147483648
    %v1251 = vmul.f32 %v1250, 1.442695
    %v1252 = vpow.pop %v1251
    %v1253 = vadd.f32 %v1252, 1.0
    %v1254 = vrcp.pop %v1253
    %v1255 = vmul.f32 %v1253, %v1254
    %v1256 = vsub.f32 1.0, %v1255
    %v1257 = vmul.f32 %v1254, %v1256
    %v1258 = vadd.f32 %v1254, %v1257
    %vm1259 = vweird.f32 %v1253
    %vm1260 = vweird.f32 %v1254
    %vm1261 = vmor %vm1259, %vm1260
    %v1262 = vsel %vm1261, %v1254, %v1258
    %v1263 = vand.u32 2147483647, %v1253
    %vm1264 = vcmp.eq.f32.partialorder %v1263, 8.507059e+37
    %v1265 = vand.u32 %v1253, 2147483648
    %v1266 = vor.u32 1.1754944e-38, %v1265
    %v1267 = vsel %vm1264, %v1266, %v1262
    %v1268 = vmul.f32 1.0, %v1267
    %v1269 = vmul.f32 %v1248, %v1147
    %v1270 = vmul.f32 %v1229, %v1249
    %v1271 = vadd.f32 %v1269, %v1270
    %v1272 = vtanh.pop %v1271
    %v1273 = vmul.f32 %v1268, %v1272
    %1274 = vst.msk [vmem:[#allocation2 + $0x18] sm:$0xff] %vm766, %v1273
    %v1275 = vpack.c.bf16 %v1273, %v1273
    %v1277 = vsel %vm766, %v1275, 0
    %1279 = vmatpush.bf16.msra.mxu0 0
    %1280 = vmatpush.bf16.msra.mxu0 0
    %1281 = vmatpush.bf16.msra.mxu0 0
    %1282 = vmatpush.bf16.msra.mxu0 0
    %1283 = vmatpush.bf16.msra.mxu0 0
    %1284 = vmatpush.bf16.msra.mxu0 %v772
    %1285 = vmatpush.bf16.msra.mxu0 %v755
    %1286 = vmatpush.bf16.msra.mxu0 %v751
    %1287 = vmatmul.bf16.gmra.mxu0 %v1277
    %v1288 = vpop.f32.mrf.mxu0
    %v1289 = vadd.f32 0.0, %v1288
    %v1290 = vpop.f32.mrf.mxu0
    %1291 = vdwg.mxu0
    %1292 = vmatpush.bf16.msra.mxu0 0
    %1293 = vmatpush.bf16.msra.mxu0 0
    %1294 = vmatpush.bf16.msra.mxu0 0
    %1295 = vmatpush.bf16.msra.mxu0 0
    %1296 = vmatpush.bf16.msra.mxu0 0
    %1297 = vmatpush.bf16.msra.mxu0 %v775
    %1298 = vmatpush.bf16.msra.mxu0 %v756
    %1299 = vmatpush.bf16.msra.mxu0 %v752
    %1300 = vmatmul.bf16.gmra.mxu0 %v1277
    %v1301 = vpop.f32.mrf.mxu0
    %v1302 = vadd.f32 0.0, %v1301
    %v1303 = vpop.f32.mrf.mxu0
    %1304 = vdwg.mxu0
    %1305 = vmatpush.bf16.msra.mxu0 0
    %1306 = vmatpush.bf16.msra.mxu0 0
    %1307 = vmatpush.bf16.msra.mxu0 0
    %1308 = vmatpush.bf16.msra.mxu0 0
    %1309 = vmatpush.bf16.msra.mxu0 0
    %1310 = vmatpush.bf16.msra.mxu0 %v778
    %1311 = vmatpush.bf16.msra.mxu0 %v757
    %1312 = vmatpush.bf16.msra.mxu0 %v753
    %1313 = vmatmul.bf16.gmra.mxu0 %v1277
    %v1314 = vpop.f32.mrf.mxu0
    %v1315 = vadd.f32 0.0, %v1314
    %v1316 = vpop.f32.mrf.mxu0
    %1317 = vdwg.mxu0
    %1318 = vmatpush.bf16.msra.mxu0 0
    %1319 = vmatpush.bf16.msra.mxu0 0
    %1320 = vmatpush.bf16.msra.mxu0 0
    %1321 = vmatpush.bf16.msra.mxu0 0
    %1322 = vmatpush.bf16.msra.mxu0 0
    %1323 = vmatpush.bf16.msra.mxu0 %v781
    %1324 = vmatpush.bf16.msra.mxu0 %v758
    %1325 = vmatpush.bf16.msra.mxu0 %v754
    %1326 = vmatmul.bf16.gmra.mxu0 %v1277
    %v1327 = vpop.f32.mrf.mxu0
    %v1328 = vadd.f32 0.0, %v1327
    %v1329 = vpop.f32.mrf.mxu0
    %1330 = vdwg.mxu0
    %v1331 = vadd.f32 %v631, %v1289
    %v1332 = vadd.f32 %v660, %v1302
    %v1333 = vadd.f32 %v689, %v1315
    %v1334 = vadd.f32 %v718, %v1328
    %v1335 = vxor.u32 %v1331, 2147483648
    %v1336 = vmul.f32 %v1335, 1.442695
    %v1337 = vpow.pop %v1336
    %v1338 = vadd.f32 %v1337, 1.0
    %v1339 = vrcp.pop %v1338
    %v1340 = vmul.f32 %v1338, %v1339
    %v1341 = vsub.f32 1.0, %v1340
    %v1342 = vmul.f32 %v1339, %v1341
    %v1343 = vadd.f32 %v1339, %v1342
    %vm1344 = vweird.f32 %v1338
    %vm1345 = vweird.f32 %v1339
    %vm1346 = vmor %vm1344, %vm1345
    %v1347 = vsel %vm1346, %v1339, %v1343
    %v1348 = vand.u32 2147483647, %v1338
    %vm1349 = vcmp.eq.f32.partialorder %v1348, 8.507059e+37
    %v1350 = vand.u32 %v1338, 2147483648
    %v1351 = vor.u32 1.1754944e-38, %v1350
    %v1352 = vsel %vm1349, %v1351, %v1347
    %v1353 = vmul.f32 1.0, %v1352
    %v1354 = vxor.u32 %v1332, 2147483648
    %v1355 = vmul.f32 %v1354, 1.442695
    %v1356 = vpow.pop %v1355
    %v1357 = vadd.f32 %v1356, 1.0
    %v1358 = vrcp.pop %v1357
    %v1359 = vmul.f32 %v1357, %v1358
    %v1360 = vsub.f32 1.0, %v1359
    %v1361 = vmul.f32 %v1358, %v1360
    %v1362 = vadd.f32 %v1358, %v1361
    %vm1363 = vweird.f32 %v1357
    %vm1364 = vweird.f32 %v1358
    %vm1365 = vmor %vm1363, %vm1364
    %v1366 = vsel %vm1365, %v1358, %v1362
    %v1367 = vand.u32 2147483647, %v1357
    %vm1368 = vcmp.eq.f32.partialorder %v1367, 8.507059e+37
    %v1369 = vand.u32 %v1357, 2147483648
    %v1370 = vor.u32 1.1754944e-38, %v1369
    %v1371 = vsel %vm1368, %v1370, %v1366
    %v1372 = vmul.f32 1.0, %v1371
    %v1373 = vtanh.pop %v1333
    %v1374 = vxor.u32 %v1334, 2147483648
    %v1375 = vmul.f32 %v1374, 1.442695
    %v1376 = vpow.pop %v1375
    %v1377 = vadd.f32 %v1376, 1.0
    %v1378 = vrcp.pop %v1377
    %v1379 = vmul.f32 %v1377, %v1378
    %v1380 = vsub.f32 1.0, %v1379
    %v1381 = vmul.f32 %v1378, %v1380
    %v1382 = vadd.f32 %v1378, %v1381
    %vm1383 = vweird.f32 %v1377
    %vm1384 = vweird.f32 %v1378
    %vm1385 = vmor %vm1383, %vm1384
    %v1386 = vsel %vm1385, %v1378, %v1382
    %v1387 = vand.u32 2147483647, %v1377
    %vm1388 = vcmp.eq.f32.partialorder %v1387, 8.507059e+37
    %v1389 = vand.u32 %v1377, 2147483648
    %v1390 = vor.u32 1.1754944e-38, %v1389
    %v1391 = vsel %vm1388, %v1390, %v1386
    %v1392 = vmul.f32 1.0, %v1391
    %v1393 = vmul.f32 %v1372, %v1271
    %v1394 = vmul.f32 %v1353, %v1373
    %v1395 = vadd.f32 %v1393, %v1394
    %v1396 = vtanh.pop %v1395
    %v1397 = vmul.f32 %v1392, %v1396
    %1398 = vst.msk [vmem:[#allocation2 + $0x20] sm:$0xff] %vm766, %v1397
    %v1399 = vpack.c.bf16 %v1397, %v1397
    %v1401 = vsel %vm766, %v1399, 0
    %1403 = vmatpush.bf16.msra.mxu0 0
    %1404 = vmatpush.bf16.msra.mxu0 0
    %1405 = vmatpush.bf16.msra.mxu0 0
    %1406 = vmatpush.bf16.msra.mxu0 0
    %1407 = vmatpush.bf16.msra.mxu0 0
    %1408 = vmatpush.bf16.msra.mxu0 %v772
    %1409 = vmatpush.bf16.msra.mxu0 %v755
    %1410 = vmatpush.bf16.msra.mxu0 %v751
    %1411 = vmatmul.bf16.gmra.mxu0 %v1401
    %v1412 = vpop.f32.mrf.mxu0
    %v1413 = vadd.f32 0.0, %v1412
    %v1414 = vpop.f32.mrf.mxu0
    %1415 = vdwg.mxu0
    %1416 = vmatpush.bf16.msra.mxu0 0
    %1417 = vmatpush.bf16.msra.mxu0 0
    %1418 = vmatpush.bf16.msra.mxu0 0
    %1419 = vmatpush.bf16.msra.mxu0 0
    %1420 = vmatpush.bf16.msra.mxu0 0
    %1421 = vmatpush.bf16.msra.mxu0 %v775
    %1422 = vmatpush.bf16.msra.mxu0 %v756
    %1423 = vmatpush.bf16.msra.mxu0 %v752
    %1424 = vmatmul.bf16.gmra.mxu0 %v1401
    %v1425 = vpop.f32.mrf.mxu0
    %v1426 = vadd.f32 0.0, %v1425
    %v1427 = vpop.f32.mrf.mxu0
    %1428 = vdwg.mxu0
    %1429 = vmatpush.bf16.msra.mxu0 0
    %1430 = vmatpush.bf16.msra.mxu0 0
    %1431 = vmatpush.bf16.msra.mxu0 0
    %1432 = vmatpush.bf16.msra.mxu0 0
    %1433 = vmatpush.bf16.msra.mxu0 0
    %1434 = vmatpush.bf16.msra.mxu0 %v778
    %1435 = vmatpush.bf16.msra.mxu0 %v757
    %1436 = vmatpush.bf16.msra.mxu0 %v753
    %1437 = vmatmul.bf16.gmra.mxu0 %v1401
    %v1438 = vpop.f32.mrf.mxu0
    %v1439 = vadd.f32 0.0, %v1438
    %v1440 = vpop.f32.mrf.mxu0
    %1441 = vdwg.mxu0
    %1442 = vmatpush.bf16.msra.mxu0 0
    %1443 = vmatpush.bf16.msra.mxu0 0
    %1444 = vmatpush.bf16.msra.mxu0 0
    %1445 = vmatpush.bf16.msra.mxu0 0
    %1446 = vmatpush.bf16.msra.mxu0 0
    %1447 = vmatpush.bf16.msra.mxu0 %v781
    %1448 = vmatpush.bf16.msra.mxu0 %v758
    %1449 = vmatpush.bf16.msra.mxu0 %v754
    %1450 = vmatmul.bf16.gmra.mxu0 %v1401
    %v1451 = vpop.f32.mrf.mxu0
    %v1452 = vadd.f32 0.0, %v1451
    %v1453 = vpop.f32.mrf.mxu0
    %1454 = vdwg.mxu0
    %v1455 = vadd.f32 %v633, %v1413
    %v1456 = vadd.f32 %v662, %v1426
    %v1457 = vadd.f32 %v691, %v1439
    %v1458 = vadd.f32 %v720, %v1452
    %v1459 = vxor.u32 %v1455, 2147483648
    %v1460 = vmul.f32 %v1459, 1.442695
    %v1461 = vpow.pop %v1460
    %v1462 = vadd.f32 %v1461, 1.0
    %v1463 = vrcp.pop %v1462
    %v1464 = vmul.f32 %v1462, %v1463
    %v1465 = vsub.f32 1.0, %v1464
    %v1466 = vmul.f32 %v1463, %v1465
    %v1467 = vadd.f32 %v1463, %v1466
    %vm1468 = vweird.f32 %v1462
    %vm1469 = vweird.f32 %v1463
    %vm1470 = vmor %vm1468, %vm1469
    %v1471 = vsel %vm1470, %v1463, %v1467
    %v1472 = vand.u32 2147483647, %v1462
    %vm1473 = vcmp.eq.f32.partialorder %v1472, 8.507059e+37
    %v1474 = vand.u32 %v1462, 2147483648
    %v1475 = vor.u32 1.1754944e-38, %v1474
    %v1476 = vsel %vm1473, %v1475, %v1471
    %v1477 = vmul.f32 1.0, %v1476
    %v1478 = vxor.u32 %v1456, 2147483648
    %v1479 = vmul.f32 %v1478, 1.442695
    %v1480 = vpow.pop %v1479
    %v1481 = vadd.f32 %v1480, 1.0
    %v1482 = vrcp.pop %v1481
    %v1483 = vmul.f32 %v1481, %v1482
    %v1484 = vsub.f32 1.0, %v1483
    %v1485 = vmul.f32 %v1482, %v1484
    %v1486 = vadd.f32 %v1482, %v1485
    %vm1487 = vweird.f32 %v1481
    %vm1488 = vweird.f32 %v1482
    %vm1489 = vmor %vm1487, %vm1488
    %v1490 = vsel %vm1489, %v1482, %v1486
    %v1491 = vand.u32 2147483647, %v1481
    %vm1492 = vcmp.eq.f32.partialorder %v1491, 8.507059e+37
    %v1493 = vand.u32 %v1481, 2147483648
    %v1494 = vor.u32 1.1754944e-38, %v1493
    %v1495 = vsel %vm1492, %v1494, %v1490
    %v1496 = vmul.f32 1.0, %v1495
    %v1497 = vtanh.pop %v1457
    %v1498 = vxor.u32 %v1458, 2147483648
    %v1499 = vmul.f32 %v1498, 1.442695
    %v1500 = vpow.pop %v1499
    %v1501 = vadd.f32 %v1500, 1.0
    %v1502 = vrcp.pop %v1501
    %v1503 = vmul.f32 %v1501, %v1502
    %v1504 = vsub.f32 1.0, %v1503
    %v1505 = vmul.f32 %v1502, %v1504
    %v1506 = vadd.f32 %v1502, %v1505
    %vm1507 = vweird.f32 %v1501
    %vm1508 = vweird.f32 %v1502
    %vm1509 = vmor %vm1507, %vm1508
    %v1510 = vsel %vm1509, %v1502, %v1506
    %v1511 = vand.u32 2147483647, %v1501
    %vm1512 = vcmp.eq.f32.partialorder %v1511, 8.507059e+37
    %v1513 = vand.u32 %v1501, 2147483648
    %v1514 = vor.u32 1.1754944e-38, %v1513
    %v1515 = vsel %vm1512, %v1514, %v1510
    %v1516 = vmul.f32 1.0, %v1515
    %v1517 = vmul.f32 %v1496, %v1395
    %v1518 = vmul.f32 %v1477, %v1497
    %v1519 = vadd.f32 %v1517, %v1518
    %v1520 = vtanh.pop %v1519
    %v1521 = vmul.f32 %v1516, %v1520
    %1522 = vst.msk [vmem:[#allocation2 + $0x28] sm:$0xff] %vm766, %v1521
    %v1523 = vpack.c.bf16 %v1521, %v1521
    %v1525 = vsel %vm766, %v1523, 0
    %1527 = vmatpush.bf16.msra.mxu0 0
    %1528 = vmatpush.bf16.msra.mxu0 0
    %1529 = vmatpush.bf16.msra.mxu0 0
    %1530 = vmatpush.bf16.msra.mxu0 0
    %1531 = vmatpush.bf16.msra.mxu0 0
    %1532 = vmatpush.bf16.msra.mxu0 %v772
    %1533 = vmatpush.bf16.msra.mxu0 %v755
    %1534 = vmatpush.bf16.msra.mxu0 %v751
    %1535 = vmatmul.bf16.gmra.mxu0 %v1525
    %v1536 = vpop.f32.mrf.mxu0
    %v1537 = vadd.f32 0.0, %v1536
    %v1538 = vpop.f32.mrf.mxu0
    %1539 = vdwg.mxu0
    %1540 = vmatpush.bf16.msra.mxu0 0
    %1541 = vmatpush.bf16.msra.mxu0 0
    %1542 = vmatpush.bf16.msra.mxu0 0
    %1543 = vmatpush.bf16.msra.mxu0 0
    %1544 = vmatpush.bf16.msra.mxu0 0
    %1545 = vmatpush.bf16.msra.mxu0 %v775
    %1546 = vmatpush.bf16.msra.mxu0 %v756
    %1547 = vmatpush.bf16.msra.mxu0 %v752
    %1548 = vmatmul.bf16.gmra.mxu0 %v1525
    %v1549 = vpop.f32.mrf.mxu0
    %v1550 = vadd.f32 0.0, %v1549
    %v1551 = vpop.f32.mrf.mxu0
    %1552 = vdwg.mxu0
    %1553 = vmatpush.bf16.msra.mxu0 0
    %1554 = vmatpush.bf16.msra.mxu0 0
    %1555 = vmatpush.bf16.msra.mxu0 0
    %1556 = vmatpush.bf16.msra.mxu0 0
    %1557 = vmatpush.bf16.msra.mxu0 0
    %1558 = vmatpush.bf16.msra.mxu0 %v778
    %1559 = vmatpush.bf16.msra.mxu0 %v757
    %1560 = vmatpush.bf16.msra.mxu0 %v753
    %1561 = vmatmul.bf16.gmra.mxu0 %v1525
    %v1562 = vpop.f32.mrf.mxu0
    %v1563 = vadd.f32 0.0, %v1562
    %v1564 = vpop.f32.mrf.mxu0
    %1565 = vdwg.mxu0
    %1566 = vmatpush.bf16.msra.mxu0 0
    %1567 = vmatpush.bf16.msra.mxu0 0
    %1568 = vmatpush.bf16.msra.mxu0 0
    %1569 = vmatpush.bf16.msra.mxu0 0
    %1570 = vmatpush.bf16.msra.mxu0 0
    %1571 = vmatpush.bf16.msra.mxu0 %v781
    %1572 = vmatpush.bf16.msra.mxu0 %v758
    %1573 = vmatpush.bf16.msra.mxu0 %v754
    %1574 = vmatmul.bf16.gmra.mxu0 %v1525
    %v1575 = vpop.f32.mrf.mxu0
    %v1576 = vadd.f32 0.0, %v1575
    %v1577 = vpop.f32.mrf.mxu0
    %1578 = vdwg.mxu0
    %v1579 = vadd.f32 %v636, %v1537
    %v1580 = vadd.f32 %v665, %v1550
    %v1581 = vadd.f32 %v694, %v1563
    %v1582 = vadd.f32 %v723, %v1576
    %v1583 = vxor.u32 %v1579, 2147483648
    %v1584 = vmul.f32 %v1583, 1.442695
    %v1585 = vpow.pop %v1584
    %v1586 = vadd.f32 %v1585, 1.0
    %v1587 = vrcp.pop %v1586
    %v1588 = vmul.f32 %v1586, %v1587
    %v1589 = vsub.f32 1.0, %v1588
    %v1590 = vmul.f32 %v1587, %v1589
    %v1591 = vadd.f32 %v1587, %v1590
    %vm1592 = vweird.f32 %v1586
    %vm1593 = vweird.f32 %v1587
    %vm1594 = vmor %vm1592, %vm1593
    %v1595 = vsel %vm1594, %v1587, %v1591
    %v1596 = vand.u32 2147483647, %v1586
    %vm1597 = vcmp.eq.f32.partialorder %v1596, 8.507059e+37
    %v1598 = vand.u32 %v1586, 2147483648
    %v1599 = vor.u32 1.1754944e-38, %v1598
    %v1600 = vsel %vm1597, %v1599, %v1595
    %v1601 = vmul.f32 1.0, %v1600
    %v1602 = vxor.u32 %v1580, 2147483648
    %v1603 = vmul.f32 %v1602, 1.442695
    %v1604 = vpow.pop %v1603
    %v1605 = vadd.f32 %v1604, 1.0
    %v1606 = vrcp.pop %v1605
    %v1607 = vmul.f32 %v1605, %v1606
    %v1608 = vsub.f32 1.0, %v1607
    %v1609 = vmul.f32 %v1606, %v1608
    %v1610 = vadd.f32 %v1606, %v1609
    %vm1611 = vweird.f32 %v1605
    %vm1612 = vweird.f32 %v1606
    %vm1613 = vmor %vm1611, %vm1612
    %v1614 = vsel %vm1613, %v1606, %v1610
    %v1615 = vand.u32 2147483647, %v1605
    %vm1616 = vcmp.eq.f32.partialorder %v1615, 8.507059e+37
    %v1617 = vand.u32 %v1605, 2147483648
    %v1618 = vor.u32 1.1754944e-38, %v1617
    %v1619 = vsel %vm1616, %v1618, %v1614
    %v1620 = vmul.f32 1.0, %v1619
    %v1621 = vtanh.pop %v1581
    %v1622 = vxor.u32 %v1582, 2147483648
    %v1623 = vmul.f32 %v1622, 1.442695
    %v1624 = vpow.pop %v1623
    %v1625 = vadd.f32 %v1624, 1.0
    %v1626 = vrcp.pop %v1625
    %v1627 = vmul.f32 %v1625, %v1626
    %v1628 = vsub.f32 1.0, %v1627
    %v1629 = vmul.f32 %v1626, %v1628
    %v1630 = vadd.f32 %v1626, %v1629
    %vm1631 = vweird.f32 %v1625
    %vm1632 = vweird.f32 %v1626
    %vm1633 = vmor %vm1631, %vm1632
    %v1634 = vsel %vm1633, %v1626, %v1630
    %v1635 = vand.u32 2147483647, %v1625
    %vm1636 = vcmp.eq.f32.partialorder %v1635, 8.507059e+37
    %v1637 = vand.u32 %v1625, 2147483648
    %v1638 = vor.u32 1.1754944e-38, %v1637
    %v1639 = vsel %vm1636, %v1638, %v1634
    %v1640 = vmul.f32 1.0, %v1639
    %v1641 = vmul.f32 %v1620, %v1519
    %v1642 = vmul.f32 %v1601, %v1621
    %v1643 = vadd.f32 %v1641, %v1642
    %v1644 = vtanh.pop %v1643
    %v1645 = vmul.f32 %v1640, %v1644
    %1646 = vst.msk [vmem:[#allocation2 + $0x30] sm:$0xff] %vm766, %v1645
    %v1647 = vpack.c.bf16 %v1645, %v1645
    %v1649 = vsel %vm766, %v1647, 0
    %1651 = vmatpush.bf16.msra.mxu0 0
    %1652 = vmatpush.bf16.msra.mxu0 0
    %1653 = vmatpush.bf16.msra.mxu0 0
    %1654 = vmatpush.bf16.msra.mxu0 0
    %1655 = vmatpush.bf16.msra.mxu0 0
    %1656 = vmatpush.bf16.msra.mxu0 %v772
    %1657 = vmatpush.bf16.msra.mxu0 %v755
    %1658 = vmatpush.bf16.msra.mxu0 %v751
    %1659 = vmatmul.bf16.gmra.mxu0 %v1649
    %v1660 = vpop.f32.mrf.mxu0
    %v1661 = vadd.f32 0.0, %v1660
    %v1662 = vpop.f32.mrf.mxu0
    %1663 = vdwg.mxu0
    %1664 = vmatpush.bf16.msra.mxu0 0
    %1665 = vmatpush.bf16.msra.mxu0 0
    %1666 = vmatpush.bf16.msra.mxu0 0
    %1667 = vmatpush.bf16.msra.mxu0 0
    %1668 = vmatpush.bf16.msra.mxu0 0
    %1669 = vmatpush.bf16.msra.mxu0 %v775
    %1670 = vmatpush.bf16.msra.mxu0 %v756
    %1671 = vmatpush.bf16.msra.mxu0 %v752
    %1672 = vmatmul.bf16.gmra.mxu0 %v1649
    %v1673 = vpop.f32.mrf.mxu0
    %v1674 = vadd.f32 0.0, %v1673
    %v1675 = vpop.f32.mrf.mxu0
    %1676 = vdwg.mxu0
    %1677 = vmatpush.bf16.msra.mxu0 0
    %1678 = vmatpush.bf16.msra.mxu0 0
    %1679 = vmatpush.bf16.msra.mxu0 0
    %1680 = vmatpush.bf16.msra.mxu0 0
    %1681 = vmatpush.bf16.msra.mxu0 0
    %1682 = vmatpush.bf16.msra.mxu0 %v778
    %1683 = vmatpush.bf16.msra.mxu0 %v757
    %1684 = vmatpush.bf16.msra.mxu0 %v753
    %1685 = vmatmul.bf16.gmra.mxu0 %v1649
    %v1686 = vpop.f32.mrf.mxu0
    %v1687 = vadd.f32 0.0, %v1686
    %v1688 = vpop.f32.mrf.mxu0
    %1689 = vdwg.mxu0
    %1690 = vmatpush.bf16.msra.mxu0 0
    %1691 = vmatpush.bf16.msra.mxu0 0
    %1692 = vmatpush.bf16.msra.mxu0 0
    %1693 = vmatpush.bf16.msra.mxu0 0
    %1694 = vmatpush.bf16.msra.mxu0 0
    %1695 = vmatpush.bf16.msra.mxu0 %v781
    %1696 = vmatpush.bf16.msra.mxu0 %v758
    %1697 = vmatpush.bf16.msra.mxu0 %v754
    %1698 = vmatmul.bf16.gmra.mxu0 %v1649
    %v1699 = vpop.f32.mrf.mxu0
    %v1700 = vadd.f32 0.0, %v1699
    %v1701 = vpop.f32.mrf.mxu0
    %1702 = vdwg.mxu0
    %v1703 = vadd.f32 %v638, %v1661
    %v1704 = vadd.f32 %v667, %v1674
    %v1705 = vadd.f32 %v696, %v1687
    %v1706 = vadd.f32 %v725, %v1700
    %v1707 = vxor.u32 %v1703, 2147483648
    %v1708 = vmul.f32 %v1707, 1.442695
    %v1709 = vpow.pop %v1708
    %v1710 = vadd.f32 %v1709, 1.0
    %v1711 = vrcp.pop %v1710
    %v1712 = vmul.f32 %v1710, %v1711
    %v1713 = vsub.f32 1.0, %v1712
    %v1714 = vmul.f32 %v1711, %v1713
    %v1715 = vadd.f32 %v1711, %v1714
    %vm1716 = vweird.f32 %v1710
    %vm1717 = vweird.f32 %v1711
    %vm1718 = vmor %vm1716, %vm1717
    %v1719 = vsel %vm1718, %v1711, %v1715
    %v1720 = vand.u32 2147483647, %v1710
    %vm1721 = vcmp.eq.f32.partialorder %v1720, 8.507059e+37
    %v1722 = vand.u32 %v1710, 2147483648
    %v1723 = vor.u32 1.1754944e-38, %v1722
    %v1724 = vsel %vm1721, %v1723, %v1719
    %v1725 = vmul.f32 1.0, %v1724
    %v1726 = vxor.u32 %v1704, 2147483648
    %v1727 = vmul.f32 %v1726, 1.442695
    %v1728 = vpow.pop %v1727
    %v1729 = vadd.f32 %v1728, 1.0
    %v1730 = vrcp.pop %v1729
    %v1731 = vmul.f32 %v1729, %v1730
    %v1732 = vsub.f32 1.0, %v1731
    %v1733 = vmul.f32 %v1730, %v1732
    %v1734 = vadd.f32 %v1730, %v1733
    %vm1735 = vweird.f32 %v1729
    %vm1736 = vweird.f32 %v1730
    %vm1737 = vmor %vm1735, %vm1736
    %v1738 = vsel %vm1737, %v1730, %v1734
    %v1739 = vand.u32 2147483647, %v1729
    %vm1740 = vcmp.eq.f32.partialorder %v1739, 8.507059e+37
    %v1741 = vand.u32 %v1729, 2147483648
    %v1742 = vor.u32 1.1754944e-38, %v1741
    %v1743 = vsel %vm1740, %v1742, %v1738
    %v1744 = vmul.f32 1.0, %v1743
    %v1745 = vtanh.pop %v1705
    %v1746 = vxor.u32 %v1706, 2147483648
    %v1747 = vmul.f32 %v1746, 1.442695
    %v1748 = vpow.pop %v1747
    %v1749 = vadd.f32 %v1748, 1.0
    %v1750 = vrcp.pop %v1749
    %v1751 = vmul.f32 %v1749, %v1750
    %v1752 = vsub.f32 1.0, %v1751
    %v1753 = vmul.f32 %v1750, %v1752
    %v1754 = vadd.f32 %v1750, %v1753
    %vm1755 = vweird.f32 %v1749
    %vm1756 = vweird.f32 %v1750
    %vm1757 = vmor %vm1755, %vm1756
    %v1758 = vsel %vm1757, %v1750, %v1754
    %v1759 = vand.u32 2147483647, %v1749
    %vm1760 = vcmp.eq.f32.partialorder %v1759, 8.507059e+37
    %v1761 = vand.u32 %v1749, 2147483648
    %v1762 = vor.u32 1.1754944e-38, %v1761
    %v1763 = vsel %vm1760, %v1762, %v1758
    %v1764 = vmul.f32 1.0, %v1763
    %v1765 = vmul.f32 %v1744, %v1643
    %v1766 = vmul.f32 %v1725, %v1745
    %v1767 = vadd.f32 %v1765, %v1766
    %v1768 = vtanh.pop %v1767
    %v1769 = vmul.f32 %v1764, %v1768
    %1770 = vst.msk [vmem:[#allocation2 + $0x38] sm:$0xff] %vm766, %v1769
    %1771 = vst.msk [vmem:[#allocation36] sm:$0xff] %vm766, %v1769
    %1772 = vst.msk [vmem:[#allocation37] sm:$0xff] %vm766, %v1767
    %v1773 = vld [vmem:[#allocation2] sm:$0xff]
    %v1774 = vld [vmem:[#allocation2 + $0x8] sm:$0xff]
    %v1775 = vld [vmem:[#allocation2 + $0x10] sm:$0xff]
    %v1776 = vld [vmem:[#allocation2 + $0x18] sm:$0xff]
    %v1777 = vld [vmem:[#allocation2 + $0x20] sm:$0xff]
    %v1778 = vld [vmem:[#allocation2 + $0x28] sm:$0xff]
    %v1779 = vld [vmem:[#allocation2 + $0x30] sm:$0xff]
    %v1780 = vld [vmem:[#allocation2 + $0x38] sm:$0xff]
    %v1781 = vld [vmem:[#allocation8] sm:$0xff]
    %v1782 = vld [vmem:[#allocation8 + $0x8] sm:$0xff]
    %v1783 = vld [vmem:[#allocation8 + $0x10] sm:$0xff]
    %v1784 = vld [vmem:[#allocation8 + $0x18] sm:$0xff]
    %v1785 = vld [vmem:[#allocation8 + $0x20] sm:$0xff]
    %v1786 = vld [vmem:[#allocation8 + $0x28] sm:$0xff]
    %v1787 = vld [vmem:[#allocation8 + $0x30] sm:$0xff]
    %v1788 = vld [vmem:[#allocation8 + $0x38] sm:$0xff]
    %v1789 = vld [vmem:[#allocation8 + $0x40] sm:$0xff]
    %v1790 = vld [vmem:[#allocation8 + $0x48] sm:$0xff]
    %v1791 = vld [vmem:[#allocation8 + $0x50] sm:$0xff]
    %v1792 = vld [vmem:[#allocation8 + $0x58] sm:$0xff]
    %v1793 = vld [vmem:[#allocation8 + $0x60] sm:$0xff]
    %v1794 = vld [vmem:[#allocation8 + $0x68] sm:$0xff]
    %v1795 = vld [vmem:[#allocation8 + $0x70] sm:$0xff]
    %v1796 = vld [vmem:[#allocation8 + $0x78] sm:$0xff]
    %v1797 = vld [vmem:[#allocation8 + $0x80] sm:$0xff]
    %v1798 = vld [vmem:[#allocation8 + $0x88] sm:$0xff]
    %v1799 = vld [vmem:[#allocation8 + $0x90] sm:$0xff]
    %v1800 = vld [vmem:[#allocation8 + $0x98] sm:$0xff]
    %v1801 = vld [vmem:[#allocation8 + $0xa0] sm:$0xf]
    %v1802 = vld [vmem:[#allocation8 + $0xa8] sm:$0xf]
    %v1803 = vld [vmem:[#allocation8 + $0xb0] sm:$0xf]
    %v1804 = vld [vmem:[#allocation8 + $0xb8] sm:$0xf]
    %v1805 = vpack.c.bf16 %v1774, %v1773
    %v1806 = vpack.c.bf16 %v1776, %v1775
    %v1807 = vpack.c.bf16 %v1778, %v1777
    %v1808 = vpack.c.bf16 %v1780, %v1779
    %v1809 = vpack.c.bf16 %v1785, %v1781
    %v1810 = vpack.c.bf16 %v1786, %v1782
    %v1811 = vpack.c.bf16 %v1787, %v1783
    %v1812 = vpack.c.bf16 %v1788, %v1784
    %v1813 = vpack.c.bf16 %v1793, %v1789
    %v1814 = vpack.c.bf16 %v1794, %v1790
    %v1815 = vpack.c.bf16 %v1795, %v1791
    %v1816 = vpack.c.bf16 %v1796, %v1792
    %v1817 = vpack.c.bf16 %v1801, %v1797
    %v1818 = vpack.c.bf16 %v1802, %v1798
    %v1819 = vpack.c.bf16 %v1803, %v1799
    %v1820 = vpack.c.bf16 %v1804, %v1800
    %v1821 = vld [vmem:[%s17] sm:$0xf]
    %v1823 = vperm.slane %v1821, 0
    %v1824 = vperm.slane %v1821, 1
    %v1825 = vperm.slane %v1821, 2
    %v1826 = vperm.slane %v1821, 3
    %v1832 = vsel %vm766, %v1805, 0
    %v1835 = vsel %vm766, %v1806, 0
    %v1838 = vsel %vm766, %v1807, 0
    %v1841 = vsel %vm766, %v1808, 0
    %v1844 = vsel %vm770, %v1817, 0
    %v1847 = vsel %vm770, %v1818, 0
    %v1850 = vsel %vm770, %v1819, 0
    %v1853 = vsel %vm770, %v1820, 0
    %1855 = vmatpush.bf16.msra.mxu0 0
    %1856 = vmatpush.bf16.msra.mxu0 0
    %1857 = vmatpush.bf16.msra.mxu0 0
    %1858 = vmatpush.bf16.msra.mxu0 0
    %1859 = vmatpush.bf16.msra.mxu0 0
    %1860 = vmatpush.bf16.msra.mxu0 %v1844
    %1861 = vmatpush.bf16.msra.mxu0 %v1813
    %1862 = vmatpush.bf16.msra.mxu0 %v1809
    %1863 = vmatmul.bf16.gmra.mxu0 %v1832
    %v1864 = vpop.f32.mrf.mxu0
    %v1865 = vadd.f32 %v1823, %v1864
    %v1866 = vpop.f32.mrf.mxu0
    %v1867 = vadd.f32 %v1823, %v1866
    %1868 = vmatmul.bf16.gmra.mxu0 %v1835
    %v1869 = vpop.f32.mrf.mxu0
    %v1870 = vadd.f32 %v1823, %v1869
    %v1871 = vpop.f32.mrf.mxu0
    %v1872 = vadd.f32 %v1823, %v1871
    %1873 = vmatmul.bf16.gmra.mxu0 %v1838
    %v1874 = vpop.f32.mrf.mxu0
    %v1875 = vadd.f32 %v1823, %v1874
    %v1876 = vpop.f32.mrf.mxu0
    %v1877 = vadd.f32 %v1823, %v1876
    %1878 = vmatmul.bf16.gmra.mxu0 %v1841
    %v1879 = vpop.f32.mrf.mxu0
    %v1880 = vadd.f32 %v1823, %v1879
    %v1881 = vpop.f32.mrf.mxu0
    %v1882 = vadd.f32 %v1823, %v1881
    %1883 = vdwg.mxu0
    %1884 = vmatpush.bf16.msra.mxu0 0
    %1885 = vmatpush.bf16.msra.mxu0 0
    %1886 = vmatpush.bf16.msra.mxu0 0
    %1887 = vmatpush.bf16.msra.mxu0 0
    %1888 = vmatpush.bf16.msra.mxu0 0
    %1889 = vmatpush.bf16.msra.mxu0 %v1847
    %1890 = vmatpush.bf16.msra.mxu0 %v1814
    %1891 = vmatpush.bf16.msra.mxu0 %v1810
    %1892 = vmatmul.bf16.gmra.mxu0 %v1832
    %v1893 = vpop.f32.mrf.mxu0
    %v1894 = vadd.f32 %v1824, %v1893
    %v1895 = vpop.f32.mrf.mxu0
    %v1896 = vadd.f32 %v1824, %v1895
    %1897 = vmatmul.bf16.gmra.mxu0 %v1835
    %v1898 = vpop.f32.mrf.mxu0
    %v1899 = vadd.f32 %v1824, %v1898
    %v1900 = vpop.f32.mrf.mxu0
    %v1901 = vadd.f32 %v1824, %v1900
    %1902 = vmatmul.bf16.gmra.mxu0 %v1838
    %v1903 = vpop.f32.mrf.mxu0
    %v1904 = vadd.f32 %v1824, %v1903
    %v1905 = vpop.f32.mrf.mxu0
    %v1906 = vadd.f32 %v1824, %v1905
    %1907 = vmatmul.bf16.gmra.mxu0 %v1841
    %v1908 = vpop.f32.mrf.mxu0
    %v1909 = vadd.f32 %v1824, %v1908
    %v1910 = vpop.f32.mrf.mxu0
    %v1911 = vadd.f32 %v1824, %v1910
    %1912 = vdwg.mxu0
    %1913 = vmatpush.bf16.msra.mxu0 0
    %1914 = vmatpush.bf16.msra.mxu0 0
    %1915 = vmatpush.bf16.msra.mxu0 0
    %1916 = vmatpush.bf16.msra.mxu0 0
    %1917 = vmatpush.bf16.msra.mxu0 0
    %1918 = vmatpush.bf16.msra.mxu0 %v1850
    %1919 = vmatpush.bf16.msra.mxu0 %v1815
    %1920 = vmatpush.bf16.msra.mxu0 %v1811
    %1921 = vmatmul.bf16.gmra.mxu0 %v1832
    %v1922 = vpop.f32.mrf.mxu0
    %v1923 = vadd.f32 %v1825, %v1922
    %v1924 = vpop.f32.mrf.mxu0
    %v1925 = vadd.f32 %v1825, %v1924
    %1926 = vmatmul.bf16.gmra.mxu0 %v1835
    %v1927 = vpop.f32.mrf.mxu0
    %v1928 = vadd.f32 %v1825, %v1927
    %v1929 = vpop.f32.mrf.mxu0
    %v1930 = vadd.f32 %v1825, %v1929
    %1931 = vmatmul.bf16.gmra.mxu0 %v1838
    %v1932 = vpop.f32.mrf.mxu0
    %v1933 = vadd.f32 %v1825, %v1932
    %v1934 = vpop.f32.mrf.mxu0
    %v1935 = vadd.f32 %v1825, %v1934
    %1936 = vmatmul.bf16.gmra.mxu0 %v1841
    %v1937 = vpop.f32.mrf.mxu0
    %v1938 = vadd.f32 %v1825, %v1937
    %v1939 = vpop.f32.mrf.mxu0
    %v1940 = vadd.f32 %v1825, %v1939
    %1941 = vdwg.mxu0
    %1942 = vmatpush.bf16.msra.mxu0 0
    %1943 = vmatpush.bf16.msra.mxu0 0
    %1944 = vmatpush.bf16.msra.mxu0 0
    %1945 = vmatpush.bf16.msra.mxu0 0
    %1946 = vmatpush.bf16.msra.mxu0 0
    %1947 = vmatpush.bf16.msra.mxu0 %v1853
    %1948 = vmatpush.bf16.msra.mxu0 %v1816
    %1949 = vmatpush.bf16.msra.mxu0 %v1812
    %1950 = vmatmul.bf16.gmra.mxu0 %v1832
    %v1951 = vpop.f32.mrf.mxu0
    %v1952 = vadd.f32 %v1826, %v1951
    %v1953 = vpop.f32.mrf.mxu0
    %v1954 = vadd.f32 %v1826, %v1953
    %1955 = vmatmul.bf16.gmra.mxu0 %v1835
    %v1956 = vpop.f32.mrf.mxu0
    %v1957 = vadd.f32 %v1826, %v1956
    %v1958 = vpop.f32.mrf.mxu0
    %v1959 = vadd.f32 %v1826, %v1958
    %1960 = vmatmul.bf16.gmra.mxu0 %v1838
    %v1961 = vpop.f32.mrf.mxu0
    %v1962 = vadd.f32 %v1826, %v1961
    %v1963 = vpop.f32.mrf.mxu0
    %v1964 = vadd.f32 %v1826, %v1963
    %1965 = vmatmul.bf16.gmra.mxu0 %v1841
    %v1966 = vpop.f32.mrf.mxu0
    %v1967 = vadd.f32 %v1826, %v1966
    %v1968 = vpop.f32.mrf.mxu0
    %v1969 = vadd.f32 %v1826, %v1968
    %1970 = vdwg.mxu0
    %v1971 = vld [vmem:[#allocation9] sm:$0xff]
    %v1972 = vld [vmem:[#allocation9 + $0x8] sm:$0xff]
    %v1973 = vld [vmem:[#allocation9 + $0x10] sm:$0xff]
    %v1974 = vld [vmem:[#allocation9 + $0x18] sm:$0xff]
    %v1975 = vld [vmem:[#allocation9 + $0x20] sm:$0xff]
    %v1976 = vld [vmem:[#allocation9 + $0x28] sm:$0xff]
    %v1977 = vld [vmem:[#allocation9 + $0x30] sm:$0xff]
    %v1978 = vld [vmem:[#allocation9 + $0x38] sm:$0xff]
    %v1979 = vld [vmem:[#allocation9 + $0x40] sm:$0xff]
    %v1980 = vld [vmem:[#allocation9 + $0x48] sm:$0xff]
    %v1981 = vld [vmem:[#allocation9 + $0x50] sm:$0xff]
    %v1982 = vld [vmem:[#allocation9 + $0x58] sm:$0xff]
    %v1983 = vld [vmem:[#allocation9 + $0x60] sm:$0xff]
    %v1984 = vld [vmem:[#allocation9 + $0x68] sm:$0xff]
    %v1985 = vld [vmem:[#allocation9 + $0x70] sm:$0xff]
    %v1986 = vld [vmem:[#allocation9 + $0x78] sm:$0xff]
    %v1987 = vld [vmem:[#allocation9 + $0x80] sm:$0xff]
    %v1988 = vld [vmem:[#allocation9 + $0x88] sm:$0xff]
    %v1989 = vld [vmem:[#allocation9 + $0x90] sm:$0xff]
    %v1990 = vld [vmem:[#allocation9 + $0x98] sm:$0xff]
    %v1991 = vld [vmem:[#allocation9 + $0xa0] sm:$0xf]
    %v1992 = vld [vmem:[#allocation9 + $0xa8] sm:$0xf]
    %v1993 = vld [vmem:[#allocation9 + $0xb0] sm:$0xf]
    %v1994 = vld [vmem:[#allocation9 + $0xb8] sm:$0xf]
    %v1995 = vpack.c.bf16 %v1975, %v1971
    %v1996 = vpack.c.bf16 %v1976, %v1972
    %v1997 = vpack.c.bf16 %v1977, %v1973
    %v1998 = vpack.c.bf16 %v1978, %v1974
    %v1999 = vpack.c.bf16 %v1983, %v1979
    %v2000 = vpack.c.bf16 %v1984, %v1980
    %v2001 = vpack.c.bf16 %v1985, %v1981
    %v2002 = vpack.c.bf16 %v1986, %v1982
    %v2003 = vpack.c.bf16 %v1991, %v1987
    %v2004 = vpack.c.bf16 %v1992, %v1988
    %v2005 = vpack.c.bf16 %v1993, %v1989
    %v2006 = vpack.c.bf16 %v1994, %v1990
    %s2007 = scalar_lea.vmem [#allocation3], 8
    %v2008 = vld [vmem:[%s2007] sm:$0xff]
    %s2009 = scalar_lea.vmem [#allocation6], 8
    %v2010 = vld [vmem:[%s2009] sm:$0xff]
    %v2011 = vpack.c.bf16 %v2008, %v2008
    %v2013 = vsel %vm766, %v2011, 0
    %v2016 = vsel %vm770, %v2003, 0
    %v2019 = vsel %vm770, %v2004, 0
    %v2022 = vsel %vm770, %v2005, 0
    %v2025 = vsel %vm770, %v2006, 0
    %2027 = vmatpush.bf16.msra.mxu0 0
    %2028 = vmatpush.bf16.msra.mxu0 0
    %2029 = vmatpush.bf16.msra.mxu0 0
    %2030 = vmatpush.bf16.msra.mxu0 0
    %2031 = vmatpush.bf16.msra.mxu0 0
    %2032 = vmatpush.bf16.msra.mxu0 %v2016
    %2033 = vmatpush.bf16.msra.mxu0 %v1999
    %2034 = vmatpush.bf16.msra.mxu0 %v1995
    %2035 = vmatmul.bf16.gmra.mxu0 %v2013
    %v2036 = vpop.f32.mrf.mxu0
    %v2037 = vadd.f32 0.0, %v2036
    %v2038 = vpop.f32.mrf.mxu0
    %2039 = vdwg.mxu0
    %2040 = vmatpush.bf16.msra.mxu0 0
    %2041 = vmatpush.bf16.msra.mxu0 0
    %2042 = vmatpush.bf16.msra.mxu0 0
    %2043 = vmatpush.bf16.msra.mxu0 0
    %2044 = vmatpush.bf16.msra.mxu0 0
    %2045 = vmatpush.bf16.msra.mxu0 %v2019
    %2046 = vmatpush.bf16.msra.mxu0 %v2000
    %2047 = vmatpush.bf16.msra.mxu0 %v1996
    %2048 = vmatmul.bf16.gmra.mxu0 %v2013
    %v2049 = vpop.f32.mrf.mxu0
    %v2050 = vadd.f32 0.0, %v2049
    %v2051 = vpop.f32.mrf.mxu0
    %2052 = vdwg.mxu0
    %2053 = vmatpush.bf16.msra.mxu0 0
    %2054 = vmatpush.bf16.msra.mxu0 0
    %2055 = vmatpush.bf16.msra.mxu0 0
    %2056 = vmatpush.bf16.msra.mxu0 0
    %2057 = vmatpush.bf16.msra.mxu0 0
    %2058 = vmatpush.bf16.msra.mxu0 %v2022
    %2059 = vmatpush.bf16.msra.mxu0 %v2001
    %2060 = vmatpush.bf16.msra.mxu0 %v1997
    %2061 = vmatmul.bf16.gmra.mxu0 %v2013
    %v2062 = vpop.f32.mrf.mxu0
    %v2063 = vadd.f32 0.0, %v2062
    %v2064 = vpop.f32.mrf.mxu0
    %2065 = vdwg.mxu0
    %2066 = vmatpush.bf16.msra.mxu0 0
    %2067 = vmatpush.bf16.msra.mxu0 0
    %2068 = vmatpush.bf16.msra.mxu0 0
    %2069 = vmatpush.bf16.msra.mxu0 0
    %2070 = vmatpush.bf16.msra.mxu0 0
    %2071 = vmatpush.bf16.msra.mxu0 %v2025
    %2072 = vmatpush.bf16.msra.mxu0 %v2002
    %2073 = vmatpush.bf16.msra.mxu0 %v1998
    %2074 = vmatmul.bf16.gmra.mxu0 %v2013
    %v2075 = vpop.f32.mrf.mxu0
    %v2076 = vadd.f32 0.0, %v2075
    %v2077 = vpop.f32.mrf.mxu0
    %2078 = vdwg.mxu0
    %v2079 = vadd.f32 %v1865, %v2037
    %v2080 = vadd.f32 %v1894, %v2050
    %v2081 = vadd.f32 %v1923, %v2063
    %v2082 = vadd.f32 %v1952, %v2076
    %v2083 = vxor.u32 %v2079, 2147483648
    %v2084 = vmul.f32 %v2083, 1.442695
    %v2085 = vpow.pop %v2084
    %v2086 = vadd.f32 %v2085, 1.0
    %v2087 = vrcp.pop %v2086
    %v2088 = vmul.f32 %v2086, %v2087
    %v2089 = vsub.f32 1.0, %v2088
    %v2090 = vmul.f32 %v2087, %v2089
    %v2091 = vadd.f32 %v2087, %v2090
    %vm2092 = vweird.f32 %v2086
    %vm2093 = vweird.f32 %v2087
    %vm2094 = vmor %vm2092, %vm2093
    %v2095 = vsel %vm2094, %v2087, %v2091
    %v2096 = vand.u32 2147483647, %v2086
    %vm2097 = vcmp.eq.f32.partialorder %v2096, 8.507059e+37
    %v2098 = vand.u32 %v2086, 2147483648
    %v2099 = vor.u32 1.1754944e-38, %v2098
    %v2100 = vsel %vm2097, %v2099, %v2095
    %v2101 = vmul.f32 1.0, %v2100
    %v2102 = vxor.u32 %v2080, 2147483648
    %v2103 = vmul.f32 %v2102, 1.442695
    %v2104 = vpow.pop %v2103
    %v2105 = vadd.f32 %v2104, 1.0
    %v2106 = vrcp.pop %v2105
    %v2107 = vmul.f32 %v2105, %v2106
    %v2108 = vsub.f32 1.0, %v2107
    %v2109 = vmul.f32 %v2106, %v2108
    %v2110 = vadd.f32 %v2106, %v2109
    %vm2111 = vweird.f32 %v2105
    %vm2112 = vweird.f32 %v2106
    %vm2113 = vmor %vm2111, %vm2112
    %v2114 = vsel %vm2113, %v2106, %v2110
    %v2115 = vand.u32 2147483647, %v2105
    %vm2116 = vcmp.eq.f32.partialorder %v2115, 8.507059e+37
    %v2117 = vand.u32 %v2105, 2147483648
    %v2118 = vor.u32 1.1754944e-38, %v2117
    %v2119 = vsel %vm2116, %v2118, %v2114
    %v2120 = vmul.f32 1.0, %v2119
    %v2121 = vtanh.pop %v2081
    %v2122 = vxor.u32 %v2082, 2147483648
    %v2123 = vmul.f32 %v2122, 1.442695
    %v2124 = vpow.pop %v2123
    %v2125 = vadd.f32 %v2124, 1.0
    %v2126 = vrcp.pop %v2125
    %v2127 = vmul.f32 %v2125, %v2126
    %v2128 = vsub.f32 1.0, %v2127
    %v2129 = vmul.f32 %v2126, %v2128
    %v2130 = vadd.f32 %v2126, %v2129
    %vm2131 = vweird.f32 %v2125
    %vm2132 = vweird.f32 %v2126
    %vm2133 = vmor %vm2131, %vm2132
    %v2134 = vsel %vm2133, %v2126, %v2130
    %v2135 = vand.u32 2147483647, %v2125
    %vm2136 = vcmp.eq.f32.partialorder %v2135, 8.507059e+37
    %v2137 = vand.u32 %v2125, 2147483648
    %v2138 = vor.u32 1.1754944e-38, %v2137
    %v2139 = vsel %vm2136, %v2138, %v2134
    %v2140 = vmul.f32 1.0, %v2139
    %v2141 = vmul.f32 %v2120, %v2010
    %v2142 = vmul.f32 %v2101, %v2121
    %v2143 = vadd.f32 %v2141, %v2142
    %v2144 = vtanh.pop %v2143
    %v2145 = vmul.f32 %v2140, %v2144
    %2146 = vst.msk [vmem:[#allocation2] sm:$0xff] %vm766, %v2145
    %v2147 = vpack.c.bf16 %v2145, %v2145
    %v2149 = vsel %vm766, %v2147, 0
    %2151 = vmatpush.bf16.msra.mxu0 0
    %2152 = vmatpush.bf16.msra.mxu0 0
    %2153 = vmatpush.bf16.msra.mxu0 0
    %2154 = vmatpush.bf16.msra.mxu0 0
    %2155 = vmatpush.bf16.msra.mxu0 0
    %2156 = vmatpush.bf16.msra.mxu0 %v2016
    %2157 = vmatpush.bf16.msra.mxu0 %v1999
    %2158 = vmatpush.bf16.msra.mxu0 %v1995
    %2159 = vmatmul.bf16.gmra.mxu0 %v2149
    %v2160 = vpop.f32.mrf.mxu0
    %v2161 = vadd.f32 0.0, %v2160
    %v2162 = vpop.f32.mrf.mxu0
    %2163 = vdwg.mxu0
    %2164 = vmatpush.bf16.msra.mxu0 0
    %2165 = vmatpush.bf16.msra.mxu0 0
    %2166 = vmatpush.bf16.msra.mxu0 0
    %2167 = vmatpush.bf16.msra.mxu0 0
    %2168 = vmatpush.bf16.msra.mxu0 0
    %2169 = vmatpush.bf16.msra.mxu0 %v2019
    %2170 = vmatpush.bf16.msra.mxu0 %v2000
    %2171 = vmatpush.bf16.msra.mxu0 %v1996
    %2172 = vmatmul.bf16.gmra.mxu0 %v2149
    %v2173 = vpop.f32.mrf.mxu0
    %v2174 = vadd.f32 0.0, %v2173
    %v2175 = vpop.f32.mrf.mxu0
    %2176 = vdwg.mxu0
    %2177 = vmatpush.bf16.msra.mxu0 0
    %2178 = vmatpush.bf16.msra.mxu0 0
    %2179 = vmatpush.bf16.msra.mxu0 0
    %2180 = vmatpush.bf16.msra.mxu0 0
    %2181 = vmatpush.bf16.msra.mxu0 0
    %2182 = vmatpush.bf16.msra.mxu0 %v2022
    %2183 = vmatpush.bf16.msra.mxu0 %v2001
    %2184 = vmatpush.bf16.msra.mxu0 %v1997
    %2185 = vmatmul.bf16.gmra.mxu0 %v2149
    %v2186 = vpop.f32.mrf.mxu0
    %v2187 = vadd.f32 0.0, %v2186
    %v2188 = vpop.f32.mrf.mxu0
    %2189 = vdwg.mxu0
    %2190 = vmatpush.bf16.msra.mxu0 0
    %2191 = vmatpush.bf16.msra.mxu0 0
    %2192 = vmatpush.bf16.msra.mxu0 0
    %2193 = vmatpush.bf16.msra.mxu0 0
    %2194 = vmatpush.bf16.msra.mxu0 0
    %2195 = vmatpush.bf16.msra.mxu0 %v2025
    %2196 = vmatpush.bf16.msra.mxu0 %v2002
    %2197 = vmatpush.bf16.msra.mxu0 %v1998
    %2198 = vmatmul.bf16.gmra.mxu0 %v2149
    %v2199 = vpop.f32.mrf.mxu0
    %v2200 = vadd.f32 0.0, %v2199
    %v2201 = vpop.f32.mrf.mxu0
    %2202 = vdwg.mxu0
    %v2203 = vadd.f32 %v1867, %v2161
    %v2204 = vadd.f32 %v1896, %v2174
    %v2205 = vadd.f32 %v1925, %v2187
    %v2206 = vadd.f32 %v1954, %v2200
    %v2207 = vxor.u32 %v2203, 2147483648
    %v2208 = vmul.f32 %v2207, 1.442695
    %v2209 = vpow.pop %v2208
    %v2210 = vadd.f32 %v2209, 1.0
    %v2211 = vrcp.pop %v2210
    %v2212 = vmul.f32 %v2210, %v2211
    %v2213 = vsub.f32 1.0, %v2212
    %v2214 = vmul.f32 %v2211, %v2213
    %v2215 = vadd.f32 %v2211, %v2214
    %vm2216 = vweird.f32 %v2210
    %vm2217 = vweird.f32 %v2211
    %vm2218 = vmor %vm2216, %vm2217
    %v2219 = vsel %vm2218, %v2211, %v2215
    %v2220 = vand.u32 2147483647, %v2210
    %vm2221 = vcmp.eq.f32.partialorder %v2220, 8.507059e+37
    %v2222 = vand.u32 %v2210, 2147483648
    %v2223 = vor.u32 1.1754944e-38, %v2222
    %v2224 = vsel %vm2221, %v2223, %v2219
    %v2225 = vmul.f32 1.0, %v2224
    %v2226 = vxor.u32 %v2204, 2147483648
    %v2227 = vmul.f32 %v2226, 1.442695
    %v2228 = vpow.pop %v2227
    %v2229 = vadd.f32 %v2228, 1.0
    %v2230 = vrcp.pop %v2229
    %v2231 = vmul.f32 %v2229, %v2230
    %v2232 = vsub.f32 1.0, %v2231
    %v2233 = vmul.f32 %v2230, %v2232
    %v2234 = vadd.f32 %v2230, %v2233
    %vm2235 = vweird.f32 %v2229
    %vm2236 = vweird.f32 %v2230
    %vm2237 = vmor %vm2235, %vm2236
    %v2238 = vsel %vm2237, %v2230, %v2234
    %v2239 = vand.u32 2147483647, %v2229
    %vm2240 = vcmp.eq.f32.partialorder %v2239, 8.507059e+37
    %v2241 = vand.u32 %v2229, 2147483648
    %v2242 = vor.u32 1.1754944e-38, %v2241
    %v2243 = vsel %vm2240, %v2242, %v2238
    %v2244 = vmul.f32 1.0, %v2243
    %v2245 = vtanh.pop %v2205
    %v2246 = vxor.u32 %v2206, 2147483648
    %v2247 = vmul.f32 %v2246, 1.442695
    %v2248 = vpow.pop %v2247
    %v2249 = vadd.f32 %v2248, 1.0
    %v2250 = vrcp.pop %v2249
    %v2251 = vmul.f32 %v2249, %v2250
    %v2252 = vsub.f32 1.0, %v2251
    %v2253 = vmul.f32 %v2250, %v2252
    %v2254 = vadd.f32 %v2250, %v2253
    %vm2255 = vweird.f32 %v2249
    %vm2256 = vweird.f32 %v2250
    %vm2257 = vmor %vm2255, %vm2256
    %v2258 = vsel %vm2257, %v2250, %v2254
    %v2259 = vand.u32 2147483647, %v2249
    %vm2260 = vcmp.eq.f32.partialorder %v2259, 8.507059e+37
    %v2261 = vand.u32 %v2249, 2147483648
    %v2262 = vor.u32 1.1754944e-38, %v2261
    %v2263 = vsel %vm2260, %v2262, %v2258
    %v2264 = vmul.f32 1.0, %v2263
    %v2265 = vmul.f32 %v2244, %v2143
    %v2266 = vmul.f32 %v2225, %v2245
    %v2267 = vadd.f32 %v2265, %v2266
    %v2268 = vtanh.pop %v2267
    %v2269 = vmul.f32 %v2264, %v2268
    %2270 = vst.msk [vmem:[#allocation2 + $0x8] sm:$0xff] %vm766, %v2269
    %v2271 = vpack.c.bf16 %v2269, %v2269
    %v2273 = vsel %vm766, %v2271, 0
    %2275 = vmatpush.bf16.msra.mxu0 0
    %2276 = vmatpush.bf16.msra.mxu0 0
    %2277 = vmatpush.bf16.msra.mxu0 0
    %2278 = vmatpush.bf16.msra.mxu0 0
    %2279 = vmatpush.bf16.msra.mxu0 0
    %2280 = vmatpush.bf16.msra.mxu0 %v2016
    %2281 = vmatpush.bf16.msra.mxu0 %v1999
    %2282 = vmatpush.bf16.msra.mxu0 %v1995
    %2283 = vmatmul.bf16.gmra.mxu0 %v2273
    %v2284 = vpop.f32.mrf.mxu0
    %v2285 = vadd.f32 0.0, %v2284
    %v2286 = vpop.f32.mrf.mxu0
    %2287 = vdwg.mxu0
    %2288 = vmatpush.bf16.msra.mxu0 0
    %2289 = vmatpush.bf16.msra.mxu0 0
    %2290 = vmatpush.bf16.msra.mxu0 0
    %2291 = vmatpush.bf16.msra.mxu0 0
    %2292 = vmatpush.bf16.msra.mxu0 0
    %2293 = vmatpush.bf16.msra.mxu0 %v2019
    %2294 = vmatpush.bf16.msra.mxu0 %v2000
    %2295 = vmatpush.bf16.msra.mxu0 %v1996
    %2296 = vmatmul.bf16.gmra.mxu0 %v2273
    %v2297 = vpop.f32.mrf.mxu0
    %v2298 = vadd.f32 0.0, %v2297
    %v2299 = vpop.f32.mrf.mxu0
    %2300 = vdwg.mxu0
    %2301 = vmatpush.bf16.msra.mxu0 0
    %2302 = vmatpush.bf16.msra.mxu0 0
    %2303 = vmatpush.bf16.msra.mxu0 0
    %2304 = vmatpush.bf16.msra.mxu0 0
    %2305 = vmatpush.bf16.msra.mxu0 0
    %2306 = vmatpush.bf16.msra.mxu0 %v2022
    %2307 = vmatpush.bf16.msra.mxu0 %v2001
    %2308 = vmatpush.bf16.msra.mxu0 %v1997
    %2309 = vmatmul.bf16.gmra.mxu0 %v2273
    %v2310 = vpop.f32.mrf.mxu0
    %v2311 = vadd.f32 0.0, %v2310
    %v2312 = vpop.f32.mrf.mxu0
    %2313 = vdwg.mxu0
    %2314 = vmatpush.bf16.msra.mxu0 0
    %2315 = vmatpush.bf16.msra.mxu0 0
    %2316 = vmatpush.bf16.msra.mxu0 0
    %2317 = vmatpush.bf16.msra.mxu0 0
    %2318 = vmatpush.bf16.msra.mxu0 0
    %2319 = vmatpush.bf16.msra.mxu0 %v2025
    %2320 = vmatpush.bf16.msra.mxu0 %v2002
    %2321 = vmatpush.bf16.msra.mxu0 %v1998
    %2322 = vmatmul.bf16.gmra.mxu0 %v2273
    %v2323 = vpop.f32.mrf.mxu0
    %v2324 = vadd.f32 0.0, %v2323
    %v2325 = vpop.f32.mrf.mxu0
    %2326 = vdwg.mxu0
    %v2327 = vadd.f32 %v1870, %v2285
    %v2328 = vadd.f32 %v1899, %v2298
    %v2329 = vadd.f32 %v1928, %v2311
    %v2330 = vadd.f32 %v1957, %v2324
    %v2331 = vxor.u32 %v2327, 2147483648
    %v2332 = vmul.f32 %v2331, 1.442695
    %v2333 = vpow.pop %v2332
    %v2334 = vadd.f32 %v2333, 1.0
    %v2335 = vrcp.pop %v2334
    %v2336 = vmul.f32 %v2334, %v2335
    %v2337 = vsub.f32 1.0, %v2336
    %v2338 = vmul.f32 %v2335, %v2337
    %v2339 = vadd.f32 %v2335, %v2338
    %vm2340 = vweird.f32 %v2334
    %vm2341 = vweird.f32 %v2335
    %vm2342 = vmor %vm2340, %vm2341
    %v2343 = vsel %vm2342, %v2335, %v2339
    %v2344 = vand.u32 2147483647, %v2334
    %vm2345 = vcmp.eq.f32.partialorder %v2344, 8.507059e+37
    %v2346 = vand.u32 %v2334, 2147483648
    %v2347 = vor.u32 1.1754944e-38, %v2346
    %v2348 = vsel %vm2345, %v2347, %v2343
    %v2349 = vmul.f32 1.0, %v2348
    %v2350 = vxor.u32 %v2328, 2147483648
    %v2351 = vmul.f32 %v2350, 1.442695
    %v2352 = vpow.pop %v2351
    %v2353 = vadd.f32 %v2352, 1.0
    %v2354 = vrcp.pop %v2353
    %v2355 = vmul.f32 %v2353, %v2354
    %v2356 = vsub.f32 1.0, %v2355
    %v2357 = vmul.f32 %v2354, %v2356
    %v2358 = vadd.f32 %v2354, %v2357
    %vm2359 = vweird.f32 %v2353
    %vm2360 = vweird.f32 %v2354
    %vm2361 = vmor %vm2359, %vm2360
    %v2362 = vsel %vm2361, %v2354, %v2358
    %v2363 = vand.u32 2147483647, %v2353
    %vm2364 = vcmp.eq.f32.partialorder %v2363, 8.507059e+37
    %v2365 = vand.u32 %v2353, 2147483648
    %v2366 = vor.u32 1.1754944e-38, %v2365
    %v2367 = vsel %vm2364, %v2366, %v2362
    %v2368 = vmul.f32 1.0, %v2367
    %v2369 = vtanh.pop %v2329
    %v2370 = vxor.u32 %v2330, 2147483648
    %v2371 = vmul.f32 %v2370, 1.442695
    %v2372 = vpow.pop %v2371
    %v2373 = vadd.f32 %v2372, 1.0
    %v2374 = vrcp.pop %v2373
    %v2375 = vmul.f32 %v2373, %v2374
    %v2376 = vsub.f32 1.0, %v2375
    %v2377 = vmul.f32 %v2374, %v2376
    %v2378 = vadd.f32 %v2374, %v2377
    %vm2379 = vweird.f32 %v2373
    %vm2380 = vweird.f32 %v2374
    %vm2381 = vmor %vm2379, %vm2380
    %v2382 = vsel %vm2381, %v2374, %v2378
    %v2383 = vand.u32 2147483647, %v2373
    %vm2384 = vcmp.eq.f32.partialorder %v2383, 8.507059e+37
    %v2385 = vand.u32 %v2373, 2147483648
    %v2386 = vor.u32 1.1754944e-38, %v2385
    %v2387 = vsel %vm2384, %v2386, %v2382
    %v2388 = vmul.f32 1.0, %v2387
    %v2389 = vmul.f32 %v2368, %v2267
    %v2390 = vmul.f32 %v2349, %v2369
    %v2391 = vadd.f32 %v2389, %v2390
    %v2392 = vtanh.pop %v2391
    %v2393 = vmul.f32 %v2388, %v2392
    %2394 = vst.msk [vmem:[#allocation2 + $0x10] sm:$0xff] %vm766, %v2393
    %v2395 = vpack.c.bf16 %v2393, %v2393
    %v2397 = vsel %vm766, %v2395, 0
    %2399 = vmatpush.bf16.msra.mxu0 0
    %2400 = vmatpush.bf16.msra.mxu0 0
    %2401 = vmatpush.bf16.msra.mxu0 0
    %2402 = vmatpush.bf16.msra.mxu0 0
    %2403 = vmatpush.bf16.msra.mxu0 0
    %2404 = vmatpush.bf16.msra.mxu0 %v2016
    %2405 = vmatpush.bf16.msra.mxu0 %v1999
    %2406 = vmatpush.bf16.msra.mxu0 %v1995
    %2407 = vmatmul.bf16.gmra.mxu0 %v2397
    %v2408 = vpop.f32.mrf.mxu0
    %v2409 = vadd.f32 0.0, %v2408
    %v2410 = vpop.f32.mrf.mxu0
    %2411 = vdwg.mxu0
    %2412 = vmatpush.bf16.msra.mxu0 0
    %2413 = vmatpush.bf16.msra.mxu0 0
    %2414 = vmatpush.bf16.msra.mxu0 0
    %2415 = vmatpush.bf16.msra.mxu0 0
    %2416 = vmatpush.bf16.msra.mxu0 0
    %2417 = vmatpush.bf16.msra.mxu0 %v2019
    %2418 = vmatpush.bf16.msra.mxu0 %v2000
    %2419 = vmatpush.bf16.msra.mxu0 %v1996
    %2420 = vmatmul.bf16.gmra.mxu0 %v2397
    %v2421 = vpop.f32.mrf.mxu0
    %v2422 = vadd.f32 0.0, %v2421
    %v2423 = vpop.f32.mrf.mxu0
    %2424 = vdwg.mxu0
    %2425 = vmatpush.bf16.msra.mxu0 0
    %2426 = vmatpush.bf16.msra.mxu0 0
    %2427 = vmatpush.bf16.msra.mxu0 0
    %2428 = vmatpush.bf16.msra.mxu0 0
    %2429 = vmatpush.bf16.msra.mxu0 0
    %2430 = vmatpush.bf16.msra.mxu0 %v2022
    %2431 = vmatpush.bf16.msra.mxu0 %v2001
    %2432 = vmatpush.bf16.msra.mxu0 %v1997
    %2433 = vmatmul.bf16.gmra.mxu0 %v2397
    %v2434 = vpop.f32.mrf.mxu0
    %v2435 = vadd.f32 0.0, %v2434
    %v2436 = vpop.f32.mrf.mxu0
    %2437 = vdwg.mxu0
    %2438 = vmatpush.bf16.msra.mxu0 0
    %2439 = vmatpush.bf16.msra.mxu0 0
    %2440 = vmatpush.bf16.msra.mxu0 0
    %2441 = vmatpush.bf16.msra.mxu0 0
    %2442 = vmatpush.bf16.msra.mxu0 0
    %2443 = vmatpush.bf16.msra.mxu0 %v2025
    %2444 = vmatpush.bf16.msra.mxu0 %v2002
    %2445 = vmatpush.bf16.msra.mxu0 %v1998
    %2446 = vmatmul.bf16.gmra.mxu0 %v2397
    %v2447 = vpop.f32.mrf.mxu0
    %v2448 = vadd.f32 0.0, %v2447
    %v2449 = vpop.f32.mrf.mxu0
    %2450 = vdwg.mxu0
    %v2451 = vadd.f32 %v1872, %v2409
    %v2452 = vadd.f32 %v1901, %v2422
    %v2453 = vadd.f32 %v1930, %v2435
    %v2454 = vadd.f32 %v1959, %v2448
    %v2455 = vxor.u32 %v2451, 2147483648
    %v2456 = vmul.f32 %v2455, 1.442695
    %v2457 = vpow.pop %v2456
    %v2458 = vadd.f32 %v2457, 1.0
    %v2459 = vrcp.pop %v2458
    %v2460 = vmul.f32 %v2458, %v2459
    %v2461 = vsub.f32 1.0, %v2460
    %v2462 = vmul.f32 %v2459, %v2461
    %v2463 = vadd.f32 %v2459, %v2462
    %vm2464 = vweird.f32 %v2458
    %vm2465 = vweird.f32 %v2459
    %vm2466 = vmor %vm2464, %vm2465
    %v2467 = vsel %vm2466, %v2459, %v2463
    %v2468 = vand.u32 2147483647, %v2458
    %vm2469 = vcmp.eq.f32.partialorder %v2468, 8.507059e+37
    %v2470 = vand.u32 %v2458, 2147483648
    %v2471 = vor.u32 1.1754944e-38, %v2470
    %v2472 = vsel %vm2469, %v2471, %v2467
    %v2473 = vmul.f32 1.0, %v2472
    %v2474 = vxor.u32 %v2452, 2147483648
    %v2475 = vmul.f32 %v2474, 1.442695
    %v2476 = vpow.pop %v2475
    %v2477 = vadd.f32 %v2476, 1.0
    %v2478 = vrcp.pop %v2477
    %v2479 = vmul.f32 %v2477, %v2478
    %v2480 = vsub.f32 1.0, %v2479
    %v2481 = vmul.f32 %v2478, %v2480
    %v2482 = vadd.f32 %v2478, %v2481
    %vm2483 = vweird.f32 %v2477
    %vm2484 = vweird.f32 %v2478
    %vm2485 = vmor %vm2483, %vm2484
    %v2486 = vsel %vm2485, %v2478, %v2482
    %v2487 = vand.u32 2147483647, %v2477
    %vm2488 = vcmp.eq.f32.partialorder %v2487, 8.507059e+37
    %v2489 = vand.u32 %v2477, 2147483648
    %v2490 = vor.u32 1.1754944e-38, %v2489
    %v2491 = vsel %vm2488, %v2490, %v2486
    %v2492 = vmul.f32 1.0, %v2491
    %v2493 = vtanh.pop %v2453
    %v2494 = vxor.u32 %v2454, 2147483648
    %v2495 = vmul.f32 %v2494, 1.442695
    %v2496 = vpow.pop %v2495
    %v2497 = vadd.f32 %v2496, 1.0
    %v2498 = vrcp.pop %v2497
    %v2499 = vmul.f32 %v2497, %v2498
    %v2500 = vsub.f32 1.0, %v2499
    %v2501 = vmul.f32 %v2498, %v2500
    %v2502 = vadd.f32 %v2498, %v2501
    %vm2503 = vweird.f32 %v2497
    %vm2504 = vweird.f32 %v2498
    %vm2505 = vmor %vm2503, %vm2504
    %v2506 = vsel %vm2505, %v2498, %v2502
    %v2507 = vand.u32 2147483647, %v2497
    %vm2508 = vcmp.eq.f32.partialorder %v2507, 8.507059e+37
    %v2509 = vand.u32 %v2497, 2147483648
    %v2510 = vor.u32 1.1754944e-38, %v2509
    %v2511 = vsel %vm2508, %v2510, %v2506
    %v2512 = vmul.f32 1.0, %v2511
    %v2513 = vmul.f32 %v2492, %v2391
    %v2514 = vmul.f32 %v2473, %v2493
    %v2515 = vadd.f32 %v2513, %v2514
    %v2516 = vtanh.pop %v2515
    %v2517 = vmul.f32 %v2512, %v2516
    %2518 = vst.msk [vmem:[#allocation2 + $0x18] sm:$0xff] %vm766, %v2517
    %v2519 = vpack.c.bf16 %v2517, %v2517
    %v2521 = vsel %vm766, %v2519, 0
    %2523 = vmatpush.bf16.msra.mxu0 0
    %2524 = vmatpush.bf16.msra.mxu0 0
    %2525 = vmatpush.bf16.msra.mxu0 0
    %2526 = vmatpush.bf16.msra.mxu0 0
    %2527 = vmatpush.bf16.msra.mxu0 0
    %2528 = vmatpush.bf16.msra.mxu0 %v2016
    %2529 = vmatpush.bf16.msra.mxu0 %v1999
    %2530 = vmatpush.bf16.msra.mxu0 %v1995
    %2531 = vmatmul.bf16.gmra.mxu0 %v2521
    %v2532 = vpop.f32.mrf.mxu0
    %v2533 = vadd.f32 0.0, %v2532
    %v2534 = vpop.f32.mrf.mxu0
    %2535 = vdwg.mxu0
    %2536 = vmatpush.bf16.msra.mxu0 0
    %2537 = vmatpush.bf16.msra.mxu0 0
    %2538 = vmatpush.bf16.msra.mxu0 0
    %2539 = vmatpush.bf16.msra.mxu0 0
    %2540 = vmatpush.bf16.msra.mxu0 0
    %2541 = vmatpush.bf16.msra.mxu0 %v2019
    %2542 = vmatpush.bf16.msra.mxu0 %v2000
    %2543 = vmatpush.bf16.msra.mxu0 %v1996
    %2544 = vmatmul.bf16.gmra.mxu0 %v2521
    %v2545 = vpop.f32.mrf.mxu0
    %v2546 = vadd.f32 0.0, %v2545
    %v2547 = vpop.f32.mrf.mxu0
    %2548 = vdwg.mxu0
    %2549 = vmatpush.bf16.msra.mxu0 0
    %2550 = vmatpush.bf16.msra.mxu0 0
    %2551 = vmatpush.bf16.msra.mxu0 0
    %2552 = vmatpush.bf16.msra.mxu0 0
    %2553 = vmatpush.bf16.msra.mxu0 0
    %2554 = vmatpush.bf16.msra.mxu0 %v2022
    %2555 = vmatpush.bf16.msra.mxu0 %v2001
    %2556 = vmatpush.bf16.msra.mxu0 %v1997
    %2557 = vmatmul.bf16.gmra.mxu0 %v2521
    %v2558 = vpop.f32.mrf.mxu0
    %v2559 = vadd.f32 0.0, %v2558
    %v2560 = vpop.f32.mrf.mxu0
    %2561 = vdwg.mxu0
    %2562 = vmatpush.bf16.msra.mxu0 0
    %2563 = vmatpush.bf16.msra.mxu0 0
    %2564 = vmatpush.bf16.msra.mxu0 0
    %2565 = vmatpush.bf16.msra.mxu0 0
    %2566 = vmatpush.bf16.msra.mxu0 0
    %2567 = vmatpush.bf16.msra.mxu0 %v2025
    %2568 = vmatpush.bf16.msra.mxu0 %v2002
    %2569 = vmatpush.bf16.msra.mxu0 %v1998
    %2570 = vmatmul.bf16.gmra.mxu0 %v2521
    %v2571 = vpop.f32.mrf.mxu0
    %v2572 = vadd.f32 0.0, %v2571
    %v2573 = vpop.f32.mrf.mxu0
    %2574 = vdwg.mxu0
    %v2575 = vadd.f32 %v1875, %v2533
    %v2576 = vadd.f32 %v1904, %v2546
    %v2577 = vadd.f32 %v1933, %v2559
    %v2578 = vadd.f32 %v1962, %v2572
    %v2579 = vxor.u32 %v2575, 2147483648
    %v2580 = vmul.f32 %v2579, 1.442695
    %v2581 = vpow.pop %v2580
    %v2582 = vadd.f32 %v2581, 1.0
    %v2583 = vrcp.pop %v2582
    %v2584 = vmul.f32 %v2582, %v2583
    %v2585 = vsub.f32 1.0, %v2584
    %v2586 = vmul.f32 %v2583, %v2585
    %v2587 = vadd.f32 %v2583, %v2586
    %vm2588 = vweird.f32 %v2582
    %vm2589 = vweird.f32 %v2583
    %vm2590 = vmor %vm2588, %vm2589
    %v2591 = vsel %vm2590, %v2583, %v2587
    %v2592 = vand.u32 2147483647, %v2582
    %vm2593 = vcmp.eq.f32.partialorder %v2592, 8.507059e+37
    %v2594 = vand.u32 %v2582, 2147483648
    %v2595 = vor.u32 1.1754944e-38, %v2594
    %v2596 = vsel %vm2593, %v2595, %v2591
    %v2597 = vmul.f32 1.0, %v2596
    %v2598 = vxor.u32 %v2576, 2147483648
    %v2599 = vmul.f32 %v2598, 1.442695
    %v2600 = vpow.pop %v2599
    %v2601 = vadd.f32 %v2600, 1.0
    %v2602 = vrcp.pop %v2601
    %v2603 = vmul.f32 %v2601, %v2602
    %v2604 = vsub.f32 1.0, %v2603
    %v2605 = vmul.f32 %v2602, %v2604
    %v2606 = vadd.f32 %v2602, %v2605
    %vm2607 = vweird.f32 %v2601
    %vm2608 = vweird.f32 %v2602
    %vm2609 = vmor %vm2607, %vm2608
    %v2610 = vsel %vm2609, %v2602, %v2606
    %v2611 = vand.u32 2147483647, %v2601
    %vm2612 = vcmp.eq.f32.partialorder %v2611, 8.507059e+37
    %v2613 = vand.u32 %v2601, 2147483648
    %v2614 = vor.u32 1.1754944e-38, %v2613
    %v2615 = vsel %vm2612, %v2614, %v2610
    %v2616 = vmul.f32 1.0, %v2615
    %v2617 = vtanh.pop %v2577
    %v2618 = vxor.u32 %v2578, 2147483648
    %v2619 = vmul.f32 %v2618, 1.442695
    %v2620 = vpow.pop %v2619
    %v2621 = vadd.f32 %v2620, 1.0
    %v2622 = vrcp.pop %v2621
    %v2623 = vmul.f32 %v2621, %v2622
    %v2624 = vsub.f32 1.0, %v2623
    %v2625 = vmul.f32 %v2622, %v2624
    %v2626 = vadd.f32 %v2622, %v2625
    %vm2627 = vweird.f32 %v2621
    %vm2628 = vweird.f32 %v2622
    %vm2629 = vmor %vm2627, %vm2628
    %v2630 = vsel %vm2629, %v2622, %v2626
    %v2631 = vand.u32 2147483647, %v2621
    %vm2632 = vcmp.eq.f32.partialorder %v2631, 8.507059e+37
    %v2633 = vand.u32 %v2621, 2147483648
    %v2634 = vor.u32 1.1754944e-38, %v2633
    %v2635 = vsel %vm2632, %v2634, %v2630
    %v2636 = vmul.f32 1.0, %v2635
    %v2637 = vmul.f32 %v2616, %v2515
    %v2638 = vmul.f32 %v2597, %v2617
    %v2639 = vadd.f32 %v2637, %v2638
    %v2640 = vtanh.pop %v2639
    %v2641 = vmul.f32 %v2636, %v2640
    %2642 = vst.msk [vmem:[#allocation2 + $0x20] sm:$0xff] %vm766, %v2641
    %v2643 = vpack.c.bf16 %v2641, %v2641
    %v2645 = vsel %vm766, %v2643, 0
    %2647 = vmatpush.bf16.msra.mxu0 0
    %2648 = vmatpush.bf16.msra.mxu0 0
    %2649 = vmatpush.bf16.msra.mxu0 0
    %2650 = vmatpush.bf16.msra.mxu0 0
    %2651 = vmatpush.bf16.msra.mxu0 0
    %2652 = vmatpush.bf16.msra.mxu0 %v2016
    %2653 = vmatpush.bf16.msra.mxu0 %v1999
    %2654 = vmatpush.bf16.msra.mxu0 %v1995
    %2655 = vmatmul.bf16.gmra.mxu0 %v2645
    %v2656 = vpop.f32.mrf.mxu0
    %v2657 = vadd.f32 0.0, %v2656
    %v2658 = vpop.f32.mrf.mxu0
    %2659 = vdwg.mxu0
    %2660 = vmatpush.bf16.msra.mxu0 0
    %2661 = vmatpush.bf16.msra.mxu0 0
    %2662 = vmatpush.bf16.msra.mxu0 0
    %2663 = vmatpush.bf16.msra.mxu0 0
    %2664 = vmatpush.bf16.msra.mxu0 0
    %2665 = vmatpush.bf16.msra.mxu0 %v2019
    %2666 = vmatpush.bf16.msra.mxu0 %v2000
    %2667 = vmatpush.bf16.msra.mxu0 %v1996
    %2668 = vmatmul.bf16.gmra.mxu0 %v2645
    %v2669 = vpop.f32.mrf.mxu0
    %v2670 = vadd.f32 0.0, %v2669
    %v2671 = vpop.f32.mrf.mxu0
    %2672 = vdwg.mxu0
    %2673 = vmatpush.bf16.msra.mxu0 0
    %2674 = vmatpush.bf16.msra.mxu0 0
    %2675 = vmatpush.bf16.msra.mxu0 0
    %2676 = vmatpush.bf16.msra.mxu0 0
    %2677 = vmatpush.bf16.msra.mxu0 0
    %2678 = vmatpush.bf16.msra.mxu0 %v2022
    %2679 = vmatpush.bf16.msra.mxu0 %v2001
    %2680 = vmatpush.bf16.msra.mxu0 %v1997
    %2681 = vmatmul.bf16.gmra.mxu0 %v2645
    %v2682 = vpop.f32.mrf.mxu0
    %v2683 = vadd.f32 0.0, %v2682
    %v2684 = vpop.f32.mrf.mxu0
    %2685 = vdwg.mxu0
    %2686 = vmatpush.bf16.msra.mxu0 0
    %2687 = vmatpush.bf16.msra.mxu0 0
    %2688 = vmatpush.bf16.msra.mxu0 0
    %2689 = vmatpush.bf16.msra.mxu0 0
    %2690 = vmatpush.bf16.msra.mxu0 0
    %2691 = vmatpush.bf16.msra.mxu0 %v2025
    %2692 = vmatpush.bf16.msra.mxu0 %v2002
    %2693 = vmatpush.bf16.msra.mxu0 %v1998
    %2694 = vmatmul.bf16.gmra.mxu0 %v2645
    %v2695 = vpop.f32.mrf.mxu0
    %v2696 = vadd.f32 0.0, %v2695
    %v2697 = vpop.f32.mrf.mxu0
    %2698 = vdwg.mxu0
    %v2699 = vadd.f32 %v1877, %v2657
    %v2700 = vadd.f32 %v1906, %v2670
    %v2701 = vadd.f32 %v1935, %v2683
    %v2702 = vadd.f32 %v1964, %v2696
    %v2703 = vxor.u32 %v2699, 2147483648
    %v2704 = vmul.f32 %v2703, 1.442695
    %v2705 = vpow.pop %v2704
    %v2706 = vadd.f32 %v2705, 1.0
    %v2707 = vrcp.pop %v2706
    %v2708 = vmul.f32 %v2706, %v2707
    %v2709 = vsub.f32 1.0, %v2708
    %v2710 = vmul.f32 %v2707, %v2709
    %v2711 = vadd.f32 %v2707, %v2710
    %vm2712 = vweird.f32 %v2706
    %vm2713 = vweird.f32 %v2707
    %vm2714 = vmor %vm2712, %vm2713
    %v2715 = vsel %vm2714, %v2707, %v2711
    %v2716 = vand.u32 2147483647, %v2706
    %vm2717 = vcmp.eq.f32.partialorder %v2716, 8.507059e+37
    %v2718 = vand.u32 %v2706, 2147483648
    %v2719 = vor.u32 1.1754944e-38, %v2718
    %v2720 = vsel %vm2717, %v2719, %v2715
    %v2721 = vmul.f32 1.0, %v2720
    %v2722 = vxor.u32 %v2700, 2147483648
    %v2723 = vmul.f32 %v2722, 1.442695
    %v2724 = vpow.pop %v2723
    %v2725 = vadd.f32 %v2724, 1.0
    %v2726 = vrcp.pop %v2725
    %v2727 = vmul.f32 %v2725, %v2726
    %v2728 = vsub.f32 1.0, %v2727
    %v2729 = vmul.f32 %v2726, %v2728
    %v2730 = vadd.f32 %v2726, %v2729
    %vm2731 = vweird.f32 %v2725
    %vm2732 = vweird.f32 %v2726
    %vm2733 = vmor %vm2731, %vm2732
    %v2734 = vsel %vm2733, %v2726, %v2730
    %v2735 = vand.u32 2147483647, %v2725
    %vm2736 = vcmp.eq.f32.partialorder %v2735, 8.507059e+37
    %v2737 = vand.u32 %v2725, 2147483648
    %v2738 = vor.u32 1.1754944e-38, %v2737
    %v2739 = vsel %vm2736, %v2738, %v2734
    %v2740 = vmul.f32 1.0, %v2739
    %v2741 = vtanh.pop %v2701
    %v2742 = vxor.u32 %v2702, 2147483648
    %v2743 = vmul.f32 %v2742, 1.442695
    %v2744 = vpow.pop %v2743
    %v2745 = vadd.f32 %v2744, 1.0
    %v2746 = vrcp.pop %v2745
    %v2747 = vmul.f32 %v2745, %v2746
    %v2748 = vsub.f32 1.0, %v2747
    %v2749 = vmul.f32 %v2746, %v2748
    %v2750 = vadd.f32 %v2746, %v2749
    %vm2751 = vweird.f32 %v2745
    %vm2752 = vweird.f32 %v2746
    %vm2753 = vmor %vm2751, %vm2752
    %v2754 = vsel %vm2753, %v2746, %v2750
    %v2755 = vand.u32 2147483647, %v2745
    %vm2756 = vcmp.eq.f32.partialorder %v2755, 8.507059e+37
    %v2757 = vand.u32 %v2745, 2147483648
    %v2758 = vor.u32 1.1754944e-38, %v2757
    %v2759 = vsel %vm2756, %v2758, %v2754
    %v2760 = vmul.f32 1.0, %v2759
    %v2761 = vmul.f32 %v2740, %v2639
    %v2762 = vmul.f32 %v2721, %v2741
    %v2763 = vadd.f32 %v2761, %v2762
    %v2764 = vtanh.pop %v2763
    %v2765 = vmul.f32 %v2760, %v2764
    %2766 = vst.msk [vmem:[#allocation2 + $0x28] sm:$0xff] %vm766, %v2765
    %v2767 = vpack.c.bf16 %v2765, %v2765
    %v2769 = vsel %vm766, %v2767, 0
    %2771 = vmatpush.bf16.msra.mxu0 0
    %2772 = vmatpush.bf16.msra.mxu0 0
    %2773 = vmatpush.bf16.msra.mxu0 0
    %2774 = vmatpush.bf16.msra.mxu0 0
    %2775 = vmatpush.bf16.msra.mxu0 0
    %2776 = vmatpush.bf16.msra.mxu0 %v2016
    %2777 = vmatpush.bf16.msra.mxu0 %v1999
    %2778 = vmatpush.bf16.msra.mxu0 %v1995
    %2779 = vmatmul.bf16.gmra.mxu0 %v2769
    %v2780 = vpop.f32.mrf.mxu0
    %v2781 = vadd.f32 0.0, %v2780
    %v2782 = vpop.f32.mrf.mxu0
    %2783 = vdwg.mxu0
    %2784 = vmatpush.bf16.msra.mxu0 0
    %2785 = vmatpush.bf16.msra.mxu0 0
    %2786 = vmatpush.bf16.msra.mxu0 0
    %2787 = vmatpush.bf16.msra.mxu0 0
    %2788 = vmatpush.bf16.msra.mxu0 0
    %2789 = vmatpush.bf16.msra.mxu0 %v2019
    %2790 = vmatpush.bf16.msra.mxu0 %v2000
    %2791 = vmatpush.bf16.msra.mxu0 %v1996
    %2792 = vmatmul.bf16.gmra.mxu0 %v2769
    %v2793 = vpop.f32.mrf.mxu0
    %v2794 = vadd.f32 0.0, %v2793
    %v2795 = vpop.f32.mrf.mxu0
    %2796 = vdwg.mxu0
    %2797 = vmatpush.bf16.msra.mxu0 0
    %2798 = vmatpush.bf16.msra.mxu0 0
    %2799 = vmatpush.bf16.msra.mxu0 0
    %2800 = vmatpush.bf16.msra.mxu0 0
    %2801 = vmatpush.bf16.msra.mxu0 0
    %2802 = vmatpush.bf16.msra.mxu0 %v2022
    %2803 = vmatpush.bf16.msra.mxu0 %v2001
    %2804 = vmatpush.bf16.msra.mxu0 %v1997
    %2805 = vmatmul.bf16.gmra.mxu0 %v2769
    %v2806 = vpop.f32.mrf.mxu0
    %v2807 = vadd.f32 0.0, %v2806
    %v2808 = vpop.f32.mrf.mxu0
    %2809 = vdwg.mxu0
    %2810 = vmatpush.bf16.msra.mxu0 0
    %2811 = vmatpush.bf16.msra.mxu0 0
    %2812 = vmatpush.bf16.msra.mxu0 0
    %2813 = vmatpush.bf16.msra.mxu0 0
    %2814 = vmatpush.bf16.msra.mxu0 0
    %2815 = vmatpush.bf16.msra.mxu0 %v2025
    %2816 = vmatpush.bf16.msra.mxu0 %v2002
    %2817 = vmatpush.bf16.msra.mxu0 %v1998
    %2818 = vmatmul.bf16.gmra.mxu0 %v2769
    %v2819 = vpop.f32.mrf.mxu0
    %v2820 = vadd.f32 0.0, %v2819
    %v2821 = vpop.f32.mrf.mxu0
    %2822 = vdwg.mxu0
    %v2823 = vadd.f32 %v1880, %v2781
    %v2824 = vadd.f32 %v1909, %v2794
    %v2825 = vadd.f32 %v1938, %v2807
    %v2826 = vadd.f32 %v1967, %v2820
    %v2827 = vxor.u32 %v2823, 2147483648
    %v2828 = vmul.f32 %v2827, 1.442695
    %v2829 = vpow.pop %v2828
    %v2830 = vadd.f32 %v2829, 1.0
    %v2831 = vrcp.pop %v2830
    %v2832 = vmul.f32 %v2830, %v2831
    %v2833 = vsub.f32 1.0, %v2832
    %v2834 = vmul.f32 %v2831, %v2833
    %v2835 = vadd.f32 %v2831, %v2834
    %vm2836 = vweird.f32 %v2830
    %vm2837 = vweird.f32 %v2831
    %vm2838 = vmor %vm2836, %vm2837
    %v2839 = vsel %vm2838, %v2831, %v2835
    %v2840 = vand.u32 2147483647, %v2830
    %vm2841 = vcmp.eq.f32.partialorder %v2840, 8.507059e+37
    %v2842 = vand.u32 %v2830, 2147483648
    %v2843 = vor.u32 1.1754944e-38, %v2842
    %v2844 = vsel %vm2841, %v2843, %v2839
    %v2845 = vmul.f32 1.0, %v2844
    %v2846 = vxor.u32 %v2824, 2147483648
    %v2847 = vmul.f32 %v2846, 1.442695
    %v2848 = vpow.pop %v2847
    %v2849 = vadd.f32 %v2848, 1.0
    %v2850 = vrcp.pop %v2849
    %v2851 = vmul.f32 %v2849, %v2850
    %v2852 = vsub.f32 1.0, %v2851
    %v2853 = vmul.f32 %v2850, %v2852
    %v2854 = vadd.f32 %v2850, %v2853
    %vm2855 = vweird.f32 %v2849
    %vm2856 = vweird.f32 %v2850
    %vm2857 = vmor %vm2855, %vm2856
    %v2858 = vsel %vm2857, %v2850, %v2854
    %v2859 = vand.u32 2147483647, %v2849
    %vm2860 = vcmp.eq.f32.partialorder %v2859, 8.507059e+37
    %v2861 = vand.u32 %v2849, 2147483648
    %v2862 = vor.u32 1.1754944e-38, %v2861
    %v2863 = vsel %vm2860, %v2862, %v2858
    %v2864 = vmul.f32 1.0, %v2863
    %v2865 = vtanh.pop %v2825
    %v2866 = vxor.u32 %v2826, 2147483648
    %v2867 = vmul.f32 %v2866, 1.442695
    %v2868 = vpow.pop %v2867
    %v2869 = vadd.f32 %v2868, 1.0
    %v2870 = vrcp.pop %v2869
    %v2871 = vmul.f32 %v2869, %v2870
    %v2872 = vsub.f32 1.0, %v2871
    %v2873 = vmul.f32 %v2870, %v2872
    %v2874 = vadd.f32 %v2870, %v2873
    %vm2875 = vweird.f32 %v2869
    %vm2876 = vweird.f32 %v2870
    %vm2877 = vmor %vm2875, %vm2876
    %v2878 = vsel %vm2877, %v2870, %v2874
    %v2879 = vand.u32 2147483647, %v2869
    %vm2880 = vcmp.eq.f32.partialorder %v2879, 8.507059e+37
    %v2881 = vand.u32 %v2869, 2147483648
    %v2882 = vor.u32 1.1754944e-38, %v2881
    %v2883 = vsel %vm2880, %v2882, %v2878
    %v2884 = vmul.f32 1.0, %v2883
    %v2885 = vmul.f32 %v2864, %v2763
    %v2886 = vmul.f32 %v2845, %v2865
    %v2887 = vadd.f32 %v2885, %v2886
    %v2888 = vtanh.pop %v2887
    %v2889 = vmul.f32 %v2884, %v2888
    %2890 = vst.msk [vmem:[#allocation2 + $0x30] sm:$0xff] %vm766, %v2889
    %v2891 = vpack.c.bf16 %v2889, %v2889
    %v2893 = vsel %vm766, %v2891, 0
    %2895 = vmatpush.bf16.msra.mxu0 0
    %2896 = vmatpush.bf16.msra.mxu0 0
    %2897 = vmatpush.bf16.msra.mxu0 0
    %2898 = vmatpush.bf16.msra.mxu0 0
    %2899 = vmatpush.bf16.msra.mxu0 0
    %2900 = vmatpush.bf16.msra.mxu0 %v2016
    %2901 = vmatpush.bf16.msra.mxu0 %v1999
    %2902 = vmatpush.bf16.msra.mxu0 %v1995
    %2903 = vmatmul.bf16.gmra.mxu0 %v2893
    %v2904 = vpop.f32.mrf.mxu0
    %v2905 = vadd.f32 0.0, %v2904
    %v2906 = vpop.f32.mrf.mxu0
    %2907 = vdwg.mxu0
    %2908 = vmatpush.bf16.msra.mxu0 0
    %2909 = vmatpush.bf16.msra.mxu0 0
    %2910 = vmatpush.bf16.msra.mxu0 0
    %2911 = vmatpush.bf16.msra.mxu0 0
    %2912 = vmatpush.bf16.msra.mxu0 0
    %2913 = vmatpush.bf16.msra.mxu0 %v2019
    %2914 = vmatpush.bf16.msra.mxu0 %v2000
    %2915 = vmatpush.bf16.msra.mxu0 %v1996
    %2916 = vmatmul.bf16.gmra.mxu0 %v2893
    %v2917 = vpop.f32.mrf.mxu0
    %v2918 = vadd.f32 0.0, %v2917
    %v2919 = vpop.f32.mrf.mxu0
    %2920 = vdwg.mxu0
    %2921 = vmatpush.bf16.msra.mxu0 0
    %2922 = vmatpush.bf16.msra.mxu0 0
    %2923 = vmatpush.bf16.msra.mxu0 0
    %2924 = vmatpush.bf16.msra.mxu0 0
    %2925 = vmatpush.bf16.msra.mxu0 0
    %2926 = vmatpush.bf16.msra.mxu0 %v2022
    %2927 = vmatpush.bf16.msra.mxu0 %v2001
    %2928 = vmatpush.bf16.msra.mxu0 %v1997
    %2929 = vmatmul.bf16.gmra.mxu0 %v2893
    %v2930 = vpop.f32.mrf.mxu0
    %v2931 = vadd.f32 0.0, %v2930
    %v2932 = vpop.f32.mrf.mxu0
    %2933 = vdwg.mxu0
    %2934 = vmatpush.bf16.msra.mxu0 0
    %2935 = vmatpush.bf16.msra.mxu0 0
    %2936 = vmatpush.bf16.msra.mxu0 0
    %2937 = vmatpush.bf16.msra.mxu0 0
    %2938 = vmatpush.bf16.msra.mxu0 0
    %2939 = vmatpush.bf16.msra.mxu0 %v2025
    %2940 = vmatpush.bf16.msra.mxu0 %v2002
    %2941 = vmatpush.bf16.msra.mxu0 %v1998
    %2942 = vmatmul.bf16.gmra.mxu0 %v2893
    %v2943 = vpop.f32.mrf.mxu0
    %v2944 = vadd.f32 0.0, %v2943
    %v2945 = vpop.f32.mrf.mxu0
    %2946 = vdwg.mxu0
    %v2947 = vadd.f32 %v1882, %v2905
    %v2948 = vadd.f32 %v1911, %v2918
    %v2949 = vadd.f32 %v1940, %v2931
    %v2950 = vadd.f32 %v1969, %v2944
    %v2951 = vxor.u32 %v2947, 2147483648
    %v2952 = vmul.f32 %v2951, 1.442695
    %v2953 = vpow.pop %v2952
    %v2954 = vadd.f32 %v2953, 1.0
    %v2955 = vrcp.pop %v2954
    %v2956 = vmul.f32 %v2954, %v2955
    %v2957 = vsub.f32 1.0, %v2956
    %v2958 = vmul.f32 %v2955, %v2957
    %v2959 = vadd.f32 %v2955, %v2958
    %vm2960 = vweird.f32 %v2954
    %vm2961 = vweird.f32 %v2955
    %vm2962 = vmor %vm2960, %vm2961
    %v2963 = vsel %vm2962, %v2955, %v2959
    %v2964 = vand.u32 2147483647, %v2954
    %vm2965 = vcmp.eq.f32.partialorder %v2964, 8.507059e+37
    %v2966 = vand.u32 %v2954, 2147483648
    %v2967 = vor.u32 1.1754944e-38, %v2966
    %v2968 = vsel %vm2965, %v2967, %v2963
    %v2969 = vmul.f32 1.0, %v2968
    %v2970 = vxor.u32 %v2948, 2147483648
    %v2971 = vmul.f32 %v2970, 1.442695
    %v2972 = vpow.pop %v2971
    %v2973 = vadd.f32 %v2972, 1.0
    %v2974 = vrcp.pop %v2973
    %v2975 = vmul.f32 %v2973, %v2974
    %v2976 = vsub.f32 1.0, %v2975
    %v2977 = vmul.f32 %v2974, %v2976
    %v2978 = vadd.f32 %v2974, %v2977
    %vm2979 = vweird.f32 %v2973
    %vm2980 = vweird.f32 %v2974
    %vm2981 = vmor %vm2979, %vm2980
    %v2982 = vsel %vm2981, %v2974, %v2978
    %v2983 = vand.u32 2147483647, %v2973
    %vm2984 = vcmp.eq.f32.partialorder %v2983, 8.507059e+37
    %v2985 = vand.u32 %v2973, 2147483648
    %v2986 = vor.u32 1.1754944e-38, %v2985
    %v2987 = vsel %vm2984, %v2986, %v2982
    %v2988 = vmul.f32 1.0, %v2987
    %v2989 = vtanh.pop %v2949
    %v2990 = vxor.u32 %v2950, 2147483648
    %v2991 = vmul.f32 %v2990, 1.442695
    %v2992 = vpow.pop %v2991
    %v2993 = vadd.f32 %v2992, 1.0
    %v2994 = vrcp.pop %v2993
    %v2995 = vmul.f32 %v2993, %v2994
    %v2996 = vsub.f32 1.0, %v2995
    %v2997 = vmul.f32 %v2994, %v2996
    %v2998 = vadd.f32 %v2994, %v2997
    %vm2999 = vweird.f32 %v2993
    %vm3000 = vweird.f32 %v2994
    %vm3001 = vmor %vm2999, %vm3000
    %v3002 = vsel %vm3001, %v2994, %v2998
    %v3003 = vand.u32 2147483647, %v2993
    %vm3004 = vcmp.eq.f32.partialorder %v3003, 8.507059e+37
    %v3005 = vand.u32 %v2993, 2147483648
    %v3006 = vor.u32 1.1754944e-38, %v3005
    %v3007 = vsel %vm3004, %v3006, %v3002
    %v3008 = vmul.f32 1.0, %v3007
    %v3009 = vmul.f32 %v2988, %v2887
    %v3010 = vmul.f32 %v2969, %v2989
    %v3011 = vadd.f32 %v3009, %v3010
    %v3012 = vtanh.pop %v3011
    %v3013 = vmul.f32 %v3008, %v3012
    %3014 = vst.msk [vmem:[#allocation2 + $0x38] sm:$0xff] %vm766, %v3013
    %s3015 = scalar_lea.vmem [#allocation36], 8
    %3016 = vst.msk [vmem:[%s3015] sm:$0xff] %vm766, %v3013
    %s3017 = scalar_lea.vmem [#allocation37], 8
    %3018 = vst.msk [vmem:[%s3017] sm:$0xff] %vm766, %v3011
    %v3019 = vld [vmem:[#allocation2] sm:$0xff]
    %v3020 = vld [vmem:[#allocation2 + $0x8] sm:$0xff]
    %v3021 = vld [vmem:[#allocation2 + $0x10] sm:$0xff]
    %v3022 = vld [vmem:[#allocation2 + $0x18] sm:$0xff]
    %v3023 = vld [vmem:[#allocation2 + $0x20] sm:$0xff]
    %v3024 = vld [vmem:[#allocation2 + $0x28] sm:$0xff]
    %v3025 = vld [vmem:[#allocation2 + $0x30] sm:$0xff]
    %v3026 = vld [vmem:[#allocation2 + $0x38] sm:$0xff]
    %v3027 = vld [vmem:[#allocation11] sm:$0xff]
    %v3028 = vld [vmem:[#allocation11 + $0x8] sm:$0xff]
    %v3029 = vld [vmem:[#allocation11 + $0x10] sm:$0xff]
    %v3030 = vld [vmem:[#allocation11 + $0x18] sm:$0xff]
    %v3031 = vld [vmem:[#allocation11 + $0x20] sm:$0xff]
    %v3032 = vld [vmem:[#allocation11 + $0x28] sm:$0xff]
    %v3033 = vld [vmem:[#allocation11 + $0x30] sm:$0xff]
    %v3034 = vld [vmem:[#allocation11 + $0x38] sm:$0xff]
    %v3035 = vld [vmem:[#allocation11 + $0x40] sm:$0xff]
    %v3036 = vld [vmem:[#allocation11 + $0x48] sm:$0xff]
    %v3037 = vld [vmem:[#allocation11 + $0x50] sm:$0xff]
    %v3038 = vld [vmem:[#allocation11 + $0x58] sm:$0xff]
    %v3039 = vld [vmem:[#allocation11 + $0x60] sm:$0xff]
    %v3040 = vld [vmem:[#allocation11 + $0x68] sm:$0xff]
    %v3041 = vld [vmem:[#allocation11 + $0x70] sm:$0xff]
    %v3042 = vld [vmem:[#allocation11 + $0x78] sm:$0xff]
    %v3043 = vld [vmem:[#allocation11 + $0x80] sm:$0xff]
    %v3044 = vld [vmem:[#allocation11 + $0x88] sm:$0xff]
    %v3045 = vld [vmem:[#allocation11 + $0x90] sm:$0xff]
    %v3046 = vld [vmem:[#allocation11 + $0x98] sm:$0xff]
    %v3047 = vld [vmem:[#allocation11 + $0xa0] sm:$0xf]
    %v3048 = vld [vmem:[#allocation11 + $0xa8] sm:$0xf]
    %v3049 = vld [vmem:[#allocation11 + $0xb0] sm:$0xf]
    %v3050 = vld [vmem:[#allocation11 + $0xb8] sm:$0xf]
    %v3051 = vpack.c.bf16 %v3020, %v3019
    %v3052 = vpack.c.bf16 %v3022, %v3021
    %v3053 = vpack.c.bf16 %v3024, %v3023
    %v3054 = vpack.c.bf16 %v3026, %v3025
    %v3055 = vpack.c.bf16 %v3031, %v3027
    %v3056 = vpack.c.bf16 %v3032, %v3028
    %v3057 = vpack.c.bf16 %v3033, %v3029
    %v3058 = vpack.c.bf16 %v3034, %v3030
    %v3059 = vpack.c.bf16 %v3039, %v3035
    %v3060 = vpack.c.bf16 %v3040, %v3036
    %v3061 = vpack.c.bf16 %v3041, %v3037
    %v3062 = vpack.c.bf16 %v3042, %v3038
    %v3063 = vpack.c.bf16 %v3047, %v3043
    %v3064 = vpack.c.bf16 %v3048, %v3044
    %v3065 = vpack.c.bf16 %v3049, %v3045
    %v3066 = vpack.c.bf16 %v3050, %v3046
    %v3067 = vld [vmem:[%s23] sm:$0xf]
    %v3069 = vperm.slane %v3067, 0
    %v3070 = vperm.slane %v3067, 1
    %v3071 = vperm.slane %v3067, 2
    %v3072 = vperm.slane %v3067, 3
    %v3078 = vsel %vm766, %v3051, 0
    %v3081 = vsel %vm766, %v3052, 0
    %v3084 = vsel %vm766, %v3053, 0
    %v3087 = vsel %vm766, %v3054, 0
    %v3090 = vsel %vm770, %v3063, 0
    %v3093 = vsel %vm770, %v3064, 0
    %v3096 = vsel %vm770, %v3065, 0
    %v3099 = vsel %vm770, %v3066, 0
    %3101 = vmatpush.bf16.msra.mxu0 0
    %3102 = vmatpush.bf16.msra.mxu0 0
    %3103 = vmatpush.bf16.msra.mxu0 0
    %3104 = vmatpush.bf16.msra.mxu0 0
    %3105 = vmatpush.bf16.msra.mxu0 0
    %3106 = vmatpush.bf16.msra.mxu0 %v3090
    %3107 = vmatpush.bf16.msra.mxu0 %v3059
    %3108 = vmatpush.bf16.msra.mxu0 %v3055
    %3109 = vmatmul.bf16.gmra.mxu0 %v3078
    %v3110 = vpop.f32.mrf.mxu0
    %v3111 = vadd.f32 %v3069, %v3110
    %v3112 = vpop.f32.mrf.mxu0
    %v3113 = vadd.f32 %v3069, %v3112
    %3114 = vmatmul.bf16.gmra.mxu0 %v3081
    %v3115 = vpop.f32.mrf.mxu0
    %v3116 = vadd.f32 %v3069, %v3115
    %v3117 = vpop.f32.mrf.mxu0
    %v3118 = vadd.f32 %v3069, %v3117
    %3119 = vmatmul.bf16.gmra.mxu0 %v3084
    %v3120 = vpop.f32.mrf.mxu0
    %v3121 = vadd.f32 %v3069, %v3120
    %v3122 = vpop.f32.mrf.mxu0
    %v3123 = vadd.f32 %v3069, %v3122
    %3124 = vmatmul.bf16.gmra.mxu0 %v3087
    %v3125 = vpop.f32.mrf.mxu0
    %v3126 = vadd.f32 %v3069, %v3125
    %v3127 = vpop.f32.mrf.mxu0
    %v3128 = vadd.f32 %v3069, %v3127
    %3129 = vdwg.mxu0
    %3130 = vmatpush.bf16.msra.mxu0 0
    %3131 = vmatpush.bf16.msra.mxu0 0
    %3132 = vmatpush.bf16.msra.mxu0 0
    %3133 = vmatpush.bf16.msra.mxu0 0
    %3134 = vmatpush.bf16.msra.mxu0 0
    %3135 = vmatpush.bf16.msra.mxu0 %v3093
    %3136 = vmatpush.bf16.msra.mxu0 %v3060
    %3137 = vmatpush.bf16.msra.mxu0 %v3056
    %3138 = vmatmul.bf16.gmra.mxu0 %v3078
    %v3139 = vpop.f32.mrf.mxu0
    %v3140 = vadd.f32 %v3070, %v3139
    %v3141 = vpop.f32.mrf.mxu0
    %v3142 = vadd.f32 %v3070, %v3141
    %3143 = vmatmul.bf16.gmra.mxu0 %v3081
    %v3144 = vpop.f32.mrf.mxu0
    %v3145 = vadd.f32 %v3070, %v3144
    %v3146 = vpop.f32.mrf.mxu0
    %v3147 = vadd.f32 %v3070, %v3146
    %3148 = vmatmul.bf16.gmra.mxu0 %v3084
    %v3149 = vpop.f32.mrf.mxu0
    %v3150 = vadd.f32 %v3070, %v3149
    %v3151 = vpop.f32.mrf.mxu0
    %v3152 = vadd.f32 %v3070, %v3151
    %3153 = vmatmul.bf16.gmra.mxu0 %v3087
    %v3154 = vpop.f32.mrf.mxu0
    %v3155 = vadd.f32 %v3070, %v3154
    %v3156 = vpop.f32.mrf.mxu0
    %v3157 = vadd.f32 %v3070, %v3156
    %3158 = vdwg.mxu0
    %3159 = vmatpush.bf16.msra.mxu0 0
    %3160 = vmatpush.bf16.msra.mxu0 0
    %3161 = vmatpush.bf16.msra.mxu0 0
    %3162 = vmatpush.bf16.msra.mxu0 0
    %3163 = vmatpush.bf16.msra.mxu0 0
    %3164 = vmatpush.bf16.msra.mxu0 %v3096
    %3165 = vmatpush.bf16.msra.mxu0 %v3061
    %3166 = vmatpush.bf16.msra.mxu0 %v3057
    %3167 = vmatmul.bf16.gmra.mxu0 %v3078
    %v3168 = vpop.f32.mrf.mxu0
    %v3169 = vadd.f32 %v3071, %v3168
    %v3170 = vpop.f32.mrf.mxu0
    %v3171 = vadd.f32 %v3071, %v3170
    %3172 = vmatmul.bf16.gmra.mxu0 %v3081
    %v3173 = vpop.f32.mrf.mxu0
    %v3174 = vadd.f32 %v3071, %v3173
    %v3175 = vpop.f32.mrf.mxu0
    %v3176 = vadd.f32 %v3071, %v3175
    %3177 = vmatmul.bf16.gmra.mxu0 %v3084
    %v3178 = vpop.f32.mrf.mxu0
    %v3179 = vadd.f32 %v3071, %v3178
    %v3180 = vpop.f32.mrf.mxu0
    %v3181 = vadd.f32 %v3071, %v3180
    %3182 = vmatmul.bf16.gmra.mxu0 %v3087
    %v3183 = vpop.f32.mrf.mxu0
    %v3184 = vadd.f32 %v3071, %v3183
    %v3185 = vpop.f32.mrf.mxu0
    %v3186 = vadd.f32 %v3071, %v3185
    %3187 = vdwg.mxu0
    %3188 = vmatpush.bf16.msra.mxu0 0
    %3189 = vmatpush.bf16.msra.mxu0 0
    %3190 = vmatpush.bf16.msra.mxu0 0
    %3191 = vmatpush.bf16.msra.mxu0 0
    %3192 = vmatpush.bf16.msra.mxu0 0
    %3193 = vmatpush.bf16.msra.mxu0 %v3099
    %3194 = vmatpush.bf16.msra.mxu0 %v3062
    %3195 = vmatpush.bf16.msra.mxu0 %v3058
    %3196 = vmatmul.bf16.gmra.mxu0 %v3078
    %v3197 = vpop.f32.mrf.mxu0
    %v3198 = vadd.f32 %v3072, %v3197
    %v3199 = vpop.f32.mrf.mxu0
    %v3200 = vadd.f32 %v3072, %v3199
    %3201 = vmatmul.bf16.gmra.mxu0 %v3081
    %v3202 = vpop.f32.mrf.mxu0
    %v3203 = vadd.f32 %v3072, %v3202
    %v3204 = vpop.f32.mrf.mxu0
    %v3205 = vadd.f32 %v3072, %v3204
    %3206 = vmatmul.bf16.gmra.mxu0 %v3084
    %v3207 = vpop.f32.mrf.mxu0
    %v3208 = vadd.f32 %v3072, %v3207
    %v3209 = vpop.f32.mrf.mxu0
    %v3210 = vadd.f32 %v3072, %v3209
    %3211 = vmatmul.bf16.gmra.mxu0 %v3087
    %v3212 = vpop.f32.mrf.mxu0
    %v3213 = vadd.f32 %v3072, %v3212
    %v3214 = vpop.f32.mrf.mxu0
    %v3215 = vadd.f32 %v3072, %v3214
    %3216 = vdwg.mxu0
    %v3217 = vld [vmem:[#allocation12] sm:$0xff]
    %v3218 = vld [vmem:[#allocation12 + $0x8] sm:$0xff]
    %v3219 = vld [vmem:[#allocation12 + $0x10] sm:$0xff]
    %v3220 = vld [vmem:[#allocation12 + $0x18] sm:$0xff]
    %v3221 = vld [vmem:[#allocation12 + $0x20] sm:$0xff]
    %v3222 = vld [vmem:[#allocation12 + $0x28] sm:$0xff]
    %v3223 = vld [vmem:[#allocation12 + $0x30] sm:$0xff]
    %v3224 = vld [vmem:[#allocation12 + $0x38] sm:$0xff]
    %v3225 = vld [vmem:[#allocation12 + $0x40] sm:$0xff]
    %v3226 = vld [vmem:[#allocation12 + $0x48] sm:$0xff]
    %v3227 = vld [vmem:[#allocation12 + $0x50] sm:$0xff]
    %v3228 = vld [vmem:[#allocation12 + $0x58] sm:$0xff]
    %v3229 = vld [vmem:[#allocation12 + $0x60] sm:$0xff]
    %v3230 = vld [vmem:[#allocation12 + $0x68] sm:$0xff]
    %v3231 = vld [vmem:[#allocation12 + $0x70] sm:$0xff]
    %v3232 = vld [vmem:[#allocation12 + $0x78] sm:$0xff]
    %v3233 = vld [vmem:[#allocation12 + $0x80] sm:$0xff]
    %v3234 = vld [vmem:[#allocation12 + $0x88] sm:$0xff]
    %v3235 = vld [vmem:[#allocation12 + $0x90] sm:$0xff]
    %v3236 = vld [vmem:[#allocation12 + $0x98] sm:$0xff]
    %v3237 = vld [vmem:[#allocation12 + $0xa0] sm:$0xf]
    %v3238 = vld [vmem:[#allocation12 + $0xa8] sm:$0xf]
    %v3239 = vld [vmem:[#allocation12 + $0xb0] sm:$0xf]
    %v3240 = vld [vmem:[#allocation12 + $0xb8] sm:$0xf]
    %v3241 = vpack.c.bf16 %v3221, %v3217
    %v3242 = vpack.c.bf16 %v3222, %v3218
    %v3243 = vpack.c.bf16 %v3223, %v3219
    %v3244 = vpack.c.bf16 %v3224, %v3220
    %v3245 = vpack.c.bf16 %v3229, %v3225
    %v3246 = vpack.c.bf16 %v3230, %v3226
    %v3247 = vpack.c.bf16 %v3231, %v3227
    %v3248 = vpack.c.bf16 %v3232, %v3228
    %v3249 = vpack.c.bf16 %v3237, %v3233
    %v3250 = vpack.c.bf16 %v3238, %v3234
    %v3251 = vpack.c.bf16 %v3239, %v3235
    %v3252 = vpack.c.bf16 %v3240, %v3236
    %s3253 = scalar_lea.vmem [#allocation3], 16
    %v3254 = vld [vmem:[%s3253] sm:$0xff]
    %s3255 = scalar_lea.vmem [#allocation6], 16
    %v3256 = vld [vmem:[%s3255] sm:$0xff]
    %v3257 = vpack.c.bf16 %v3254, %v3254
    %v3259 = vsel %vm766, %v3257, 0
    %v3262 = vsel %vm770, %v3249, 0
    %v3265 = vsel %vm770, %v3250, 0
    %v3268 = vsel %vm770, %v3251, 0
    %v3271 = vsel %vm770, %v3252, 0
    %3273 = vmatpush.bf16.msra.mxu0 0
    %3274 = vmatpush.bf16.msra.mxu0 0
    %3275 = vmatpush.bf16.msra.mxu0 0
    %3276 = vmatpush.bf16.msra.mxu0 0
    %3277 = vmatpush.bf16.msra.mxu0 0
    %3278 = vmatpush.bf16.msra.mxu0 %v3262
    %3279 = vmatpush.bf16.msra.mxu0 %v3245
    %3280 = vmatpush.bf16.msra.mxu0 %v3241
    %3281 = vmatmul.bf16.gmra.mxu0 %v3259
    %v3282 = vpop.f32.mrf.mxu0
    %v3283 = vadd.f32 0.0, %v3282
    %v3284 = vpop.f32.mrf.mxu0
    %3285 = vdwg.mxu0
    %3286 = vmatpush.bf16.msra.mxu0 0
    %3287 = vmatpush.bf16.msra.mxu0 0
    %3288 = vmatpush.bf16.msra.mxu0 0
    %3289 = vmatpush.bf16.msra.mxu0 0
    %3290 = vmatpush.bf16.msra.mxu0 0
    %3291 = vmatpush.bf16.msra.mxu0 %v3265
    %3292 = vmatpush.bf16.msra.mxu0 %v3246
    %3293 = vmatpush.bf16.msra.mxu0 %v3242
    %3294 = vmatmul.bf16.gmra.mxu0 %v3259
    %v3295 = vpop.f32.mrf.mxu0
    %v3296 = vadd.f32 0.0, %v3295
    %v3297 = vpop.f32.mrf.mxu0
    %3298 = vdwg.mxu0
    %3299 = vmatpush.bf16.msra.mxu0 0
    %3300 = vmatpush.bf16.msra.mxu0 0
    %3301 = vmatpush.bf16.msra.mxu0 0
    %3302 = vmatpush.bf16.msra.mxu0 0
    %3303 = vmatpush.bf16.msra.mxu0 0
    %3304 = vmatpush.bf16.msra.mxu0 %v3268
    %3305 = vmatpush.bf16.msra.mxu0 %v3247
    %3306 = vmatpush.bf16.msra.mxu0 %v3243
    %3307 = vmatmul.bf16.gmra.mxu0 %v3259
    %v3308 = vpop.f32.mrf.mxu0
    %v3309 = vadd.f32 0.0, %v3308
    %v3310 = vpop.f32.mrf.mxu0
    %3311 = vdwg.mxu0
    %3312 = vmatpush.bf16.msra.mxu0 0
    %3313 = vmatpush.bf16.msra.mxu0 0
    %3314 = vmatpush.bf16.msra.mxu0 0
    %3315 = vmatpush.bf16.msra.mxu0 0
    %3316 = vmatpush.bf16.msra.mxu0 0
    %3317 = vmatpush.bf16.msra.mxu0 %v3271
    %3318 = vmatpush.bf16.msra.mxu0 %v3248
    %3319 = vmatpush.bf16.msra.mxu0 %v3244
    %3320 = vmatmul.bf16.gmra.mxu0 %v3259
    %v3321 = vpop.f32.mrf.mxu0
    %v3322 = vadd.f32 0.0, %v3321
    %v3323 = vpop.f32.mrf.mxu0
    %3324 = vdwg.mxu0
    %v3325 = vadd.f32 %v3111, %v3283
    %v3326 = vadd.f32 %v3140, %v3296
    %v3327 = vadd.f32 %v3169, %v3309
    %v3328 = vadd.f32 %v3198, %v3322
    %v3329 = vxor.u32 %v3325, 2147483648
    %v3330 = vmul.f32 %v3329, 1.442695
    %v3331 = vpow.pop %v3330
    %v3332 = vadd.f32 %v3331, 1.0
    %v3333 = vrcp.pop %v3332
    %v3334 = vmul.f32 %v3332, %v3333
    %v3335 = vsub.f32 1.0, %v3334
    %v3336 = vmul.f32 %v3333, %v3335
    %v3337 = vadd.f32 %v3333, %v3336
    %vm3338 = vweird.f32 %v3332
    %vm3339 = vweird.f32 %v3333
    %vm3340 = vmor %vm3338, %vm3339
    %v3341 = vsel %vm3340, %v3333, %v3337
    %v3342 = vand.u32 2147483647, %v3332
    %vm3343 = vcmp.eq.f32.partialorder %v3342, 8.507059e+37
    %v3344 = vand.u32 %v3332, 2147483648
    %v3345 = vor.u32 1.1754944e-38, %v3344
    %v3346 = vsel %vm3343, %v3345, %v3341
    %v3347 = vmul.f32 1.0, %v3346
    %v3348 = vxor.u32 %v3326, 2147483648
    %v3349 = vmul.f32 %v3348, 1.442695
    %v3350 = vpow.pop %v3349
    %v3351 = vadd.f32 %v3350, 1.0
    %v3352 = vrcp.pop %v3351
    %v3353 = vmul.f32 %v3351, %v3352
    %v3354 = vsub.f32 1.0, %v3353
    %v3355 = vmul.f32 %v3352, %v3354
    %v3356 = vadd.f32 %v3352, %v3355
    %vm3357 = vweird.f32 %v3351
    %vm3358 = vweird.f32 %v3352
    %vm3359 = vmor %vm3357, %vm3358
    %v3360 = vsel %vm3359, %v3352, %v3356
    %v3361 = vand.u32 2147483647, %v3351
    %vm3362 = vcmp.eq.f32.partialorder %v3361, 8.507059e+37
    %v3363 = vand.u32 %v3351, 2147483648
    %v3364 = vor.u32 1.1754944e-38, %v3363
    %v3365 = vsel %vm3362, %v3364, %v3360
    %v3366 = vmul.f32 1.0, %v3365
    %v3367 = vtanh.pop %v3327
    %v3368 = vxor.u32 %v3328, 2147483648
    %v3369 = vmul.f32 %v3368, 1.442695
    %v3370 = vpow.pop %v3369
    %v3371 = vadd.f32 %v3370, 1.0
    %v3372 = vrcp.pop %v3371
    %v3373 = vmul.f32 %v3371, %v3372
    %v3374 = vsub.f32 1.0, %v3373
    %v3375 = vmul.f32 %v3372, %v3374
    %v3376 = vadd.f32 %v3372, %v3375
    %vm3377 = vweird.f32 %v3371
    %vm3378 = vweird.f32 %v3372
    %vm3379 = vmor %vm3377, %vm3378
    %v3380 = vsel %vm3379, %v3372, %v3376
    %v3381 = vand.u32 2147483647, %v3371
    %vm3382 = vcmp.eq.f32.partialorder %v3381, 8.507059e+37
    %v3383 = vand.u32 %v3371, 2147483648
    %v3384 = vor.u32 1.1754944e-38, %v3383
    %v3385 = vsel %vm3382, %v3384, %v3380
    %v3386 = vmul.f32 1.0, %v3385
    %v3387 = vmul.f32 %v3366, %v3256
    %v3388 = vmul.f32 %v3347, %v3367
    %v3389 = vadd.f32 %v3387, %v3388
    %v3390 = vtanh.pop %v3389
    %v3391 = vmul.f32 %v3386, %v3390
    %v3392 = vpack.c.bf16 %v3391, %v3391
    %v3394 = vsel %vm766, %v3392, 0
    %3396 = vmatpush.bf16.msra.mxu0 0
    %3397 = vmatpush.bf16.msra.mxu0 0
    %3398 = vmatpush.bf16.msra.mxu0 0
    %3399 = vmatpush.bf16.msra.mxu0 0
    %3400 = vmatpush.bf16.msra.mxu0 0
    %3401 = vmatpush.bf16.msra.mxu0 %v3262
    %3402 = vmatpush.bf16.msra.mxu0 %v3245
    %3403 = vmatpush.bf16.msra.mxu0 %v3241
    %3404 = vmatmul.bf16.gmra.mxu0 %v3394
    %v3405 = vpop.f32.mrf.mxu0
    %v3406 = vadd.f32 0.0, %v3405
    %v3407 = vpop.f32.mrf.mxu0
    %3408 = vdwg.mxu0
    %3409 = vmatpush.bf16.msra.mxu0 0
    %3410 = vmatpush.bf16.msra.mxu0 0
    %3411 = vmatpush.bf16.msra.mxu0 0
    %3412 = vmatpush.bf16.msra.mxu0 0
    %3413 = vmatpush.bf16.msra.mxu0 0
    %3414 = vmatpush.bf16.msra.mxu0 %v3265
    %3415 = vmatpush.bf16.msra.mxu0 %v3246
    %3416 = vmatpush.bf16.msra.mxu0 %v3242
    %3417 = vmatmul.bf16.gmra.mxu0 %v3394
    %v3418 = vpop.f32.mrf.mxu0
    %v3419 = vadd.f32 0.0, %v3418
    %v3420 = vpop.f32.mrf.mxu0
    %3421 = vdwg.mxu0
    %3422 = vmatpush.bf16.msra.mxu0 0
    %3423 = vmatpush.bf16.msra.mxu0 0
    %3424 = vmatpush.bf16.msra.mxu0 0
    %3425 = vmatpush.bf16.msra.mxu0 0
    %3426 = vmatpush.bf16.msra.mxu0 0
    %3427 = vmatpush.bf16.msra.mxu0 %v3268
    %3428 = vmatpush.bf16.msra.mxu0 %v3247
    %3429 = vmatpush.bf16.msra.mxu0 %v3243
    %3430 = vmatmul.bf16.gmra.mxu0 %v3394
    %v3431 = vpop.f32.mrf.mxu0
    %v3432 = vadd.f32 0.0, %v3431
    %v3433 = vpop.f32.mrf.mxu0
    %3434 = vdwg.mxu0
    %3435 = vmatpush.bf16.msra.mxu0 0
    %3436 = vmatpush.bf16.msra.mxu0 0
    %3437 = vmatpush.bf16.msra.mxu0 0
    %3438 = vmatpush.bf16.msra.mxu0 0
    %3439 = vmatpush.bf16.msra.mxu0 0
    %3440 = vmatpush.bf16.msra.mxu0 %v3271
    %3441 = vmatpush.bf16.msra.mxu0 %v3248
    %3442 = vmatpush.bf16.msra.mxu0 %v3244
    %3443 = vmatmul.bf16.gmra.mxu0 %v3394
    %v3444 = vpop.f32.mrf.mxu0
    %v3445 = vadd.f32 0.0, %v3444
    %v3446 = vpop.f32.mrf.mxu0
    %3447 = vdwg.mxu0
    %v3448 = vadd.f32 %v3113, %v3406
    %v3449 = vadd.f32 %v3142, %v3419
    %v3450 = vadd.f32 %v3171, %v3432
    %v3451 = vadd.f32 %v3200, %v3445
    %v3452 = vxor.u32 %v3448, 2147483648
    %v3453 = vmul.f32 %v3452, 1.442695
    %v3454 = vpow.pop %v3453
    %v3455 = vadd.f32 %v3454, 1.0
    %v3456 = vrcp.pop %v3455
    %v3457 = vmul.f32 %v3455, %v3456
    %v3458 = vsub.f32 1.0, %v3457
    %v3459 = vmul.f32 %v3456, %v3458
    %v3460 = vadd.f32 %v3456, %v3459
    %vm3461 = vweird.f32 %v3455
    %vm3462 = vweird.f32 %v3456
    %vm3463 = vmor %vm3461, %vm3462
    %v3464 = vsel %vm3463, %v3456, %v3460
    %v3465 = vand.u32 2147483647, %v3455
    %vm3466 = vcmp.eq.f32.partialorder %v3465, 8.507059e+37
    %v3467 = vand.u32 %v3455, 2147483648
    %v3468 = vor.u32 1.1754944e-38, %v3467
    %v3469 = vsel %vm3466, %v3468, %v3464
    %v3470 = vmul.f32 1.0, %v3469
    %v3471 = vxor.u32 %v3449, 2147483648
    %v3472 = vmul.f32 %v3471, 1.442695
    %v3473 = vpow.pop %v3472
    %v3474 = vadd.f32 %v3473, 1.0
    %v3475 = vrcp.pop %v3474
    %v3476 = vmul.f32 %v3474, %v3475
    %v3477 = vsub.f32 1.0, %v3476
    %v3478 = vmul.f32 %v3475, %v3477
    %v3479 = vadd.f32 %v3475, %v3478
    %vm3480 = vweird.f32 %v3474
    %vm3481 = vweird.f32 %v3475
    %vm3482 = vmor %vm3480, %vm3481
    %v3483 = vsel %vm3482, %v3475, %v3479
    %v3484 = vand.u32 2147483647, %v3474
    %vm3485 = vcmp.eq.f32.partialorder %v3484, 8.507059e+37
    %v3486 = vand.u32 %v3474, 2147483648
    %v3487 = vor.u32 1.1754944e-38, %v3486
    %v3488 = vsel %vm3485, %v3487, %v3483
    %v3489 = vmul.f32 1.0, %v3488
    %v3490 = vtanh.pop %v3450
    %v3491 = vxor.u32 %v3451, 2147483648
    %v3492 = vmul.f32 %v3491, 1.442695
    %v3493 = vpow.pop %v3492
    %v3494 = vadd.f32 %v3493, 1.0
    %v3495 = vrcp.pop %v3494
    %v3496 = vmul.f32 %v3494, %v3495
    %v3497 = vsub.f32 1.0, %v3496
    %v3498 = vmul.f32 %v3495, %v3497
    %v3499 = vadd.f32 %v3495, %v3498
    %vm3500 = vweird.f32 %v3494
    %vm3501 = vweird.f32 %v3495
    %vm3502 = vmor %vm3500, %vm3501
    %v3503 = vsel %vm3502, %v3495, %v3499
    %v3504 = vand.u32 2147483647, %v3494
    %vm3505 = vcmp.eq.f32.partialorder %v3504, 8.507059e+37
    %v3506 = vand.u32 %v3494, 2147483648
    %v3507 = vor.u32 1.1754944e-38, %v3506
    %v3508 = vsel %vm3505, %v3507, %v3503
    %v3509 = vmul.f32 1.0, %v3508
    %v3510 = vmul.f32 %v3489, %v3389
    %v3511 = vmul.f32 %v3470, %v3490
    %v3512 = vadd.f32 %v3510, %v3511
    %v3513 = vtanh.pop %v3512
    %v3514 = vmul.f32 %v3509, %v3513
    %v3515 = vpack.c.bf16 %v3514, %v3514
    %v3517 = vsel %vm766, %v3515, 0
    %3519 = vmatpush.bf16.msra.mxu0 0
    %3520 = vmatpush.bf16.msra.mxu0 0
    %3521 = vmatpush.bf16.msra.mxu0 0
    %3522 = vmatpush.bf16.msra.mxu0 0
    %3523 = vmatpush.bf16.msra.mxu0 0
    %3524 = vmatpush.bf16.msra.mxu0 %v3262
    %3525 = vmatpush.bf16.msra.mxu0 %v3245
    %3526 = vmatpush.bf16.msra.mxu0 %v3241
    %3527 = vmatmul.bf16.gmra.mxu0 %v3517
    %v3528 = vpop.f32.mrf.mxu0
    %v3529 = vadd.f32 0.0, %v3528
    %v3530 = vpop.f32.mrf.mxu0
    %3531 = vdwg.mxu0
    %3532 = vmatpush.bf16.msra.mxu0 0
    %3533 = vmatpush.bf16.msra.mxu0 0
    %3534 = vmatpush.bf16.msra.mxu0 0
    %3535 = vmatpush.bf16.msra.mxu0 0
    %3536 = vmatpush.bf16.msra.mxu0 0
    %3537 = vmatpush.bf16.msra.mxu0 %v3265
    %3538 = vmatpush.bf16.msra.mxu0 %v3246
    %3539 = vmatpush.bf16.msra.mxu0 %v3242
    %3540 = vmatmul.bf16.gmra.mxu0 %v3517
    %v3541 = vpop.f32.mrf.mxu0
    %v3542 = vadd.f32 0.0, %v3541
    %v3543 = vpop.f32.mrf.mxu0
    %3544 = vdwg.mxu0
    %3545 = vmatpush.bf16.msra.mxu0 0
    %3546 = vmatpush.bf16.msra.mxu0 0
    %3547 = vmatpush.bf16.msra.mxu0 0
    %3548 = vmatpush.bf16.msra.mxu0 0
    %3549 = vmatpush.bf16.msra.mxu0 0
    %3550 = vmatpush.bf16.msra.mxu0 %v3268
    %3551 = vmatpush.bf16.msra.mxu0 %v3247
    %3552 = vmatpush.bf16.msra.mxu0 %v3243
    %3553 = vmatmul.bf16.gmra.mxu0 %v3517
    %v3554 = vpop.f32.mrf.mxu0
    %v3555 = vadd.f32 0.0, %v3554
    %v3556 = vpop.f32.mrf.mxu0
    %3557 = vdwg.mxu0
    %3558 = vmatpush.bf16.msra.mxu0 0
    %3559 = vmatpush.bf16.msra.mxu0 0
    %3560 = vmatpush.bf16.msra.mxu0 0
    %3561 = vmatpush.bf16.msra.mxu0 0
    %3562 = vmatpush.bf16.msra.mxu0 0
    %3563 = vmatpush.bf16.msra.mxu0 %v3271
    %3564 = vmatpush.bf16.msra.mxu0 %v3248
    %3565 = vmatpush.bf16.msra.mxu0 %v3244
    %3566 = vmatmul.bf16.gmra.mxu0 %v3517
    %v3567 = vpop.f32.mrf.mxu0
    %v3568 = vadd.f32 0.0, %v3567
    %v3569 = vpop.f32.mrf.mxu0
    %3570 = vdwg.mxu0
    %v3571 = vadd.f32 %v3116, %v3529
    %v3572 = vadd.f32 %v3145, %v3542
    %v3573 = vadd.f32 %v3174, %v3555
    %v3574 = vadd.f32 %v3203, %v3568
    %v3575 = vxor.u32 %v3571, 2147483648
    %v3576 = vmul.f32 %v3575, 1.442695
    %v3577 = vpow.pop %v3576
    %v3578 = vadd.f32 %v3577, 1.0
    %v3579 = vrcp.pop %v3578
    %v3580 = vmul.f32 %v3578, %v3579
    %v3581 = vsub.f32 1.0, %v3580
    %v3582 = vmul.f32 %v3579, %v3581
    %v3583 = vadd.f32 %v3579, %v3582
    %vm3584 = vweird.f32 %v3578
    %vm3585 = vweird.f32 %v3579
    %vm3586 = vmor %vm3584, %vm3585
    %v3587 = vsel %vm3586, %v3579, %v3583
    %v3588 = vand.u32 2147483647, %v3578
    %vm3589 = vcmp.eq.f32.partialorder %v3588, 8.507059e+37
    %v3590 = vand.u32 %v3578, 2147483648
    %v3591 = vor.u32 1.1754944e-38, %v3590
    %v3592 = vsel %vm3589, %v3591, %v3587
    %v3593 = vmul.f32 1.0, %v3592
    %v3594 = vxor.u32 %v3572, 2147483648
    %v3595 = vmul.f32 %v3594, 1.442695
    %v3596 = vpow.pop %v3595
    %v3597 = vadd.f32 %v3596, 1.0
    %v3598 = vrcp.pop %v3597
    %v3599 = vmul.f32 %v3597, %v3598
    %v3600 = vsub.f32 1.0, %v3599
    %v3601 = vmul.f32 %v3598, %v3600
    %v3602 = vadd.f32 %v3598, %v3601
    %vm3603 = vweird.f32 %v3597
    %vm3604 = vweird.f32 %v3598
    %vm3605 = vmor %vm3603, %vm3604
    %v3606 = vsel %vm3605, %v3598, %v3602
    %v3607 = vand.u32 2147483647, %v3597
    %vm3608 = vcmp.eq.f32.partialorder %v3607, 8.507059e+37
    %v3609 = vand.u32 %v3597, 2147483648
    %v3610 = vor.u32 1.1754944e-38, %v3609
    %v3611 = vsel %vm3608, %v3610, %v3606
    %v3612 = vmul.f32 1.0, %v3611
    %v3613 = vtanh.pop %v3573
    %v3614 = vxor.u32 %v3574, 2147483648
    %v3615 = vmul.f32 %v3614, 1.442695
    %v3616 = vpow.pop %v3615
    %v3617 = vadd.f32 %v3616, 1.0
    %v3618 = vrcp.pop %v3617
    %v3619 = vmul.f32 %v3617, %v3618
    %v3620 = vsub.f32 1.0, %v3619
    %v3621 = vmul.f32 %v3618, %v3620
    %v3622 = vadd.f32 %v3618, %v3621
    %vm3623 = vweird.f32 %v3617
    %vm3624 = vweird.f32 %v3618
    %vm3625 = vmor %vm3623, %vm3624
    %v3626 = vsel %vm3625, %v3618, %v3622
    %v3627 = vand.u32 2147483647, %v3617
    %vm3628 = vcmp.eq.f32.partialorder %v3627, 8.507059e+37
    %v3629 = vand.u32 %v3617, 2147483648
    %v3630 = vor.u32 1.1754944e-38, %v3629
    %v3631 = vsel %vm3628, %v3630, %v3626
    %v3632 = vmul.f32 1.0, %v3631
    %v3633 = vmul.f32 %v3612, %v3512
    %v3634 = vmul.f32 %v3593, %v3613
    %v3635 = vadd.f32 %v3633, %v3634
    %v3636 = vtanh.pop %v3635
    %v3637 = vmul.f32 %v3632, %v3636
    %v3638 = vpack.c.bf16 %v3637, %v3637
    %v3640 = vsel %vm766, %v3638, 0
    %3642 = vmatpush.bf16.msra.mxu0 0
    %3643 = vmatpush.bf16.msra.mxu0 0
    %3644 = vmatpush.bf16.msra.mxu0 0
    %3645 = vmatpush.bf16.msra.mxu0 0
    %3646 = vmatpush.bf16.msra.mxu0 0
    %3647 = vmatpush.bf16.msra.mxu0 %v3262
    %3648 = vmatpush.bf16.msra.mxu0 %v3245
    %3649 = vmatpush.bf16.msra.mxu0 %v3241
    %3650 = vmatmul.bf16.gmra.mxu0 %v3640
    %v3651 = vpop.f32.mrf.mxu0
    %v3652 = vadd.f32 0.0, %v3651
    %v3653 = vpop.f32.mrf.mxu0
    %3654 = vdwg.mxu0
    %3655 = vmatpush.bf16.msra.mxu0 0
    %3656 = vmatpush.bf16.msra.mxu0 0
    %3657 = vmatpush.bf16.msra.mxu0 0
    %3658 = vmatpush.bf16.msra.mxu0 0
    %3659 = vmatpush.bf16.msra.mxu0 0
    %3660 = vmatpush.bf16.msra.mxu0 %v3265
    %3661 = vmatpush.bf16.msra.mxu0 %v3246
    %3662 = vmatpush.bf16.msra.mxu0 %v3242
    %3663 = vmatmul.bf16.gmra.mxu0 %v3640
    %v3664 = vpop.f32.mrf.mxu0
    %v3665 = vadd.f32 0.0, %v3664
    %v3666 = vpop.f32.mrf.mxu0
    %3667 = vdwg.mxu0
    %3668 = vmatpush.bf16.msra.mxu0 0
    %3669 = vmatpush.bf16.msra.mxu0 0
    %3670 = vmatpush.bf16.msra.mxu0 0
    %3671 = vmatpush.bf16.msra.mxu0 0
    %3672 = vmatpush.bf16.msra.mxu0 0
    %3673 = vmatpush.bf16.msra.mxu0 %v3268
    %3674 = vmatpush.bf16.msra.mxu0 %v3247
    %3675 = vmatpush.bf16.msra.mxu0 %v3243
    %3676 = vmatmul.bf16.gmra.mxu0 %v3640
    %v3677 = vpop.f32.mrf.mxu0
    %v3678 = vadd.f32 0.0, %v3677
    %v3679 = vpop.f32.mrf.mxu0
    %3680 = vdwg.mxu0
    %3681 = vmatpush.bf16.msra.mxu0 0
    %3682 = vmatpush.bf16.msra.mxu0 0
    %3683 = vmatpush.bf16.msra.mxu0 0
    %3684 = vmatpush.bf16.msra.mxu0 0
    %3685 = vmatpush.bf16.msra.mxu0 0
    %3686 = vmatpush.bf16.msra.mxu0 %v3271
    %3687 = vmatpush.bf16.msra.mxu0 %v3248
    %3688 = vmatpush.bf16.msra.mxu0 %v3244
    %3689 = vmatmul.bf16.gmra.mxu0 %v3640
    %v3690 = vpop.f32.mrf.mxu0
    %v3691 = vadd.f32 0.0, %v3690
    %v3692 = vpop.f32.mrf.mxu0
    %3693 = vdwg.mxu0
    %v3694 = vadd.f32 %v3118, %v3652
    %v3695 = vadd.f32 %v3147, %v3665
    %v3696 = vadd.f32 %v3176, %v3678
    %v3697 = vadd.f32 %v3205, %v3691
    %v3698 = vxor.u32 %v3694, 2147483648
    %v3699 = vmul.f32 %v3698, 1.442695
    %v3700 = vpow.pop %v3699
    %v3701 = vadd.f32 %v3700, 1.0
    %v3702 = vrcp.pop %v3701
    %v3703 = vmul.f32 %v3701, %v3702
    %v3704 = vsub.f32 1.0, %v3703
    %v3705 = vmul.f32 %v3702, %v3704
    %v3706 = vadd.f32 %v3702, %v3705
    %vm3707 = vweird.f32 %v3701
    %vm3708 = vweird.f32 %v3702
    %vm3709 = vmor %vm3707, %vm3708
    %v3710 = vsel %vm3709, %v3702, %v3706
    %v3711 = vand.u32 2147483647, %v3701
    %vm3712 = vcmp.eq.f32.partialorder %v3711, 8.507059e+37
    %v3713 = vand.u32 %v3701, 2147483648
    %v3714 = vor.u32 1.1754944e-38, %v3713
    %v3715 = vsel %vm3712, %v3714, %v3710
    %v3716 = vmul.f32 1.0, %v3715
    %v3717 = vxor.u32 %v3695, 2147483648
    %v3718 = vmul.f32 %v3717, 1.442695
    %v3719 = vpow.pop %v3718
    %v3720 = vadd.f32 %v3719, 1.0
    %v3721 = vrcp.pop %v3720
    %v3722 = vmul.f32 %v3720, %v3721
    %v3723 = vsub.f32 1.0, %v3722
    %v3724 = vmul.f32 %v3721, %v3723
    %v3725 = vadd.f32 %v3721, %v3724
    %vm3726 = vweird.f32 %v3720
    %vm3727 = vweird.f32 %v3721
    %vm3728 = vmor %vm3726, %vm3727
    %v3729 = vsel %vm3728, %v3721, %v3725
    %v3730 = vand.u32 2147483647, %v3720
    %vm3731 = vcmp.eq.f32.partialorder %v3730, 8.507059e+37
    %v3732 = vand.u32 %v3720, 2147483648
    %v3733 = vor.u32 1.1754944e-38, %v3732
    %v3734 = vsel %vm3731, %v3733, %v3729
    %v3735 = vmul.f32 1.0, %v3734
    %v3736 = vtanh.pop %v3696
    %v3737 = vxor.u32 %v3697, 2147483648
    %v3738 = vmul.f32 %v3737, 1.442695
    %v3739 = vpow.pop %v3738
    %v3740 = vadd.f32 %v3739, 1.0
    %v3741 = vrcp.pop %v3740
    %v3742 = vmul.f32 %v3740, %v3741
    %v3743 = vsub.f32 1.0, %v3742
    %v3744 = vmul.f32 %v3741, %v3743
    %v3745 = vadd.f32 %v3741, %v3744
    %vm3746 = vweird.f32 %v3740
    %vm3747 = vweird.f32 %v3741
    %vm3748 = vmor %vm3746, %vm3747
    %v3749 = vsel %vm3748, %v3741, %v3745
    %v3750 = vand.u32 2147483647, %v3740
    %vm3751 = vcmp.eq.f32.partialorder %v3750, 8.507059e+37
    %v3752 = vand.u32 %v3740, 2147483648
    %v3753 = vor.u32 1.1754944e-38, %v3752
    %v3754 = vsel %vm3751, %v3753, %v3749
    %v3755 = vmul.f32 1.0, %v3754
    %v3756 = vmul.f32 %v3735, %v3635
    %v3757 = vmul.f32 %v3716, %v3736
    %v3758 = vadd.f32 %v3756, %v3757
    %v3759 = vtanh.pop %v3758
    %v3760 = vmul.f32 %v3755, %v3759
    %v3761 = vpack.c.bf16 %v3760, %v3760
    %v3763 = vsel %vm766, %v3761, 0
    %3765 = vmatpush.bf16.msra.mxu0 0
    %3766 = vmatpush.bf16.msra.mxu0 0
    %3767 = vmatpush.bf16.msra.mxu0 0
    %3768 = vmatpush.bf16.msra.mxu0 0
    %3769 = vmatpush.bf16.msra.mxu0 0
    %3770 = vmatpush.bf16.msra.mxu0 %v3262
    %3771 = vmatpush.bf16.msra.mxu0 %v3245
    %3772 = vmatpush.bf16.msra.mxu0 %v3241
    %3773 = vmatmul.bf16.gmra.mxu0 %v3763
    %v3774 = vpop.f32.mrf.mxu0
    %v3775 = vadd.f32 0.0, %v3774
    %v3776 = vpop.f32.mrf.mxu0
    %3777 = vdwg.mxu0
    %3778 = vmatpush.bf16.msra.mxu0 0
    %3779 = vmatpush.bf16.msra.mxu0 0
    %3780 = vmatpush.bf16.msra.mxu0 0
    %3781 = vmatpush.bf16.msra.mxu0 0
    %3782 = vmatpush.bf16.msra.mxu0 0
    %3783 = vmatpush.bf16.msra.mxu0 %v3265
    %3784 = vmatpush.bf16.msra.mxu0 %v3246
    %3785 = vmatpush.bf16.msra.mxu0 %v3242
    %3786 = vmatmul.bf16.gmra.mxu0 %v3763
    %v3787 = vpop.f32.mrf.mxu0
    %v3788 = vadd.f32 0.0, %v3787
    %v3789 = vpop.f32.mrf.mxu0
    %3790 = vdwg.mxu0
    %3791 = vmatpush.bf16.msra.mxu0 0
    %3792 = vmatpush.bf16.msra.mxu0 0
    %3793 = vmatpush.bf16.msra.mxu0 0
    %3794 = vmatpush.bf16.msra.mxu0 0
    %3795 = vmatpush.bf16.msra.mxu0 0
    %3796 = vmatpush.bf16.msra.mxu0 %v3268
    %3797 = vmatpush.bf16.msra.mxu0 %v3247
    %3798 = vmatpush.bf16.msra.mxu0 %v3243
    %3799 = vmatmul.bf16.gmra.mxu0 %v3763
    %v3800 = vpop.f32.mrf.mxu0
    %v3801 = vadd.f32 0.0, %v3800
    %v3802 = vpop.f32.mrf.mxu0
    %3803 = vdwg.mxu0
    %3804 = vmatpush.bf16.msra.mxu0 0
    %3805 = vmatpush.bf16.msra.mxu0 0
    %3806 = vmatpush.bf16.msra.mxu0 0
    %3807 = vmatpush.bf16.msra.mxu0 0
    %3808 = vmatpush.bf16.msra.mxu0 0
    %3809 = vmatpush.bf16.msra.mxu0 %v3271
    %3810 = vmatpush.bf16.msra.mxu0 %v3248
    %3811 = vmatpush.bf16.msra.mxu0 %v3244
    %3812 = vmatmul.bf16.gmra.mxu0 %v3763
    %v3813 = vpop.f32.mrf.mxu0
    %v3814 = vadd.f32 0.0, %v3813
    %v3815 = vpop.f32.mrf.mxu0
    %3816 = vdwg.mxu0
    %v3817 = vadd.f32 %v3121, %v3775
    %v3818 = vadd.f32 %v3150, %v3788
    %v3819 = vadd.f32 %v3179, %v3801
    %v3820 = vadd.f32 %v3208, %v3814
    %v3821 = vxor.u32 %v3817, 2147483648
    %v3822 = vmul.f32 %v3821, 1.442695
    %v3823 = vpow.pop %v3822
    %v3824 = vadd.f32 %v3823, 1.0
    %v3825 = vrcp.pop %v3824
    %v3826 = vmul.f32 %v3824, %v3825
    %v3827 = vsub.f32 1.0, %v3826
    %v3828 = vmul.f32 %v3825, %v3827
    %v3829 = vadd.f32 %v3825, %v3828
    %vm3830 = vweird.f32 %v3824
    %vm3831 = vweird.f32 %v3825
    %vm3832 = vmor %vm3830, %vm3831
    %v3833 = vsel %vm3832, %v3825, %v3829
    %v3834 = vand.u32 2147483647, %v3824
    %vm3835 = vcmp.eq.f32.partialorder %v3834, 8.507059e+37
    %v3836 = vand.u32 %v3824, 2147483648
    %v3837 = vor.u32 1.1754944e-38, %v3836
    %v3838 = vsel %vm3835, %v3837, %v3833
    %v3839 = vmul.f32 1.0, %v3838
    %v3840 = vxor.u32 %v3818, 2147483648
    %v3841 = vmul.f32 %v3840, 1.442695
    %v3842 = vpow.pop %v3841
    %v3843 = vadd.f32 %v3842, 1.0
    %v3844 = vrcp.pop %v3843
    %v3845 = vmul.f32 %v3843, %v3844
    %v3846 = vsub.f32 1.0, %v3845
    %v3847 = vmul.f32 %v3844, %v3846
    %v3848 = vadd.f32 %v3844, %v3847
    %vm3849 = vweird.f32 %v3843
    %vm3850 = vweird.f32 %v3844
    %vm3851 = vmor %vm3849, %vm3850
    %v3852 = vsel %vm3851, %v3844, %v3848
    %v3853 = vand.u32 2147483647, %v3843
    %vm3854 = vcmp.eq.f32.partialorder %v3853, 8.507059e+37
    %v3855 = vand.u32 %v3843, 2147483648
    %v3856 = vor.u32 1.1754944e-38, %v3855
    %v3857 = vsel %vm3854, %v3856, %v3852
    %v3858 = vmul.f32 1.0, %v3857
    %v3859 = vtanh.pop %v3819
    %v3860 = vxor.u32 %v3820, 2147483648
    %v3861 = vmul.f32 %v3860, 1.442695
    %v3862 = vpow.pop %v3861
    %v3863 = vadd.f32 %v3862, 1.0
    %v3864 = vrcp.pop %v3863
    %v3865 = vmul.f32 %v3863, %v3864
    %v3866 = vsub.f32 1.0, %v3865
    %v3867 = vmul.f32 %v3864, %v3866
    %v3868 = vadd.f32 %v3864, %v3867
    %vm3869 = vweird.f32 %v3863
    %vm3870 = vweird.f32 %v3864
    %vm3871 = vmor %vm3869, %vm3870
    %v3872 = vsel %vm3871, %v3864, %v3868
    %v3873 = vand.u32 2147483647, %v3863
    %vm3874 = vcmp.eq.f32.partialorder %v3873, 8.507059e+37
    %v3875 = vand.u32 %v3863, 2147483648
    %v3876 = vor.u32 1.1754944e-38, %v3875
    %v3877 = vsel %vm3874, %v3876, %v3872
    %v3878 = vmul.f32 1.0, %v3877
    %v3879 = vmul.f32 %v3858, %v3758
    %v3880 = vmul.f32 %v3839, %v3859
    %v3881 = vadd.f32 %v3879, %v3880
    %v3882 = vtanh.pop %v3881
    %v3883 = vmul.f32 %v3878, %v3882
    %v3884 = vpack.c.bf16 %v3883, %v3883
    %v3886 = vsel %vm766, %v3884, 0
    %3888 = vmatpush.bf16.msra.mxu0 0
    %3889 = vmatpush.bf16.msra.mxu0 0
    %3890 = vmatpush.bf16.msra.mxu0 0
    %3891 = vmatpush.bf16.msra.mxu0 0
    %3892 = vmatpush.bf16.msra.mxu0 0
    %3893 = vmatpush.bf16.msra.mxu0 %v3262
    %3894 = vmatpush.bf16.msra.mxu0 %v3245
    %3895 = vmatpush.bf16.msra.mxu0 %v3241
    %3896 = vmatmul.bf16.gmra.mxu0 %v3886
    %v3897 = vpop.f32.mrf.mxu0
    %v3898 = vadd.f32 0.0, %v3897
    %v3899 = vpop.f32.mrf.mxu0
    %3900 = vdwg.mxu0
    %3901 = vmatpush.bf16.msra.mxu0 0
    %3902 = vmatpush.bf16.msra.mxu0 0
    %3903 = vmatpush.bf16.msra.mxu0 0
    %3904 = vmatpush.bf16.msra.mxu0 0
    %3905 = vmatpush.bf16.msra.mxu0 0
    %3906 = vmatpush.bf16.msra.mxu0 %v3265
    %3907 = vmatpush.bf16.msra.mxu0 %v3246
    %3908 = vmatpush.bf16.msra.mxu0 %v3242
    %3909 = vmatmul.bf16.gmra.mxu0 %v3886
    %v3910 = vpop.f32.mrf.mxu0
    %v3911 = vadd.f32 0.0, %v3910
    %v3912 = vpop.f32.mrf.mxu0
    %3913 = vdwg.mxu0
    %3914 = vmatpush.bf16.msra.mxu0 0
    %3915 = vmatpush.bf16.msra.mxu0 0
    %3916 = vmatpush.bf16.msra.mxu0 0
    %3917 = vmatpush.bf16.msra.mxu0 0
    %3918 = vmatpush.bf16.msra.mxu0 0
    %3919 = vmatpush.bf16.msra.mxu0 %v3268
    %3920 = vmatpush.bf16.msra.mxu0 %v3247
    %3921 = vmatpush.bf16.msra.mxu0 %v3243
    %3922 = vmatmul.bf16.gmra.mxu0 %v3886
    %v3923 = vpop.f32.mrf.mxu0
    %v3924 = vadd.f32 0.0, %v3923
    %v3925 = vpop.f32.mrf.mxu0
    %3926 = vdwg.mxu0
    %3927 = vmatpush.bf16.msra.mxu0 0
    %3928 = vmatpush.bf16.msra.mxu0 0
    %3929 = vmatpush.bf16.msra.mxu0 0
    %3930 = vmatpush.bf16.msra.mxu0 0
    %3931 = vmatpush.bf16.msra.mxu0 0
    %3932 = vmatpush.bf16.msra.mxu0 %v3271
    %3933 = vmatpush.bf16.msra.mxu0 %v3248
    %3934 = vmatpush.bf16.msra.mxu0 %v3244
    %3935 = vmatmul.bf16.gmra.mxu0 %v3886
    %v3936 = vpop.f32.mrf.mxu0
    %v3937 = vadd.f32 0.0, %v3936
    %v3938 = vpop.f32.mrf.mxu0
    %3939 = vdwg.mxu0
    %v3940 = vadd.f32 %v3123, %v3898
    %v3941 = vadd.f32 %v3152, %v3911
    %v3942 = vadd.f32 %v3181, %v3924
    %v3943 = vadd.f32 %v3210, %v3937
    %v3944 = vxor.u32 %v3940, 2147483648
    %v3945 = vmul.f32 %v3944, 1.442695
    %v3946 = vpow.pop %v3945
    %v3947 = vadd.f32 %v3946, 1.0
    %v3948 = vrcp.pop %v3947
    %v3949 = vmul.f32 %v3947, %v3948
    %v3950 = vsub.f32 1.0, %v3949
    %v3951 = vmul.f32 %v3948, %v3950
    %v3952 = vadd.f32 %v3948, %v3951
    %vm3953 = vweird.f32 %v3947
    %vm3954 = vweird.f32 %v3948
    %vm3955 = vmor %vm3953, %vm3954
    %v3956 = vsel %vm3955, %v3948, %v3952
    %v3957 = vand.u32 2147483647, %v3947
    %vm3958 = vcmp.eq.f32.partialorder %v3957, 8.507059e+37
    %v3959 = vand.u32 %v3947, 2147483648
    %v3960 = vor.u32 1.1754944e-38, %v3959
    %v3961 = vsel %vm3958, %v3960, %v3956
    %v3962 = vmul.f32 1.0, %v3961
    %v3963 = vxor.u32 %v3941, 2147483648
    %v3964 = vmul.f32 %v3963, 1.442695
    %v3965 = vpow.pop %v3964
    %v3966 = vadd.f32 %v3965, 1.0
    %v3967 = vrcp.pop %v3966
    %v3968 = vmul.f32 %v3966, %v3967
    %v3969 = vsub.f32 1.0, %v3968
    %v3970 = vmul.f32 %v3967, %v3969
    %v3971 = vadd.f32 %v3967, %v3970
    %vm3972 = vweird.f32 %v3966
    %vm3973 = vweird.f32 %v3967
    %vm3974 = vmor %vm3972, %vm3973
    %v3975 = vsel %vm3974, %v3967, %v3971
    %v3976 = vand.u32 2147483647, %v3966
    %vm3977 = vcmp.eq.f32.partialorder %v3976, 8.507059e+37
    %v3978 = vand.u32 %v3966, 2147483648
    %v3979 = vor.u32 1.1754944e-38, %v3978
    %v3980 = vsel %vm3977, %v3979, %v3975
    %v3981 = vmul.f32 1.0, %v3980
    %v3982 = vtanh.pop %v3942
    %v3983 = vxor.u32 %v3943, 2147483648
    %v3984 = vmul.f32 %v3983, 1.442695
    %v3985 = vpow.pop %v3984
    %v3986 = vadd.f32 %v3985, 1.0
    %v3987 = vrcp.pop %v3986
    %v3988 = vmul.f32 %v3986, %v3987
    %v3989 = vsub.f32 1.0, %v3988
    %v3990 = vmul.f32 %v3987, %v3989
    %v3991 = vadd.f32 %v3987, %v3990
    %vm3992 = vweird.f32 %v3986
    %vm3993 = vweird.f32 %v3987
    %vm3994 = vmor %vm3992, %vm3993
    %v3995 = vsel %vm3994, %v3987, %v3991
    %v3996 = vand.u32 2147483647, %v3986
    %vm3997 = vcmp.eq.f32.partialorder %v3996, 8.507059e+37
    %v3998 = vand.u32 %v3986, 2147483648
    %v3999 = vor.u32 1.1754944e-38, %v3998
    %v4000 = vsel %vm3997, %v3999, %v3995
    %v4001 = vmul.f32 1.0, %v4000
    %v4002 = vmul.f32 %v3981, %v3881
    %v4003 = vmul.f32 %v3962, %v3982
    %v4004 = vadd.f32 %v4002, %v4003
    %v4005 = vtanh.pop %v4004
    %v4006 = vmul.f32 %v4001, %v4005
    %v4007 = vpack.c.bf16 %v4006, %v4006
    %v4009 = vsel %vm766, %v4007, 0
    %4011 = vmatpush.bf16.msra.mxu0 0
    %4012 = vmatpush.bf16.msra.mxu0 0
    %4013 = vmatpush.bf16.msra.mxu0 0
    %4014 = vmatpush.bf16.msra.mxu0 0
    %4015 = vmatpush.bf16.msra.mxu0 0
    %4016 = vmatpush.bf16.msra.mxu0 %v3262
    %4017 = vmatpush.bf16.msra.mxu0 %v3245
    %4018 = vmatpush.bf16.msra.mxu0 %v3241
    %4019 = vmatmul.bf16.gmra.mxu0 %v4009
    %v4020 = vpop.f32.mrf.mxu0
    %v4021 = vadd.f32 0.0, %v4020
    %v4022 = vpop.f32.mrf.mxu0
    %4023 = vdwg.mxu0
    %4024 = vmatpush.bf16.msra.mxu0 0
    %4025 = vmatpush.bf16.msra.mxu0 0
    %4026 = vmatpush.bf16.msra.mxu0 0
    %4027 = vmatpush.bf16.msra.mxu0 0
    %4028 = vmatpush.bf16.msra.mxu0 0
    %4029 = vmatpush.bf16.msra.mxu0 %v3265
    %4030 = vmatpush.bf16.msra.mxu0 %v3246
    %4031 = vmatpush.bf16.msra.mxu0 %v3242
    %4032 = vmatmul.bf16.gmra.mxu0 %v4009
    %v4033 = vpop.f32.mrf.mxu0
    %v4034 = vadd.f32 0.0, %v4033
    %v4035 = vpop.f32.mrf.mxu0
    %4036 = vdwg.mxu0
    %4037 = vmatpush.bf16.msra.mxu0 0
    %4038 = vmatpush.bf16.msra.mxu0 0
    %4039 = vmatpush.bf16.msra.mxu0 0
    %4040 = vmatpush.bf16.msra.mxu0 0
    %4041 = vmatpush.bf16.msra.mxu0 0
    %4042 = vmatpush.bf16.msra.mxu0 %v3268
    %4043 = vmatpush.bf16.msra.mxu0 %v3247
    %4044 = vmatpush.bf16.msra.mxu0 %v3243
    %4045 = vmatmul.bf16.gmra.mxu0 %v4009
    %v4046 = vpop.f32.mrf.mxu0
    %v4047 = vadd.f32 0.0, %v4046
    %v4048 = vpop.f32.mrf.mxu0
    %4049 = vdwg.mxu0
    %4050 = vmatpush.bf16.msra.mxu0 0
    %4051 = vmatpush.bf16.msra.mxu0 0
    %4052 = vmatpush.bf16.msra.mxu0 0
    %4053 = vmatpush.bf16.msra.mxu0 0
    %4054 = vmatpush.bf16.msra.mxu0 0
    %4055 = vmatpush.bf16.msra.mxu0 %v3271
    %4056 = vmatpush.bf16.msra.mxu0 %v3248
    %4057 = vmatpush.bf16.msra.mxu0 %v3244
    %4058 = vmatmul.bf16.gmra.mxu0 %v4009
    %v4059 = vpop.f32.mrf.mxu0
    %v4060 = vadd.f32 0.0, %v4059
    %v4061 = vpop.f32.mrf.mxu0
    %4062 = vdwg.mxu0
    %v4063 = vadd.f32 %v3126, %v4021
    %v4064 = vadd.f32 %v3155, %v4034
    %v4065 = vadd.f32 %v3184, %v4047
    %v4066 = vadd.f32 %v3213, %v4060
    %v4067 = vxor.u32 %v4063, 2147483648
    %v4068 = vmul.f32 %v4067, 1.442695
    %v4069 = vpow.pop %v4068
    %v4070 = vadd.f32 %v4069, 1.0
    %v4071 = vrcp.pop %v4070
    %v4072 = vmul.f32 %v4070, %v4071
    %v4073 = vsub.f32 1.0, %v4072
    %v4074 = vmul.f32 %v4071, %v4073
    %v4075 = vadd.f32 %v4071, %v4074
    %vm4076 = vweird.f32 %v4070
    %vm4077 = vweird.f32 %v4071
    %vm4078 = vmor %vm4076, %vm4077
    %v4079 = vsel %vm4078, %v4071, %v4075
    %v4080 = vand.u32 2147483647, %v4070
    %vm4081 = vcmp.eq.f32.partialorder %v4080, 8.507059e+37
    %v4082 = vand.u32 %v4070, 2147483648
    %v4083 = vor.u32 1.1754944e-38, %v4082
    %v4084 = vsel %vm4081, %v4083, %v4079
    %v4085 = vmul.f32 1.0, %v4084
    %v4086 = vxor.u32 %v4064, 2147483648
    %v4087 = vmul.f32 %v4086, 1.442695
    %v4088 = vpow.pop %v4087
    %v4089 = vadd.f32 %v4088, 1.0
    %v4090 = vrcp.pop %v4089
    %v4091 = vmul.f32 %v4089, %v4090
    %v4092 = vsub.f32 1.0, %v4091
    %v4093 = vmul.f32 %v4090, %v4092
    %v4094 = vadd.f32 %v4090, %v4093
    %vm4095 = vweird.f32 %v4089
    %vm4096 = vweird.f32 %v4090
    %vm4097 = vmor %vm4095, %vm4096
    %v4098 = vsel %vm4097, %v4090, %v4094
    %v4099 = vand.u32 2147483647, %v4089
    %vm4100 = vcmp.eq.f32.partialorder %v4099, 8.507059e+37
    %v4101 = vand.u32 %v4089, 2147483648
    %v4102 = vor.u32 1.1754944e-38, %v4101
    %v4103 = vsel %vm4100, %v4102, %v4098
    %v4104 = vmul.f32 1.0, %v4103
    %v4105 = vtanh.pop %v4065
    %v4106 = vxor.u32 %v4066, 2147483648
    %v4107 = vmul.f32 %v4106, 1.442695
    %v4108 = vpow.pop %v4107
    %v4109 = vadd.f32 %v4108, 1.0
    %v4110 = vrcp.pop %v4109
    %v4111 = vmul.f32 %v4109, %v4110
    %v4112 = vsub.f32 1.0, %v4111
    %v4113 = vmul.f32 %v4110, %v4112
    %v4114 = vadd.f32 %v4110, %v4113
    %vm4115 = vweird.f32 %v4109
    %vm4116 = vweird.f32 %v4110
    %vm4117 = vmor %vm4115, %vm4116
    %v4118 = vsel %vm4117, %v4110, %v4114
    %v4119 = vand.u32 2147483647, %v4109
    %vm4120 = vcmp.eq.f32.partialorder %v4119, 8.507059e+37
    %v4121 = vand.u32 %v4109, 2147483648
    %v4122 = vor.u32 1.1754944e-38, %v4121
    %v4123 = vsel %vm4120, %v4122, %v4118
    %v4124 = vmul.f32 1.0, %v4123
    %v4125 = vmul.f32 %v4104, %v4004
    %v4126 = vmul.f32 %v4085, %v4105
    %v4127 = vadd.f32 %v4125, %v4126
    %v4128 = vtanh.pop %v4127
    %v4129 = vmul.f32 %v4124, %v4128
    %v4130 = vpack.c.bf16 %v4129, %v4129
    %v4132 = vsel %vm766, %v4130, 0
    %4134 = vmatpush.bf16.msra.mxu0 0
    %4135 = vmatpush.bf16.msra.mxu0 0
    %4136 = vmatpush.bf16.msra.mxu0 0
    %4137 = vmatpush.bf16.msra.mxu0 0
    %4138 = vmatpush.bf16.msra.mxu0 0
    %4139 = vmatpush.bf16.msra.mxu0 %v3262
    %4140 = vmatpush.bf16.msra.mxu0 %v3245
    %4141 = vmatpush.bf16.msra.mxu0 %v3241
    %4142 = vmatmul.bf16.gmra.mxu0 %v4132
    %v4143 = vpop.f32.mrf.mxu0
    %v4144 = vadd.f32 0.0, %v4143
    %v4145 = vpop.f32.mrf.mxu0
    %4146 = vdwg.mxu0
    %4147 = vmatpush.bf16.msra.mxu0 0
    %4148 = vmatpush.bf16.msra.mxu0 0
    %4149 = vmatpush.bf16.msra.mxu0 0
    %4150 = vmatpush.bf16.msra.mxu0 0
    %4151 = vmatpush.bf16.msra.mxu0 0
    %4152 = vmatpush.bf16.msra.mxu0 %v3265
    %4153 = vmatpush.bf16.msra.mxu0 %v3246
    %4154 = vmatpush.bf16.msra.mxu0 %v3242
    %4155 = vmatmul.bf16.gmra.mxu0 %v4132
    %v4156 = vpop.f32.mrf.mxu0
    %v4157 = vadd.f32 0.0, %v4156
    %v4158 = vpop.f32.mrf.mxu0
    %4159 = vdwg.mxu0
    %4160 = vmatpush.bf16.msra.mxu0 0
    %4161 = vmatpush.bf16.msra.mxu0 0
    %4162 = vmatpush.bf16.msra.mxu0 0
    %4163 = vmatpush.bf16.msra.mxu0 0
    %4164 = vmatpush.bf16.msra.mxu0 0
    %4165 = vmatpush.bf16.msra.mxu0 %v3268
    %4166 = vmatpush.bf16.msra.mxu0 %v3247
    %4167 = vmatpush.bf16.msra.mxu0 %v3243
    %4168 = vmatmul.bf16.gmra.mxu0 %v4132
    %v4169 = vpop.f32.mrf.mxu0
    %v4170 = vadd.f32 0.0, %v4169
    %v4171 = vpop.f32.mrf.mxu0
    %4172 = vdwg.mxu0
    %4173 = vmatpush.bf16.msra.mxu0 0
    %4174 = vmatpush.bf16.msra.mxu0 0
    %4175 = vmatpush.bf16.msra.mxu0 0
    %4176 = vmatpush.bf16.msra.mxu0 0
    %4177 = vmatpush.bf16.msra.mxu0 0
    %4178 = vmatpush.bf16.msra.mxu0 %v3271
    %4179 = vmatpush.bf16.msra.mxu0 %v3248
    %4180 = vmatpush.bf16.msra.mxu0 %v3244
    %4181 = vmatmul.bf16.gmra.mxu0 %v4132
    %v4182 = vpop.f32.mrf.mxu0
    %v4183 = vadd.f32 0.0, %v4182
    %v4184 = vpop.f32.mrf.mxu0
    %4185 = vdwg.mxu0
    %v4186 = vadd.f32 %v3128, %v4144
    %v4187 = vadd.f32 %v3157, %v4157
    %v4188 = vadd.f32 %v3186, %v4170
    %v4189 = vadd.f32 %v3215, %v4183
    %v4190 = vxor.u32 %v4186, 2147483648
    %v4191 = vmul.f32 %v4190, 1.442695
    %v4192 = vpow.pop %v4191
    %v4193 = vadd.f32 %v4192, 1.0
    %v4194 = vrcp.pop %v4193
    %v4195 = vmul.f32 %v4193, %v4194
    %v4196 = vsub.f32 1.0, %v4195
    %v4197 = vmul.f32 %v4194, %v4196
    %v4198 = vadd.f32 %v4194, %v4197
    %vm4199 = vweird.f32 %v4193
    %vm4200 = vweird.f32 %v4194
    %vm4201 = vmor %vm4199, %vm4200
    %v4202 = vsel %vm4201, %v4194, %v4198
    %v4203 = vand.u32 2147483647, %v4193
    %vm4204 = vcmp.eq.f32.partialorder %v4203, 8.507059e+37
    %v4205 = vand.u32 %v4193, 2147483648
    %v4206 = vor.u32 1.1754944e-38, %v4205
    %v4207 = vsel %vm4204, %v4206, %v4202
    %v4208 = vmul.f32 1.0, %v4207
    %v4209 = vxor.u32 %v4187, 2147483648
    %v4210 = vmul.f32 %v4209, 1.442695
    %v4211 = vpow.pop %v4210
    %v4212 = vadd.f32 %v4211, 1.0
    %v4213 = vrcp.pop %v4212
    %v4214 = vmul.f32 %v4212, %v4213
    %v4215 = vsub.f32 1.0, %v4214
    %v4216 = vmul.f32 %v4213, %v4215
    %v4217 = vadd.f32 %v4213, %v4216
    %vm4218 = vweird.f32 %v4212
    %vm4219 = vweird.f32 %v4213
    %vm4220 = vmor %vm4218, %vm4219
    %v4221 = vsel %vm4220, %v4213, %v4217
    %v4222 = vand.u32 2147483647, %v4212
    %vm4223 = vcmp.eq.f32.partialorder %v4222, 8.507059e+37
    %v4224 = vand.u32 %v4212, 2147483648
    %v4225 = vor.u32 1.1754944e-38, %v4224
    %v4226 = vsel %vm4223, %v4225, %v4221
    %v4227 = vmul.f32 1.0, %v4226
    %v4228 = vtanh.pop %v4188
    %v4229 = vxor.u32 %v4189, 2147483648
    %v4230 = vmul.f32 %v4229, 1.442695
    %v4231 = vpow.pop %v4230
    %v4232 = vadd.f32 %v4231, 1.0
    %v4233 = vrcp.pop %v4232
    %v4234 = vmul.f32 %v4232, %v4233
    %v4235 = vsub.f32 1.0, %v4234
    %v4236 = vmul.f32 %v4233, %v4235
    %v4237 = vadd.f32 %v4233, %v4236
    %vm4238 = vweird.f32 %v4232
    %vm4239 = vweird.f32 %v4233
    %vm4240 = vmor %vm4238, %vm4239
    %v4241 = vsel %vm4240, %v4233, %v4237
    %v4242 = vand.u32 2147483647, %v4232
    %vm4243 = vcmp.eq.f32.partialorder %v4242, 8.507059e+37
    %v4244 = vand.u32 %v4232, 2147483648
    %v4245 = vor.u32 1.1754944e-38, %v4244
    %v4246 = vsel %vm4243, %v4245, %v4241
    %v4247 = vmul.f32 1.0, %v4246
    %v4248 = vmul.f32 %v4227, %v4127
    %v4249 = vmul.f32 %v4208, %v4228
    %v4250 = vadd.f32 %v4248, %v4249
    %v4251 = vtanh.pop %v4250
    %v4252 = vmul.f32 %v4247, %v4251
    %s4253 = scalar_lea.vmem [#allocation36], 16
    %4254 = vst.msk [vmem:[%s4253] sm:$0xff] %vm766, %v4252
    %s4255 = scalar_lea.vmem [#allocation37], 16
    %4256 = vst.msk [vmem:[%s4255] sm:$0xff] %vm766, %v4250
    %v4257 = vld [vmem:[#allocation14] sm:$0xff]
    %v4258 = vld [vmem:[#allocation14 + $0x8] sm:$0xff]
    %v4259 = vld [vmem:[#allocation14 + $0x10] sm:$0xff]
    %v4260 = vld [vmem:[#allocation14 + $0x18] sm:$0xff]
    %v4261 = vld [vmem:[#allocation14 + $0x20] sm:$0xff]
    %v4262 = vld [vmem:[#allocation14 + $0x28] sm:$0xf]
    %v4263 = vpack.c.bf16 %v4252, %v4252
    %v4264 = vpack.c.bf16 %v4258, %v4257
    %v4265 = vpack.c.bf16 %v4260, %v4259
    %v4266 = vpack.c.bf16 %v4262, %v4261
    %v4267 = vld [vmem:[%s27] sm:$0x1]
    %v4269 = vperm.slane %v4267, 0
    %v4272 = vsel %vm766, %v4263, 0
    %v4275 = vsel %vm770, %v4266, 0
    %4277 = vmatpush.bf16.msra.mxu0 0
    %4278 = vmatpush.bf16.msra.mxu0 0
    %4279 = vmatpush.bf16.msra.mxu0 0
    %4280 = vmatpush.bf16.msra.mxu0 0
    %4281 = vmatpush.bf16.msra.mxu0 0
    %4282 = vmatpush.bf16.msra.mxu0 %v4275
    %4283 = vmatpush.bf16.msra.mxu0 %v4265
    %4284 = vmatpush.bf16.msra.mxu0 %v4264
    %4285 = vmatmul.bf16.gmra.mxu0 %v4272
    %v4286 = vpop.f32.mrf.mxu0
    %v4287 = vadd.f32 %v4269, %v4286
    %v4288 = vpop.f32.mrf.mxu0
    %4289 = vdwg.mxu0
    %v4290 = vmax.f32 %v4287, 0.0
    %v4291 = vld [vmem:[%s29] sm:$0xff]
    %v4292 = vld [vmem:[%s29 + $0x8] sm:$0xff]
    %v4293 = vld [vmem:[%s29 + $0x10] sm:$0xff]
    %v4294 = vld [vmem:[%s29 + $0x18] sm:$0xff]
    %v4295 = vld [vmem:[%s29 + $0x20] sm:$0xff]
    %v4296 = vld [vmem:[%s29 + $0x28] sm:$0xff]
    %v4297 = vld [vmem:[%s29 + $0x30] sm:$0xff]
    %v4298 = vld [vmem:[%s29 + $0x38] sm:$0xff]
    %v4299 = vpack.c.bf16 %v4290, %v4290
    %v4300 = vpack.c.bf16 %v4292, %v4291
    %v4301 = vpack.c.bf16 %v4294, %v4293
    %v4302 = vpack.c.bf16 %v4296, %v4295
    %v4303 = vpack.c.bf16 %v4298, %v4297
    %v4304 = vld [vmem:[#allocation15] sm:$0x1]
    %v4306 = vperm.slane %v4304, 0
    %vm4308 = vcmask 523264
    %v4310 = vsel %vm4308, %v4299, 0
    %4312 = vmatpush.bf16.msra.mxu0 0
    %4313 = vmatpush.bf16.msra.mxu0 0
    %4314 = vmatpush.bf16.msra.mxu0 0
    %4315 = vmatpush.bf16.msra.mxu0 0
    %4316 = vmatpush.bf16.msra.mxu0 %v4303
    %4317 = vmatpush.bf16.msra.mxu0 %v4302
    %4318 = vmatpush.bf16.msra.mxu0 %v4301
    %4319 = vmatpush.bf16.msra.mxu0 %v4300
    %4320 = vmatmul.bf16.gmra.mxu0 %v4310
    %v4321 = vpop.f32.mrf.mxu0
    %v4322 = vadd.f32 %v4306, %v4321
    %v4323 = vpop.f32.mrf.mxu0
    %4324 = vdwg.mxu0
    %v4325 = vmax.f32 %v4322, 0.0
    %v4326 = vld [vmem:[#allocation17] sm:$0xff]
    %v4327 = vld [vmem:[#allocation17 + $0x8] sm:$0xff]
    %v4328 = vld [vmem:[#allocation17 + $0x10] sm:$0xff]
    %v4329 = vld [vmem:[#allocation17 + $0x18] sm:$0xff]
    %v4330 = vld [vmem:[#allocation17 + $0x20] sm:$0xff]
    %v4331 = vld [vmem:[#allocation17 + $0x28] sm:$0xff]
    %v4332 = vld [vmem:[#allocation17 + $0x30] sm:$0xff]
    %v4333 = vld [vmem:[#allocation17 + $0x38] sm:$0xff]
    %v4334 = vpack.c.bf16 %v4325, %v4325
    %v4335 = vpack.c.bf16 %v4327, %v4326
    %v4336 = vpack.c.bf16 %v4329, %v4328
    %v4337 = vpack.c.bf16 %v4331, %v4330
    %v4338 = vpack.c.bf16 %v4333, %v4332
    %v4339 = vld [vmem:[#allocation18] sm:$0x1]
    %v4341 = vperm.slane %v4339, 0
    %v4344 = vsel %vm4308, %v4334, 0
    %4346 = vmatpush.bf16.msra.mxu0 0
    %4347 = vmatpush.bf16.msra.mxu0 0
    %4348 = vmatpush.bf16.msra.mxu0 0
    %4349 = vmatpush.bf16.msra.mxu0 0
    %4350 = vmatpush.bf16.msra.mxu0 %v4338
    %4351 = vmatpush.bf16.msra.mxu0 %v4337
    %4352 = vmatpush.bf16.msra.mxu0 %v4336
    %4353 = vmatpush.bf16.msra.mxu0 %v4335
    %4354 = vmatmul.bf16.gmra.mxu0 %v4344
    %v4355 = vpop.f32.mrf.mxu0
    %v4356 = vadd.f32 %v4341, %v4355
    %v4357 = vpop.f32.mrf.mxu0
    %4358 = vdwg.mxu0
    %v4359 = vmax.f32 %v4356, 0.0
    %v4360 = vld [vmem:[%s37] sm:$0xff]
    %v4361 = vld [vmem:[%s37 + $0x8] sm:$0xff]
    %v4362 = vld [vmem:[%s37 + $0x10] sm:$0xff]
    %v4363 = vld [vmem:[%s37 + $0x18] sm:$0xff]
    %v4364 = vld [vmem:[%s37 + $0x20] sm:$0xff]
    %v4365 = vld [vmem:[%s37 + $0x28] sm:$0xff]
    %v4366 = vld [vmem:[%s37 + $0x30] sm:$0xff]
    %v4367 = vld [vmem:[%s37 + $0x38] sm:$0xff]
    %v4368 = vpack.c.bf16 %v4359, %v4359
    %v4369 = vpack.c.bf16 %v4361, %v4360
    %v4370 = vpack.c.bf16 %v4363, %v4362
    %v4371 = vpack.c.bf16 %v4365, %v4364
    %v4372 = vpack.c.bf16 %v4367, %v4366
    %v4373 = vld [vmem:[#allocation20] sm:$0x1]
    %v4375 = vperm.slane %v4373, 0
    %v4378 = vsel %vm4308, %v4368, 0
    %4380 = vmatpush.bf16.msra.mxu0 0
    %4381 = vmatpush.bf16.msra.mxu0 0
    %4382 = vmatpush.bf16.msra.mxu0 0
    %4383 = vmatpush.bf16.msra.mxu0 0
    %4384 = vmatpush.bf16.msra.mxu0 %v4372
    %4385 = vmatpush.bf16.msra.mxu0 %v4371
    %4386 = vmatpush.bf16.msra.mxu0 %v4370
    %4387 = vmatpush.bf16.msra.mxu0 %v4369
    %4388 = vmatmul.bf16.gmra.mxu0 %v4378
    %v4389 = vpop.f32.mrf.mxu0
    %v4390 = vadd.f32 %v4375, %v4389
    %v4391 = vpop.f32.mrf.mxu0
    %4392 = vdwg.mxu0
    %vm4393 = vcmask 261120
    %v4394 = vsel %vm4393, %v4390, -inf
    %4395 = vmax.xlane.f32.xlu0 %v4394
    %v4396 = vpop.xlane.xlu0 %4395
    %v4397 = vsub.f32 %v4390, %v4396
    %v4398 = vmul.f32 %v4397, 1.442695
    %v4399 = vpow.pop %v4398
    %v4400 = vsel %vm4393, %v4399, 0.0
    %4401 = vadd.xlane.f32.xlu0 %v4400
    %v4402 = vpop.xlane.xlu0 %4401
    %v4403 = vrcp.pop %v4402
    %v4404 = vmul.f32 %v4402, %v4403
    %v4405 = vsub.f32 1.0, %v4404
    %v4406 = vmul.f32 %v4403, %v4405
    %v4407 = vadd.f32 %v4403, %v4406
    %vm4408 = vweird.f32 %v4402
    %vm4409 = vweird.f32 %v4403
    %vm4410 = vmor %vm4408, %vm4409
    %v4411 = vsel %vm4410, %v4403, %v4407
    %v4412 = vand.u32 2147483647, %v4402
    %vm4413 = vcmp.eq.f32.partialorder %v4412, 8.507059e+37
    %v4414 = vand.u32 %v4402, 2147483648
    %v4415 = vor.u32 1.1754944e-38, %v4414
    %v4416 = vsel %vm4413, %v4415, %v4411
    %v4417 = vmul.f32 %v4399, %v4416
    %v4418 = vld [vmem:[#allocation21] sm:$0xff]
    %v4419 = vld [vmem:[#allocation21 + $0x8] sm:$0xff]
    %v4420 = vld [vmem:[#allocation21 + $0x10] sm:$0xff]
    %v4421 = vld [vmem:[#allocation21 + $0x18] sm:$0xff]
    %v4422 = vld [vmem:[#allocation21 + $0x20] sm:$0xff]
    %v4423 = vld [vmem:[#allocation21 + $0x28] sm:$0xf]
    %v4424 = vpack.c.bf16 %v4419, %v4418
    %v4425 = vpack.c.bf16 %v4421, %v4420
    %v4426 = vpack.c.bf16 %v4423, %v4422
    %v4427 = vld [vmem:[#allocation23] sm:$0x1]
    %v4429 = vperm.slane %v4427, 0
    %v4432 = vsel %vm770, %v4426, 0
    %4434 = vmatpush.bf16.msra.mxu0 0
    %4435 = vmatpush.bf16.msra.mxu0 0
    %4436 = vmatpush.bf16.msra.mxu0 0
    %4437 = vmatpush.bf16.msra.mxu0 0
    %4438 = vmatpush.bf16.msra.mxu0 0
    %4439 = vmatpush.bf16.msra.mxu0 %v4432
    %4440 = vmatpush.bf16.msra.mxu0 %v4425
    %4441 = vmatpush.bf16.msra.mxu0 %v4424
    %4442 = vmatmul.bf16.gmra.mxu0 %v4272
    %v4443 = vpop.f32.mrf.mxu0
    %v4444 = vadd.f32 %v4429, %v4443
    %v4445 = vpop.f32.mrf.mxu0
    %4446 = vdwg.mxu0
    %v4447 = vmax.f32 %v4444, 0.0
    %v4448 = vld [vmem:[%s45] sm:$0xff]
    %v4449 = vld [vmem:[%s45 + $0x8] sm:$0xff]
    %v4450 = vld [vmem:[%s45 + $0x10] sm:$0xff]
    %v4451 = vld [vmem:[%s45 + $0x18] sm:$0xff]
    %v4452 = vld [vmem:[%s45 + $0x20] sm:$0xff]
    %v4453 = vld [vmem:[%s45 + $0x28] sm:$0xff]
    %v4454 = vld [vmem:[%s45 + $0x30] sm:$0xff]
    %v4455 = vld [vmem:[%s45 + $0x38] sm:$0xff]
    %v4456 = vld [vmem:[%s45 + $0x40] sm:$0xff]
    %v4457 = vld [vmem:[%s45 + $0x48] sm:$0xff]
    %v4458 = vld [vmem:[%s45 + $0x50] sm:$0x3]
    %v4459 = vpack.c.bf16 %v4447, %v4447
    %v4460 = vpack.c.bf16 %v4449, %v4448
    %v4461 = vpack.c.bf16 %v4451, %v4450
    %v4462 = vpack.c.bf16 %v4453, %v4452
    %v4463 = vpack.c.bf16 %v4455, %v4454
    %v4464 = vpack.c.bf16 %v4457, %v4456
    %v4465 = vpack.c.bf16 %v4458, %v4458
    %v4466 = vld [vmem:[#allocation24] sm:$0x1]
    %v4468 = vperm.slane %v4466, 0
    %vm4470 = vcmask 670720
    %v4472 = vsel %vm4470, %v4459, 0
    %vm4474 = vcmask 1040384
    %v4476 = vsel %vm4474, %v4465, 0
    %4478 = vmatpush.bf16.msra.mxu0 0
    %4479 = vmatpush.bf16.msra.mxu0 0
    %4480 = vmatpush.bf16.msra.mxu0 %v4476
    %4481 = vmatpush.bf16.msra.mxu0 %v4464
    %4482 = vmatpush.bf16.msra.mxu0 %v4463
    %4483 = vmatpush.bf16.msra.mxu0 %v4462
    %4484 = vmatpush.bf16.msra.mxu0 %v4461
    %4485 = vmatpush.bf16.msra.mxu0 %v4460
    %4486 = vmatmul.bf16.gmra.mxu0 %v4472
    %v4487 = vpop.f32.mrf.mxu0
    %v4488 = vadd.f32 %v4468, %v4487
    %v4489 = vpop.f32.mrf.mxu0
    %4490 = vdwg.mxu0
    %v4491 = vmax.f32 %v4488, 0.0
    %v4492 = vld [vmem:[#allocation26] sm:$0xff]
    %v4493 = vld [vmem:[#allocation26 + $0x8] sm:$0xff]
    %v4494 = vld [vmem:[#allocation26 + $0x10] sm:$0xff]
    %v4495 = vld [vmem:[#allocation26 + $0x18] sm:$0xff]
    %v4496 = vld [vmem:[#allocation26 + $0x20] sm:$0xff]
    %v4497 = vld [vmem:[#allocation26 + $0x28] sm:$0xff]
    %v4498 = vld [vmem:[#allocation26 + $0x30] sm:$0xff]
    %v4499 = vld [vmem:[#allocation26 + $0x38] sm:$0xff]
    %v4500 = vld [vmem:[#allocation26 + $0x40] sm:$0xff]
    %v4501 = vld [vmem:[#allocation26 + $0x48] sm:$0xff]
    %v4502 = vld [vmem:[#allocation26 + $0x50] sm:$0x3]
    %v4503 = vpack.c.bf16 %v4491, %v4491
    %v4504 = vpack.c.bf16 %v4493, %v4492
    %v4505 = vpack.c.bf16 %v4495, %v4494
    %v4506 = vpack.c.bf16 %v4497, %v4496
    %v4507 = vpack.c.bf16 %v4499, %v4498
    %v4508 = vpack.c.bf16 %v4501, %v4500
    %v4509 = vpack.c.bf16 %v4502, %v4502
    %v4510 = vld [vmem:[#allocation27] sm:$0x1]
    %v4512 = vperm.slane %v4510, 0
    %v4515 = vsel %vm4470, %v4503, 0
    %v4518 = vsel %vm4474, %v4509, 0
    %4520 = vmatpush.bf16.msra.mxu0 0
    %4521 = vmatpush.bf16.msra.mxu0 0
    %4522 = vmatpush.bf16.msra.mxu0 %v4518
    %4523 = vmatpush.bf16.msra.mxu0 %v4508
    %4524 = vmatpush.bf16.msra.mxu0 %v4507
    %4525 = vmatpush.bf16.msra.mxu0 %v4506
    %4526 = vmatpush.bf16.msra.mxu0 %v4505
    %4527 = vmatpush.bf16.msra.mxu0 %v4504
    %4528 = vmatmul.bf16.gmra.mxu0 %v4515
    %v4529 = vpop.f32.mrf.mxu0
    %v4530 = vadd.f32 %v4512, %v4529
    %v4531 = vpop.f32.mrf.mxu0
    %4532 = vdwg.mxu0
    %v4533 = vmax.f32 %v4530, 0.0
    %v4534 = vld [vmem:[%s53] sm:$0xff]
    %v4535 = vld [vmem:[%s53 + $0x8] sm:$0xff]
    %v4536 = vld [vmem:[%s53 + $0x10] sm:$0xff]
    %v4537 = vld [vmem:[%s53 + $0x18] sm:$0xff]
    %v4538 = vld [vmem:[%s53 + $0x20] sm:$0xff]
    %v4539 = vld [vmem:[%s53 + $0x28] sm:$0xff]
    %v4540 = vld [vmem:[%s53 + $0x30] sm:$0xff]
    %v4541 = vld [vmem:[%s53 + $0x38] sm:$0xff]
    %v4542 = vld [vmem:[%s53 + $0x40] sm:$0xff]
    %v4543 = vld [vmem:[%s53 + $0x48] sm:$0xff]
    %v4544 = vld [vmem:[%s53 + $0x50] sm:$0x3]
    %v4545 = vpack.c.bf16 %v4533, %v4533
    %v4546 = vpack.c.bf16 %v4535, %v4534
    %v4547 = vpack.c.bf16 %v4537, %v4536
    %v4548 = vpack.c.bf16 %v4539, %v4538
    %v4549 = vpack.c.bf16 %v4541, %v4540
    %v4550 = vpack.c.bf16 %v4543, %v4542
    %v4551 = vpack.c.bf16 %v4544, %v4544
    %v4552 = vld [vmem:[#allocation29] sm:$0x1]
    %v4554 = vperm.slane %v4552, 0
    %v4557 = vsel %vm4470, %v4545, 0
    %v4560 = vsel %vm4474, %v4551, 0
    %4562 = vmatpush.bf16.msra.mxu0 0
    %4563 = vmatpush.bf16.msra.mxu0 0
    %4564 = vmatpush.bf16.msra.mxu0 %v4560
    %4565 = vmatpush.bf16.msra.mxu0 %v4550
    %4566 = vmatpush.bf16.msra.mxu0 %v4549
    %4567 = vmatpush.bf16.msra.mxu0 %v4548
    %4568 = vmatpush.bf16.msra.mxu0 %v4547
    %4569 = vmatpush.bf16.msra.mxu0 %v4546
    %4570 = vmatmul.bf16.gmra.mxu0 %v4557
    %v4571 = vpop.f32.mrf.mxu0
    %v4572 = vadd.f32 %v4554, %v4571
    %v4573 = vpop.f32.mrf.mxu0
    %4574 = vdwg.mxu0
    %vm4575 = vcmask 334848
    %v4576 = vsel %vm4575, %v4572, -inf
    %4577 = vmax.xlane.f32.xlu0 %v4576
    %v4578 = vpop.xlane.xlu0 %4577
    %v4579 = vsub.f32 %v4572, %v4578
    %v4580 = vmul.f32 %v4579, 1.442695
    %v4581 = vpow.pop %v4580
    %v4582 = vsel %vm4575, %v4581, 0.0
    %4583 = vadd.xlane.f32.xlu0 %v4582
    %v4584 = vpop.xlane.xlu0 %4583
    %v4585 = vrcp.pop %v4584
    %v4586 = vmul.f32 %v4584, %v4585
    %v4587 = vsub.f32 1.0, %v4586
    %v4588 = vmul.f32 %v4585, %v4587
    %v4589 = vadd.f32 %v4585, %v4588
    %vm4590 = vweird.f32 %v4584
    %vm4591 = vweird.f32 %v4585
    %vm4592 = vmor %vm4590, %vm4591
    %v4593 = vsel %vm4592, %v4585, %v4589
    %v4594 = vand.u32 2147483647, %v4584
    %vm4595 = vcmp.eq.f32.partialorder %v4594, 8.507059e+37
    %v4596 = vand.u32 %v4584, 2147483648
    %v4597 = vor.u32 1.1754944e-38, %v4596
    %v4598 = vsel %vm4595, %v4597, %v4593
    %v4599 = vmul.f32 %v4581, %v4598
    %v4600 = vld [vmem:[%s57] sm:$0xff]
    %v4601 = vld [vmem:[%s57 + $0x8] sm:$0xff]
    %v4602 = vld [vmem:[%s57 + $0x10] sm:$0xff]
    %v4603 = vld [vmem:[%s57 + $0x18] sm:$0xff]
    %v4604 = vld [vmem:[%s57 + $0x20] sm:$0xff]
    %v4605 = vld [vmem:[%s57 + $0x28] sm:$0xf]
    %v4606 = vpack.c.bf16 %v4601, %v4600
    %v4607 = vpack.c.bf16 %v4603, %v4602
    %v4608 = vpack.c.bf16 %v4605, %v4604
    %v4609 = vld [vmem:[%s59] sm:$0x1]
    %v4611 = vperm.slane %v4609, 0
    %v4614 = vsel %vm770, %v4608, 0
    %4616 = vmatpush.bf16.msra.mxu0 0
    %4617 = vmatpush.bf16.msra.mxu0 0
    %4618 = vmatpush.bf16.msra.mxu0 0
    %4619 = vmatpush.bf16.msra.mxu0 0
    %4620 = vmatpush.bf16.msra.mxu0 0
    %4621 = vmatpush.bf16.msra.mxu0 %v4614
    %4622 = vmatpush.bf16.msra.mxu0 %v4607
    %4623 = vmatpush.bf16.msra.mxu0 %v4606
    %4624 = vmatmul.bf16.gmra.mxu0 %v4272
    %v4625 = vpop.f32.mrf.mxu0
    %v4626 = vadd.f32 %v4611, %v4625
    %v4627 = vpop.f32.mrf.mxu0
    %4628 = vdwg.mxu0
    %v4629 = vmax.f32 %v4626, 0.0
    %v4630 = vld [vmem:[#allocation30] sm:$0xff]
    %v4631 = vld [vmem:[#allocation30 + $0x8] sm:$0xff]
    %v4632 = vld [vmem:[#allocation30 + $0x10] sm:$0xff]
    %v4633 = vld [vmem:[#allocation30 + $0x18] sm:$0xff]
    %v4634 = vld [vmem:[#allocation30 + $0x20] sm:$0x3]
    %v4635 = vpack.c.bf16 %v4629, %v4629
    %v4636 = vpack.c.bf16 %v4631, %v4630
    %v4637 = vpack.c.bf16 %v4633, %v4632
    %v4638 = vpack.c.bf16 %v4634, %v4634
    %v4639 = vld [vmem:[%s63] sm:$0x1]
    %v4641 = vperm.slane %v4639, 0
    %vm4643 = vcmask 277504
    %v4645 = vsel %vm4643, %v4635, 0
    %v4648 = vsel %vm4474, %v4638, 0
    %4650 = vmatpush.bf16.msra.mxu0 0
    %4651 = vmatpush.bf16.msra.mxu0 0
    %4652 = vmatpush.bf16.msra.mxu0 0
    %4653 = vmatpush.bf16.msra.mxu0 0
    %4654 = vmatpush.bf16.msra.mxu0 0
    %4655 = vmatpush.bf16.msra.mxu0 %v4648
    %4656 = vmatpush.bf16.msra.mxu0 %v4637
    %4657 = vmatpush.bf16.msra.mxu0 %v4636
    %4658 = vmatmul.bf16.gmra.mxu0 %v4645
    %v4659 = vpop.f32.mrf.mxu0
    %v4660 = vadd.f32 %v4641, %v4659
    %v4661 = vpop.f32.mrf.mxu0
    %4662 = vdwg.mxu0
    %v4663 = vmax.f32 %v4660, 0.0
    %v4664 = vld [vmem:[#allocation32] sm:$0xff]
    %v4665 = vld [vmem:[#allocation32 + $0x8] sm:$0xff]
    %v4666 = vld [vmem:[#allocation32 + $0x10] sm:$0xff]
    %v4667 = vld [vmem:[#allocation32 + $0x18] sm:$0xff]
    %v4668 = vld [vmem:[#allocation32 + $0x20] sm:$0x3]
    %v4669 = vpack.c.bf16 %v4663, %v4663
    %v4670 = vpack.c.bf16 %v4665, %v4664
    %v4671 = vpack.c.bf16 %v4667, %v4666
    %v4672 = vpack.c.bf16 %v4668, %v4668
    %v4673 = vld [vmem:[%s67] sm:$0x1]
    %v4675 = vperm.slane %v4673, 0
    %v4678 = vsel %vm4643, %v4669, 0
    %v4681 = vsel %vm4474, %v4672, 0
    %4683 = vmatpush.bf16.msra.mxu0 0
    %4684 = vmatpush.bf16.msra.mxu0 0
    %4685 = vmatpush.bf16.msra.mxu0 0
    %4686 = vmatpush.bf16.msra.mxu0 0
    %4687 = vmatpush.bf16.msra.mxu0 0
    %4688 = vmatpush.bf16.msra.mxu0 %v4681
    %4689 = vmatpush.bf16.msra.mxu0 %v4671
    %4690 = vmatpush.bf16.msra.mxu0 %v4670
    %4691 = vmatmul.bf16.gmra.mxu0 %v4678
    %v4692 = vpop.f32.mrf.mxu0
    %v4693 = vadd.f32 %v4675, %v4692
    %v4694 = vpop.f32.mrf.mxu0
    %4695 = vdwg.mxu0
    %v4696 = vmax.f32 %v4693, 0.0
    %v4697 = vld [vmem:[%s69] sm:$0xff]
    %v4698 = vld [vmem:[%s69 + $0x8] sm:$0xff]
    %v4699 = vld [vmem:[%s69 + $0x10] sm:$0xff]
    %v4700 = vld [vmem:[%s69 + $0x18] sm:$0xff]
    %v4701 = vld [vmem:[%s69 + $0x20] sm:$0x3]
    %v4702 = vpack.c.bf16 %v4696, %v4696
    %v4703 = vpack.c.bf16 %v4698, %v4697
    %v4704 = vpack.c.bf16 %v4700, %v4699
    %v4705 = vpack.c.bf16 %v4701, %v4701
    %v4706 = vld [vmem:[%s71] sm:$0x1]
    %v4708 = vperm.slane %v4706, 0
    %v4711 = vsel %vm4643, %v4702, 0
    %v4714 = vsel %vm4474, %v4705, 0
    %4716 = vmatpush.bf16.msra.mxu0 0
    %4717 = vmatpush.bf16.msra.mxu0 0
    %4718 = vmatpush.bf16.msra.mxu0 0
    %4719 = vmatpush.bf16.msra.mxu0 0
    %4720 = vmatpush.bf16.msra.mxu0 0
    %4721 = vmatpush.bf16.msra.mxu0 %v4714
    %4722 = vmatpush.bf16.msra.mxu0 %v4704
    %4723 = vmatpush.bf16.msra.mxu0 %v4703
    %4724 = vmatmul.bf16.gmra.mxu0 %v4711
    %v4725 = vpop.f32.mrf.mxu0
    %v4726 = vadd.f32 %v4708, %v4725
    %v4727 = vpop.f32.mrf.mxu0
    %4728 = vdwg.mxu0
    %vm4729 = vcmask 138240
    %v4730 = vsel %vm4729, %v4726, -inf
    %4731 = vmax.xlane.f32.xlu0 %v4730
    %v4732 = vpop.xlane.xlu0 %4731
    %v4733 = vsub.f32 %v4726, %v4732
    %v4734 = vmul.f32 %v4733, 1.442695
    %v4735 = vpow.pop %v4734
    %v4736 = vsel %vm4729, %v4735, 0.0
    %4737 = vadd.xlane.f32.xlu0 %v4736
    %v4738 = vpop.xlane.xlu0 %4737
    %v4739 = vrcp.pop %v4738
    %v4740 = vmul.f32 %v4738, %v4739
    %v4741 = vsub.f32 1.0, %v4740
    %v4742 = vmul.f32 %v4739, %v4741
    %v4743 = vadd.f32 %v4739, %v4742
    %vm4744 = vweird.f32 %v4738
    %vm4745 = vweird.f32 %v4739
    %vm4746 = vmor %vm4744, %vm4745
    %v4747 = vsel %vm4746, %v4739, %v4743
    %v4748 = vand.u32 2147483647, %v4738
    %vm4749 = vcmp.eq.f32.partialorder %v4748, 8.507059e+37
    %v4750 = vand.u32 %v4738, 2147483648
    %v4751 = vor.u32 1.1754944e-38, %v4750
    %v4752 = vsel %vm4749, %v4751, %v4747
    %v4753 = vmul.f32 %v4735, %v4752
    %v4754 = vld [vmem:[%s73] sm:$0xff]
    %v4755 = vld [vmem:[%s73 + $0x8] sm:$0xff]
    %v4756 = vld [vmem:[%s73 + $0x10] sm:$0xff]
    %v4757 = vld [vmem:[%s73 + $0x18] sm:$0xff]
    %v4758 = vld [vmem:[%s73 + $0x20] sm:$0xff]
    %v4759 = vld [vmem:[%s73 + $0x28] sm:$0xff]
    %v4760 = vld [vmem:[%s73 + $0x30] sm:$0xff]
    %v4761 = vld [vmem:[%s73 + $0x38] sm:$0xff]
    %v4762 = vld [vmem:[%s73 + $0x40] sm:$0xff]
    %v4763 = vld [vmem:[%s73 + $0x48] sm:$0xff]
    %v4764 = vld [vmem:[%s73 + $0x50] sm:$0xff]
    %v4765 = vld [vmem:[%s73 + $0x58] sm:$0xff]
    %v4766 = vld [vmem:[%s73 + $0x60] sm:$0xff]
    %v4767 = vld [vmem:[%s73 + $0x68] sm:$0xff]
    %v4768 = vld [vmem:[%s73 + $0x70] sm:$0xff]
    %v4769 = vld [vmem:[%s73 + $0x78] sm:$0xff]
    %v4770 = vld [vmem:[%s73 + $0x80] sm:$0xff]
    %v4771 = vld [vmem:[%s73 + $0x88] sm:$0xff]
    %v4772 = vld [vmem:[%s73 + $0x90] sm:$0xff]
    %v4773 = vld [vmem:[%s73 + $0x98] sm:$0xff]
    %v4774 = vld [vmem:[%s73 + $0xa0] sm:$0xff]
    %v4775 = vld [vmem:[%s73 + $0xa8] sm:$0xff]
    %v4776 = vld [vmem:[%s73 + $0xb0] sm:$0xff]
    %v4777 = vld [vmem:[%s73 + $0xb8] sm:$0xff]
    %v4778 = vld [vmem:[%s73 + $0xc0] sm:$0xff]
    %v4779 = vld [vmem:[%s73 + $0xc8] sm:$0xf]
    %v4780 = vld [vmem:[%s73 + $0xd0] sm:$0xf]
    %v4781 = vld [vmem:[%s73 + $0xd8] sm:$0xf]
    %v4782 = vld [vmem:[%s73 + $0xe0] sm:$0xf]
    %v4783 = vld [vmem:[%s73 + $0xe8] sm:$0xf]
    %v4784 = vpack.c.bf16 %v4759, %v4754
    %v4785 = vpack.c.bf16 %v4760, %v4755
    %v4786 = vpack.c.bf16 %v4761, %v4756
    %v4787 = vpack.c.bf16 %v4762, %v4757
    %v4788 = vpack.c.bf16 %v4763, %v4758
    %v4789 = vpack.c.bf16 %v4769, %v4764
    %v4790 = vpack.c.bf16 %v4770, %v4765
    %v4791 = vpack.c.bf16 %v4771, %v4766
    %v4792 = vpack.c.bf16 %v4772, %v4767
    %v4793 = vpack.c.bf16 %v4773, %v4768
    %v4794 = vpack.c.bf16 %v4779, %v4774
    %v4795 = vpack.c.bf16 %v4780, %v4775
    %v4796 = vpack.c.bf16 %v4781, %v4776
    %v4797 = vpack.c.bf16 %v4782, %v4777
    %v4798 = vpack.c.bf16 %v4783, %v4778
    %v4799 = vld [vmem:[%s75] sm:$0x1f]
    %v4801 = vperm.slane %v4799, 0
    %v4802 = vperm.slane %v4799, 1
    %v4803 = vperm.slane %v4799, 2
    %v4804 = vperm.slane %v4799, 3
    %v4805 = vperm.slane %v4799, 4
    %v4812 = vsel %vm770, %v4794, 0
    %v4815 = vsel %vm770, %v4795, 0
    %v4818 = vsel %vm770, %v4796, 0
    %v4821 = vsel %vm770, %v4797, 0
    %v4824 = vsel %vm770, %v4798, 0
    %4826 = vmatpush.bf16.msra.mxu0 0
    %4827 = vmatpush.bf16.msra.mxu0 0
    %4828 = vmatpush.bf16.msra.mxu0 0
    %4829 = vmatpush.bf16.msra.mxu0 0
    %4830 = vmatpush.bf16.msra.mxu0 0
    %4831 = vmatpush.bf16.msra.mxu0 %v4812
    %4832 = vmatpush.bf16.msra.mxu0 %v4789
    %4833 = vmatpush.bf16.msra.mxu0 %v4784
    %4834 = vmatmul.bf16.gmra.mxu0 %v4272
    %v4835 = vpop.f32.mrf.mxu0
    %v4836 = vadd.f32 %v4801, %v4835
    %v4837 = vpop.f32.mrf.mxu0
    %4838 = vdwg.mxu0
    %4839 = vmatpush.bf16.msra.mxu0 0
    %4840 = vmatpush.bf16.msra.mxu0 0
    %4841 = vmatpush.bf16.msra.mxu0 0
    %4842 = vmatpush.bf16.msra.mxu0 0
    %4843 = vmatpush.bf16.msra.mxu0 0
    %4844 = vmatpush.bf16.msra.mxu0 %v4815
    %4845 = vmatpush.bf16.msra.mxu0 %v4790
    %4846 = vmatpush.bf16.msra.mxu0 %v4785
    %4847 = vmatmul.bf16.gmra.mxu0 %v4272
    %v4848 = vpop.f32.mrf.mxu0
    %v4849 = vadd.f32 %v4802, %v4848
    %v4850 = vpop.f32.mrf.mxu0
    %4851 = vdwg.mxu0
    %4852 = vmatpush.bf16.msra.mxu0 0
    %4853 = vmatpush.bf16.msra.mxu0 0
    %4854 = vmatpush.bf16.msra.mxu0 0
    %4855 = vmatpush.bf16.msra.mxu0 0
    %4856 = vmatpush.bf16.msra.mxu0 0
    %4857 = vmatpush.bf16.msra.mxu0 %v4818
    %4858 = vmatpush.bf16.msra.mxu0 %v4791
    %4859 = vmatpush.bf16.msra.mxu0 %v4786
    %4860 = vmatmul.bf16.gmra.mxu0 %v4272
    %v4861 = vpop.f32.mrf.mxu0
    %v4862 = vadd.f32 %v4803, %v4861
    %v4863 = vpop.f32.mrf.mxu0
    %4864 = vdwg.mxu0
    %4865 = vmatpush.bf16.msra.mxu0 0
    %4866 = vmatpush.bf16.msra.mxu0 0
    %4867 = vmatpush.bf16.msra.mxu0 0
    %4868 = vmatpush.bf16.msra.mxu0 0
    %4869 = vmatpush.bf16.msra.mxu0 0
    %4870 = vmatpush.bf16.msra.mxu0 %v4821
    %4871 = vmatpush.bf16.msra.mxu0 %v4792
    %4872 = vmatpush.bf16.msra.mxu0 %v4787
    %4873 = vmatmul.bf16.gmra.mxu0 %v4272
    %v4874 = vpop.f32.mrf.mxu0
    %v4875 = vadd.f32 %v4804, %v4874
    %v4876 = vpop.f32.mrf.mxu0
    %4877 = vdwg.mxu0
    %4878 = vmatpush.bf16.msra.mxu0 0
    %4879 = vmatpush.bf16.msra.mxu0 0
    %4880 = vmatpush.bf16.msra.mxu0 0
    %4881 = vmatpush.bf16.msra.mxu0 0
    %4882 = vmatpush.bf16.msra.mxu0 0
    %4883 = vmatpush.bf16.msra.mxu0 %v4824
    %4884 = vmatpush.bf16.msra.mxu0 %v4793
    %4885 = vmatpush.bf16.msra.mxu0 %v4788
    %4886 = vmatmul.bf16.gmra.mxu0 %v4272
    %v4887 = vpop.f32.mrf.mxu0
    %v4888 = vadd.f32 %v4805, %v4887
    %v4889 = vpop.f32.mrf.mxu0
    %4890 = vdwg.mxu0
    %v4891 = vmax.f32 %v4836, 0.0
    %v4892 = vmax.f32 %v4849, 0.0
    %v4893 = vmax.f32 %v4862, 0.0
    %v4894 = vmax.f32 %v4875, 0.0
    %v4895 = vmax.f32 %v4888, 0.0
    %v4896 = vld [vmem:[%s77] sm:$0xff]
    %v4897 = vld [vmem:[%s77 + $0x8] sm:$0xff]
    %v4898 = vld [vmem:[%s77 + $0x10] sm:$0xff]
    %v4899 = vld [vmem:[%s77 + $0x18] sm:$0xff]
    %v4900 = vld [vmem:[%s77 + $0x20] sm:$0xff]
    %v4901 = vld [vmem:[%s77 + $0x28] sm:$0xff]
    %v4902 = vld [vmem:[%s77 + $0x30] sm:$0xff]
    %v4903 = vld [vmem:[%s77 + $0x38] sm:$0xff]
    %v4904 = vld [vmem:[%s77 + $0x40] sm:$0xff]
    %v4905 = vld [vmem:[%s77 + $0x48] sm:$0xff]
    %v4906 = vld [vmem:[%s77 + $0x50] sm:$0xff]
    %v4907 = vld [vmem:[%s77 + $0x58] sm:$0xff]
    %v4908 = vld [vmem:[%s77 + $0x60] sm:$0xff]
    %v4909 = vld [vmem:[%s77 + $0x68] sm:$0xff]
    %v4910 = vld [vmem:[%s77 + $0x70] sm:$0xff]
    %v4911 = vld [vmem:[%s77 + $0x78] sm:$0xff]
    %v4912 = vld [vmem:[%s77 + $0x80] sm:$0xff]
    %v4913 = vld [vmem:[%s77 + $0x88] sm:$0xff]
    %v4914 = vld [vmem:[%s77 + $0x90] sm:$0xff]
    %v4915 = vld [vmem:[%s77 + $0x98] sm:$0xff]
    %v4916 = vld [vmem:[%s77 + $0xa0] sm:$0xff]
    %v4917 = vld [vmem:[%s77 + $0xa8] sm:$0xff]
    %v4918 = vld [vmem:[%s77 + $0xb0] sm:$0xff]
    %v4919 = vld [vmem:[%s77 + $0xb8] sm:$0xff]
    %v4920 = vld [vmem:[%s77 + $0xc0] sm:$0xff]
    %v4921 = vld [vmem:[%s77 + $0xc8] sm:$0xff]
    %v4922 = vld [vmem:[%s77 + $0xd0] sm:$0xff]
    %v4923 = vld [vmem:[%s77 + $0xd8] sm:$0xff]
    %v4924 = vld [vmem:[%s77 + $0xe0] sm:$0xff]
    %v4925 = vld [vmem:[%s77 + $0xe8] sm:$0xff]
    %v4926 = vld [vmem:[%s77 + $0xf0] sm:$0xff]
    %v4927 = vld [vmem:[%s77 + $0xf8] sm:$0xff]
    %v4928 = vld [vmem:[%s77 + $0x100] sm:$0xff]
    %v4929 = vld [vmem:[%s77 + $0x108] sm:$0xff]
    %v4930 = vld [vmem:[%s77 + $0x110] sm:$0xff]
    %v4931 = vld [vmem:[%s77 + $0x118] sm:$0xff]
    %v4932 = vld [vmem:[%s77 + $0x120] sm:$0xff]
    %v4933 = vld [vmem:[%s77 + $0x128] sm:$0xff]
    %v4934 = vld [vmem:[%s77 + $0x130] sm:$0xff]
    %v4935 = vld [vmem:[%s77 + $0x138] sm:$0xff]
    %v4936 = vld [vmem:[%s77 + $0x140] sm:$0xff]
    %v4937 = vld [vmem:[%s77 + $0x148] sm:$0xff]
    %v4938 = vld [vmem:[%s77 + $0x150] sm:$0xff]
    %v4939 = vld [vmem:[%s77 + $0x158] sm:$0xff]
    %v4940 = vld [vmem:[%s77 + $0x160] sm:$0xff]
    %v4941 = vld [vmem:[%s77 + $0x168] sm:$0xff]
    %v4942 = vld [vmem:[%s77 + $0x170] sm:$0xff]
    %v4943 = vld [vmem:[%s77 + $0x178] sm:$0xff]
    %v4944 = vld [vmem:[%s77 + $0x180] sm:$0xff]
    %v4945 = vld [vmem:[%s77 + $0x188] sm:$0xff]
    %v4946 = vld [vmem:[%s77 + $0x190] sm:$0xff]
    %v4947 = vld [vmem:[%s77 + $0x198] sm:$0xff]
    %v4948 = vld [vmem:[%s77 + $0x1a0] sm:$0xff]
    %v4949 = vld [vmem:[%s77 + $0x1a8] sm:$0xff]
    %v4950 = vld [vmem:[%s77 + $0x1b0] sm:$0xff]
    %v4951 = vld [vmem:[%s77 + $0x1b8] sm:$0xff]
    %v4952 = vld [vmem:[%s77 + $0x1c0] sm:$0xff]
    %v4953 = vld [vmem:[%s77 + $0x1c8] sm:$0xff]
    %v4954 = vld [vmem:[%s77 + $0x1d0] sm:$0xff]
    %v4955 = vld [vmem:[%s77 + $0x1d8] sm:$0xff]
    %v4956 = vld [vmem:[%s77 + $0x1e0] sm:$0xff]
    %v4957 = vld [vmem:[%s77 + $0x1e8] sm:$0xff]
    %v4958 = vld [vmem:[%s77 + $0x1f0] sm:$0xff]
    %v4959 = vld [vmem:[%s77 + $0x1f8] sm:$0xff]
    %v4960 = vld [vmem:[%s77 + $0x200] sm:$0xff]
    %v4961 = vld [vmem:[%s77 + $0x208] sm:$0xff]
    %v4962 = vld [vmem:[%s77 + $0x210] sm:$0xff]
    %v4963 = vld [vmem:[%s77 + $0x218] sm:$0xff]
    %v4964 = vld [vmem:[%s77 + $0x220] sm:$0xff]
    %v4965 = vld [vmem:[%s77 + $0x228] sm:$0xff]
    %v4966 = vld [vmem:[%s77 + $0x230] sm:$0xff]
    %v4967 = vld [vmem:[%s77 + $0x238] sm:$0xff]
    %v4968 = vld [vmem:[%s77 + $0x240] sm:$0xff]
    %v4969 = vld [vmem:[%s77 + $0x248] sm:$0xff]
    %v4970 = vld [vmem:[%s77 + $0x250] sm:$0xff]
    %v4971 = vld [vmem:[%s77 + $0x258] sm:$0xff]
    %v4972 = vld [vmem:[%s77 + $0x260] sm:$0xff]
    %v4973 = vld [vmem:[%s77 + $0x268] sm:$0xff]
    %v4974 = vld [vmem:[%s77 + $0x270] sm:$0xff]
    %v4975 = vld [vmem:[%s77 + $0x278] sm:$0xff]
    %v4976 = vld [vmem:[%s77 + $0x280] sm:$0xff]
    %v4977 = vld [vmem:[%s77 + $0x288] sm:$0xff]
    %v4978 = vld [vmem:[%s77 + $0x290] sm:$0xff]
    %v4979 = vld [vmem:[%s77 + $0x298] sm:$0xff]
    %v4980 = vld [vmem:[%s77 + $0x2a0] sm:$0xff]
    %v4981 = vld [vmem:[%s77 + $0x2a8] sm:$0xff]
    %v4982 = vld [vmem:[%s77 + $0x2b0] sm:$0xff]
    %v4983 = vld [vmem:[%s77 + $0x2b8] sm:$0xff]
    %v4984 = vld [vmem:[%s77 + $0x2c0] sm:$0xff]
    %v4985 = vld [vmem:[%s77 + $0x2c8] sm:$0xff]
    %v4986 = vld [vmem:[%s77 + $0x2d0] sm:$0xff]
    %v4987 = vld [vmem:[%s77 + $0x2d8] sm:$0xff]
    %v4988 = vld [vmem:[%s77 + $0x2e0] sm:$0xff]
    %v4989 = vld [vmem:[%s77 + $0x2e8] sm:$0xff]
    %v4990 = vld [vmem:[%s77 + $0x2f0] sm:$0xff]
    %v4991 = vld [vmem:[%s77 + $0x2f8] sm:$0xff]
    %v4992 = vld [vmem:[%s77 + $0x300] sm:$0xff]
    %v4993 = vld [vmem:[%s77 + $0x308] sm:$0xff]
    %v4994 = vld [vmem:[%s77 + $0x310] sm:$0xff]
    %v4995 = vld [vmem:[%s77 + $0x318] sm:$0xff]
    %v4996 = vld [vmem:[%s77 + $0x320] sm:$0xff]
    %v4997 = vld [vmem:[%s77 + $0x328] sm:$0xff]
    %v4998 = vld [vmem:[%s77 + $0x330] sm:$0xff]
    %v4999 = vld [vmem:[%s77 + $0x338] sm:$0xff]
    %v5000 = vld [vmem:[%s77 + $0x340] sm:$0xff]
    %v5001 = vld [vmem:[%s77 + $0x348] sm:$0xff]
    %v5002 = vld [vmem:[%s77 + $0x350] sm:$0xff]
    %v5003 = vld [vmem:[%s77 + $0x358] sm:$0xff]
    %v5004 = vld [vmem:[%s77 + $0x360] sm:$0xff]
    %v5005 = vld [vmem:[%s77 + $0x368] sm:$0xff]
    %v5006 = vld [vmem:[%s77 + $0x370] sm:$0xff]
    %v5007 = vld [vmem:[%s77 + $0x378] sm:$0xff]
    %v5008 = vld [vmem:[%s77 + $0x380] sm:$0xff]
    %v5009 = vld [vmem:[%s77 + $0x388] sm:$0xff]
    %v5010 = vld [vmem:[%s77 + $0x390] sm:$0xff]
    %v5011 = vld [vmem:[%s77 + $0x398] sm:$0xff]
    %v5012 = vld [vmem:[%s77 + $0x3a0] sm:$0xff]
    %v5013 = vld [vmem:[%s77 + $0x3a8] sm:$0xff]
    %v5014 = vld [vmem:[%s77 + $0x3b0] sm:$0xff]
    %v5015 = vld [vmem:[%s77 + $0x3b8] sm:$0xff]
    %v5016 = vld [vmem:[%s77 + $0x3c0] sm:$0xff]
    %v5017 = vld [vmem:[%s77 + $0x3c8] sm:$0xff]
    %v5018 = vld [vmem:[%s77 + $0x3d0] sm:$0xff]
    %v5019 = vld [vmem:[%s77 + $0x3d8] sm:$0xff]
    %v5020 = vld [vmem:[%s77 + $0x3e0] sm:$0xff]
    %v5021 = vld [vmem:[%s77 + $0x3e8] sm:$0xff]
    %v5022 = vld [vmem:[%s77 + $0x3f0] sm:$0xff]
    %v5023 = vld [vmem:[%s77 + $0x3f8] sm:$0xff]
    %v5024 = vld [vmem:[%s77 + $0x400] sm:$0xff]
    %v5025 = vld [vmem:[%s77 + $0x408] sm:$0xff]
    %v5026 = vld [vmem:[%s77 + $0x410] sm:$0xff]
    %v5027 = vld [vmem:[%s77 + $0x418] sm:$0xff]
    %v5028 = vld [vmem:[%s77 + $0x420] sm:$0xff]
    %v5029 = vld [vmem:[%s77 + $0x428] sm:$0xff]
    %v5030 = vld [vmem:[%s77 + $0x430] sm:$0xff]
    %v5031 = vld [vmem:[%s77 + $0x438] sm:$0xff]
    %v5032 = vld [vmem:[%s77 + $0x440] sm:$0xff]
    %v5033 = vld [vmem:[%s77 + $0x448] sm:$0xff]
    %v5034 = vld [vmem:[%s77 + $0x450] sm:$0xff]
    %v5035 = vld [vmem:[%s77 + $0x458] sm:$0xff]
    %v5036 = vld [vmem:[%s77 + $0x460] sm:$0xff]
    %v5037 = vld [vmem:[%s77 + $0x468] sm:$0xff]
    %v5038 = vld [vmem:[%s77 + $0x470] sm:$0xff]
    %v5039 = vld [vmem:[%s77 + $0x478] sm:$0xff]
    %v5040 = vld [vmem:[%s77 + $0x480] sm:$0xff]
    %v5041 = vld [vmem:[%s77 + $0x488] sm:$0xff]
    %v5042 = vld [vmem:[%s77 + $0x490] sm:$0xff]
    %v5043 = vld [vmem:[%s77 + $0x498] sm:$0xff]
    %v5044 = vld [vmem:[%s77 + $0x4a0] sm:$0xff]
    %v5045 = vld [vmem:[%s77 + $0x4a8] sm:$0xff]
    %v5046 = vld [vmem:[%s77 + $0x4b0] sm:$0xff]
    %v5047 = vld [vmem:[%s77 + $0x4b8] sm:$0xff]
    %v5048 = vld [vmem:[%s77 + $0x4c0] sm:$0xff]
    %v5049 = vld [vmem:[%s77 + $0x4c8] sm:$0xff]
    %v5050 = vld [vmem:[%s77 + $0x4d0] sm:$0xff]
    %v5051 = vld [vmem:[%s77 + $0x4d8] sm:$0xff]
    %v5052 = vld [vmem:[%s77 + $0x4e0] sm:$0xff]
    %v5053 = vld [vmem:[%s77 + $0x4e8] sm:$0xff]
    %v5054 = vld [vmem:[%s77 + $0x4f0] sm:$0xff]
    %v5055 = vld [vmem:[%s77 + $0x4f8] sm:$0xff]
    %v5056 = vld [vmem:[%s77 + $0x500] sm:$0xff]
    %v5057 = vld [vmem:[%s77 + $0x508] sm:$0xff]
    %v5058 = vld [vmem:[%s77 + $0x510] sm:$0xff]
    %v5059 = vld [vmem:[%s77 + $0x518] sm:$0xff]
    %v5060 = vld [vmem:[%s77 + $0x520] sm:$0xff]
    %v5061 = vld [vmem:[%s77 + $0x528] sm:$0xff]
    %v5062 = vld [vmem:[%s77 + $0x530] sm:$0xff]
    %v5063 = vld [vmem:[%s77 + $0x538] sm:$0xff]
    %v5064 = vld [vmem:[%s77 + $0x540] sm:$0xff]
    %v5065 = vld [vmem:[%s77 + $0x548] sm:$0xff]
    %v5066 = vld [vmem:[%s77 + $0x550] sm:$0xff]
    %v5067 = vld [vmem:[%s77 + $0x558] sm:$0xff]
    %v5068 = vld [vmem:[%s77 + $0x560] sm:$0xff]
    %v5069 = vld [vmem:[%s77 + $0x568] sm:$0xff]
    %v5070 = vld [vmem:[%s77 + $0x570] sm:$0xff]
    %v5071 = vld [vmem:[%s77 + $0x578] sm:$0xff]
    %v5072 = vld [vmem:[%s77 + $0x580] sm:$0xff]
    %v5073 = vld [vmem:[%s77 + $0x588] sm:$0xff]
    %v5074 = vld [vmem:[%s77 + $0x590] sm:$0xff]
    %v5075 = vld [vmem:[%s77 + $0x598] sm:$0xff]
    %v5076 = vld [vmem:[%s77 + $0x5a0] sm:$0xff]
    %v5077 = vld [vmem:[%s77 + $0x5a8] sm:$0xff]
    %v5078 = vld [vmem:[%s77 + $0x5b0] sm:$0xff]
    %v5079 = vld [vmem:[%s77 + $0x5b8] sm:$0xff]
    %v5080 = vld [vmem:[%s77 + $0x5c0] sm:$0xff]
    %v5081 = vld [vmem:[%s77 + $0x5c8] sm:$0xff]
    %v5082 = vld [vmem:[%s77 + $0x5d0] sm:$0xff]
    %v5083 = vld [vmem:[%s77 + $0x5d8] sm:$0xff]
    %v5084 = vld [vmem:[%s77 + $0x5e0] sm:$0xff]
    %v5085 = vld [vmem:[%s77 + $0x5e8] sm:$0xff]
    %v5086 = vld [vmem:[%s77 + $0x5f0] sm:$0xff]
    %v5087 = vld [vmem:[%s77 + $0x5f8] sm:$0xff]
    %v5088 = vld [vmem:[%s77 + $0x600] sm:$0xff]
    %v5089 = vld [vmem:[%s77 + $0x608] sm:$0xff]
    %v5090 = vld [vmem:[%s77 + $0x610] sm:$0xff]
    %v5091 = vld [vmem:[%s77 + $0x618] sm:$0xff]
    %v5092 = vld [vmem:[%s77 + $0x620] sm:$0xff]
    %v5093 = vld [vmem:[%s77 + $0x628] sm:$0xff]
    %v5094 = vld [vmem:[%s77 + $0x630] sm:$0xff]
    %v5095 = vld [vmem:[%s77 + $0x638] sm:$0xff]
    %v5096 = vld [vmem:[%s77 + $0x640] sm:$0xff]
    %v5097 = vld [vmem:[%s77 + $0x648] sm:$0xff]
    %v5098 = vld [vmem:[%s77 + $0x650] sm:$0xff]
    %v5099 = vld [vmem:[%s77 + $0x658] sm:$0xff]
    %v5100 = vld [vmem:[%s77 + $0x660] sm:$0xff]
    %v5101 = vld [vmem:[%s77 + $0x668] sm:$0xff]
    %v5102 = vld [vmem:[%s77 + $0x670] sm:$0xff]
    %v5103 = vld [vmem:[%s77 + $0x678] sm:$0xff]
    %v5104 = vld [vmem:[%s77 + $0x680] sm:$0xff]
    %v5105 = vld [vmem:[%s77 + $0x688] sm:$0xff]
    %v5106 = vld [vmem:[%s77 + $0x690] sm:$0xff]
    %v5107 = vld [vmem:[%s77 + $0x698] sm:$0xff]
    %v5108 = vld [vmem:[%s77 + $0x6a0] sm:$0xff]
    %v5109 = vld [vmem:[%s77 + $0x6a8] sm:$0xff]
    %v5110 = vld [vmem:[%s77 + $0x6b0] sm:$0xff]
    %v5111 = vld [vmem:[%s77 + $0x6b8] sm:$0xff]
    %v5112 = vld [vmem:[%s77 + $0x6c0] sm:$0xff]
    %v5113 = vld [vmem:[%s77 + $0x6c8] sm:$0xff]
    %v5114 = vld [vmem:[%s77 + $0x6d0] sm:$0xff]
    %v5115 = vld [vmem:[%s77 + $0x6d8] sm:$0xff]
    %v5116 = vld [vmem:[%s77 + $0x6e0] sm:$0xff]
    %v5117 = vld [vmem:[%s77 + $0x6e8] sm:$0xff]
    %v5118 = vld [vmem:[%s77 + $0x6f0] sm:$0xff]
    %v5119 = vld [vmem:[%s77 + $0x6f8] sm:$0xff]
    %v5120 = vld [vmem:[%s77 + $0x700] sm:$0xff]
    %v5121 = vld [vmem:[%s77 + $0x708] sm:$0xff]
    %v5122 = vld [vmem:[%s77 + $0x710] sm:$0xff]
    %v5123 = vld [vmem:[%s77 + $0x718] sm:$0xff]
    %v5124 = vld [vmem:[%s77 + $0x720] sm:$0xff]
    %v5125 = vld [vmem:[%s77 + $0x728] sm:$0xff]
    %v5126 = vld [vmem:[%s77 + $0x730] sm:$0xff]
    %v5127 = vld [vmem:[%s77 + $0x738] sm:$0xff]
    %v5128 = vld [vmem:[%s77 + $0x740] sm:$0xff]
    %v5129 = vld [vmem:[%s77 + $0x748] sm:$0xff]
    %v5130 = vld [vmem:[%s77 + $0x750] sm:$0xff]
    %v5131 = vld [vmem:[%s77 + $0x758] sm:$0xff]
    %v5132 = vld [vmem:[%s77 + $0x760] sm:$0xff]
    %v5133 = vld [vmem:[%s77 + $0x768] sm:$0xff]
    %v5134 = vld [vmem:[%s77 + $0x770] sm:$0xff]
    %v5135 = vld [vmem:[%s77 + $0x778] sm:$0xff]
    %v5136 = vld [vmem:[%s77 + $0x780] sm:$0xff]
    %v5137 = vld [vmem:[%s77 + $0x788] sm:$0xff]
    %v5138 = vld [vmem:[%s77 + $0x790] sm:$0xff]
    %v5139 = vld [vmem:[%s77 + $0x798] sm:$0xff]
    %v5140 = vld [vmem:[%s77 + $0x7a0] sm:$0xff]
    %v5141 = vld [vmem:[%s77 + $0x7a8] sm:$0xff]
    %v5142 = vld [vmem:[%s77 + $0x7b0] sm:$0xff]
    %v5143 = vld [vmem:[%s77 + $0x7b8] sm:$0xff]
    %v5144 = vld [vmem:[%s77 + $0x7c0] sm:$0xff]
    %v5145 = vld [vmem:[%s77 + $0x7c8] sm:$0xff]
    %v5146 = vld [vmem:[%s77 + $0x7d0] sm:$0xff]
    %v5147 = vld [vmem:[%s77 + $0x7d8] sm:$0xff]
    %v5148 = vld [vmem:[%s77 + $0x7e0] sm:$0xff]
    %v5149 = vld [vmem:[%s77 + $0x7e8] sm:$0xff]
    %v5150 = vld [vmem:[%s77 + $0x7f0] sm:$0xff]
    %v5151 = vld [vmem:[%s77 + $0x7f8] sm:$0xff]
    %v5152 = vld [vmem:[%s77 + $0x800] sm:$0xff]
    %v5153 = vld [vmem:[%s77 + $0x808] sm:$0xff]
    %v5154 = vld [vmem:[%s77 + $0x810] sm:$0xff]
    %v5155 = vld [vmem:[%s77 + $0x818] sm:$0xff]
    %v5156 = vld [vmem:[%s77 + $0x820] sm:$0xff]
    %v5157 = vld [vmem:[%s77 + $0x828] sm:$0xff]
    %v5158 = vld [vmem:[%s77 + $0x830] sm:$0xff]
    %v5159 = vld [vmem:[%s77 + $0x838] sm:$0xff]
    %v5160 = vld [vmem:[%s77 + $0x840] sm:$0xff]
    %v5161 = vld [vmem:[%s77 + $0x848] sm:$0xff]
    %v5162 = vld [vmem:[%s77 + $0x850] sm:$0xff]
    %v5163 = vld [vmem:[%s77 + $0x858] sm:$0xff]
    %v5164 = vld [vmem:[%s77 + $0x860] sm:$0xff]
    %v5165 = vld [vmem:[%s77 + $0x868] sm:$0xff]
    %v5166 = vld [vmem:[%s77 + $0x870] sm:$0xff]
    %v5167 = vld [vmem:[%s77 + $0x878] sm:$0xff]
    %v5168 = vld [vmem:[%s77 + $0x880] sm:$0xff]
    %v5169 = vld [vmem:[%s77 + $0x888] sm:$0xff]
    %v5170 = vld [vmem:[%s77 + $0x890] sm:$0xff]
    %v5171 = vld [vmem:[%s77 + $0x898] sm:$0xff]
    %v5172 = vld [vmem:[%s77 + $0x8a0] sm:$0xff]
    %v5173 = vld [vmem:[%s77 + $0x8a8] sm:$0xff]
    %v5174 = vld [vmem:[%s77 + $0x8b0] sm:$0xff]
    %v5175 = vld [vmem:[%s77 + $0x8b8] sm:$0xff]
    %v5176 = vld [vmem:[%s77 + $0x8c0] sm:$0xff]
    %v5177 = vld [vmem:[%s77 + $0x8c8] sm:$0xff]
    %v5178 = vld [vmem:[%s77 + $0x8d0] sm:$0xff]
    %v5179 = vld [vmem:[%s77 + $0x8d8] sm:$0xff]
    %v5180 = vld [vmem:[%s77 + $0x8e0] sm:$0xff]
    %v5181 = vld [vmem:[%s77 + $0x8e8] sm:$0xff]
    %v5182 = vld [vmem:[%s77 + $0x8f0] sm:$0xff]
    %v5183 = vld [vmem:[%s77 + $0x8f8] sm:$0xff]
    %v5184 = vld [vmem:[%s77 + $0x900] sm:$0xff]
    %v5185 = vld [vmem:[%s77 + $0x908] sm:$0xff]
    %v5186 = vld [vmem:[%s77 + $0x910] sm:$0xff]
    %v5187 = vld [vmem:[%s77 + $0x918] sm:$0xff]
    %v5188 = vld [vmem:[%s77 + $0x920] sm:$0xff]
    %v5189 = vld [vmem:[%s77 + $0x928] sm:$0xff]
    %v5190 = vld [vmem:[%s77 + $0x930] sm:$0xff]
    %v5191 = vld [vmem:[%s77 + $0x938] sm:$0xff]
    %v5192 = vld [vmem:[%s77 + $0x940] sm:$0xff]
    %v5193 = vld [vmem:[%s77 + $0x948] sm:$0xff]
    %v5194 = vld [vmem:[%s77 + $0x950] sm:$0xff]
    %v5195 = vld [vmem:[%s77 + $0x958] sm:$0xff]
    %v5196 = vld [vmem:[%s77 + $0x960] sm:$0xff]
    %v5197 = vld [vmem:[%s77 + $0x968] sm:$0xff]
    %v5198 = vld [vmem:[%s77 + $0x970] sm:$0xff]
    %v5199 = vld [vmem:[%s77 + $0x978] sm:$0xff]
    %v5200 = vld [vmem:[%s77 + $0x980] sm:$0xff]
    %v5201 = vld [vmem:[%s77 + $0x988] sm:$0xff]
    %v5202 = vld [vmem:[%s77 + $0x990] sm:$0xff]
    %v5203 = vld [vmem:[%s77 + $0x998] sm:$0xff]
    %v5204 = vld [vmem:[%s77 + $0x9a0] sm:$0xff]
    %v5205 = vld [vmem:[%s77 + $0x9a8] sm:$0xff]
    %v5206 = vld [vmem:[%s77 + $0x9b0] sm:$0xff]
    %v5207 = vld [vmem:[%s77 + $0x9b8] sm:$0xff]
    %v5208 = vld [vmem:[%s77 + $0x9c0] sm:$0xff]
    %v5209 = vld [vmem:[%s77 + $0x9c8] sm:$0xff]
    %v5210 = vld [vmem:[%s77 + $0x9d0] sm:$0xff]
    %v5211 = vld [vmem:[%s77 + $0x9d8] sm:$0xff]
    %v5212 = vld [vmem:[%s77 + $0x9e0] sm:$0xff]
    %v5213 = vld [vmem:[%s77 + $0x9e8] sm:$0xff]
    %v5214 = vld [vmem:[%s77 + $0x9f0] sm:$0xff]
    %v5215 = vld [vmem:[%s77 + $0x9f8] sm:$0xff]
    %v5216 = vld [vmem:[%s77 + $0xa00] sm:$0xff]
    %v5217 = vld [vmem:[%s77 + $0xa08] sm:$0xff]
    %v5218 = vld [vmem:[%s77 + $0xa10] sm:$0xff]
    %v5219 = vld [vmem:[%s77 + $0xa18] sm:$0xff]
    %v5220 = vld [vmem:[%s77 + $0xa20] sm:$0xff]
    %v5221 = vld [vmem:[%s77 + $0xa28] sm:$0xff]
    %v5222 = vld [vmem:[%s77 + $0xa30] sm:$0xff]
    %v5223 = vld [vmem:[%s77 + $0xa38] sm:$0xff]
    %v5224 = vld [vmem:[%s77 + $0xa40] sm:$0xff]
    %v5225 = vld [vmem:[%s77 + $0xa48] sm:$0xff]
    %v5226 = vld [vmem:[%s77 + $0xa50] sm:$0xff]
    %v5227 = vld [vmem:[%s77 + $0xa58] sm:$0xff]
    %v5228 = vld [vmem:[%s77 + $0xa60] sm:$0xff]
    %v5229 = vld [vmem:[%s77 + $0xa68] sm:$0xff]
    %v5230 = vld [vmem:[%s77 + $0xa70] sm:$0xff]
    %v5231 = vld [vmem:[%s77 + $0xa78] sm:$0xff]
    %v5232 = vld [vmem:[%s77 + $0xa80] sm:$0xff]
    %v5233 = vld [vmem:[%s77 + $0xa88] sm:$0xff]
    %v5234 = vld [vmem:[%s77 + $0xa90] sm:$0xff]
    %v5235 = vld [vmem:[%s77 + $0xa98] sm:$0xff]
    %v5236 = vld [vmem:[%s77 + $0xaa0] sm:$0xff]
    %v5237 = vld [vmem:[%s77 + $0xaa8] sm:$0xff]
    %v5238 = vld [vmem:[%s77 + $0xab0] sm:$0xff]
    %v5239 = vld [vmem:[%s77 + $0xab8] sm:$0xff]
    %v5240 = vld [vmem:[%s77 + $0xac0] sm:$0xff]
    %v5241 = vld [vmem:[%s77 + $0xac8] sm:$0xff]
    %v5242 = vld [vmem:[%s77 + $0xad0] sm:$0xff]
    %v5243 = vld [vmem:[%s77 + $0xad8] sm:$0xff]
    %v5244 = vld [vmem:[%s77 + $0xae0] sm:$0xff]
    %v5245 = vld [vmem:[%s77 + $0xae8] sm:$0xff]
    %v5246 = vld [vmem:[%s77 + $0xaf0] sm:$0xff]
    %v5247 = vld [vmem:[%s77 + $0xaf8] sm:$0xff]
    %v5248 = vld [vmem:[%s77 + $0xb00] sm:$0xff]
    %v5249 = vld [vmem:[%s77 + $0xb08] sm:$0xff]
    %v5250 = vld [vmem:[%s77 + $0xb10] sm:$0xff]
    %v5251 = vld [vmem:[%s77 + $0xb18] sm:$0xff]
    %v5252 = vld [vmem:[%s77 + $0xb20] sm:$0xff]
    %v5253 = vld [vmem:[%s77 + $0xb28] sm:$0xff]
    %v5254 = vld [vmem:[%s77 + $0xb30] sm:$0xff]
    %v5255 = vld [vmem:[%s77 + $0xb38] sm:$0xff]
    %v5256 = vpack.c.bf16 %v4891, %v4891
    %v5257 = vpack.c.bf16 %v4892, %v4892
    %v5258 = vpack.c.bf16 %v4893, %v4893
    %v5259 = vpack.c.bf16 %v4894, %v4894
    %v5260 = vpack.c.bf16 %v4895, %v4895
    %v5261 = vpack.c.bf16 %v4901, %v4896
    %v5262 = vpack.c.bf16 %v4902, %v4897
    %v5263 = vpack.c.bf16 %v4903, %v4898
    %v5264 = vpack.c.bf16 %v4904, %v4899
    %v5265 = vpack.c.bf16 %v4905, %v4900
    %v5266 = vpack.c.bf16 %v4911, %v4906
    %v5267 = vpack.c.bf16 %v4912, %v4907
    %v5268 = vpack.c.bf16 %v4913, %v4908
    %v5269 = vpack.c.bf16 %v4914, %v4909
    %v5270 = vpack.c.bf16 %v4915, %v4910
    %v5271 = vpack.c.bf16 %v4921, %v4916
    %v5272 = vpack.c.bf16 %v4922, %v4917
    %v5273 = vpack.c.bf16 %v4923, %v4918
    %v5274 = vpack.c.bf16 %v4924, %v4919
    %v5275 = vpack.c.bf16 %v4925, %v4920
    %v5276 = vpack.c.bf16 %v4931, %v4926
    %v5277 = vpack.c.bf16 %v4932, %v4927
    %v5278 = vpack.c.bf16 %v4933, %v4928
    %v5279 = vpack.c.bf16 %v4934, %v4929
    %v5280 = vpack.c.bf16 %v4935, %v4930
    %v5281 = vpack.c.bf16 %v4941, %v4936
    %v5282 = vpack.c.bf16 %v4942, %v4937
    %v5283 = vpack.c.bf16 %v4943, %v4938
    %v5284 = vpack.c.bf16 %v4944, %v4939
    %v5285 = vpack.c.bf16 %v4945, %v4940
    %v5286 = vpack.c.bf16 %v4951, %v4946
    %v5287 = vpack.c.bf16 %v4952, %v4947
    %v5288 = vpack.c.bf16 %v4953, %v4948
    %v5289 = vpack.c.bf16 %v4954, %v4949
    %v5290 = vpack.c.bf16 %v4955, %v4950
    %v5291 = vpack.c.bf16 %v4961, %v4956
    %v5292 = vpack.c.bf16 %v4962, %v4957
    %v5293 = vpack.c.bf16 %v4963, %v4958
    %v5294 = vpack.c.bf16 %v4964, %v4959
    %v5295 = vpack.c.bf16 %v4965, %v4960
    %v5296 = vpack.c.bf16 %v4971, %v4966
    %v5297 = vpack.c.bf16 %v4972, %v4967
    %v5298 = vpack.c.bf16 %v4973, %v4968
    %v5299 = vpack.c.bf16 %v4974, %v4969
    %v5300 = vpack.c.bf16 %v4975, %v4970
    %v5301 = vpack.c.bf16 %v4981, %v4976
    %v5302 = vpack.c.bf16 %v4982, %v4977
    %v5303 = vpack.c.bf16 %v4983, %v4978
    %v5304 = vpack.c.bf16 %v4984, %v4979
    %v5305 = vpack.c.bf16 %v4985, %v4980
    %v5306 = vpack.c.bf16 %v4991, %v4986
    %v5307 = vpack.c.bf16 %v4992, %v4987
    %v5308 = vpack.c.bf16 %v4993, %v4988
    %v5309 = vpack.c.bf16 %v4994, %v4989
    %v5310 = vpack.c.bf16 %v4995, %v4990
    %v5311 = vpack.c.bf16 %v5001, %v4996
    %v5312 = vpack.c.bf16 %v5002, %v4997
    %v5313 = vpack.c.bf16 %v5003, %v4998
    %v5314 = vpack.c.bf16 %v5004, %v4999
    %v5315 = vpack.c.bf16 %v5005, %v5000
    %v5316 = vpack.c.bf16 %v5011, %v5006
    %v5317 = vpack.c.bf16 %v5012, %v5007
    %v5318 = vpack.c.bf16 %v5013, %v5008
    %v5319 = vpack.c.bf16 %v5014, %v5009
    %v5320 = vpack.c.bf16 %v5015, %v5010
    %v5321 = vpack.c.bf16 %v5021, %v5016
    %v5322 = vpack.c.bf16 %v5022, %v5017
    %v5323 = vpack.c.bf16 %v5023, %v5018
    %v5324 = vpack.c.bf16 %v5024, %v5019
    %v5325 = vpack.c.bf16 %v5025, %v5020
    %v5326 = vpack.c.bf16 %v5031, %v5026
    %v5327 = vpack.c.bf16 %v5032, %v5027
    %v5328 = vpack.c.bf16 %v5033, %v5028
    %v5329 = vpack.c.bf16 %v5034, %v5029
    %v5330 = vpack.c.bf16 %v5035, %v5030
    %v5331 = vpack.c.bf16 %v5041, %v5036
    %v5332 = vpack.c.bf16 %v5042, %v5037
    %v5333 = vpack.c.bf16 %v5043, %v5038
    %v5334 = vpack.c.bf16 %v5044, %v5039
    %v5335 = vpack.c.bf16 %v5045, %v5040
    %v5336 = vpack.c.bf16 %v5051, %v5046
    %v5337 = vpack.c.bf16 %v5052, %v5047
    %v5338 = vpack.c.bf16 %v5053, %v5048
    %v5339 = vpack.c.bf16 %v5054, %v5049
    %v5340 = vpack.c.bf16 %v5055, %v5050
    %v5341 = vpack.c.bf16 %v5061, %v5056
    %v5342 = vpack.c.bf16 %v5062, %v5057
    %v5343 = vpack.c.bf16 %v5063, %v5058
    %v5344 = vpack.c.bf16 %v5064, %v5059
    %v5345 = vpack.c.bf16 %v5065, %v5060
    %v5346 = vpack.c.bf16 %v5071, %v5066
    %v5347 = vpack.c.bf16 %v5072, %v5067
    %v5348 = vpack.c.bf16 %v5073, %v5068
    %v5349 = vpack.c.bf16 %v5074, %v5069
    %v5350 = vpack.c.bf16 %v5075, %v5070
    %v5351 = vpack.c.bf16 %v5081, %v5076
    %v5352 = vpack.c.bf16 %v5082, %v5077
    %v5353 = vpack.c.bf16 %v5083, %v5078
    %v5354 = vpack.c.bf16 %v5084, %v5079
    %v5355 = vpack.c.bf16 %v5085, %v5080
    %v5356 = vpack.c.bf16 %v5091, %v5086
    %v5357 = vpack.c.bf16 %v5092, %v5087
    %v5358 = vpack.c.bf16 %v5093, %v5088
    %v5359 = vpack.c.bf16 %v5094, %v5089
    %v5360 = vpack.c.bf16 %v5095, %v5090
    %v5361 = vpack.c.bf16 %v5101, %v5096
    %v5362 = vpack.c.bf16 %v5102, %v5097
    %v5363 = vpack.c.bf16 %v5103, %v5098
    %v5364 = vpack.c.bf16 %v5104, %v5099
    %v5365 = vpack.c.bf16 %v5105, %v5100
    %v5366 = vpack.c.bf16 %v5111, %v5106
    %v5367 = vpack.c.bf16 %v5112, %v5107
    %v5368 = vpack.c.bf16 %v5113, %v5108
    %v5369 = vpack.c.bf16 %v5114, %v5109
    %v5370 = vpack.c.bf16 %v5115, %v5110
    %v5371 = vpack.c.bf16 %v5121, %v5116
    %v5372 = vpack.c.bf16 %v5122, %v5117
    %v5373 = vpack.c.bf16 %v5123, %v5118
    %v5374 = vpack.c.bf16 %v5124, %v5119
    %v5375 = vpack.c.bf16 %v5125, %v5120
    %v5376 = vpack.c.bf16 %v5131, %v5126
    %v5377 = vpack.c.bf16 %v5132, %v5127
    %v5378 = vpack.c.bf16 %v5133, %v5128
    %v5379 = vpack.c.bf16 %v5134, %v5129
    %v5380 = vpack.c.bf16 %v5135, %v5130
    %v5381 = vpack.c.bf16 %v5141, %v5136
    %v5382 = vpack.c.bf16 %v5142, %v5137
    %v5383 = vpack.c.bf16 %v5143, %v5138
    %v5384 = vpack.c.bf16 %v5144, %v5139
    %v5385 = vpack.c.bf16 %v5145, %v5140
    %v5386 = vpack.c.bf16 %v5151, %v5146
    %v5387 = vpack.c.bf16 %v5152, %v5147
    %v5388 = vpack.c.bf16 %v5153, %v5148
    %v5389 = vpack.c.bf16 %v5154, %v5149
    %v5390 = vpack.c.bf16 %v5155, %v5150
    %v5391 = vpack.c.bf16 %v5161, %v5156
    %v5392 = vpack.c.bf16 %v5162, %v5157
    %v5393 = vpack.c.bf16 %v5163, %v5158
    %v5394 = vpack.c.bf16 %v5164, %v5159
    %v5395 = vpack.c.bf16 %v5165, %v5160
    %v5396 = vpack.c.bf16 %v5171, %v5166
    %v5397 = vpack.c.bf16 %v5172, %v5167
    %v5398 = vpack.c.bf16 %v5173, %v5168
    %v5399 = vpack.c.bf16 %v5174, %v5169
    %v5400 = vpack.c.bf16 %v5175, %v5170
    %v5401 = vpack.c.bf16 %v5181, %v5176
    %v5402 = vpack.c.bf16 %v5182, %v5177
    %v5403 = vpack.c.bf16 %v5183, %v5178
    %v5404 = vpack.c.bf16 %v5184, %v5179
    %v5405 = vpack.c.bf16 %v5185, %v5180
    %v5406 = vpack.c.bf16 %v5191, %v5186
    %v5407 = vpack.c.bf16 %v5192, %v5187
    %v5408 = vpack.c.bf16 %v5193, %v5188
    %v5409 = vpack.c.bf16 %v5194, %v5189
    %v5410 = vpack.c.bf16 %v5195, %v5190
    %v5411 = vpack.c.bf16 %v5201, %v5196
    %v5412 = vpack.c.bf16 %v5202, %v5197
    %v5413 = vpack.c.bf16 %v5203, %v5198
    %v5414 = vpack.c.bf16 %v5204, %v5199
    %v5415 = vpack.c.bf16 %v5205, %v5200
    %v5416 = vpack.c.bf16 %v5211, %v5206
    %v5417 = vpack.c.bf16 %v5212, %v5207
    %v5418 = vpack.c.bf16 %v5213, %v5208
    %v5419 = vpack.c.bf16 %v5214, %v5209
    %v5420 = vpack.c.bf16 %v5215, %v5210
    %v5421 = vpack.c.bf16 %v5221, %v5216
    %v5422 = vpack.c.bf16 %v5222, %v5217
    %v5423 = vpack.c.bf16 %v5223, %v5218
    %v5424 = vpack.c.bf16 %v5224, %v5219
    %v5425 = vpack.c.bf16 %v5225, %v5220
    %v5426 = vpack.c.bf16 %v5231, %v5226
    %v5427 = vpack.c.bf16 %v5232, %v5227
    %v5428 = vpack.c.bf16 %v5233, %v5228
    %v5429 = vpack.c.bf16 %v5234, %v5229
    %v5430 = vpack.c.bf16 %v5235, %v5230
    %v5431 = vpack.c.bf16 %v5241, %v5236
    %v5432 = vpack.c.bf16 %v5242, %v5237
    %v5433 = vpack.c.bf16 %v5243, %v5238
    %v5434 = vpack.c.bf16 %v5244, %v5239
    %v5435 = vpack.c.bf16 %v5245, %v5240
    %v5436 = vpack.c.bf16 %v5251, %v5246
    %v5437 = vpack.c.bf16 %v5252, %v5247
    %v5438 = vpack.c.bf16 %v5253, %v5248
    %v5439 = vpack.c.bf16 %v5254, %v5249
    %v5440 = vpack.c.bf16 %v5255, %v5250
    %v5441 = vld [vmem:[%s79] sm:$0x1f]
    %v5443 = vperm.slane %v5441, 0
    %v5444 = vperm.slane %v5441, 1
    %v5445 = vperm.slane %v5441, 2
    %v5446 = vperm.slane %v5441, 3
    %v5447 = vperm.slane %v5441, 4
    %v5454 = vsel %vm4308, %v5260, 0
    %5456 = vmatpush.bf16.msra.mxu0 %v5296
    %5457 = vmatpush.bf16.msra.mxu0 %v5291
    %5458 = vmatpush.bf16.msra.mxu0 %v5286
    %5459 = vmatpush.bf16.msra.mxu0 %v5281
    %5460 = vmatpush.bf16.msra.mxu0 %v5276
    %5461 = vmatpush.bf16.msra.mxu0 %v5271
    %5462 = vmatpush.bf16.msra.mxu0 %v5266
    %5463 = vmatpush.bf16.msra.mxu0 %v5261
    %5464 = vmatmul.bf16.gmra.mxu0 %v5256
    %v5465 = vpop.f32.mrf.mxu0
    %v5466 = vadd.f32 %v5443, %v5465
    %v5467 = vpop.f32.mrf.mxu0
    %5468 = vdwg.mxu0
    %5469 = vmatpush.bf16.msra.mxu0 %v5336
    %5470 = vmatpush.bf16.msra.mxu0 %v5331
    %5471 = vmatpush.bf16.msra.mxu0 %v5326
    %5472 = vmatpush.bf16.msra.mxu0 %v5321
    %5473 = vmatpush.bf16.msra.mxu0 %v5316
    %5474 = vmatpush.bf16.msra.mxu0 %v5311
    %5475 = vmatpush.bf16.msra.mxu0 %v5306
    %5476 = vmatpush.bf16.msra.mxu0 %v5301
    %5477 = vmatmul.bf16.gmra.mxu0 %v5257
    %v5478 = vpop.f32.mrf.mxu0
    %v5479 = vadd.f32 %v5466, %v5478
    %v5480 = vpop.f32.mrf.mxu0
    %5481 = vdwg.mxu0
    %5482 = vmatpush.bf16.msra.mxu0 %v5376
    %5483 = vmatpush.bf16.msra.mxu0 %v5371
    %5484 = vmatpush.bf16.msra.mxu0 %v5366
    %5485 = vmatpush.bf16.msra.mxu0 %v5361
    %5486 = vmatpush.bf16.msra.mxu0 %v5356
    %5487 = vmatpush.bf16.msra.mxu0 %v5351
    %5488 = vmatpush.bf16.msra.mxu0 %v5346
    %5489 = vmatpush.bf16.msra.mxu0 %v5341
    %5490 = vmatmul.bf16.gmra.mxu0 %v5258
    %v5491 = vpop.f32.mrf.mxu0
    %v5492 = vadd.f32 %v5479, %v5491
    %v5493 = vpop.f32.mrf.mxu0
    %5494 = vdwg.mxu0
    %5495 = vmatpush.bf16.msra.mxu0 %v5416
    %5496 = vmatpush.bf16.msra.mxu0 %v5411
    %5497 = vmatpush.bf16.msra.mxu0 %v5406
    %5498 = vmatpush.bf16.msra.mxu0 %v5401
    %5499 = vmatpush.bf16.msra.mxu0 %v5396
    %5500 = vmatpush.bf16.msra.mxu0 %v5391
    %5501 = vmatpush.bf16.msra.mxu0 %v5386
    %5502 = vmatpush.bf16.msra.mxu0 %v5381
    %5503 = vmatmul.bf16.gmra.mxu0 %v5259
    %v5504 = vpop.f32.mrf.mxu0
    %v5505 = vadd.f32 %v5492, %v5504
    %v5506 = vpop.f32.mrf.mxu0
    %5507 = vdwg.mxu0
    %5508 = vmatpush.bf16.msra.mxu0 0
    %5509 = vmatpush.bf16.msra.mxu0 0
    %5510 = vmatpush.bf16.msra.mxu0 0
    %5511 = vmatpush.bf16.msra.mxu0 0
    %5512 = vmatpush.bf16.msra.mxu0 %v5436
    %5513 = vmatpush.bf16.msra.mxu0 %v5431
    %5514 = vmatpush.bf16.msra.mxu0 %v5426
    %5515 = vmatpush.bf16.msra.mxu0 %v5421
    %5516 = vmatmul.bf16.gmra.mxu0 %v5454
    %v5517 = vpop.f32.mrf.mxu0
    %v5518 = vadd.f32 %v5505, %v5517
    %v5519 = vpop.f32.mrf.mxu0
    %5520 = vdwg.mxu0
    %5521 = vmatpush.bf16.msra.mxu0 %v5297
    %5522 = vmatpush.bf16.msra.mxu0 %v5292
    %5523 = vmatpush.bf16.msra.mxu0 %v5287
    %5524 = vmatpush.bf16.msra.mxu0 %v5282
    %5525 = vmatpush.bf16.msra.mxu0 %v5277
    %5526 = vmatpush.bf16.msra.mxu0 %v5272
    %5527 = vmatpush.bf16.msra.mxu0 %v5267
    %5528 = vmatpush.bf16.msra.mxu0 %v5262
    %5529 = vmatmul.bf16.gmra.mxu0 %v5256
    %v5530 = vpop.f32.mrf.mxu0
    %v5531 = vadd.f32 %v5444, %v5530
    %v5532 = vpop.f32.mrf.mxu0
    %5533 = vdwg.mxu0
    %5534 = vmatpush.bf16.msra.mxu0 %v5337
    %5535 = vmatpush.bf16.msra.mxu0 %v5332
    %5536 = vmatpush.bf16.msra.mxu0 %v5327
    %5537 = vmatpush.bf16.msra.mxu0 %v5322
    %5538 = vmatpush.bf16.msra.mxu0 %v5317
    %5539 = vmatpush.bf16.msra.mxu0 %v5312
    %5540 = vmatpush.bf16.msra.mxu0 %v5307
    %5541 = vmatpush.bf16.msra.mxu0 %v5302
    %5542 = vmatmul.bf16.gmra.mxu0 %v5257
    %v5543 = vpop.f32.mrf.mxu0
    %v5544 = vadd.f32 %v5531, %v5543
    %v5545 = vpop.f32.mrf.mxu0
    %5546 = vdwg.mxu0
    %5547 = vmatpush.bf16.msra.mxu0 %v5377
    %5548 = vmatpush.bf16.msra.mxu0 %v5372
    %5549 = vmatpush.bf16.msra.mxu0 %v5367
    %5550 = vmatpush.bf16.msra.mxu0 %v5362
    %5551 = vmatpush.bf16.msra.mxu0 %v5357
    %5552 = vmatpush.bf16.msra.mxu0 %v5352
    %5553 = vmatpush.bf16.msra.mxu0 %v5347
    %5554 = vmatpush.bf16.msra.mxu0 %v5342
    %5555 = vmatmul.bf16.gmra.mxu0 %v5258
    %v5556 = vpop.f32.mrf.mxu0
    %v5557 = vadd.f32 %v5544, %v5556
    %v5558 = vpop.f32.mrf.mxu0
    %5559 = vdwg.mxu0
    %5560 = vmatpush.bf16.msra.mxu0 %v5417
    %5561 = vmatpush.bf16.msra.mxu0 %v5412
    %5562 = vmatpush.bf16.msra.mxu0 %v5407
    %5563 = vmatpush.bf16.msra.mxu0 %v5402
    %5564 = vmatpush.bf16.msra.mxu0 %v5397
    %5565 = vmatpush.bf16.msra.mxu0 %v5392
    %5566 = vmatpush.bf16.msra.mxu0 %v5387
    %5567 = vmatpush.bf16.msra.mxu0 %v5382
    %5568 = vmatmul.bf16.gmra.mxu0 %v5259
    %v5569 = vpop.f32.mrf.mxu0
    %v5570 = vadd.f32 %v5557, %v5569
    %v5571 = vpop.f32.mrf.mxu0
    %5572 = vdwg.mxu0
    %5573 = vmatpush.bf16.msra.mxu0 0
    %5574 = vmatpush.bf16.msra.mxu0 0
    %5575 = vmatpush.bf16.msra.mxu0 0
    %5576 = vmatpush.bf16.msra.mxu0 0
    %5577 = vmatpush.bf16.msra.mxu0 %v5437
    %5578 = vmatpush.bf16.msra.mxu0 %v5432
    %5579 = vmatpush.bf16.msra.mxu0 %v5427
    %5580 = vmatpush.bf16.msra.mxu0 %v5422
    %5581 = vmatmul.bf16.gmra.mxu0 %v5454
    %v5582 = vpop.f32.mrf.mxu0
    %v5583 = vadd.f32 %v5570, %v5582
    %v5584 = vpop.f32.mrf.mxu0
    %5585 = vdwg.mxu0
    %5586 = vmatpush.bf16.msra.mxu0 %v5298
    %5587 = vmatpush.bf16.msra.mxu0 %v5293
    %5588 = vmatpush.bf16.msra.mxu0 %v5288
    %5589 = vmatpush.bf16.msra.mxu0 %v5283
    %5590 = vmatpush.bf16.msra.mxu0 %v5278
    %5591 = vmatpush.bf16.msra.mxu0 %v5273
    %5592 = vmatpush.bf16.msra.mxu0 %v5268
    %5593 = vmatpush.bf16.msra.mxu0 %v5263
    %5594 = vmatmul.bf16.gmra.mxu0 %v5256
    %v5595 = vpop.f32.mrf.mxu0
    %v5596 = vadd.f32 %v5445, %v5595
    %v5597 = vpop.f32.mrf.mxu0
    %5598 = vdwg.mxu0
    %5599 = vmatpush.bf16.msra.mxu0 %v5338
    %5600 = vmatpush.bf16.msra.mxu0 %v5333
    %5601 = vmatpush.bf16.msra.mxu0 %v5328
    %5602 = vmatpush.bf16.msra.mxu0 %v5323
    %5603 = vmatpush.bf16.msra.mxu0 %v5318
    %5604 = vmatpush.bf16.msra.mxu0 %v5313
    %5605 = vmatpush.bf16.msra.mxu0 %v5308
    %5606 = vmatpush.bf16.msra.mxu0 %v5303
    %5607 = vmatmul.bf16.gmra.mxu0 %v5257
    %v5608 = vpop.f32.mrf.mxu0
    %v5609 = vadd.f32 %v5596, %v5608
    %v5610 = vpop.f32.mrf.mxu0
    %5611 = vdwg.mxu0
    %5612 = vmatpush.bf16.msra.mxu0 %v5378
    %5613 = vmatpush.bf16.msra.mxu0 %v5373
    %5614 = vmatpush.bf16.msra.mxu0 %v5368
    %5615 = vmatpush.bf16.msra.mxu0 %v5363
    %5616 = vmatpush.bf16.msra.mxu0 %v5358
    %5617 = vmatpush.bf16.msra.mxu0 %v5353
    %5618 = vmatpush.bf16.msra.mxu0 %v5348
    %5619 = vmatpush.bf16.msra.mxu0 %v5343
    %5620 = vmatmul.bf16.gmra.mxu0 %v5258
    %v5621 = vpop.f32.mrf.mxu0
    %v5622 = vadd.f32 %v5609, %v5621
    %v5623 = vpop.f32.mrf.mxu0
    %5624 = vdwg.mxu0
    %5625 = vmatpush.bf16.msra.mxu0 %v5418
    %5626 = vmatpush.bf16.msra.mxu0 %v5413
    %5627 = vmatpush.bf16.msra.mxu0 %v5408
    %5628 = vmatpush.bf16.msra.mxu0 %v5403
    %5629 = vmatpush.bf16.msra.mxu0 %v5398
    %5630 = vmatpush.bf16.msra.mxu0 %v5393
    %5631 = vmatpush.bf16.msra.mxu0 %v5388
    %5632 = vmatpush.bf16.msra.mxu0 %v5383
    %5633 = vmatmul.bf16.gmra.mxu0 %v5259
    %v5634 = vpop.f32.mrf.mxu0
    %v5635 = vadd.f32 %v5622, %v5634
    %v5636 = vpop.f32.mrf.mxu0
    %5637 = vdwg.mxu0
    %5638 = vmatpush.bf16.msra.mxu0 0
    %5639 = vmatpush.bf16.msra.mxu0 0
    %5640 = vmatpush.bf16.msra.mxu0 0
    %5641 = vmatpush.bf16.msra.mxu0 0
    %5642 = vmatpush.bf16.msra.mxu0 %v5438
    %5643 = vmatpush.bf16.msra.mxu0 %v5433
    %5644 = vmatpush.bf16.msra.mxu0 %v5428
    %5645 = vmatpush.bf16.msra.mxu0 %v5423
    %5646 = vmatmul.bf16.gmra.mxu0 %v5454
    %v5647 = vpop.f32.mrf.mxu0
    %v5648 = vadd.f32 %v5635, %v5647
    %v5649 = vpop.f32.mrf.mxu0
    %5650 = vdwg.mxu0
    %5651 = vmatpush.bf16.msra.mxu0 %v5299
    %5652 = vmatpush.bf16.msra.mxu0 %v5294
    %5653 = vmatpush.bf16.msra.mxu0 %v5289
    %5654 = vmatpush.bf16.msra.mxu0 %v5284
    %5655 = vmatpush.bf16.msra.mxu0 %v5279
    %5656 = vmatpush.bf16.msra.mxu0 %v5274
    %5657 = vmatpush.bf16.msra.mxu0 %v5269
    %5658 = vmatpush.bf16.msra.mxu0 %v5264
    %5659 = vmatmul.bf16.gmra.mxu0 %v5256
    %v5660 = vpop.f32.mrf.mxu0
    %v5661 = vadd.f32 %v5446, %v5660
    %v5662 = vpop.f32.mrf.mxu0
    %5663 = vdwg.mxu0
    %5664 = vmatpush.bf16.msra.mxu0 %v5339
    %5665 = vmatpush.bf16.msra.mxu0 %v5334
    %5666 = vmatpush.bf16.msra.mxu0 %v5329
    %5667 = vmatpush.bf16.msra.mxu0 %v5324
    %5668 = vmatpush.bf16.msra.mxu0 %v5319
    %5669 = vmatpush.bf16.msra.mxu0 %v5314
    %5670 = vmatpush.bf16.msra.mxu0 %v5309
    %5671 = vmatpush.bf16.msra.mxu0 %v5304
    %5672 = vmatmul.bf16.gmra.mxu0 %v5257
    %v5673 = vpop.f32.mrf.mxu0
    %v5674 = vadd.f32 %v5661, %v5673
    %v5675 = vpop.f32.mrf.mxu0
    %5676 = vdwg.mxu0
    %5677 = vmatpush.bf16.msra.mxu0 %v5379
    %5678 = vmatpush.bf16.msra.mxu0 %v5374
    %5679 = vmatpush.bf16.msra.mxu0 %v5369
    %5680 = vmatpush.bf16.msra.mxu0 %v5364
    %5681 = vmatpush.bf16.msra.mxu0 %v5359
    %5682 = vmatpush.bf16.msra.mxu0 %v5354
    %5683 = vmatpush.bf16.msra.mxu0 %v5349
    %5684 = vmatpush.bf16.msra.mxu0 %v5344
    %5685 = vmatmul.bf16.gmra.mxu0 %v5258
    %v5686 = vpop.f32.mrf.mxu0
    %v5687 = vadd.f32 %v5674, %v5686
    %v5688 = vpop.f32.mrf.mxu0
    %5689 = vdwg.mxu0
    %5690 = vmatpush.bf16.msra.mxu0 %v5419
    %5691 = vmatpush.bf16.msra.mxu0 %v5414
    %5692 = vmatpush.bf16.msra.mxu0 %v5409
    %5693 = vmatpush.bf16.msra.mxu0 %v5404
    %5694 = vmatpush.bf16.msra.mxu0 %v5399
    %5695 = vmatpush.bf16.msra.mxu0 %v5394
    %5696 = vmatpush.bf16.msra.mxu0 %v5389
    %5697 = vmatpush.bf16.msra.mxu0 %v5384
    %5698 = vmatmul.bf16.gmra.mxu0 %v5259
    %v5699 = vpop.f32.mrf.mxu0
    %v5700 = vadd.f32 %v5687, %v5699
    %v5701 = vpop.f32.mrf.mxu0
    %5702 = vdwg.mxu0
    %5703 = vmatpush.bf16.msra.mxu0 0
    %5704 = vmatpush.bf16.msra.mxu0 0
    %5705 = vmatpush.bf16.msra.mxu0 0
    %5706 = vmatpush.bf16.msra.mxu0 0
    %5707 = vmatpush.bf16.msra.mxu0 %v5439
    %5708 = vmatpush.bf16.msra.mxu0 %v5434
    %5709 = vmatpush.bf16.msra.mxu0 %v5429
    %5710 = vmatpush.bf16.msra.mxu0 %v5424
    %5711 = vmatmul.bf16.gmra.mxu0 %v5454
    %v5712 = vpop.f32.mrf.mxu0
    %v5713 = vadd.f32 %v5700, %v5712
    %v5714 = vpop.f32.mrf.mxu0
    %5715 = vdwg.mxu0
    %5716 = vmatpush.bf16.msra.mxu0 %v5300
    %5717 = vmatpush.bf16.msra.mxu0 %v5295
    %5718 = vmatpush.bf16.msra.mxu0 %v5290
    %5719 = vmatpush.bf16.msra.mxu0 %v5285
    %5720 = vmatpush.bf16.msra.mxu0 %v5280
    %5721 = vmatpush.bf16.msra.mxu0 %v5275
    %5722 = vmatpush.bf16.msra.mxu0 %v5270
    %5723 = vmatpush.bf16.msra.mxu0 %v5265
    %5724 = vmatmul.bf16.gmra.mxu0 %v5256
    %v5725 = vpop.f32.mrf.mxu0
    %v5726 = vadd.f32 %v5447, %v5725
    %v5727 = vpop.f32.mrf.mxu0
    %5728 = vdwg.mxu0
    %5729 = vmatpush.bf16.msra.mxu0 %v5340
    %5730 = vmatpush.bf16.msra.mxu0 %v5335
    %5731 = vmatpush.bf16.msra.mxu0 %v5330
    %5732 = vmatpush.bf16.msra.mxu0 %v5325
    %5733 = vmatpush.bf16.msra.mxu0 %v5320
    %5734 = vmatpush.bf16.msra.mxu0 %v5315
    %5735 = vmatpush.bf16.msra.mxu0 %v5310
    %5736 = vmatpush.bf16.msra.mxu0 %v5305
    %5737 = vmatmul.bf16.gmra.mxu0 %v5257
    %v5738 = vpop.f32.mrf.mxu0
    %v5739 = vadd.f32 %v5726, %v5738
    %v5740 = vpop.f32.mrf.mxu0
    %5741 = vdwg.mxu0
    %5742 = vmatpush.bf16.msra.mxu0 %v5380
    %5743 = vmatpush.bf16.msra.mxu0 %v5375
    %5744 = vmatpush.bf16.msra.mxu0 %v5370
    %5745 = vmatpush.bf16.msra.mxu0 %v5365
    %5746 = vmatpush.bf16.msra.mxu0 %v5360
    %5747 = vmatpush.bf16.msra.mxu0 %v5355
    %5748 = vmatpush.bf16.msra.mxu0 %v5350
    %5749 = vmatpush.bf16.msra.mxu0 %v5345
    %5750 = vmatmul.bf16.gmra.mxu0 %v5258
    %v5751 = vpop.f32.mrf.mxu0
    %v5752 = vadd.f32 %v5739, %v5751
    %v5753 = vpop.f32.mrf.mxu0
    %5754 = vdwg.mxu0
    %5755 = vmatpush.bf16.msra.mxu0 %v5420
    %5756 = vmatpush.bf16.msra.mxu0 %v5415
    %5757 = vmatpush.bf16.msra.mxu0 %v5410
    %5758 = vmatpush.bf16.msra.mxu0 %v5405
    %5759 = vmatpush.bf16.msra.mxu0 %v5400
    %5760 = vmatpush.bf16.msra.mxu0 %v5395
    %5761 = vmatpush.bf16.msra.mxu0 %v5390
    %5762 = vmatpush.bf16.msra.mxu0 %v5385
    %5763 = vmatmul.bf16.gmra.mxu0 %v5259
    %v5764 = vpop.f32.mrf.mxu0
    %v5765 = vadd.f32 %v5752, %v5764
    %v5766 = vpop.f32.mrf.mxu0
    %5767 = vdwg.mxu0
    %5768 = vmatpush.bf16.msra.mxu0 0
    %5769 = vmatpush.bf16.msra.mxu0 0
    %5770 = vmatpush.bf16.msra.mxu0 0
    %5771 = vmatpush.bf16.msra.mxu0 0
    %5772 = vmatpush.bf16.msra.mxu0 %v5440
    %5773 = vmatpush.bf16.msra.mxu0 %v5435
    %5774 = vmatpush.bf16.msra.mxu0 %v5430
    %5775 = vmatpush.bf16.msra.mxu0 %v5425
    %5776 = vmatmul.bf16.gmra.mxu0 %v5454
    %v5777 = vpop.f32.mrf.mxu0
    %v5778 = vadd.f32 %v5765, %v5777
    %v5779 = vpop.f32.mrf.mxu0
    %5780 = vdwg.mxu0
    %v5781 = vmax.f32 %v5518, 0.0
    %v5782 = vmax.f32 %v5583, 0.0
    %v5783 = vmax.f32 %v5648, 0.0
    %v5784 = vmax.f32 %v5713, 0.0
    %v5785 = vmax.f32 %v5778, 0.0
    %v5786 = vld [vmem:[#allocation33] sm:$0xff]
    %v5787 = vld [vmem:[#allocation33 + $0x8] sm:$0xff]
    %v5788 = vld [vmem:[#allocation33 + $0x10] sm:$0xff]
    %v5789 = vld [vmem:[#allocation33 + $0x18] sm:$0xff]
    %v5790 = vld [vmem:[#allocation33 + $0x20] sm:$0xff]
    %v5791 = vld [vmem:[#allocation33 + $0x28] sm:$0xff]
    %v5792 = vld [vmem:[#allocation33 + $0x30] sm:$0xff]
    %v5793 = vld [vmem:[#allocation33 + $0x38] sm:$0xff]
    %v5794 = vld [vmem:[#allocation33 + $0x40] sm:$0xff]
    %v5795 = vld [vmem:[#allocation33 + $0x48] sm:$0xff]
    %v5796 = vld [vmem:[#allocation33 + $0x50] sm:$0xff]
    %v5797 = vld [vmem:[#allocation33 + $0x58] sm:$0xff]
    %v5798 = vld [vmem:[#allocation33 + $0x60] sm:$0xff]
    %v5799 = vld [vmem:[#allocation33 + $0x68] sm:$0xff]
    %v5800 = vld [vmem:[#allocation33 + $0x70] sm:$0xff]
    %v5801 = vld [vmem:[#allocation33 + $0x78] sm:$0xff]
    %v5802 = vld [vmem:[#allocation33 + $0x80] sm:$0xff]
    %v5803 = vld [vmem:[#allocation33 + $0x88] sm:$0xff]
    %v5804 = vld [vmem:[#allocation33 + $0x90] sm:$0xff]
    %v5805 = vld [vmem:[#allocation33 + $0x98] sm:$0xff]
    %v5806 = vld [vmem:[#allocation33 + $0xa0] sm:$0xff]
    %v5807 = vld [vmem:[#allocation33 + $0xa8] sm:$0xff]
    %v5808 = vld [vmem:[#allocation33 + $0xb0] sm:$0xff]
    %v5809 = vld [vmem:[#allocation33 + $0xb8] sm:$0xff]
    %v5810 = vld [vmem:[#allocation33 + $0xc0] sm:$0xff]
    %v5811 = vld [vmem:[#allocation33 + $0xc8] sm:$0xff]
    %v5812 = vld [vmem:[#allocation33 + $0xd0] sm:$0xff]
    %v5813 = vld [vmem:[#allocation33 + $0xd8] sm:$0xff]
    %v5814 = vld [vmem:[#allocation33 + $0xe0] sm:$0xff]
    %v5815 = vld [vmem:[#allocation33 + $0xe8] sm:$0xff]
    %v5816 = vld [vmem:[#allocation33 + $0xf0] sm:$0xff]
    %v5817 = vld [vmem:[#allocation33 + $0xf8] sm:$0xff]
    %v5818 = vld [vmem:[#allocation33 + $0x100] sm:$0xff]
    %v5819 = vld [vmem:[#allocation33 + $0x108] sm:$0xff]
    %v5820 = vld [vmem:[#allocation33 + $0x110] sm:$0xff]
    %v5821 = vld [vmem:[#allocation33 + $0x118] sm:$0xff]
    %v5822 = vld [vmem:[#allocation33 + $0x120] sm:$0xff]
    %v5823 = vld [vmem:[#allocation33 + $0x128] sm:$0xff]
    %v5824 = vld [vmem:[#allocation33 + $0x130] sm:$0xff]
    %v5825 = vld [vmem:[#allocation33 + $0x138] sm:$0xff]
    %v5826 = vld [vmem:[#allocation33 + $0x140] sm:$0xff]
    %v5827 = vld [vmem:[#allocation33 + $0x148] sm:$0xff]
    %v5828 = vld [vmem:[#allocation33 + $0x150] sm:$0xff]
    %v5829 = vld [vmem:[#allocation33 + $0x158] sm:$0xff]
    %v5830 = vld [vmem:[#allocation33 + $0x160] sm:$0xff]
    %v5831 = vld [vmem:[#allocation33 + $0x168] sm:$0xff]
    %v5832 = vld [vmem:[#allocation33 + $0x170] sm:$0xff]
    %v5833 = vld [vmem:[#allocation33 + $0x178] sm:$0xff]
    %v5834 = vld [vmem:[#allocation33 + $0x180] sm:$0xff]
    %v5835 = vld [vmem:[#allocation33 + $0x188] sm:$0xff]
    %v5836 = vld [vmem:[#allocation33 + $0x190] sm:$0xff]
    %v5837 = vld [vmem:[#allocation33 + $0x198] sm:$0xff]
    %v5838 = vld [vmem:[#allocation33 + $0x1a0] sm:$0xff]
    %v5839 = vld [vmem:[#allocation33 + $0x1a8] sm:$0xff]
    %v5840 = vld [vmem:[#allocation33 + $0x1b0] sm:$0xff]
    %v5841 = vld [vmem:[#allocation33 + $0x1b8] sm:$0xff]
    %v5842 = vld [vmem:[#allocation33 + $0x1c0] sm:$0xff]
    %v5843 = vld [vmem:[#allocation33 + $0x1c8] sm:$0xff]
    %v5844 = vld [vmem:[#allocation33 + $0x1d0] sm:$0xff]
    %v5845 = vld [vmem:[#allocation33 + $0x1d8] sm:$0xff]
    %v5846 = vld [vmem:[#allocation33 + $0x1e0] sm:$0xff]
    %v5847 = vld [vmem:[#allocation33 + $0x1e8] sm:$0xff]
    %v5848 = vld [vmem:[#allocation33 + $0x1f0] sm:$0xff]
    %v5849 = vld [vmem:[#allocation33 + $0x1f8] sm:$0xff]
    %v5850 = vld [vmem:[#allocation33 + $0x200] sm:$0xff]
    %v5851 = vld [vmem:[#allocation33 + $0x208] sm:$0xff]
    %v5852 = vld [vmem:[#allocation33 + $0x210] sm:$0xff]
    %v5853 = vld [vmem:[#allocation33 + $0x218] sm:$0xff]
    %v5854 = vld [vmem:[#allocation33 + $0x220] sm:$0xff]
    %v5855 = vld [vmem:[#allocation33 + $0x228] sm:$0xff]
    %v5856 = vld [vmem:[#allocation33 + $0x230] sm:$0xff]
    %v5857 = vld [vmem:[#allocation33 + $0x238] sm:$0xff]
    %v5858 = vld [vmem:[#allocation33 + $0x240] sm:$0xff]
    %v5859 = vld [vmem:[#allocation33 + $0x248] sm:$0xff]
    %v5860 = vld [vmem:[#allocation33 + $0x250] sm:$0xff]
    %v5861 = vld [vmem:[#allocation33 + $0x258] sm:$0xff]
    %v5862 = vld [vmem:[#allocation33 + $0x260] sm:$0xff]
    %v5863 = vld [vmem:[#allocation33 + $0x268] sm:$0xff]
    %v5864 = vld [vmem:[#allocation33 + $0x270] sm:$0xff]
    %v5865 = vld [vmem:[#allocation33 + $0x278] sm:$0xff]
    %v5866 = vld [vmem:[#allocation33 + $0x280] sm:$0xff]
    %v5867 = vld [vmem:[#allocation33 + $0x288] sm:$0xff]
    %v5868 = vld [vmem:[#allocation33 + $0x290] sm:$0xff]
    %v5869 = vld [vmem:[#allocation33 + $0x298] sm:$0xff]
    %v5870 = vld [vmem:[#allocation33 + $0x2a0] sm:$0xff]
    %v5871 = vld [vmem:[#allocation33 + $0x2a8] sm:$0xff]
    %v5872 = vld [vmem:[#allocation33 + $0x2b0] sm:$0xff]
    %v5873 = vld [vmem:[#allocation33 + $0x2b8] sm:$0xff]
    %v5874 = vld [vmem:[#allocation33 + $0x2c0] sm:$0xff]
    %v5875 = vld [vmem:[#allocation33 + $0x2c8] sm:$0xff]
    %v5876 = vld [vmem:[#allocation33 + $0x2d0] sm:$0xff]
    %v5877 = vld [vmem:[#allocation33 + $0x2d8] sm:$0xff]
    %v5878 = vld [vmem:[#allocation33 + $0x2e0] sm:$0xff]
    %v5879 = vld [vmem:[#allocation33 + $0x2e8] sm:$0xff]
    %v5880 = vld [vmem:[#allocation33 + $0x2f0] sm:$0xff]
    %v5881 = vld [vmem:[#allocation33 + $0x2f8] sm:$0xff]
    %v5882 = vld [vmem:[#allocation33 + $0x300] sm:$0xff]
    %v5883 = vld [vmem:[#allocation33 + $0x308] sm:$0xff]
    %v5884 = vld [vmem:[#allocation33 + $0x310] sm:$0xff]
    %v5885 = vld [vmem:[#allocation33 + $0x318] sm:$0xff]
    %v5886 = vld [vmem:[#allocation33 + $0x320] sm:$0xff]
    %v5887 = vld [vmem:[#allocation33 + $0x328] sm:$0xff]
    %v5888 = vld [vmem:[#allocation33 + $0x330] sm:$0xff]
    %v5889 = vld [vmem:[#allocation33 + $0x338] sm:$0xff]
    %v5890 = vld [vmem:[#allocation33 + $0x340] sm:$0xff]
    %v5891 = vld [vmem:[#allocation33 + $0x348] sm:$0xff]
    %v5892 = vld [vmem:[#allocation33 + $0x350] sm:$0xff]
    %v5893 = vld [vmem:[#allocation33 + $0x358] sm:$0xff]
    %v5894 = vld [vmem:[#allocation33 + $0x360] sm:$0xff]
    %v5895 = vld [vmem:[#allocation33 + $0x368] sm:$0xff]
    %v5896 = vld [vmem:[#allocation33 + $0x370] sm:$0xff]
    %v5897 = vld [vmem:[#allocation33 + $0x378] sm:$0xff]
    %v5898 = vld [vmem:[#allocation33 + $0x380] sm:$0xff]
    %v5899 = vld [vmem:[#allocation33 + $0x388] sm:$0xff]
    %v5900 = vld [vmem:[#allocation33 + $0x390] sm:$0xff]
    %v5901 = vld [vmem:[#allocation33 + $0x398] sm:$0xff]
    %v5902 = vld [vmem:[#allocation33 + $0x3a0] sm:$0xff]
    %v5903 = vld [vmem:[#allocation33 + $0x3a8] sm:$0xff]
    %v5904 = vld [vmem:[#allocation33 + $0x3b0] sm:$0xff]
    %v5905 = vld [vmem:[#allocation33 + $0x3b8] sm:$0xff]
    %v5906 = vld [vmem:[#allocation33 + $0x3c0] sm:$0xff]
    %v5907 = vld [vmem:[#allocation33 + $0x3c8] sm:$0xff]
    %v5908 = vld [vmem:[#allocation33 + $0x3d0] sm:$0xff]
    %v5909 = vld [vmem:[#allocation33 + $0x3d8] sm:$0xff]
    %v5910 = vld [vmem:[#allocation33 + $0x3e0] sm:$0xff]
    %v5911 = vld [vmem:[#allocation33 + $0x3e8] sm:$0xff]
    %v5912 = vld [vmem:[#allocation33 + $0x3f0] sm:$0xff]
    %v5913 = vld [vmem:[#allocation33 + $0x3f8] sm:$0xff]
    %v5914 = vld [vmem:[#allocation33 + $0x400] sm:$0xff]
    %v5915 = vld [vmem:[#allocation33 + $0x408] sm:$0xff]
    %v5916 = vld [vmem:[#allocation33 + $0x410] sm:$0xff]
    %v5917 = vld [vmem:[#allocation33 + $0x418] sm:$0xff]
    %v5918 = vld [vmem:[#allocation33 + $0x420] sm:$0xff]
    %v5919 = vld [vmem:[#allocation33 + $0x428] sm:$0xff]
    %v5920 = vld [vmem:[#allocation33 + $0x430] sm:$0xff]
    %v5921 = vld [vmem:[#allocation33 + $0x438] sm:$0xff]
    %v5922 = vld [vmem:[#allocation33 + $0x440] sm:$0xff]
    %v5923 = vld [vmem:[#allocation33 + $0x448] sm:$0xff]
    %v5924 = vld [vmem:[#allocation33 + $0x450] sm:$0xff]
    %v5925 = vld [vmem:[#allocation33 + $0x458] sm:$0xff]
    %v5926 = vld [vmem:[#allocation33 + $0x460] sm:$0xff]
    %v5927 = vld [vmem:[#allocation33 + $0x468] sm:$0xff]
    %v5928 = vld [vmem:[#allocation33 + $0x470] sm:$0xff]
    %v5929 = vld [vmem:[#allocation33 + $0x478] sm:$0xff]
    %v5930 = vld [vmem:[#allocation33 + $0x480] sm:$0xff]
    %v5931 = vld [vmem:[#allocation33 + $0x488] sm:$0xff]
    %v5932 = vld [vmem:[#allocation33 + $0x490] sm:$0xff]
    %v5933 = vld [vmem:[#allocation33 + $0x498] sm:$0xff]
    %v5934 = vld [vmem:[#allocation33 + $0x4a0] sm:$0xff]
    %v5935 = vld [vmem:[#allocation33 + $0x4a8] sm:$0xff]
    %v5936 = vld [vmem:[#allocation33 + $0x4b0] sm:$0xff]
    %v5937 = vld [vmem:[#allocation33 + $0x4b8] sm:$0xff]
    %v5938 = vld [vmem:[#allocation33 + $0x4c0] sm:$0xff]
    %v5939 = vld [vmem:[#allocation33 + $0x4c8] sm:$0xff]
    %v5940 = vld [vmem:[#allocation33 + $0x4d0] sm:$0xff]
    %v5941 = vld [vmem:[#allocation33 + $0x4d8] sm:$0xff]
    %v5942 = vld [vmem:[#allocation33 + $0x4e0] sm:$0xff]
    %v5943 = vld [vmem:[#allocation33 + $0x4e8] sm:$0xff]
    %v5944 = vld [vmem:[#allocation33 + $0x4f0] sm:$0xff]
    %v5945 = vld [vmem:[#allocation33 + $0x4f8] sm:$0xff]
    %v5946 = vld [vmem:[#allocation33 + $0x500] sm:$0xff]
    %v5947 = vld [vmem:[#allocation33 + $0x508] sm:$0xff]
    %v5948 = vld [vmem:[#allocation33 + $0x510] sm:$0xff]
    %v5949 = vld [vmem:[#allocation33 + $0x518] sm:$0xff]
    %v5950 = vld [vmem:[#allocation33 + $0x520] sm:$0xff]
    %v5951 = vld [vmem:[#allocation33 + $0x528] sm:$0xff]
    %v5952 = vld [vmem:[#allocation33 + $0x530] sm:$0xff]
    %v5953 = vld [vmem:[#allocation33 + $0x538] sm:$0xff]
    %v5954 = vld [vmem:[#allocation33 + $0x540] sm:$0xff]
    %v5955 = vld [vmem:[#allocation33 + $0x548] sm:$0xff]
    %v5956 = vld [vmem:[#allocation33 + $0x550] sm:$0xff]
    %v5957 = vld [vmem:[#allocation33 + $0x558] sm:$0xff]
    %v5958 = vld [vmem:[#allocation33 + $0x560] sm:$0xff]
    %v5959 = vld [vmem:[#allocation33 + $0x568] sm:$0xff]
    %v5960 = vld [vmem:[#allocation33 + $0x570] sm:$0xff]
    %v5961 = vld [vmem:[#allocation33 + $0x578] sm:$0xff]
    %v5962 = vld [vmem:[#allocation33 + $0x580] sm:$0xff]
    %v5963 = vld [vmem:[#allocation33 + $0x588] sm:$0xff]
    %v5964 = vld [vmem:[#allocation33 + $0x590] sm:$0xff]
    %v5965 = vld [vmem:[#allocation33 + $0x598] sm:$0xff]
    %v5966 = vld [vmem:[#allocation33 + $0x5a0] sm:$0xff]
    %v5967 = vld [vmem:[#allocation33 + $0x5a8] sm:$0xff]
    %v5968 = vld [vmem:[#allocation33 + $0x5b0] sm:$0xff]
    %v5969 = vld [vmem:[#allocation33 + $0x5b8] sm:$0xff]
    %v5970 = vld [vmem:[#allocation33 + $0x5c0] sm:$0xff]
    %v5971 = vld [vmem:[#allocation33 + $0x5c8] sm:$0xff]
    %v5972 = vld [vmem:[#allocation33 + $0x5d0] sm:$0xff]
    %v5973 = vld [vmem:[#allocation33 + $0x5d8] sm:$0xff]
    %v5974 = vld [vmem:[#allocation33 + $0x5e0] sm:$0xff]
    %v5975 = vld [vmem:[#allocation33 + $0x5e8] sm:$0xff]
    %v5976 = vld [vmem:[#allocation33 + $0x5f0] sm:$0xff]
    %v5977 = vld [vmem:[#allocation33 + $0x5f8] sm:$0xff]
    %v5978 = vld [vmem:[#allocation33 + $0x600] sm:$0xff]
    %v5979 = vld [vmem:[#allocation33 + $0x608] sm:$0xff]
    %v5980 = vld [vmem:[#allocation33 + $0x610] sm:$0xff]
    %v5981 = vld [vmem:[#allocation33 + $0x618] sm:$0xff]
    %v5982 = vld [vmem:[#allocation33 + $0x620] sm:$0xff]
    %v5983 = vld [vmem:[#allocation33 + $0x628] sm:$0xff]
    %v5984 = vld [vmem:[#allocation33 + $0x630] sm:$0xff]
    %v5985 = vld [vmem:[#allocation33 + $0x638] sm:$0xff]
    %v5986 = vld [vmem:[#allocation33 + $0x640] sm:$0xff]
    %v5987 = vld [vmem:[#allocation33 + $0x648] sm:$0xff]
    %v5988 = vld [vmem:[#allocation33 + $0x650] sm:$0xff]
    %v5989 = vld [vmem:[#allocation33 + $0x658] sm:$0xff]
    %v5990 = vld [vmem:[#allocation33 + $0x660] sm:$0xff]
    %v5991 = vld [vmem:[#allocation33 + $0x668] sm:$0xff]
    %v5992 = vld [vmem:[#allocation33 + $0x670] sm:$0xff]
    %v5993 = vld [vmem:[#allocation33 + $0x678] sm:$0xff]
    %v5994 = vld [vmem:[#allocation33 + $0x680] sm:$0xff]
    %v5995 = vld [vmem:[#allocation33 + $0x688] sm:$0xff]
    %v5996 = vld [vmem:[#allocation33 + $0x690] sm:$0xff]
    %v5997 = vld [vmem:[#allocation33 + $0x698] sm:$0xff]
    %v5998 = vld [vmem:[#allocation33 + $0x6a0] sm:$0xff]
    %v5999 = vld [vmem:[#allocation33 + $0x6a8] sm:$0xff]
    %v6000 = vld [vmem:[#allocation33 + $0x6b0] sm:$0xff]
    %v6001 = vld [vmem:[#allocation33 + $0x6b8] sm:$0xff]
    %v6002 = vld [vmem:[#allocation33 + $0x6c0] sm:$0xff]
    %v6003 = vld [vmem:[#allocation33 + $0x6c8] sm:$0xff]
    %v6004 = vld [vmem:[#allocation33 + $0x6d0] sm:$0xff]
    %v6005 = vld [vmem:[#allocation33 + $0x6d8] sm:$0xff]
    %v6006 = vld [vmem:[#allocation33 + $0x6e0] sm:$0xff]
    %v6007 = vld [vmem:[#allocation33 + $0x6e8] sm:$0xff]
    %v6008 = vld [vmem:[#allocation33 + $0x6f0] sm:$0xff]
    %v6009 = vld [vmem:[#allocation33 + $0x6f8] sm:$0xff]
    %v6010 = vld [vmem:[#allocation33 + $0x700] sm:$0xff]
    %v6011 = vld [vmem:[#allocation33 + $0x708] sm:$0xff]
    %v6012 = vld [vmem:[#allocation33 + $0x710] sm:$0xff]
    %v6013 = vld [vmem:[#allocation33 + $0x718] sm:$0xff]
    %v6014 = vld [vmem:[#allocation33 + $0x720] sm:$0xff]
    %v6015 = vld [vmem:[#allocation33 + $0x728] sm:$0xff]
    %v6016 = vld [vmem:[#allocation33 + $0x730] sm:$0xff]
    %v6017 = vld [vmem:[#allocation33 + $0x738] sm:$0xff]
    %v6018 = vld [vmem:[#allocation33 + $0x740] sm:$0xff]
    %v6019 = vld [vmem:[#allocation33 + $0x748] sm:$0xff]
    %v6020 = vld [vmem:[#allocation33 + $0x750] sm:$0xff]
    %v6021 = vld [vmem:[#allocation33 + $0x758] sm:$0xff]
    %v6022 = vld [vmem:[#allocation33 + $0x760] sm:$0xff]
    %v6023 = vld [vmem:[#allocation33 + $0x768] sm:$0xff]
    %v6024 = vld [vmem:[#allocation33 + $0x770] sm:$0xff]
    %v6025 = vld [vmem:[#allocation33 + $0x778] sm:$0xff]
    %v6026 = vld [vmem:[#allocation33 + $0x780] sm:$0xff]
    %v6027 = vld [vmem:[#allocation33 + $0x788] sm:$0xff]
    %v6028 = vld [vmem:[#allocation33 + $0x790] sm:$0xff]
    %v6029 = vld [vmem:[#allocation33 + $0x798] sm:$0xff]
    %v6030 = vld [vmem:[#allocation33 + $0x7a0] sm:$0xff]
    %v6031 = vld [vmem:[#allocation33 + $0x7a8] sm:$0xff]
    %v6032 = vld [vmem:[#allocation33 + $0x7b0] sm:$0xff]
    %v6033 = vld [vmem:[#allocation33 + $0x7b8] sm:$0xff]
    %v6034 = vld [vmem:[#allocation33 + $0x7c0] sm:$0xff]
    %v6035 = vld [vmem:[#allocation33 + $0x7c8] sm:$0xff]
    %v6036 = vld [vmem:[#allocation33 + $0x7d0] sm:$0xff]
    %v6037 = vld [vmem:[#allocation33 + $0x7d8] sm:$0xff]
    %v6038 = vld [vmem:[#allocation33 + $0x7e0] sm:$0xff]
    %v6039 = vld [vmem:[#allocation33 + $0x7e8] sm:$0xff]
    %v6040 = vld [vmem:[#allocation33 + $0x7f0] sm:$0xff]
    %v6041 = vld [vmem:[#allocation33 + $0x7f8] sm:$0xff]
    %v6042 = vld [vmem:[#allocation33 + $0x800] sm:$0xff]
    %v6043 = vld [vmem:[#allocation33 + $0x808] sm:$0xff]
    %v6044 = vld [vmem:[#allocation33 + $0x810] sm:$0xff]
    %v6045 = vld [vmem:[#allocation33 + $0x818] sm:$0xff]
    %v6046 = vld [vmem:[#allocation33 + $0x820] sm:$0xff]
    %v6047 = vld [vmem:[#allocation33 + $0x828] sm:$0xff]
    %v6048 = vld [vmem:[#allocation33 + $0x830] sm:$0xff]
    %v6049 = vld [vmem:[#allocation33 + $0x838] sm:$0xff]
    %v6050 = vld [vmem:[#allocation33 + $0x840] sm:$0xff]
    %v6051 = vld [vmem:[#allocation33 + $0x848] sm:$0xff]
    %v6052 = vld [vmem:[#allocation33 + $0x850] sm:$0xff]
    %v6053 = vld [vmem:[#allocation33 + $0x858] sm:$0xff]
    %v6054 = vld [vmem:[#allocation33 + $0x860] sm:$0xff]
    %v6055 = vld [vmem:[#allocation33 + $0x868] sm:$0xff]
    %v6056 = vld [vmem:[#allocation33 + $0x870] sm:$0xff]
    %v6057 = vld [vmem:[#allocation33 + $0x878] sm:$0xff]
    %v6058 = vld [vmem:[#allocation33 + $0x880] sm:$0xff]
    %v6059 = vld [vmem:[#allocation33 + $0x888] sm:$0xff]
    %v6060 = vld [vmem:[#allocation33 + $0x890] sm:$0xff]
    %v6061 = vld [vmem:[#allocation33 + $0x898] sm:$0xff]
    %v6062 = vld [vmem:[#allocation33 + $0x8a0] sm:$0xff]
    %v6063 = vld [vmem:[#allocation33 + $0x8a8] sm:$0xff]
    %v6064 = vld [vmem:[#allocation33 + $0x8b0] sm:$0xff]
    %v6065 = vld [vmem:[#allocation33 + $0x8b8] sm:$0xff]
    %v6066 = vld [vmem:[#allocation33 + $0x8c0] sm:$0xff]
    %v6067 = vld [vmem:[#allocation33 + $0x8c8] sm:$0xff]
    %v6068 = vld [vmem:[#allocation33 + $0x8d0] sm:$0xff]
    %v6069 = vld [vmem:[#allocation33 + $0x8d8] sm:$0xff]
    %v6070 = vld [vmem:[#allocation33 + $0x8e0] sm:$0xff]
    %v6071 = vld [vmem:[#allocation33 + $0x8e8] sm:$0xff]
    %v6072 = vld [vmem:[#allocation33 + $0x8f0] sm:$0xff]
    %v6073 = vld [vmem:[#allocation33 + $0x8f8] sm:$0xff]
    %v6074 = vld [vmem:[#allocation33 + $0x900] sm:$0xff]
    %v6075 = vld [vmem:[#allocation33 + $0x908] sm:$0xff]
    %v6076 = vld [vmem:[#allocation33 + $0x910] sm:$0xff]
    %v6077 = vld [vmem:[#allocation33 + $0x918] sm:$0xff]
    %v6078 = vld [vmem:[#allocation33 + $0x920] sm:$0xff]
    %v6079 = vld [vmem:[#allocation33 + $0x928] sm:$0xff]
    %v6080 = vld [vmem:[#allocation33 + $0x930] sm:$0xff]
    %v6081 = vld [vmem:[#allocation33 + $0x938] sm:$0xff]
    %v6082 = vld [vmem:[#allocation33 + $0x940] sm:$0xff]
    %v6083 = vld [vmem:[#allocation33 + $0x948] sm:$0xff]
    %v6084 = vld [vmem:[#allocation33 + $0x950] sm:$0xff]
    %v6085 = vld [vmem:[#allocation33 + $0x958] sm:$0xff]
    %v6086 = vld [vmem:[#allocation33 + $0x960] sm:$0xff]
    %v6087 = vld [vmem:[#allocation33 + $0x968] sm:$0xff]
    %v6088 = vld [vmem:[#allocation33 + $0x970] sm:$0xff]
    %v6089 = vld [vmem:[#allocation33 + $0x978] sm:$0xff]
    %v6090 = vld [vmem:[#allocation33 + $0x980] sm:$0xff]
    %v6091 = vld [vmem:[#allocation33 + $0x988] sm:$0xff]
    %v6092 = vld [vmem:[#allocation33 + $0x990] sm:$0xff]
    %v6093 = vld [vmem:[#allocation33 + $0x998] sm:$0xff]
    %v6094 = vld [vmem:[#allocation33 + $0x9a0] sm:$0xff]
    %v6095 = vld [vmem:[#allocation33 + $0x9a8] sm:$0xff]
    %v6096 = vld [vmem:[#allocation33 + $0x9b0] sm:$0xff]
    %v6097 = vld [vmem:[#allocation33 + $0x9b8] sm:$0xff]
    %v6098 = vld [vmem:[#allocation33 + $0x9c0] sm:$0xff]
    %v6099 = vld [vmem:[#allocation33 + $0x9c8] sm:$0xff]
    %v6100 = vld [vmem:[#allocation33 + $0x9d0] sm:$0xff]
    %v6101 = vld [vmem:[#allocation33 + $0x9d8] sm:$0xff]
    %v6102 = vld [vmem:[#allocation33 + $0x9e0] sm:$0xff]
    %v6103 = vld [vmem:[#allocation33 + $0x9e8] sm:$0xff]
    %v6104 = vld [vmem:[#allocation33 + $0x9f0] sm:$0xff]
    %v6105 = vld [vmem:[#allocation33 + $0x9f8] sm:$0xff]
    %v6106 = vld [vmem:[#allocation33 + $0xa00] sm:$0xff]
    %v6107 = vld [vmem:[#allocation33 + $0xa08] sm:$0xff]
    %v6108 = vld [vmem:[#allocation33 + $0xa10] sm:$0xff]
    %v6109 = vld [vmem:[#allocation33 + $0xa18] sm:$0xff]
    %v6110 = vld [vmem:[#allocation33 + $0xa20] sm:$0xff]
    %v6111 = vld [vmem:[#allocation33 + $0xa28] sm:$0xff]
    %v6112 = vld [vmem:[#allocation33 + $0xa30] sm:$0xff]
    %v6113 = vld [vmem:[#allocation33 + $0xa38] sm:$0xff]
    %v6114 = vld [vmem:[#allocation33 + $0xa40] sm:$0xff]
    %v6115 = vld [vmem:[#allocation33 + $0xa48] sm:$0xff]
    %v6116 = vld [vmem:[#allocation33 + $0xa50] sm:$0xff]
    %v6117 = vld [vmem:[#allocation33 + $0xa58] sm:$0xff]
    %v6118 = vld [vmem:[#allocation33 + $0xa60] sm:$0xff]
    %v6119 = vld [vmem:[#allocation33 + $0xa68] sm:$0xff]
    %v6120 = vld [vmem:[#allocation33 + $0xa70] sm:$0xff]
    %v6121 = vld [vmem:[#allocation33 + $0xa78] sm:$0xff]
    %v6122 = vld [vmem:[#allocation33 + $0xa80] sm:$0xff]
    %v6123 = vld [vmem:[#allocation33 + $0xa88] sm:$0xff]
    %v6124 = vld [vmem:[#allocation33 + $0xa90] sm:$0xff]
    %v6125 = vld [vmem:[#allocation33 + $0xa98] sm:$0xff]
    %v6126 = vld [vmem:[#allocation33 + $0xaa0] sm:$0xff]
    %v6127 = vld [vmem:[#allocation33 + $0xaa8] sm:$0xff]
    %v6128 = vld [vmem:[#allocation33 + $0xab0] sm:$0xff]
    %v6129 = vld [vmem:[#allocation33 + $0xab8] sm:$0xff]
    %v6130 = vld [vmem:[#allocation33 + $0xac0] sm:$0xff]
    %v6131 = vld [vmem:[#allocation33 + $0xac8] sm:$0xff]
    %v6132 = vld [vmem:[#allocation33 + $0xad0] sm:$0xff]
    %v6133 = vld [vmem:[#allocation33 + $0xad8] sm:$0xff]
    %v6134 = vld [vmem:[#allocation33 + $0xae0] sm:$0xff]
    %v6135 = vld [vmem:[#allocation33 + $0xae8] sm:$0xff]
    %v6136 = vld [vmem:[#allocation33 + $0xaf0] sm:$0xff]
    %v6137 = vld [vmem:[#allocation33 + $0xaf8] sm:$0xff]
    %v6138 = vld [vmem:[#allocation33 + $0xb00] sm:$0xff]
    %v6139 = vld [vmem:[#allocation33 + $0xb08] sm:$0xff]
    %v6140 = vld [vmem:[#allocation33 + $0xb10] sm:$0xff]
    %v6141 = vld [vmem:[#allocation33 + $0xb18] sm:$0xff]
    %v6142 = vld [vmem:[#allocation33 + $0xb20] sm:$0xff]
    %v6143 = vld [vmem:[#allocation33 + $0xb28] sm:$0xff]
    %v6144 = vld [vmem:[#allocation33 + $0xb30] sm:$0xff]
    %v6145 = vld [vmem:[#allocation33 + $0xb38] sm:$0xff]
    %v6146 = vpack.c.bf16 %v5781, %v5781
    %v6147 = vpack.c.bf16 %v5782, %v5782
    %v6148 = vpack.c.bf16 %v5783, %v5783
    %v6149 = vpack.c.bf16 %v5784, %v5784
    %v6150 = vpack.c.bf16 %v5785, %v5785
    %v6151 = vpack.c.bf16 %v5791, %v5786
    %v6152 = vpack.c.bf16 %v5792, %v5787
    %v6153 = vpack.c.bf16 %v5793, %v5788
    %v6154 = vpack.c.bf16 %v5794, %v5789
    %v6155 = vpack.c.bf16 %v5795, %v5790
    %v6156 = vpack.c.bf16 %v5801, %v5796
    %v6157 = vpack.c.bf16 %v5802, %v5797
    %v6158 = vpack.c.bf16 %v5803, %v5798
    %v6159 = vpack.c.bf16 %v5804, %v5799
    %v6160 = vpack.c.bf16 %v5805, %v5800
    %v6161 = vpack.c.bf16 %v5811, %v5806
    %v6162 = vpack.c.bf16 %v5812, %v5807
    %v6163 = vpack.c.bf16 %v5813, %v5808
    %v6164 = vpack.c.bf16 %v5814, %v5809
    %v6165 = vpack.c.bf16 %v5815, %v5810
    %v6166 = vpack.c.bf16 %v5821, %v5816
    %v6167 = vpack.c.bf16 %v5822, %v5817
    %v6168 = vpack.c.bf16 %v5823, %v5818
    %v6169 = vpack.c.bf16 %v5824, %v5819
    %v6170 = vpack.c.bf16 %v5825, %v5820
    %v6171 = vpack.c.bf16 %v5831, %v5826
    %v6172 = vpack.c.bf16 %v5832, %v5827
    %v6173 = vpack.c.bf16 %v5833, %v5828
    %v6174 = vpack.c.bf16 %v5834, %v5829
    %v6175 = vpack.c.bf16 %v5835, %v5830
    %v6176 = vpack.c.bf16 %v5841, %v5836
    %v6177 = vpack.c.bf16 %v5842, %v5837
    %v6178 = vpack.c.bf16 %v5843, %v5838
    %v6179 = vpack.c.bf16 %v5844, %v5839
    %v6180 = vpack.c.bf16 %v5845, %v5840
    %v6181 = vpack.c.bf16 %v5851, %v5846
    %v6182 = vpack.c.bf16 %v5852, %v5847
    %v6183 = vpack.c.bf16 %v5853, %v5848
    %v6184 = vpack.c.bf16 %v5854, %v5849
    %v6185 = vpack.c.bf16 %v5855, %v5850
    %v6186 = vpack.c.bf16 %v5861, %v5856
    %v6187 = vpack.c.bf16 %v5862, %v5857
    %v6188 = vpack.c.bf16 %v5863, %v5858
    %v6189 = vpack.c.bf16 %v5864, %v5859
    %v6190 = vpack.c.bf16 %v5865, %v5860
    %v6191 = vpack.c.bf16 %v5871, %v5866
    %v6192 = vpack.c.bf16 %v5872, %v5867
    %v6193 = vpack.c.bf16 %v5873, %v5868
    %v6194 = vpack.c.bf16 %v5874, %v5869
    %v6195 = vpack.c.bf16 %v5875, %v5870
    %v6196 = vpack.c.bf16 %v5881, %v5876
    %v6197 = vpack.c.bf16 %v5882, %v5877
    %v6198 = vpack.c.bf16 %v5883, %v5878
    %v6199 = vpack.c.bf16 %v5884, %v5879
    %v6200 = vpack.c.bf16 %v5885, %v5880
    %v6201 = vpack.c.bf16 %v5891, %v5886
    %v6202 = vpack.c.bf16 %v5892, %v5887
    %v6203 = vpack.c.bf16 %v5893, %v5888
    %v6204 = vpack.c.bf16 %v5894, %v5889
    %v6205 = vpack.c.bf16 %v5895, %v5890
    %v6206 = vpack.c.bf16 %v5901, %v5896
    %v6207 = vpack.c.bf16 %v5902, %v5897
    %v6208 = vpack.c.bf16 %v5903, %v5898
    %v6209 = vpack.c.bf16 %v5904, %v5899
    %v6210 = vpack.c.bf16 %v5905, %v5900
    %v6211 = vpack.c.bf16 %v5911, %v5906
    %v6212 = vpack.c.bf16 %v5912, %v5907
    %v6213 = vpack.c.bf16 %v5913, %v5908
    %v6214 = vpack.c.bf16 %v5914, %v5909
    %v6215 = vpack.c.bf16 %v5915, %v5910
    %v6216 = vpack.c.bf16 %v5921, %v5916
    %v6217 = vpack.c.bf16 %v5922, %v5917
    %v6218 = vpack.c.bf16 %v5923, %v5918
    %v6219 = vpack.c.bf16 %v5924, %v5919
    %v6220 = vpack.c.bf16 %v5925, %v5920
    %v6221 = vpack.c.bf16 %v5931, %v5926
    %v6222 = vpack.c.bf16 %v5932, %v5927
    %v6223 = vpack.c.bf16 %v5933, %v5928
    %v6224 = vpack.c.bf16 %v5934, %v5929
    %v6225 = vpack.c.bf16 %v5935, %v5930
    %v6226 = vpack.c.bf16 %v5941, %v5936
    %v6227 = vpack.c.bf16 %v5942, %v5937
    %v6228 = vpack.c.bf16 %v5943, %v5938
    %v6229 = vpack.c.bf16 %v5944, %v5939
    %v6230 = vpack.c.bf16 %v5945, %v5940
    %v6231 = vpack.c.bf16 %v5951, %v5946
    %v6232 = vpack.c.bf16 %v5952, %v5947
    %v6233 = vpack.c.bf16 %v5953, %v5948
    %v6234 = vpack.c.bf16 %v5954, %v5949
    %v6235 = vpack.c.bf16 %v5955, %v5950
    %v6236 = vpack.c.bf16 %v5961, %v5956
    %v6237 = vpack.c.bf16 %v5962, %v5957
    %v6238 = vpack.c.bf16 %v5963, %v5958
    %v6239 = vpack.c.bf16 %v5964, %v5959
    %v6240 = vpack.c.bf16 %v5965, %v5960
    %v6241 = vpack.c.bf16 %v5971, %v5966
    %v6242 = vpack.c.bf16 %v5972, %v5967
    %v6243 = vpack.c.bf16 %v5973, %v5968
    %v6244 = vpack.c.bf16 %v5974, %v5969
    %v6245 = vpack.c.bf16 %v5975, %v5970
    %v6246 = vpack.c.bf16 %v5981, %v5976
    %v6247 = vpack.c.bf16 %v5982, %v5977
    %v6248 = vpack.c.bf16 %v5983, %v5978
    %v6249 = vpack.c.bf16 %v5984, %v5979
    %v6250 = vpack.c.bf16 %v5985, %v5980
    %v6251 = vpack.c.bf16 %v5991, %v5986
    %v6252 = vpack.c.bf16 %v5992, %v5987
    %v6253 = vpack.c.bf16 %v5993, %v5988
    %v6254 = vpack.c.bf16 %v5994, %v5989
    %v6255 = vpack.c.bf16 %v5995, %v5990
    %v6256 = vpack.c.bf16 %v6001, %v5996
    %v6257 = vpack.c.bf16 %v6002, %v5997
    %v6258 = vpack.c.bf16 %v6003, %v5998
    %v6259 = vpack.c.bf16 %v6004, %v5999
    %v6260 = vpack.c.bf16 %v6005, %v6000
    %v6261 = vpack.c.bf16 %v6011, %v6006
    %v6262 = vpack.c.bf16 %v6012, %v6007
    %v6263 = vpack.c.bf16 %v6013, %v6008
    %v6264 = vpack.c.bf16 %v6014, %v6009
    %v6265 = vpack.c.bf16 %v6015, %v6010
    %v6266 = vpack.c.bf16 %v6021, %v6016
    %v6267 = vpack.c.bf16 %v6022, %v6017
    %v6268 = vpack.c.bf16 %v6023, %v6018
    %v6269 = vpack.c.bf16 %v6024, %v6019
    %v6270 = vpack.c.bf16 %v6025, %v6020
    %v6271 = vpack.c.bf16 %v6031, %v6026
    %v6272 = vpack.c.bf16 %v6032, %v6027
    %v6273 = vpack.c.bf16 %v6033, %v6028
    %v6274 = vpack.c.bf16 %v6034, %v6029
    %v6275 = vpack.c.bf16 %v6035, %v6030
    %v6276 = vpack.c.bf16 %v6041, %v6036
    %v6277 = vpack.c.bf16 %v6042, %v6037
    %v6278 = vpack.c.bf16 %v6043, %v6038
    %v6279 = vpack.c.bf16 %v6044, %v6039
    %v6280 = vpack.c.bf16 %v6045, %v6040
    %v6281 = vpack.c.bf16 %v6051, %v6046
    %v6282 = vpack.c.bf16 %v6052, %v6047
    %v6283 = vpack.c.bf16 %v6053, %v6048
    %v6284 = vpack.c.bf16 %v6054, %v6049
    %v6285 = vpack.c.bf16 %v6055, %v6050
    %v6286 = vpack.c.bf16 %v6061, %v6056
    %v6287 = vpack.c.bf16 %v6062, %v6057
    %v6288 = vpack.c.bf16 %v6063, %v6058
    %v6289 = vpack.c.bf16 %v6064, %v6059
    %v6290 = vpack.c.bf16 %v6065, %v6060
    %v6291 = vpack.c.bf16 %v6071, %v6066
    %v6292 = vpack.c.bf16 %v6072, %v6067
    %v6293 = vpack.c.bf16 %v6073, %v6068
    %v6294 = vpack.c.bf16 %v6074, %v6069
    %v6295 = vpack.c.bf16 %v6075, %v6070
    %v6296 = vpack.c.bf16 %v6081, %v6076
    %v6297 = vpack.c.bf16 %v6082, %v6077
    %v6298 = vpack.c.bf16 %v6083, %v6078
    %v6299 = vpack.c.bf16 %v6084, %v6079
    %v6300 = vpack.c.bf16 %v6085, %v6080
    %v6301 = vpack.c.bf16 %v6091, %v6086
    %v6302 = vpack.c.bf16 %v6092, %v6087
    %v6303 = vpack.c.bf16 %v6093, %v6088
    %v6304 = vpack.c.bf16 %v6094, %v6089
    %v6305 = vpack.c.bf16 %v6095, %v6090
    %v6306 = vpack.c.bf16 %v6101, %v6096
    %v6307 = vpack.c.bf16 %v6102, %v6097
    %v6308 = vpack.c.bf16 %v6103, %v6098
    %v6309 = vpack.c.bf16 %v6104, %v6099
    %v6310 = vpack.c.bf16 %v6105, %v6100
    %v6311 = vpack.c.bf16 %v6111, %v6106
    %v6312 = vpack.c.bf16 %v6112, %v6107
    %v6313 = vpack.c.bf16 %v6113, %v6108
    %v6314 = vpack.c.bf16 %v6114, %v6109
    %v6315 = vpack.c.bf16 %v6115, %v6110
    %v6316 = vpack.c.bf16 %v6121, %v6116
    %v6317 = vpack.c.bf16 %v6122, %v6117
    %v6318 = vpack.c.bf16 %v6123, %v6118
    %v6319 = vpack.c.bf16 %v6124, %v6119
    %v6320 = vpack.c.bf16 %v6125, %v6120
    %v6321 = vpack.c.bf16 %v6131, %v6126
    %v6322 = vpack.c.bf16 %v6132, %v6127
    %v6323 = vpack.c.bf16 %v6133, %v6128
    %v6324 = vpack.c.bf16 %v6134, %v6129
    %v6325 = vpack.c.bf16 %v6135, %v6130
    %v6326 = vpack.c.bf16 %v6141, %v6136
    %v6327 = vpack.c.bf16 %v6142, %v6137
    %v6328 = vpack.c.bf16 %v6143, %v6138
    %v6329 = vpack.c.bf16 %v6144, %v6139
    %v6330 = vpack.c.bf16 %v6145, %v6140
    %v6331 = vld [vmem:[%s83] sm:$0x1f]
    %v6333 = vperm.slane %v6331, 0
    %v6334 = vperm.slane %v6331, 1
    %v6335 = vperm.slane %v6331, 2
    %v6336 = vperm.slane %v6331, 3
    %v6337 = vperm.slane %v6331, 4
    %v6344 = vsel %vm4308, %v6150, 0
    %6346 = vmatpush.bf16.msra.mxu0 %v6186
    %6347 = vmatpush.bf16.msra.mxu0 %v6181
    %6348 = vmatpush.bf16.msra.mxu0 %v6176
    %6349 = vmatpush.bf16.msra.mxu0 %v6171
    %6350 = vmatpush.bf16.msra.mxu0 %v6166
    %6351 = vmatpush.bf16.msra.mxu0 %v6161
    %6352 = vmatpush.bf16.msra.mxu0 %v6156
    %6353 = vmatpush.bf16.msra.mxu0 %v6151
    %6354 = vmatmul.bf16.gmra.mxu0 %v6146
    %v6355 = vpop.f32.mrf.mxu0
    %v6356 = vadd.f32 %v6333, %v6355
    %v6357 = vpop.f32.mrf.mxu0
    %6358 = vdwg.mxu0
    %6359 = vmatpush.bf16.msra.mxu0 %v6226
    %6360 = vmatpush.bf16.msra.mxu0 %v6221
    %6361 = vmatpush.bf16.msra.mxu0 %v6216
    %6362 = vmatpush.bf16.msra.mxu0 %v6211
    %6363 = vmatpush.bf16.msra.mxu0 %v6206
    %6364 = vmatpush.bf16.msra.mxu0 %v6201
    %6365 = vmatpush.bf16.msra.mxu0 %v6196
    %6366 = vmatpush.bf16.msra.mxu0 %v6191
    %6367 = vmatmul.bf16.gmra.mxu0 %v6147
    %v6368 = vpop.f32.mrf.mxu0
    %v6369 = vadd.f32 %v6356, %v6368
    %v6370 = vpop.f32.mrf.mxu0
    %6371 = vdwg.mxu0
    %6372 = vmatpush.bf16.msra.mxu0 %v6266
    %6373 = vmatpush.bf16.msra.mxu0 %v6261
    %6374 = vmatpush.bf16.msra.mxu0 %v6256
    %6375 = vmatpush.bf16.msra.mxu0 %v6251
    %6376 = vmatpush.bf16.msra.mxu0 %v6246
    %6377 = vmatpush.bf16.msra.mxu0 %v6241
    %6378 = vmatpush.bf16.msra.mxu0 %v6236
    %6379 = vmatpush.bf16.msra.mxu0 %v6231
    %6380 = vmatmul.bf16.gmra.mxu0 %v6148
    %v6381 = vpop.f32.mrf.mxu0
    %v6382 = vadd.f32 %v6369, %v6381
    %v6383 = vpop.f32.mrf.mxu0
    %6384 = vdwg.mxu0
    %6385 = vmatpush.bf16.msra.mxu0 %v6306
    %6386 = vmatpush.bf16.msra.mxu0 %v6301
    %6387 = vmatpush.bf16.msra.mxu0 %v6296
    %6388 = vmatpush.bf16.msra.mxu0 %v6291
    %6389 = vmatpush.bf16.msra.mxu0 %v6286
    %6390 = vmatpush.bf16.msra.mxu0 %v6281
    %6391 = vmatpush.bf16.msra.mxu0 %v6276
    %6392 = vmatpush.bf16.msra.mxu0 %v6271
    %6393 = vmatmul.bf16.gmra.mxu0 %v6149
    %v6394 = vpop.f32.mrf.mxu0
    %v6395 = vadd.f32 %v6382, %v6394
    %v6396 = vpop.f32.mrf.mxu0
    %6397 = vdwg.mxu0
    %6398 = vmatpush.bf16.msra.mxu0 0
    %6399 = vmatpush.bf16.msra.mxu0 0
    %6400 = vmatpush.bf16.msra.mxu0 0
    %6401 = vmatpush.bf16.msra.mxu0 0
    %6402 = vmatpush.bf16.msra.mxu0 %v6326
    %6403 = vmatpush.bf16.msra.mxu0 %v6321
    %6404 = vmatpush.bf16.msra.mxu0 %v6316
    %6405 = vmatpush.bf16.msra.mxu0 %v6311
    %6406 = vmatmul.bf16.gmra.mxu0 %v6344
    %v6407 = vpop.f32.mrf.mxu0
    %v6408 = vadd.f32 %v6395, %v6407
    %v6409 = vpop.f32.mrf.mxu0
    %6410 = vdwg.mxu0
    %6411 = vmatpush.bf16.msra.mxu0 %v6187
    %6412 = vmatpush.bf16.msra.mxu0 %v6182
    %6413 = vmatpush.bf16.msra.mxu0 %v6177
    %6414 = vmatpush.bf16.msra.mxu0 %v6172
    %6415 = vmatpush.bf16.msra.mxu0 %v6167
    %6416 = vmatpush.bf16.msra.mxu0 %v6162
    %6417 = vmatpush.bf16.msra.mxu0 %v6157
    %6418 = vmatpush.bf16.msra.mxu0 %v6152
    %6419 = vmatmul.bf16.gmra.mxu0 %v6146
    %v6420 = vpop.f32.mrf.mxu0
    %v6421 = vadd.f32 %v6334, %v6420
    %v6422 = vpop.f32.mrf.mxu0
    %6423 = vdwg.mxu0
    %6424 = vmatpush.bf16.msra.mxu0 %v6227
    %6425 = vmatpush.bf16.msra.mxu0 %v6222
    %6426 = vmatpush.bf16.msra.mxu0 %v6217
    %6427 = vmatpush.bf16.msra.mxu0 %v6212
    %6428 = vmatpush.bf16.msra.mxu0 %v6207
    %6429 = vmatpush.bf16.msra.mxu0 %v6202
    %6430 = vmatpush.bf16.msra.mxu0 %v6197
    %6431 = vmatpush.bf16.msra.mxu0 %v6192
    %6432 = vmatmul.bf16.gmra.mxu0 %v6147
    %v6433 = vpop.f32.mrf.mxu0
    %v6434 = vadd.f32 %v6421, %v6433
    %v6435 = vpop.f32.mrf.mxu0
    %6436 = vdwg.mxu0
    %6437 = vmatpush.bf16.msra.mxu0 %v6267
    %6438 = vmatpush.bf16.msra.mxu0 %v6262
    %6439 = vmatpush.bf16.msra.mxu0 %v6257
    %6440 = vmatpush.bf16.msra.mxu0 %v6252
    %6441 = vmatpush.bf16.msra.mxu0 %v6247
    %6442 = vmatpush.bf16.msra.mxu0 %v6242
    %6443 = vmatpush.bf16.msra.mxu0 %v6237
    %6444 = vmatpush.bf16.msra.mxu0 %v6232
    %6445 = vmatmul.bf16.gmra.mxu0 %v6148
    %v6446 = vpop.f32.mrf.mxu0
    %v6447 = vadd.f32 %v6434, %v6446
    %v6448 = vpop.f32.mrf.mxu0
    %6449 = vdwg.mxu0
    %6450 = vmatpush.bf16.msra.mxu0 %v6307
    %6451 = vmatpush.bf16.msra.mxu0 %v6302
    %6452 = vmatpush.bf16.msra.mxu0 %v6297
    %6453 = vmatpush.bf16.msra.mxu0 %v6292
    %6454 = vmatpush.bf16.msra.mxu0 %v6287
    %6455 = vmatpush.bf16.msra.mxu0 %v6282
    %6456 = vmatpush.bf16.msra.mxu0 %v6277
    %6457 = vmatpush.bf16.msra.mxu0 %v6272
    %6458 = vmatmul.bf16.gmra.mxu0 %v6149
    %v6459 = vpop.f32.mrf.mxu0
    %v6460 = vadd.f32 %v6447, %v6459
    %v6461 = vpop.f32.mrf.mxu0
    %6462 = vdwg.mxu0
    %6463 = vmatpush.bf16.msra.mxu0 0
    %6464 = vmatpush.bf16.msra.mxu0 0
    %6465 = vmatpush.bf16.msra.mxu0 0
    %6466 = vmatpush.bf16.msra.mxu0 0
    %6467 = vmatpush.bf16.msra.mxu0 %v6327
    %6468 = vmatpush.bf16.msra.mxu0 %v6322
    %6469 = vmatpush.bf16.msra.mxu0 %v6317
    %6470 = vmatpush.bf16.msra.mxu0 %v6312
    %6471 = vmatmul.bf16.gmra.mxu0 %v6344
    %v6472 = vpop.f32.mrf.mxu0
    %v6473 = vadd.f32 %v6460, %v6472
    %v6474 = vpop.f32.mrf.mxu0
    %6475 = vdwg.mxu0
    %6476 = vmatpush.bf16.msra.mxu0 %v6188
    %6477 = vmatpush.bf16.msra.mxu0 %v6183
    %6478 = vmatpush.bf16.msra.mxu0 %v6178
    %6479 = vmatpush.bf16.msra.mxu0 %v6173
    %6480 = vmatpush.bf16.msra.mxu0 %v6168
    %6481 = vmatpush.bf16.msra.mxu0 %v6163
    %6482 = vmatpush.bf16.msra.mxu0 %v6158
    %6483 = vmatpush.bf16.msra.mxu0 %v6153
    %6484 = vmatmul.bf16.gmra.mxu0 %v6146
    %v6485 = vpop.f32.mrf.mxu0
    %v6486 = vadd.f32 %v6335, %v6485
    %v6487 = vpop.f32.mrf.mxu0
    %6488 = vdwg.mxu0
    %6489 = vmatpush.bf16.msra.mxu0 %v6228
    %6490 = vmatpush.bf16.msra.mxu0 %v6223
    %6491 = vmatpush.bf16.msra.mxu0 %v6218
    %6492 = vmatpush.bf16.msra.mxu0 %v6213
    %6493 = vmatpush.bf16.msra.mxu0 %v6208
    %6494 = vmatpush.bf16.msra.mxu0 %v6203
    %6495 = vmatpush.bf16.msra.mxu0 %v6198
    %6496 = vmatpush.bf16.msra.mxu0 %v6193
    %6497 = vmatmul.bf16.gmra.mxu0 %v6147
    %v6498 = vpop.f32.mrf.mxu0
    %v6499 = vadd.f32 %v6486, %v6498
    %v6500 = vpop.f32.mrf.mxu0
    %6501 = vdwg.mxu0
    %6502 = vmatpush.bf16.msra.mxu0 %v6268
    %6503 = vmatpush.bf16.msra.mxu0 %v6263
    %6504 = vmatpush.bf16.msra.mxu0 %v6258
    %6505 = vmatpush.bf16.msra.mxu0 %v6253
    %6506 = vmatpush.bf16.msra.mxu0 %v6248
    %6507 = vmatpush.bf16.msra.mxu0 %v6243
    %6508 = vmatpush.bf16.msra.mxu0 %v6238
    %6509 = vmatpush.bf16.msra.mxu0 %v6233
    %6510 = vmatmul.bf16.gmra.mxu0 %v6148
    %v6511 = vpop.f32.mrf.mxu0
    %v6512 = vadd.f32 %v6499, %v6511
    %v6513 = vpop.f32.mrf.mxu0
    %6514 = vdwg.mxu0
    %6515 = vmatpush.bf16.msra.mxu0 %v6308
    %6516 = vmatpush.bf16.msra.mxu0 %v6303
    %6517 = vmatpush.bf16.msra.mxu0 %v6298
    %6518 = vmatpush.bf16.msra.mxu0 %v6293
    %6519 = vmatpush.bf16.msra.mxu0 %v6288
    %6520 = vmatpush.bf16.msra.mxu0 %v6283
    %6521 = vmatpush.bf16.msra.mxu0 %v6278
    %6522 = vmatpush.bf16.msra.mxu0 %v6273
    %6523 = vmatmul.bf16.gmra.mxu0 %v6149
    %v6524 = vpop.f32.mrf.mxu0
    %v6525 = vadd.f32 %v6512, %v6524
    %v6526 = vpop.f32.mrf.mxu0
    %6527 = vdwg.mxu0
    %6528 = vmatpush.bf16.msra.mxu0 0
    %6529 = vmatpush.bf16.msra.mxu0 0
    %6530 = vmatpush.bf16.msra.mxu0 0
    %6531 = vmatpush.bf16.msra.mxu0 0
    %6532 = vmatpush.bf16.msra.mxu0 %v6328
    %6533 = vmatpush.bf16.msra.mxu0 %v6323
    %6534 = vmatpush.bf16.msra.mxu0 %v6318
    %6535 = vmatpush.bf16.msra.mxu0 %v6313
    %6536 = vmatmul.bf16.gmra.mxu0 %v6344
    %v6537 = vpop.f32.mrf.mxu0
    %v6538 = vadd.f32 %v6525, %v6537
    %v6539 = vpop.f32.mrf.mxu0
    %6540 = vdwg.mxu0
    %6541 = vmatpush.bf16.msra.mxu0 %v6189
    %6542 = vmatpush.bf16.msra.mxu0 %v6184
    %6543 = vmatpush.bf16.msra.mxu0 %v6179
    %6544 = vmatpush.bf16.msra.mxu0 %v6174
    %6545 = vmatpush.bf16.msra.mxu0 %v6169
    %6546 = vmatpush.bf16.msra.mxu0 %v6164
    %6547 = vmatpush.bf16.msra.mxu0 %v6159
    %6548 = vmatpush.bf16.msra.mxu0 %v6154
    %6549 = vmatmul.bf16.gmra.mxu0 %v6146
    %v6550 = vpop.f32.mrf.mxu0
    %v6551 = vadd.f32 %v6336, %v6550
    %v6552 = vpop.f32.mrf.mxu0
    %6553 = vdwg.mxu0
    %6554 = vmatpush.bf16.msra.mxu0 %v6229
    %6555 = vmatpush.bf16.msra.mxu0 %v6224
    %6556 = vmatpush.bf16.msra.mxu0 %v6219
    %6557 = vmatpush.bf16.msra.mxu0 %v6214
    %6558 = vmatpush.bf16.msra.mxu0 %v6209
    %6559 = vmatpush.bf16.msra.mxu0 %v6204
    %6560 = vmatpush.bf16.msra.mxu0 %v6199
    %6561 = vmatpush.bf16.msra.mxu0 %v6194
    %6562 = vmatmul.bf16.gmra.mxu0 %v6147
    %v6563 = vpop.f32.mrf.mxu0
    %v6564 = vadd.f32 %v6551, %v6563
    %v6565 = vpop.f32.mrf.mxu0
    %6566 = vdwg.mxu0
    %6567 = vmatpush.bf16.msra.mxu0 %v6269
    %6568 = vmatpush.bf16.msra.mxu0 %v6264
    %6569 = vmatpush.bf16.msra.mxu0 %v6259
    %6570 = vmatpush.bf16.msra.mxu0 %v6254
    %6571 = vmatpush.bf16.msra.mxu0 %v6249
    %6572 = vmatpush.bf16.msra.mxu0 %v6244
    %6573 = vmatpush.bf16.msra.mxu0 %v6239
    %6574 = vmatpush.bf16.msra.mxu0 %v6234
    %6575 = vmatmul.bf16.gmra.mxu0 %v6148
    %v6576 = vpop.f32.mrf.mxu0
    %v6577 = vadd.f32 %v6564, %v6576
    %v6578 = vpop.f32.mrf.mxu0
    %6579 = vdwg.mxu0
    %6580 = vmatpush.bf16.msra.mxu0 %v6309
    %6581 = vmatpush.bf16.msra.mxu0 %v6304
    %6582 = vmatpush.bf16.msra.mxu0 %v6299
    %6583 = vmatpush.bf16.msra.mxu0 %v6294
    %6584 = vmatpush.bf16.msra.mxu0 %v6289
    %6585 = vmatpush.bf16.msra.mxu0 %v6284
    %6586 = vmatpush.bf16.msra.mxu0 %v6279
    %6587 = vmatpush.bf16.msra.mxu0 %v6274
    %6588 = vmatmul.bf16.gmra.mxu0 %v6149
    %v6589 = vpop.f32.mrf.mxu0
    %v6590 = vadd.f32 %v6577, %v6589
    %v6591 = vpop.f32.mrf.mxu0
    %6592 = vdwg.mxu0
    %6593 = vmatpush.bf16.msra.mxu0 0
    %6594 = vmatpush.bf16.msra.mxu0 0
    %6595 = vmatpush.bf16.msra.mxu0 0
    %6596 = vmatpush.bf16.msra.mxu0 0
    %6597 = vmatpush.bf16.msra.mxu0 %v6329
    %6598 = vmatpush.bf16.msra.mxu0 %v6324
    %6599 = vmatpush.bf16.msra.mxu0 %v6319
    %6600 = vmatpush.bf16.msra.mxu0 %v6314
    %6601 = vmatmul.bf16.gmra.mxu0 %v6344
    %v6602 = vpop.f32.mrf.mxu0
    %v6603 = vadd.f32 %v6590, %v6602
    %v6604 = vpop.f32.mrf.mxu0
    %6605 = vdwg.mxu0
    %6606 = vmatpush.bf16.msra.mxu0 %v6190
    %6607 = vmatpush.bf16.msra.mxu0 %v6185
    %6608 = vmatpush.bf16.msra.mxu0 %v6180
    %6609 = vmatpush.bf16.msra.mxu0 %v6175
    %6610 = vmatpush.bf16.msra.mxu0 %v6170
    %6611 = vmatpush.bf16.msra.mxu0 %v6165
    %6612 = vmatpush.bf16.msra.mxu0 %v6160
    %6613 = vmatpush.bf16.msra.mxu0 %v6155
    %6614 = vmatmul.bf16.gmra.mxu0 %v6146
    %v6615 = vpop.f32.mrf.mxu0
    %v6616 = vadd.f32 %v6337, %v6615
    %v6617 = vpop.f32.mrf.mxu0
    %6618 = vdwg.mxu0
    %6619 = vmatpush.bf16.msra.mxu0 %v6230
    %6620 = vmatpush.bf16.msra.mxu0 %v6225
    %6621 = vmatpush.bf16.msra.mxu0 %v6220
    %6622 = vmatpush.bf16.msra.mxu0 %v6215
    %6623 = vmatpush.bf16.msra.mxu0 %v6210
    %6624 = vmatpush.bf16.msra.mxu0 %v6205
    %6625 = vmatpush.bf16.msra.mxu0 %v6200
    %6626 = vmatpush.bf16.msra.mxu0 %v6195
    %6627 = vmatmul.bf16.gmra.mxu0 %v6147
    %v6628 = vpop.f32.mrf.mxu0
    %v6629 = vadd.f32 %v6616, %v6628
    %v6630 = vpop.f32.mrf.mxu0
    %6631 = vdwg.mxu0
    %6632 = vmatpush.bf16.msra.mxu0 %v6270
    %6633 = vmatpush.bf16.msra.mxu0 %v6265
    %6634 = vmatpush.bf16.msra.mxu0 %v6260
    %6635 = vmatpush.bf16.msra.mxu0 %v6255
    %6636 = vmatpush.bf16.msra.mxu0 %v6250
    %6637 = vmatpush.bf16.msra.mxu0 %v6245
    %6638 = vmatpush.bf16.msra.mxu0 %v6240
    %6639 = vmatpush.bf16.msra.mxu0 %v6235
    %6640 = vmatmul.bf16.gmra.mxu0 %v6148
    %v6641 = vpop.f32.mrf.mxu0
    %v6642 = vadd.f32 %v6629, %v6641
    %v6643 = vpop.f32.mrf.mxu0
    %6644 = vdwg.mxu0
    %6645 = vmatpush.bf16.msra.mxu0 %v6310
    %6646 = vmatpush.bf16.msra.mxu0 %v6305
    %6647 = vmatpush.bf16.msra.mxu0 %v6300
    %6648 = vmatpush.bf16.msra.mxu0 %v6295
    %6649 = vmatpush.bf16.msra.mxu0 %v6290
    %6650 = vmatpush.bf16.msra.mxu0 %v6285
    %6651 = vmatpush.bf16.msra.mxu0 %v6280
    %6652 = vmatpush.bf16.msra.mxu0 %v6275
    %6653 = vmatmul.bf16.gmra.mxu0 %v6149
    %v6654 = vpop.f32.mrf.mxu0
    %v6655 = vadd.f32 %v6642, %v6654
    %v6656 = vpop.f32.mrf.mxu0
    %6657 = vdwg.mxu0
    %6658 = vmatpush.bf16.msra.mxu0 0
    %6659 = vmatpush.bf16.msra.mxu0 0
    %6660 = vmatpush.bf16.msra.mxu0 0
    %6661 = vmatpush.bf16.msra.mxu0 0
    %6662 = vmatpush.bf16.msra.mxu0 %v6330
    %6663 = vmatpush.bf16.msra.mxu0 %v6325
    %6664 = vmatpush.bf16.msra.mxu0 %v6320
    %6665 = vmatpush.bf16.msra.mxu0 %v6315
    %6666 = vmatmul.bf16.gmra.mxu0 %v6344
    %v6667 = vpop.f32.mrf.mxu0
    %v6668 = vadd.f32 %v6655, %v6667
    %v6669 = vpop.f32.mrf.mxu0
    %6670 = vdwg.mxu0
    %v6671 = vmax.f32 %v6408, 0.0
    %v6672 = vmax.f32 %v6473, 0.0
    %v6673 = vmax.f32 %v6538, 0.0
    %v6674 = vmax.f32 %v6603, 0.0
    %v6675 = vmax.f32 %v6668, 0.0
    %v6676 = vld [vmem:[%s85] sm:$0xff]
    %v6677 = vld [vmem:[%s85 + $0x8] sm:$0xff]
    %v6678 = vld [vmem:[%s85 + $0x10] sm:$0xff]
    %v6679 = vld [vmem:[%s85 + $0x18] sm:$0xff]
    %v6680 = vld [vmem:[%s85 + $0x20] sm:$0xff]
    %v6681 = vld [vmem:[%s85 + $0x28] sm:$0xff]
    %v6682 = vld [vmem:[%s85 + $0x30] sm:$0xff]
    %v6683 = vld [vmem:[%s85 + $0x38] sm:$0xff]
    %v6684 = vld [vmem:[%s85 + $0x40] sm:$0xff]
    %v6685 = vld [vmem:[%s85 + $0x48] sm:$0xff]
    %v6686 = vld [vmem:[%s85 + $0x50] sm:$0xff]
    %v6687 = vld [vmem:[%s85 + $0x58] sm:$0xff]
    %v6688 = vld [vmem:[%s85 + $0x60] sm:$0xff]
    %v6689 = vld [vmem:[%s85 + $0x68] sm:$0xff]
    %v6690 = vld [vmem:[%s85 + $0x70] sm:$0xff]
    %v6691 = vld [vmem:[%s85 + $0x78] sm:$0xff]
    %v6692 = vld [vmem:[%s85 + $0x80] sm:$0xff]
    %v6693 = vld [vmem:[%s85 + $0x88] sm:$0xff]
    %v6694 = vld [vmem:[%s85 + $0x90] sm:$0xff]
    %v6695 = vld [vmem:[%s85 + $0x98] sm:$0xff]
    %v6696 = vld [vmem:[%s85 + $0xa0] sm:$0xff]
    %v6697 = vld [vmem:[%s85 + $0xa8] sm:$0xff]
    %v6698 = vld [vmem:[%s85 + $0xb0] sm:$0xff]
    %v6699 = vld [vmem:[%s85 + $0xb8] sm:$0xff]
    %v6700 = vld [vmem:[%s85 + $0xc0] sm:$0xff]
    %v6701 = vld [vmem:[%s85 + $0xc8] sm:$0xff]
    %v6702 = vld [vmem:[%s85 + $0xd0] sm:$0xff]
    %v6703 = vld [vmem:[%s85 + $0xd8] sm:$0xff]
    %v6704 = vld [vmem:[%s85 + $0xe0] sm:$0xff]
    %v6705 = vld [vmem:[%s85 + $0xe8] sm:$0xff]
    %v6706 = vld [vmem:[%s85 + $0xf0] sm:$0xff]
    %v6707 = vld [vmem:[%s85 + $0xf8] sm:$0xff]
    %v6708 = vld [vmem:[%s85 + $0x100] sm:$0xff]
    %v6709 = vld [vmem:[%s85 + $0x108] sm:$0xff]
    %v6710 = vld [vmem:[%s85 + $0x110] sm:$0xff]
    %v6711 = vld [vmem:[%s85 + $0x118] sm:$0xff]
    %v6712 = vld [vmem:[%s85 + $0x120] sm:$0xff]
    %v6713 = vld [vmem:[%s85 + $0x128] sm:$0xff]
    %v6714 = vld [vmem:[%s85 + $0x130] sm:$0xff]
    %v6715 = vld [vmem:[%s85 + $0x138] sm:$0xff]
    %v6716 = vld [vmem:[%s85 + $0x140] sm:$0xff]
    %v6717 = vld [vmem:[%s85 + $0x148] sm:$0xff]
    %v6718 = vld [vmem:[%s85 + $0x150] sm:$0xff]
    %v6719 = vld [vmem:[%s85 + $0x158] sm:$0xff]
    %v6720 = vld [vmem:[%s85 + $0x160] sm:$0xff]
    %v6721 = vld [vmem:[%s85 + $0x168] sm:$0xff]
    %v6722 = vld [vmem:[%s85 + $0x170] sm:$0xff]
    %v6723 = vld [vmem:[%s85 + $0x178] sm:$0xff]
    %v6724 = vld [vmem:[%s85 + $0x180] sm:$0xff]
    %v6725 = vld [vmem:[%s85 + $0x188] sm:$0xff]
    %v6726 = vld [vmem:[%s85 + $0x190] sm:$0xff]
    %v6727 = vld [vmem:[%s85 + $0x198] sm:$0xff]
    %v6728 = vld [vmem:[%s85 + $0x1a0] sm:$0xff]
    %v6729 = vld [vmem:[%s85 + $0x1a8] sm:$0xff]
    %v6730 = vld [vmem:[%s85 + $0x1b0] sm:$0xff]
    %v6731 = vld [vmem:[%s85 + $0x1b8] sm:$0xff]
    %v6732 = vld [vmem:[%s85 + $0x1c0] sm:$0xff]
    %v6733 = vld [vmem:[%s85 + $0x1c8] sm:$0xff]
    %v6734 = vld [vmem:[%s85 + $0x1d0] sm:$0xff]
    %v6735 = vld [vmem:[%s85 + $0x1d8] sm:$0xff]
    %v6736 = vld [vmem:[%s85 + $0x1e0] sm:$0xff]
    %v6737 = vld [vmem:[%s85 + $0x1e8] sm:$0xff]
    %v6738 = vld [vmem:[%s85 + $0x1f0] sm:$0xff]
    %v6739 = vld [vmem:[%s85 + $0x1f8] sm:$0xff]
    %v6740 = vld [vmem:[%s85 + $0x200] sm:$0xff]
    %v6741 = vld [vmem:[%s85 + $0x208] sm:$0xff]
    %v6742 = vld [vmem:[%s85 + $0x210] sm:$0xff]
    %v6743 = vld [vmem:[%s85 + $0x218] sm:$0xff]
    %v6744 = vld [vmem:[%s85 + $0x220] sm:$0xff]
    %v6745 = vld [vmem:[%s85 + $0x228] sm:$0xff]
    %v6746 = vld [vmem:[%s85 + $0x230] sm:$0xff]
    %v6747 = vld [vmem:[%s85 + $0x238] sm:$0xff]
    %v6748 = vld [vmem:[%s85 + $0x240] sm:$0xff]
    %v6749 = vld [vmem:[%s85 + $0x248] sm:$0xff]
    %v6750 = vld [vmem:[%s85 + $0x250] sm:$0xff]
    %v6751 = vld [vmem:[%s85 + $0x258] sm:$0xff]
    %v6752 = vld [vmem:[%s85 + $0x260] sm:$0xff]
    %v6753 = vld [vmem:[%s85 + $0x268] sm:$0xff]
    %v6754 = vld [vmem:[%s85 + $0x270] sm:$0xff]
    %v6755 = vld [vmem:[%s85 + $0x278] sm:$0xff]
    %v6756 = vld [vmem:[%s85 + $0x280] sm:$0xff]
    %v6757 = vld [vmem:[%s85 + $0x288] sm:$0xff]
    %v6758 = vld [vmem:[%s85 + $0x290] sm:$0xff]
    %v6759 = vld [vmem:[%s85 + $0x298] sm:$0xff]
    %v6760 = vld [vmem:[%s85 + $0x2a0] sm:$0xff]
    %v6761 = vld [vmem:[%s85 + $0x2a8] sm:$0xff]
    %v6762 = vld [vmem:[%s85 + $0x2b0] sm:$0xff]
    %v6763 = vld [vmem:[%s85 + $0x2b8] sm:$0xff]
    %v6764 = vld [vmem:[%s85 + $0x2c0] sm:$0xff]
    %v6765 = vld [vmem:[%s85 + $0x2c8] sm:$0xff]
    %v6766 = vld [vmem:[%s85 + $0x2d0] sm:$0xff]
    %v6767 = vld [vmem:[%s85 + $0x2d8] sm:$0xff]
    %v6768 = vld [vmem:[%s85 + $0x2e0] sm:$0xff]
    %v6769 = vld [vmem:[%s85 + $0x2e8] sm:$0xff]
    %v6770 = vld [vmem:[%s85 + $0x2f0] sm:$0xff]
    %v6771 = vld [vmem:[%s85 + $0x2f8] sm:$0xff]
    %v6772 = vld [vmem:[%s85 + $0x300] sm:$0xff]
    %v6773 = vld [vmem:[%s85 + $0x308] sm:$0xff]
    %v6774 = vld [vmem:[%s85 + $0x310] sm:$0xff]
    %v6775 = vld [vmem:[%s85 + $0x318] sm:$0xff]
    %v6776 = vld [vmem:[%s85 + $0x320] sm:$0xff]
    %v6777 = vld [vmem:[%s85 + $0x328] sm:$0xff]
    %v6778 = vld [vmem:[%s85 + $0x330] sm:$0xff]
    %v6779 = vld [vmem:[%s85 + $0x338] sm:$0xff]
    %v6780 = vld [vmem:[%s85 + $0x340] sm:$0xff]
    %v6781 = vld [vmem:[%s85 + $0x348] sm:$0xff]
    %v6782 = vld [vmem:[%s85 + $0x350] sm:$0xff]
    %v6783 = vld [vmem:[%s85 + $0x358] sm:$0xff]
    %v6784 = vld [vmem:[%s85 + $0x360] sm:$0xff]
    %v6785 = vld [vmem:[%s85 + $0x368] sm:$0xff]
    %v6786 = vld [vmem:[%s85 + $0x370] sm:$0xff]
    %v6787 = vld [vmem:[%s85 + $0x378] sm:$0xff]
    %v6788 = vld [vmem:[%s85 + $0x380] sm:$0xff]
    %v6789 = vld [vmem:[%s85 + $0x388] sm:$0xff]
    %v6790 = vld [vmem:[%s85 + $0x390] sm:$0xff]
    %v6791 = vld [vmem:[%s85 + $0x398] sm:$0xff]
    %v6792 = vld [vmem:[%s85 + $0x3a0] sm:$0xff]
    %v6793 = vld [vmem:[%s85 + $0x3a8] sm:$0xff]
    %v6794 = vld [vmem:[%s85 + $0x3b0] sm:$0xff]
    %v6795 = vld [vmem:[%s85 + $0x3b8] sm:$0xff]
    %v6796 = vld [vmem:[%s85 + $0x3c0] sm:$0xff]
    %v6797 = vld [vmem:[%s85 + $0x3c8] sm:$0xff]
    %v6798 = vld [vmem:[%s85 + $0x3d0] sm:$0xff]
    %v6799 = vld [vmem:[%s85 + $0x3d8] sm:$0xff]
    %v6800 = vld [vmem:[%s85 + $0x3e0] sm:$0xff]
    %v6801 = vld [vmem:[%s85 + $0x3e8] sm:$0xff]
    %v6802 = vld [vmem:[%s85 + $0x3f0] sm:$0xff]
    %v6803 = vld [vmem:[%s85 + $0x3f8] sm:$0xff]
    %v6804 = vld [vmem:[%s85 + $0x400] sm:$0xff]
    %v6805 = vld [vmem:[%s85 + $0x408] sm:$0xff]
    %v6806 = vld [vmem:[%s85 + $0x410] sm:$0xff]
    %v6807 = vld [vmem:[%s85 + $0x418] sm:$0xff]
    %v6808 = vld [vmem:[%s85 + $0x420] sm:$0xff]
    %v6809 = vld [vmem:[%s85 + $0x428] sm:$0xff]
    %v6810 = vld [vmem:[%s85 + $0x430] sm:$0xff]
    %v6811 = vld [vmem:[%s85 + $0x438] sm:$0xff]
    %v6812 = vld [vmem:[%s85 + $0x440] sm:$0xff]
    %v6813 = vld [vmem:[%s85 + $0x448] sm:$0xff]
    %v6814 = vld [vmem:[%s85 + $0x450] sm:$0xff]
    %v6815 = vld [vmem:[%s85 + $0x458] sm:$0xff]
    %v6816 = vld [vmem:[%s85 + $0x460] sm:$0xff]
    %v6817 = vld [vmem:[%s85 + $0x468] sm:$0xff]
    %v6818 = vld [vmem:[%s85 + $0x470] sm:$0xff]
    %v6819 = vld [vmem:[%s85 + $0x478] sm:$0xff]
    %v6820 = vld [vmem:[%s85 + $0x480] sm:$0xff]
    %v6821 = vld [vmem:[%s85 + $0x488] sm:$0xff]
    %v6822 = vld [vmem:[%s85 + $0x490] sm:$0xff]
    %v6823 = vld [vmem:[%s85 + $0x498] sm:$0xff]
    %v6824 = vld [vmem:[%s85 + $0x4a0] sm:$0xff]
    %v6825 = vld [vmem:[%s85 + $0x4a8] sm:$0xff]
    %v6826 = vld [vmem:[%s85 + $0x4b0] sm:$0xff]
    %v6827 = vld [vmem:[%s85 + $0x4b8] sm:$0xff]
    %v6828 = vld [vmem:[%s85 + $0x4c0] sm:$0xff]
    %v6829 = vld [vmem:[%s85 + $0x4c8] sm:$0xff]
    %v6830 = vld [vmem:[%s85 + $0x4d0] sm:$0xff]
    %v6831 = vld [vmem:[%s85 + $0x4d8] sm:$0xff]
    %v6832 = vld [vmem:[%s85 + $0x4e0] sm:$0xff]
    %v6833 = vld [vmem:[%s85 + $0x4e8] sm:$0xff]
    %v6834 = vld [vmem:[%s85 + $0x4f0] sm:$0xff]
    %v6835 = vld [vmem:[%s85 + $0x4f8] sm:$0xff]
    %v6836 = vld [vmem:[%s85 + $0x500] sm:$0xff]
    %v6837 = vld [vmem:[%s85 + $0x508] sm:$0xff]
    %v6838 = vld [vmem:[%s85 + $0x510] sm:$0xff]
    %v6839 = vld [vmem:[%s85 + $0x518] sm:$0xff]
    %v6840 = vld [vmem:[%s85 + $0x520] sm:$0xff]
    %v6841 = vld [vmem:[%s85 + $0x528] sm:$0xff]
    %v6842 = vld [vmem:[%s85 + $0x530] sm:$0xff]
    %v6843 = vld [vmem:[%s85 + $0x538] sm:$0xff]
    %v6844 = vld [vmem:[%s85 + $0x540] sm:$0xff]
    %v6845 = vld [vmem:[%s85 + $0x548] sm:$0xff]
    %v6846 = vld [vmem:[%s85 + $0x550] sm:$0xff]
    %v6847 = vld [vmem:[%s85 + $0x558] sm:$0xff]
    %v6848 = vld [vmem:[%s85 + $0x560] sm:$0xff]
    %v6849 = vld [vmem:[%s85 + $0x568] sm:$0xff]
    %v6850 = vld [vmem:[%s85 + $0x570] sm:$0xff]
    %v6851 = vld [vmem:[%s85 + $0x578] sm:$0xff]
    %v6852 = vld [vmem:[%s85 + $0x580] sm:$0xff]
    %v6853 = vld [vmem:[%s85 + $0x588] sm:$0xff]
    %v6854 = vld [vmem:[%s85 + $0x590] sm:$0xff]
    %v6855 = vld [vmem:[%s85 + $0x598] sm:$0xff]
    %v6856 = vld [vmem:[%s85 + $0x5a0] sm:$0xff]
    %v6857 = vld [vmem:[%s85 + $0x5a8] sm:$0xff]
    %v6858 = vld [vmem:[%s85 + $0x5b0] sm:$0xff]
    %v6859 = vld [vmem:[%s85 + $0x5b8] sm:$0xff]
    %v6860 = vld [vmem:[%s85 + $0x5c0] sm:$0xff]
    %v6861 = vld [vmem:[%s85 + $0x5c8] sm:$0xff]
    %v6862 = vld [vmem:[%s85 + $0x5d0] sm:$0xff]
    %v6863 = vld [vmem:[%s85 + $0x5d8] sm:$0xff]
    %v6864 = vld [vmem:[%s85 + $0x5e0] sm:$0xff]
    %v6865 = vld [vmem:[%s85 + $0x5e8] sm:$0xff]
    %v6866 = vld [vmem:[%s85 + $0x5f0] sm:$0xff]
    %v6867 = vld [vmem:[%s85 + $0x5f8] sm:$0xff]
    %v6868 = vld [vmem:[%s85 + $0x600] sm:$0xff]
    %v6869 = vld [vmem:[%s85 + $0x608] sm:$0xff]
    %v6870 = vld [vmem:[%s85 + $0x610] sm:$0xff]
    %v6871 = vld [vmem:[%s85 + $0x618] sm:$0xff]
    %v6872 = vld [vmem:[%s85 + $0x620] sm:$0xff]
    %v6873 = vld [vmem:[%s85 + $0x628] sm:$0xff]
    %v6874 = vld [vmem:[%s85 + $0x630] sm:$0xff]
    %v6875 = vld [vmem:[%s85 + $0x638] sm:$0xff]
    %v6876 = vld [vmem:[%s85 + $0x640] sm:$0xff]
    %v6877 = vld [vmem:[%s85 + $0x648] sm:$0xff]
    %v6878 = vld [vmem:[%s85 + $0x650] sm:$0xff]
    %v6879 = vld [vmem:[%s85 + $0x658] sm:$0xff]
    %v6880 = vld [vmem:[%s85 + $0x660] sm:$0xff]
    %v6881 = vld [vmem:[%s85 + $0x668] sm:$0xff]
    %v6882 = vld [vmem:[%s85 + $0x670] sm:$0xff]
    %v6883 = vld [vmem:[%s85 + $0x678] sm:$0xff]
    %v6884 = vld [vmem:[%s85 + $0x680] sm:$0xff]
    %v6885 = vld [vmem:[%s85 + $0x688] sm:$0xff]
    %v6886 = vld [vmem:[%s85 + $0x690] sm:$0xff]
    %v6887 = vld [vmem:[%s85 + $0x698] sm:$0xff]
    %v6888 = vld [vmem:[%s85 + $0x6a0] sm:$0xff]
    %v6889 = vld [vmem:[%s85 + $0x6a8] sm:$0xff]
    %v6890 = vld [vmem:[%s85 + $0x6b0] sm:$0xff]
    %v6891 = vld [vmem:[%s85 + $0x6b8] sm:$0xff]
    %v6892 = vpack.c.bf16 %v6671, %v6671
    %v6893 = vpack.c.bf16 %v6672, %v6672
    %v6894 = vpack.c.bf16 %v6673, %v6673
    %v6895 = vpack.c.bf16 %v6674, %v6674
    %v6896 = vpack.c.bf16 %v6675, %v6675
    %v6897 = vpack.c.bf16 %v6679, %v6676
    %v6898 = vpack.c.bf16 %v6680, %v6677
    %v6899 = vpack.c.bf16 %v6681, %v6678
    %v6900 = vpack.c.bf16 %v6685, %v6682
    %v6901 = vpack.c.bf16 %v6686, %v6683
    %v6902 = vpack.c.bf16 %v6687, %v6684
    %v6903 = vpack.c.bf16 %v6691, %v6688
    %v6904 = vpack.c.bf16 %v6692, %v6689
    %v6905 = vpack.c.bf16 %v6693, %v6690
    %v6906 = vpack.c.bf16 %v6697, %v6694
    %v6907 = vpack.c.bf16 %v6698, %v6695
    %v6908 = vpack.c.bf16 %v6699, %v6696
    %v6909 = vpack.c.bf16 %v6703, %v6700
    %v6910 = vpack.c.bf16 %v6704, %v6701
    %v6911 = vpack.c.bf16 %v6705, %v6702
    %v6912 = vpack.c.bf16 %v6709, %v6706
    %v6913 = vpack.c.bf16 %v6710, %v6707
    %v6914 = vpack.c.bf16 %v6711, %v6708
    %v6915 = vpack.c.bf16 %v6715, %v6712
    %v6916 = vpack.c.bf16 %v6716, %v6713
    %v6917 = vpack.c.bf16 %v6717, %v6714
    %v6918 = vpack.c.bf16 %v6721, %v6718
    %v6919 = vpack.c.bf16 %v6722, %v6719
    %v6920 = vpack.c.bf16 %v6723, %v6720
    %v6921 = vpack.c.bf16 %v6727, %v6724
    %v6922 = vpack.c.bf16 %v6728, %v6725
    %v6923 = vpack.c.bf16 %v6729, %v6726
    %v6924 = vpack.c.bf16 %v6733, %v6730
    %v6925 = vpack.c.bf16 %v6734, %v6731
    %v6926 = vpack.c.bf16 %v6735, %v6732
    %v6927 = vpack.c.bf16 %v6739, %v6736
    %v6928 = vpack.c.bf16 %v6740, %v6737
    %v6929 = vpack.c.bf16 %v6741, %v6738
    %v6930 = vpack.c.bf16 %v6745, %v6742
    %v6931 = vpack.c.bf16 %v6746, %v6743
    %v6932 = vpack.c.bf16 %v6747, %v6744
    %v6933 = vpack.c.bf16 %v6751, %v6748
    %v6934 = vpack.c.bf16 %v6752, %v6749
    %v6935 = vpack.c.bf16 %v6753, %v6750
    %v6936 = vpack.c.bf16 %v6757, %v6754
    %v6937 = vpack.c.bf16 %v6758, %v6755
    %v6938 = vpack.c.bf16 %v6759, %v6756
    %v6939 = vpack.c.bf16 %v6763, %v6760
    %v6940 = vpack.c.bf16 %v6764, %v6761
    %v6941 = vpack.c.bf16 %v6765, %v6762
    %v6942 = vpack.c.bf16 %v6769, %v6766
    %v6943 = vpack.c.bf16 %v6770, %v6767
    %v6944 = vpack.c.bf16 %v6771, %v6768
    %v6945 = vpack.c.bf16 %v6775, %v6772
    %v6946 = vpack.c.bf16 %v6776, %v6773
    %v6947 = vpack.c.bf16 %v6777, %v6774
    %v6948 = vpack.c.bf16 %v6781, %v6778
    %v6949 = vpack.c.bf16 %v6782, %v6779
    %v6950 = vpack.c.bf16 %v6783, %v6780
    %v6951 = vpack.c.bf16 %v6787, %v6784
    %v6952 = vpack.c.bf16 %v6788, %v6785
    %v6953 = vpack.c.bf16 %v6789, %v6786
    %v6954 = vpack.c.bf16 %v6793, %v6790
    %v6955 = vpack.c.bf16 %v6794, %v6791
    %v6956 = vpack.c.bf16 %v6795, %v6792
    %v6957 = vpack.c.bf16 %v6799, %v6796
    %v6958 = vpack.c.bf16 %v6800, %v6797
    %v6959 = vpack.c.bf16 %v6801, %v6798
    %v6960 = vpack.c.bf16 %v6805, %v6802
    %v6961 = vpack.c.bf16 %v6806, %v6803
    %v6962 = vpack.c.bf16 %v6807, %v6804
    %v6963 = vpack.c.bf16 %v6811, %v6808
    %v6964 = vpack.c.bf16 %v6812, %v6809
    %v6965 = vpack.c.bf16 %v6813, %v6810
    %v6966 = vpack.c.bf16 %v6817, %v6814
    %v6967 = vpack.c.bf16 %v6818, %v6815
    %v6968 = vpack.c.bf16 %v6819, %v6816
    %v6969 = vpack.c.bf16 %v6823, %v6820
    %v6970 = vpack.c.bf16 %v6824, %v6821
    %v6971 = vpack.c.bf16 %v6825, %v6822
    %v6972 = vpack.c.bf16 %v6829, %v6826
    %v6973 = vpack.c.bf16 %v6830, %v6827
    %v6974 = vpack.c.bf16 %v6831, %v6828
    %v6975 = vpack.c.bf16 %v6835, %v6832
    %v6976 = vpack.c.bf16 %v6836, %v6833
    %v6977 = vpack.c.bf16 %v6837, %v6834
    %v6978 = vpack.c.bf16 %v6841, %v6838
    %v6979 = vpack.c.bf16 %v6842, %v6839
    %v6980 = vpack.c.bf16 %v6843, %v6840
    %v6981 = vpack.c.bf16 %v6847, %v6844
    %v6982 = vpack.c.bf16 %v6848, %v6845
    %v6983 = vpack.c.bf16 %v6849, %v6846
    %v6984 = vpack.c.bf16 %v6853, %v6850
    %v6985 = vpack.c.bf16 %v6854, %v6851
    %v6986 = vpack.c.bf16 %v6855, %v6852
    %v6987 = vpack.c.bf16 %v6859, %v6856
    %v6988 = vpack.c.bf16 %v6860, %v6857
    %v6989 = vpack.c.bf16 %v6861, %v6858
    %v6990 = vpack.c.bf16 %v6865, %v6862
    %v6991 = vpack.c.bf16 %v6866, %v6863
    %v6992 = vpack.c.bf16 %v6867, %v6864
    %v6993 = vpack.c.bf16 %v6871, %v6868
    %v6994 = vpack.c.bf16 %v6872, %v6869
    %v6995 = vpack.c.bf16 %v6873, %v6870
    %v6996 = vpack.c.bf16 %v6877, %v6874
    %v6997 = vpack.c.bf16 %v6878, %v6875
    %v6998 = vpack.c.bf16 %v6879, %v6876
    %v6999 = vpack.c.bf16 %v6883, %v6880
    %v7000 = vpack.c.bf16 %v6884, %v6881
    %v7001 = vpack.c.bf16 %v6885, %v6882
    %v7002 = vpack.c.bf16 %v6889, %v6886
    %v7003 = vpack.c.bf16 %v6890, %v6887
    %v7004 = vpack.c.bf16 %v6891, %v6888
    %v7005 = vld [vmem:[#allocation35] sm:$0x7]
    %v7007 = vperm.slane %v7005, 0
    %v7008 = vperm.slane %v7005, 1
    %v7009 = vperm.slane %v7005, 2
    %v7014 = vsel %vm4308, %v6896, 0
    %7016 = vmatpush.bf16.msra.mxu0 %v6918
    %7017 = vmatpush.bf16.msra.mxu0 %v6915
    %7018 = vmatpush.bf16.msra.mxu0 %v6912
    %7019 = vmatpush.bf16.msra.mxu0 %v6909
    %7020 = vmatpush.bf16.msra.mxu0 %v6906
    %7021 = vmatpush.bf16.msra.mxu0 %v6903
    %7022 = vmatpush.bf16.msra.mxu0 %v6900
    %7023 = vmatpush.bf16.msra.mxu0 %v6897
    %7024 = vmatmul.bf16.gmra.mxu0 %v6892
    %v7025 = vpop.f32.mrf.mxu0
    %v7026 = vadd.f32 %v7007, %v7025
    %v7027 = vpop.f32.mrf.mxu0
    %7028 = vdwg.mxu0
    %7029 = vmatpush.bf16.msra.mxu0 %v6942
    %7030 = vmatpush.bf16.msra.mxu0 %v6939
    %7031 = vmatpush.bf16.msra.mxu0 %v6936
    %7032 = vmatpush.bf16.msra.mxu0 %v6933
    %7033 = vmatpush.bf16.msra.mxu0 %v6930
    %7034 = vmatpush.bf16.msra.mxu0 %v6927
    %7035 = vmatpush.bf16.msra.mxu0 %v6924
    %7036 = vmatpush.bf16.msra.mxu0 %v6921
    %7037 = vmatmul.bf16.gmra.mxu0 %v6893
    %v7038 = vpop.f32.mrf.mxu0
    %v7039 = vadd.f32 %v7026, %v7038
    %v7040 = vpop.f32.mrf.mxu0
    %7041 = vdwg.mxu0
    %7042 = vmatpush.bf16.msra.mxu0 %v6966
    %7043 = vmatpush.bf16.msra.mxu0 %v6963
    %7044 = vmatpush.bf16.msra.mxu0 %v6960
    %7045 = vmatpush.bf16.msra.mxu0 %v6957
    %7046 = vmatpush.bf16.msra.mxu0 %v6954
    %7047 = vmatpush.bf16.msra.mxu0 %v6951
    %7048 = vmatpush.bf16.msra.mxu0 %v6948
    %7049 = vmatpush.bf16.msra.mxu0 %v6945
    %7050 = vmatmul.bf16.gmra.mxu0 %v6894
    %v7051 = vpop.f32.mrf.mxu0
    %v7052 = vadd.f32 %v7039, %v7051
    %v7053 = vpop.f32.mrf.mxu0
    %7054 = vdwg.mxu0
    %7055 = vmatpush.bf16.msra.mxu0 %v6990
    %7056 = vmatpush.bf16.msra.mxu0 %v6987
    %7057 = vmatpush.bf16.msra.mxu0 %v6984
    %7058 = vmatpush.bf16.msra.mxu0 %v6981
    %7059 = vmatpush.bf16.msra.mxu0 %v6978
    %7060 = vmatpush.bf16.msra.mxu0 %v6975
    %7061 = vmatpush.bf16.msra.mxu0 %v6972
    %7062 = vmatpush.bf16.msra.mxu0 %v6969
    %7063 = vmatmul.bf16.gmra.mxu0 %v6895
    %v7064 = vpop.f32.mrf.mxu0
    %v7065 = vadd.f32 %v7052, %v7064
    %v7066 = vpop.f32.mrf.mxu0
    %7067 = vdwg.mxu0
    %7068 = vmatpush.bf16.msra.mxu0 0
    %7069 = vmatpush.bf16.msra.mxu0 0
    %7070 = vmatpush.bf16.msra.mxu0 0
    %7071 = vmatpush.bf16.msra.mxu0 0
    %7072 = vmatpush.bf16.msra.mxu0 %v7002
    %7073 = vmatpush.bf16.msra.mxu0 %v6999
    %7074 = vmatpush.bf16.msra.mxu0 %v6996
    %7075 = vmatpush.bf16.msra.mxu0 %v6993
    %7076 = vmatmul.bf16.gmra.mxu0 %v7014
    %v7077 = vpop.f32.mrf.mxu0
    %v7078 = vadd.f32 %v7065, %v7077
    %v7079 = vpop.f32.mrf.mxu0
    %7080 = vdwg.mxu0
    %7081 = vmatpush.bf16.msra.mxu0 %v6919
    %7082 = vmatpush.bf16.msra.mxu0 %v6916
    %7083 = vmatpush.bf16.msra.mxu0 %v6913
    %7084 = vmatpush.bf16.msra.mxu0 %v6910
    %7085 = vmatpush.bf16.msra.mxu0 %v6907
    %7086 = vmatpush.bf16.msra.mxu0 %v6904
    %7087 = vmatpush.bf16.msra.mxu0 %v6901
    %7088 = vmatpush.bf16.msra.mxu0 %v6898
    %7089 = vmatmul.bf16.gmra.mxu0 %v6892
    %v7090 = vpop.f32.mrf.mxu0
    %v7091 = vadd.f32 %v7008, %v7090
    %v7092 = vpop.f32.mrf.mxu0
    %7093 = vdwg.mxu0
    %7094 = vmatpush.bf16.msra.mxu0 %v6943
    %7095 = vmatpush.bf16.msra.mxu0 %v6940
    %7096 = vmatpush.bf16.msra.mxu0 %v6937
    %7097 = vmatpush.bf16.msra.mxu0 %v6934
    %7098 = vmatpush.bf16.msra.mxu0 %v6931
    %7099 = vmatpush.bf16.msra.mxu0 %v6928
    %7100 = vmatpush.bf16.msra.mxu0 %v6925
    %7101 = vmatpush.bf16.msra.mxu0 %v6922
    %7102 = vmatmul.bf16.gmra.mxu0 %v6893
    %v7103 = vpop.f32.mrf.mxu0
    %v7104 = vadd.f32 %v7091, %v7103
    %v7105 = vpop.f32.mrf.mxu0
    %7106 = vdwg.mxu0
    %7107 = vmatpush.bf16.msra.mxu0 %v6967
    %7108 = vmatpush.bf16.msra.mxu0 %v6964
    %7109 = vmatpush.bf16.msra.mxu0 %v6961
    %7110 = vmatpush.bf16.msra.mxu0 %v6958
    %7111 = vmatpush.bf16.msra.mxu0 %v6955
    %7112 = vmatpush.bf16.msra.mxu0 %v6952
    %7113 = vmatpush.bf16.msra.mxu0 %v6949
    %7114 = vmatpush.bf16.msra.mxu0 %v6946
    %7115 = vmatmul.bf16.gmra.mxu0 %v6894
    %v7116 = vpop.f32.mrf.mxu0
    %v7117 = vadd.f32 %v7104, %v7116
    %v7118 = vpop.f32.mrf.mxu0
    %7119 = vdwg.mxu0
    %7120 = vmatpush.bf16.msra.mxu0 %v6991
    %7121 = vmatpush.bf16.msra.mxu0 %v6988
    %7122 = vmatpush.bf16.msra.mxu0 %v6985
    %7123 = vmatpush.bf16.msra.mxu0 %v6982
    %7124 = vmatpush.bf16.msra.mxu0 %v6979
    %7125 = vmatpush.bf16.msra.mxu0 %v6976
    %7126 = vmatpush.bf16.msra.mxu0 %v6973
    %7127 = vmatpush.bf16.msra.mxu0 %v6970
    %7128 = vmatmul.bf16.gmra.mxu0 %v6895
    %v7129 = vpop.f32.mrf.mxu0
    %v7130 = vadd.f32 %v7117, %v7129
    %v7131 = vpop.f32.mrf.mxu0
    %7132 = vdwg.mxu0
    %7133 = vmatpush.bf16.msra.mxu0 0
    %7134 = vmatpush.bf16.msra.mxu0 0
    %7135 = vmatpush.bf16.msra.mxu0 0
    %7136 = vmatpush.bf16.msra.mxu0 0
    %7137 = vmatpush.bf16.msra.mxu0 %v7003
    %7138 = vmatpush.bf16.msra.mxu0 %v7000
    %7139 = vmatpush.bf16.msra.mxu0 %v6997
    %7140 = vmatpush.bf16.msra.mxu0 %v6994
    %7141 = vmatmul.bf16.gmra.mxu0 %v7014
    %v7142 = vpop.f32.mrf.mxu0
    %v7143 = vadd.f32 %v7130, %v7142
    %v7144 = vpop.f32.mrf.mxu0
    %7145 = vdwg.mxu0
    %7146 = vmatpush.bf16.msra.mxu0 %v6920
    %7147 = vmatpush.bf16.msra.mxu0 %v6917
    %7148 = vmatpush.bf16.msra.mxu0 %v6914
    %7149 = vmatpush.bf16.msra.mxu0 %v6911
    %7150 = vmatpush.bf16.msra.mxu0 %v6908
    %7151 = vmatpush.bf16.msra.mxu0 %v6905
    %7152 = vmatpush.bf16.msra.mxu0 %v6902
    %7153 = vmatpush.bf16.msra.mxu0 %v6899
    %7154 = vmatmul.bf16.gmra.mxu0 %v6892
    %v7155 = vpop.f32.mrf.mxu0
    %v7156 = vadd.f32 %v7009, %v7155
    %v7157 = vpop.f32.mrf.mxu0
    %7158 = vdwg.mxu0
    %7159 = vmatpush.bf16.msra.mxu0 %v6944
    %7160 = vmatpush.bf16.msra.mxu0 %v6941
    %7161 = vmatpush.bf16.msra.mxu0 %v6938
    %7162 = vmatpush.bf16.msra.mxu0 %v6935
    %7163 = vmatpush.bf16.msra.mxu0 %v6932
    %7164 = vmatpush.bf16.msra.mxu0 %v6929
    %7165 = vmatpush.bf16.msra.mxu0 %v6926
    %7166 = vmatpush.bf16.msra.mxu0 %v6923
    %7167 = vmatmul.bf16.gmra.mxu0 %v6893
    %v7168 = vpop.f32.mrf.mxu0
    %v7169 = vadd.f32 %v7156, %v7168
    %v7170 = vpop.f32.mrf.mxu0
    %7171 = vdwg.mxu0
    %7172 = vmatpush.bf16.msra.mxu0 %v6968
    %7173 = vmatpush.bf16.msra.mxu0 %v6965
    %7174 = vmatpush.bf16.msra.mxu0 %v6962
    %7175 = vmatpush.bf16.msra.mxu0 %v6959
    %7176 = vmatpush.bf16.msra.mxu0 %v6956
    %7177 = vmatpush.bf16.msra.mxu0 %v6953
    %7178 = vmatpush.bf16.msra.mxu0 %v6950
    %7179 = vmatpush.bf16.msra.mxu0 %v6947
    %7180 = vmatmul.bf16.gmra.mxu0 %v6894
    %v7181 = vpop.f32.mrf.mxu0
    %v7182 = vadd.f32 %v7169, %v7181
    %v7183 = vpop.f32.mrf.mxu0
    %7184 = vdwg.mxu0
    %7185 = vmatpush.bf16.msra.mxu0 %v6992
    %7186 = vmatpush.bf16.msra.mxu0 %v6989
    %7187 = vmatpush.bf16.msra.mxu0 %v6986
    %7188 = vmatpush.bf16.msra.mxu0 %v6983
    %7189 = vmatpush.bf16.msra.mxu0 %v6980
    %7190 = vmatpush.bf16.msra.mxu0 %v6977
    %7191 = vmatpush.bf16.msra.mxu0 %v6974
    %7192 = vmatpush.bf16.msra.mxu0 %v6971
    %7193 = vmatmul.bf16.gmra.mxu0 %v6895
    %v7194 = vpop.f32.mrf.mxu0
    %v7195 = vadd.f32 %v7182, %v7194
    %v7196 = vpop.f32.mrf.mxu0
    %7197 = vdwg.mxu0
    %7198 = vmatpush.bf16.msra.mxu0 0
    %7199 = vmatpush.bf16.msra.mxu0 0
    %7200 = vmatpush.bf16.msra.mxu0 0
    %7201 = vmatpush.bf16.msra.mxu0 0
    %7202 = vmatpush.bf16.msra.mxu0 %v7004
    %7203 = vmatpush.bf16.msra.mxu0 %v7001
    %7204 = vmatpush.bf16.msra.mxu0 %v6998
    %7205 = vmatpush.bf16.msra.mxu0 %v6995
    %7206 = vmatmul.bf16.gmra.mxu0 %v7014
    %v7207 = vpop.f32.mrf.mxu0
    %v7208 = vadd.f32 %v7195, %v7207
    %v7209 = vpop.f32.mrf.mxu0
    %7210 = vdwg.mxu0
    %v7211 = vsel %vm4393, %v7208, -inf
    %v7212 = vmax.f32 %v7078, %v7143
    %v7213 = vmax.f32 %v7212, %v7211
    %7214 = vmax.xlane.f32.xlu0 %v7213
    %v7215 = vpop.xlane.xlu0 %7214
    %v7216 = vsub.f32 %v7078, %v7215
    %v7217 = vsub.f32 %v7143, %v7215
    %v7218 = vsub.f32 %v7208, %v7215
    %v7219 = vmul.f32 %v7216, 1.442695
    %v7220 = vpow.pop %v7219
    %v7221 = vmul.f32 %v7217, 1.442695
    %v7222 = vpow.pop %v7221
    %v7223 = vmul.f32 %v7218, 1.442695
    %v7224 = vpow.pop %v7223
    %v7225 = vadd.f32 %v7220, %v7222
    %v7226 = vsel %vm4393, %v7224, 0.0
    %v7227 = vadd.f32 %v7225, %v7226
    %7228 = vadd.xlane.f32.xlu0 %v7227
    %v7229 = vpop.xlane.xlu0 %7228
    %v7230 = vrcp.pop %v7229
    %v7231 = vmul.f32 %v7229, %v7230
    %v7232 = vsub.f32 1.0, %v7231
    %v7233 = vmul.f32 %v7230, %v7232
    %v7234 = vadd.f32 %v7230, %v7233
    %vm7235 = vweird.f32 %v7229
    %vm7236 = vweird.f32 %v7230
    %vm7237 = vmor %vm7235, %vm7236
    %v7238 = vsel %vm7237, %v7230, %v7234
    %v7239 = vand.u32 2147483647, %v7229
    %vm7240 = vcmp.eq.f32.partialorder %v7239, 8.507059e+37
    %v7241 = vand.u32 %v7229, 2147483648
    %v7242 = vor.u32 1.1754944e-38, %v7241
    %v7243 = vsel %vm7240, %v7242, %v7238
    %v7244 = vmul.f32 %v7220, %v7243
    %v7245 = vmul.f32 %v7222, %v7243
    %v7246 = vmul.f32 %v7224, %v7243
    %v7247 = vld [vmem:[%s89] sm:$0xff]
    %v7248 = vld [vmem:[%s89 + $0x8] sm:$0xff]
    %v7249 = vld [vmem:[%s89 + $0x10] sm:$0xff]
    %v7250 = vld [vmem:[%s89 + $0x18] sm:$0xff]
    %v7251 = vld [vmem:[%s89 + $0x20] sm:$0xff]
    %v7252 = vld [vmem:[%s89 + $0x28] sm:$0xf]
    %v7253 = vpack.c.bf16 %v7248, %v7247
    %v7254 = vpack.c.bf16 %v7250, %v7249
    %v7255 = vpack.c.bf16 %v7252, %v7251
    %v7256 = vld [vmem:[%s91] sm:$0x1]
    %v7258 = vperm.slane %v7256, 0
    %v7261 = vsel %vm770, %v7255, 0
    %7263 = vmatpush.bf16.msra.mxu0 0
    %7264 = vmatpush.bf16.msra.mxu0 0
    %7265 = vmatpush.bf16.msra.mxu0 0
    %7266 = vmatpush.bf16.msra.mxu0 0
    %7267 = vmatpush.bf16.msra.mxu0 0
    %7268 = vmatpush.bf16.msra.mxu0 %v7261
    %7269 = vmatpush.bf16.msra.mxu0 %v7254
    %7270 = vmatpush.bf16.msra.mxu0 %v7253
    %7271 = vmatmul.bf16.gmra.mxu0 %v4272
    %v7272 = vpop.f32.mrf.mxu0
    %v7273 = vadd.f32 %v7258, %v7272
    %v7274 = vpop.f32.mrf.mxu0
    %7275 = vdwg.mxu0
    %v7276 = vmax.f32 %v7273, 0.0
    %v7277 = vld [vmem:[%s93] sm:$0xff]
    %v7278 = vld [vmem:[%s93 + $0x8] sm:$0xff]
    %v7279 = vld [vmem:[%s93 + $0x10] sm:$0x3f]
    %v7280 = vpack.c.bf16 %v7276, %v7276
    %v7281 = vpack.c.bf16 %v7278, %v7277
    %v7282 = vpack.c.bf16 %v7279, %v7279
    %v7283 = vld [vmem:[%s95] sm:$0x1]
    %v7285 = vperm.slane %v7283, 0
    %vm7287 = vcmask 179200
    %v7289 = vsel %vm7287, %v7280, 0
    %vm7291 = vcmask 1042432
    %v7293 = vsel %vm7291, %v7282, 0
    %7295 = vmatpush.bf16.msra.mxu0 0
    %7296 = vmatpush.bf16.msra.mxu0 0
    %7297 = vmatpush.bf16.msra.mxu0 0
    %7298 = vmatpush.bf16.msra.mxu0 0
    %7299 = vmatpush.bf16.msra.mxu0 0
    %7300 = vmatpush.bf16.msra.mxu0 0
    %7301 = vmatpush.bf16.msra.mxu0 %v7293
    %7302 = vmatpush.bf16.msra.mxu0 %v7281
    %7303 = vmatmul.bf16.gmra.mxu0 %v7289
    %v7304 = vpop.f32.mrf.mxu0
    %v7305 = vadd.f32 %v7285, %v7304
    %v7306 = vpop.f32.mrf.mxu0
    %7307 = vdwg.mxu0
    %vm7308 = vcmask 15360
    %v7309 = vsel %vm7308, %v7305, -inf
    %7310 = vmax.xlane.f32.xlu0 %v7309
    %v7311 = vpop.xlane.xlu0 %7310
    %v7312 = vsub.f32 %v7305, %v7311
    %v7313 = vmul.f32 %v7312, 1.442695
    %v7314 = vpow.pop %v7313
    %v7315 = vsel %vm7308, %v7314, 0.0
    %7316 = vadd.xlane.f32.xlu0 %v7315
    %v7317 = vpop.xlane.xlu0 %7316
    %v7318 = vrcp.pop %v7317
    %v7319 = vmul.f32 %v7317, %v7318
    %v7320 = vsub.f32 1.0, %v7319
    %v7321 = vmul.f32 %v7318, %v7320
    %v7322 = vadd.f32 %v7318, %v7321
    %vm7323 = vweird.f32 %v7317
    %vm7324 = vweird.f32 %v7318
    %vm7325 = vmor %vm7323, %vm7324
    %v7326 = vsel %vm7325, %v7318, %v7322
    %v7327 = vand.u32 2147483647, %v7317
    %vm7328 = vcmp.eq.f32.partialorder %v7327, 8.507059e+37
    %v7329 = vand.u32 %v7317, 2147483648
    %v7330 = vor.u32 1.1754944e-38, %v7329
    %v7331 = vsel %vm7328, %v7330, %v7326
    %v7332 = vmul.f32 %v7314, %v7331
    %v7333 = vmul.f32 %v7332, 2.0
    %v7334 = vsub.f32 %v7333, 1.0
    %7335 = vst [vmem:[%s97] sm:$0xff] 0.0
    %7336 = vst [vmem:[%s97 + $0x8] sm:$0xff] 0.0
    %7337 = vst [vmem:[%s97 + $0x10] sm:$0xff] 0.0
    %7338 = vst [vmem:[%s97 + $0x18] sm:$0xff] 0.0
    %7339 = vst [vmem:[%s97 + $0x20] sm:$0xff] 0.0
    %7340 = vst [vmem:[%s97 + $0x28] sm:$0xff] 0.0
    %7341 = vst [vmem:[%s97 + $0x30] sm:$0xff] 0.0
    %7342 = vst [vmem:[%s97] sm:$0xff] %v7244
    %7343 = vst [vmem:[%s97 + $0x8] sm:$0xff] %v7245
    %7344 = vst.msk [vmem:[%s97 + $0x10] sm:$0xff] %vm4393, %v7246
    %7345 = vst.msk [vmem:[%s97 + $0x18] sm:$0xff] %vm4393, %v4417
    %7346 = vst.msk [vmem:[%s97 + $0x20] sm:$0xff] %vm4575, %v4599
    %7347 = vst.msk [vmem:[%s97 + $0x28] sm:$0xff] %vm4729, %v4753
    %7348 = vst.msk [vmem:[%s97 + $0x30] sm:$0xff] %vm7308, %v7334
    // Predicated region
    $region278: #{hero_model_forward.1} parent=1 // pred_check
      _
    $region279: #{hero_model_forward.1} parent=1 // pred_check_branch
      %7350 = sbr.rel (0) target = $region281
    $region280: #{hero_model_forward.1} parent=1 // pred_region
      _
    $region281: #{hero_model_forward.1} parent=1 // pred_fallthru
      _
    // Predicated region
    $region282: #{hero_model_forward.1} parent=1 // pred_check
      _
    $region283: #{hero_model_forward.1} parent=1 // pred_check_branch
      %7352 = sbr.rel (0) target = $region285
    $region284: #{hero_model_forward.1} parent=1 // pred_region
      %7354 = vsyncadd [#allocation5], 0
      %s7355 = sshll.u32 [#allocation36], 4
      %s7356 = int_to_ptr.vmem [resolvable:$true] %s7355
      %s7357 = sshll.u32 %s99, 4
      %s7358 = int_to_ptr.hbm [resolvable:$true] %s7357
      %7363 = dma.vmem_to_hbm [thread:$0]  %s7356, 384, %s7358, [#allocation5], 128, 128, 8
    $region285: #{hero_model_forward.1} parent=1 // pred_fallthru
      _
    // Predicated region
    $region286: #{hero_model_forward.1} parent=1 // pred_check
      _
    $region287: #{hero_model_forward.1} parent=1 // pred_check_branch
      %7365 = sbr.rel (0) target = $region289
    $region288: #{hero_model_forward.1} parent=1 // pred_region
      %7367 = vsyncadd [#allocation38], 0
      %s7368 = sshll.u32 [#allocation37], 4
      %s7369 = int_to_ptr.vmem [resolvable:$true] %s7368
      %s7370 = sshll.u32 %s101, 4
      %s7371 = int_to_ptr.hbm [resolvable:$true] %s7370
      %7376 = dma.vmem_to_hbm [thread:$0]  %s7369, 384, %s7371, [#allocation38], 128, 128, 8
    $region289: #{hero_model_forward.1} parent=1 // pred_fallthru
      _
    // Predicated region
    $region290: #{hero_model_forward.1} parent=1 // pred_check
      _
    $region291: #{hero_model_forward.1} parent=1 // pred_check_branch
      %7378 = sbr.rel (0) target = $region293
    $region292: #{hero_model_forward.1} parent=1 // pred_region
      _
    $region293: #{hero_model_forward.1} parent=1 // pred_fallthru
      _
    // Predicated region
    $region294: #{hero_model_forward.1} parent=1 // pred_check
      _
    $region295: #{hero_model_forward.1} parent=1 // pred_check_branch
      %7380 = sbr.rel (0) target = $region297
    $region296: #{hero_model_forward.1} parent=1 // pred_region
      %7382 = dma.done [#allocation5], 384
    $region297: #{hero_model_forward.1} parent=1 // pred_fallthru
      _
    // Predicated region
    $region298: #{hero_model_forward.1} parent=1 // pred_check
      _
    $region299: #{hero_model_forward.1} parent=1 // pred_check_branch
      %7384 = sbr.rel (0) target = $region301
    $region300: #{hero_model_forward.1} parent=1 // pred_region
      %7386 = dma.done [#allocation38], 384
    $region301: #{hero_model_forward.1} parent=1 // pred_fallthru
      _
    %7387 = vsyncpa [#allocation4], 1
    %7388 = vsyncpa [#allocation7], 1
    %7389 = vsyncpa [#allocation10], 1
    %7390 = vsyncpa [#allocation13], 1
    %7391 = vsyncpa [#allocation16], 1
    %7392 = vsyncpa [#allocation19], 1
    %7393 = vsyncpa [#allocation22], 1
    %7394 = vsyncpa [#allocation25], 1
    %7395 = vsyncpa [#allocation28], 1
    %7396 = vsyncpa [#allocation31], 1
    %7397 = vsyncpa [#allocation34], 1
    %7398 = vsyncpa [#allocation5], 1
    %7399 = vsyncpa [#allocation38], 1

</llo_original>
